<compile_context>
chip_gen: v5e
topology: v5e:2x2
jax: 0.10.0
libtpu: 0.0.40
codegen_flags: <defaults>
</compile_context>

<pallas_src>
import functools

import numpy as np
import jax
import jax.numpy as jnp
from jax.experimental import pallas as pl
from jax.experimental.pallas import tpu as pltpu

# ----------------------------- configuration --------------------------------
B       = 2                    # batch
IN_CH   = 3                    # RGB
IMG     = 16                   # input image H = W        (stand-in for 224)
PATCH   = 4                    # ViT patch size           (stand-in for 14)
D_ENC   = 32                   # encoder embed dim        (stand-in for 1024)
HEADS   = 4
DEPTH   = 24                   # transformer blocks (same count as ViT-L)
MLP_DIM = 4 * D_ENC
FEAT_HW = IMG // PATCH         # 4x4 patch grid
TOKENS  = FEAT_HW * FEAT_HW + 1
TAPS    = (5, 11, 17, 23)      # feature extraction blocks (as in DYNO.py)
D_DEC   = 64                   # decoder channels         (stand-in for 512)
OUT_HW  = 16                   # decoder output_size      (stand-in for 224)
NPIX    = OUT_HW * OUT_HW
PAD_W   = 24                   # pad rows for 3x3 conv plane (>= OUT_HW+1, x8)
PAD_ROWS = NPIX + 2 * PAD_W


# =============================== Pallas kernels ==============================
def _vit_blocks_kernel(tok0_ref, qkvw_ref, projw_ref, fc1w_ref, fc2w_ref,
                       vec_ref, taps_ref, tok_ref, *, num_heads, taps):
    """One grid step = one DINOv2-style transformer block for the whole batch.

    grid = (DEPTH,) ("arbitrary"): per-block weights are streamed once per
    forward; tok_ref (VMEM scratch, (B, T, D)) carries the token state across
    the depth axis.  The batch loop is inside the kernel (weights re-used, no
    per-batch weight re-DMA).  Feature taps are written into a resident output.
    """
    d = pl.program_id(0)
    bsz, t, dim = tok_ref.shape
    dh = dim // num_heads
    mlp = fc1w_ref.shape[-1]
    scale = float(dh) ** -0.5
    eps = 1e-6

    @pl.when(d == 0)
    def _():
        tok_ref[...] = tok0_ref[...]

    # packed per-block vectors: one DMA stream instead of 10 tiny ones
    vec = vec_ref[...]                                       # (10, MLP_DIM) f32
    ln1g, ln1b = vec[0:1, :dim], vec[1:2, :dim]
    qkvb       = vec[2:3, :3 * dim]
    projb, ls1 = vec[3:4, :dim], vec[4:5, :dim]
    ln2g, ln2b = vec[5:6, :dim], vec[6:7, :dim]
    fc1b       = vec[7:8, :mlp]
    fc2b, ls2  = vec[8:9, :dim], vec[9:10, :dim]

    qkvw = qkvw_ref[...]                                     # bf16 (D, 3D)
    projw = projw_ref[...]                                   # bf16 (D, D)
    fc1w = fc1w_ref[...]                                     # bf16 (D, 4D)
    fc2w = fc2w_ref[...]                                     # bf16 (4D, D)

    def layernorm(v, g, bta):
        mu = jnp.mean(v, axis=-1, keepdims=True)
        var = jnp.mean((v - mu) ** 2, axis=-1, keepdims=True)
        return (v - mu) * jax.lax.rsqrt(var + eps) * g + bta

    for b in range(bsz):                       # batch loop inside one grid step
        x = tok_ref[b]                                         # (T, D) f32

        # ----------------- attention: fused QKV, full-K projection -----------
        h = layernorm(x, ln1g, ln1b)
        qkv = jnp.dot(h.astype(jnp.bfloat16), qkvw,
                      preferred_element_type=jnp.float32) + qkvb     # (T, 3D)
        q = qkv[:, :dim] * scale
        k = qkv[:, dim:2 * dim]
        v = qkv[:, 2 * dim:]
        heads = []
        for hd in range(num_heads):            # only softmax / PV is per-head
            lo = hd * dh
            qh = q[:, lo:lo + dh].astype(jnp.bfloat16)
            kh = k[:, lo:lo + dh].astype(jnp.bfloat16)
            vh = v[:, lo:lo + dh].astype(jnp.bfloat16)
            s = jax.lax.dot_general(qh, kh, (((1,), (1,)), ((), ())),
                                    preferred_element_type=jnp.float32)  # (T,T)
            s = s - jnp.max(s, axis=-1, keepdims=True)
            e = jnp.exp(s)
            p = e * pl.reciprocal(jnp.sum(e, axis=-1, keepdims=True),
                                  approx=True)
            heads.append(jnp.dot(p.astype(jnp.bfloat16), vh,
                                 preferred_element_type=jnp.float32))   # (T,dh)
        # stack heads along lanes and do ONE (T,D)x(D,D) projection
        ao = jnp.concatenate(heads, axis=1)                             # (T, D)
        attn = jnp.dot(ao.astype(jnp.bfloat16), projw,
                       preferred_element_type=jnp.float32) + projb
        x1 = x + ls1 * attn

        # ----------------- MLP ------------------------------------------------
        h2 = layernorm(x1, ln2g, ln2b)
        m = jnp.dot(h2.astype(jnp.bfloat16), fc1w,
                    preferred_element_type=jnp.float32) + fc1b
        # TODO(synk): DINOv2 uses exact erf-GELU; tanh-approximate GELU here.
        m = jax.nn.gelu(m, approximate=True)
        m = jnp.dot(m.astype(jnp.bfloat16), fc2w,
                    preferred_element_type=jnp.float32) + fc2b
        x2 = x1 + ls2 * m
        tok_ref[b] = x2

        # ----------------- feature taps (cls dropped in the wrapper) ---------
        for si, tap_d in enumerate(taps):
            @pl.when(d == tap_d)
            def _(si=si, b=b, x2=x2):
                taps_ref[si, b] = x2


def _decoder_head_kernel(feat_ref, rw_ref, rb_ref, rg_ref, rbe_ref, up_ref,
                         xmask_ref, c1w_ref, c1b_ref, c2w_ref, c2b_ref,
                         c3w_ref, c3b_ref, o_ref, pad_ref, *, out_hw, feat_hw):
    """Fused DPTDecoder + DepthPredictionHead for ONE batch element.

    grid = (B,) "parallel" (one TensorCore per batch element on v7x).
    feat:(4, B*hw, Cenc)  rw/rb/rg/rbe:(4,...)  up:(npix, hw) kron-bilinear
    xmask:(3, npix, 1) left/center/right image-edge masks
    out:(B, 1, npix) lane-dense.  pad_ref: zero-padded VMEM plane for 3x3 conv.
    """
    b = pl.program_id(0)
    nscale = feat_ref.shape[0]
    hw_in = feat_hw * feat_hw
    bsz = feat_ref.shape[1] // hw_in
    npix = out_hw * out_hw
    cdec = rw_ref.shape[-1]

    pad_ref[...] = jnp.zeros_like(pad_ref)       # keep pad border rows at zero
    upM = up_ref[...]                            # (npix, hw_in) f32

    # ---- decoder: per scale 1x1 conv + BN(train-mode batch stats, computed
    #      redundantly per grid step) + ReLU, bilinear upsample (align_corners)
    #      as one kron matmul, summed for THIS batch element only (one
    #      (npix, Cdec) accumulator live at a time).
    acc = jnp.zeros((npix, cdec), jnp.float32)
    for s in range(nscale - 1, -1, -1):          # matches ((d3 + d2) + d1) + d0
        y = jnp.dot(feat_ref[s].astype(jnp.bfloat16), rw_ref[s],
                    preferred_element_type=jnp.float32) + rb_ref[s]   # (B*hw,C)
        mu = jnp.mean(y, axis=0, keepdims=True)                       # over BHW
        var = jnp.mean((y - mu) ** 2, axis=0, keepdims=True)          # biased
        yn = jnp.maximum((y - mu) * jax.lax.rsqrt(var + 1e-5) * rg_ref[s]
                         + rbe_ref[s], 0.0)
        yb = yn[0:hw_in, :]                      # select this batch element
        for bb in range(1, bsz):
            yb = jnp.where(b == bb, yn[bb * hw_in:(bb + 1) * hw_in, :], yb)
        acc = acc + jnp.dot(upM, yb, preferred_element_type=jnp.float32)

    # ---- depth head: 3x3 "same" convs via a zero-padded VMEM plane: each tap
    #      (ky,kx) is a static row-shifted window + left/right edge mask; the
    #      only MXU work is the real (npix,Cin)x(Cin,Cout) matmul.
    def conv3x3(x_flat, w_ref_, bias, cin, cout):
        pad_ref[pl.ds(PAD_W, npix), 0:cin] = x_flat
        out = jnp.zeros((npix, cout), jnp.float32)
        for ky in range(3):
            for kx in range(3):
                off = PAD_W + (ky - 1) * out_hw + (kx - 1)
                sh = pad_ref[pl.ds(off, npix), 0:cin] * xmask_ref[kx]
                out = out + jnp.dot(sh.astype(jnp.bfloat16), w_ref_[ky, kx],
                                    preferred_element_type=jnp.float32)
        return jnp.maximum(out + bias, 0.0)

    y1 = conv3x3(acc, c1w_ref, c1b_ref[...], cdec, c1w_ref.shape[-1])   # ->32
    y2 = conv3x3(y1, c2w_ref, c2b_ref[...],
                 c1w_ref.shape[-1], c2w_ref.shape[-1])                  # ->32

    # final 1x1 conv emitted lane-dense: (1,Cin) x (npix,Cin)^T -> (1, npix)
    row = jax.lax.dot_general(c3w_ref[...], y2, (((1,), (1,)), ((), ())),
                              preferred_element_type=jnp.float32)
    o_ref[...] = (row + c3b_ref[...]).astype(o_ref.dtype)


# ============================== model wrappers ===============================
def encoder_forward(x_nchw, p):
    """DynoV2Encoder: patch-embed + cls + pos (XLA), 24 blocks in ONE
    pallas_call with per-block weights streamed once, taps at (5,11,17,23)."""
    bsz = x_nchw.shape[0]
    g = FEAT_HW
    # patchify + patch embedding + cls + pos: tiny one-off work, left to XLA
    # (drops the old standalone linear pallas_call and its HBM round trip).
    x = jnp.transpose(x_nchw, (0, 2, 3, 1))                        # NHWC
    x = x.reshape(bsz, g, PATCH, g, PATCH, IN_CH)
    px = jnp.transpose(x, (0, 1, 3, 2, 4, 5)).reshape(
        bsz, g * g, PATCH * PATCH * IN_CH)
    ptok = jnp.dot(px, p["patch_w"]) + p["patch_b"]                # (B, gg, D)
    cls = jnp.broadcast_to(p["cls"], (bsz, 1, D_ENC))
    tok0 = jnp.concatenate([cls, ptok], axis=1) + p["pos"]         # (B, T, D)

    def wspec(a):        # stream block d's slab of the stacked weight per step
        return pl.BlockSpec((None,) + a.shape[1:],
                            lambda d, _n=a.ndim: (d,) + (0,) * (_n - 1))

    weights = [p["qkv_w"], p["proj_w"], p["fc1_w"], p["fc2_w"], p["vec"]]

    taps = pl.pallas_call(
        functools.partial(_vit_blocks_kernel, num_heads=HEADS, taps=TAPS),
        out_shape=jax.ShapeDtypeStruct(
            (len(TAPS), bsz, TOKENS, D_ENC), jnp.float32),
        grid_spec=pltpu.PrefetchScalarGridSpec(
            num_scalar_prefetch=0,
            grid=(DEPTH,),
            in_specs=[pl.BlockSpec((bsz, TOKENS, D_ENC), lambda d: (0, 0, 0))]
                     + [wspec(w) for w in weights],
            out_specs=pl.BlockSpec((len(TAPS), bsz, TOKENS, D_ENC),
                                   lambda d: (0, 0, 0, 0)),
            scratch_shapes=[pltpu.VMEM((bsz, TOKENS, D_ENC), jnp.float32)]),
        compiler_params=pltpu.CompilerParams(
            dimension_semantics=("arbitrary",),
            # re-derive for real ViT-L dims (bf16 streamed weights make the
            # double-buffered set fit v7x's 64 MiB VMEM)
            vmem_limit_bytes=48 * 1024 * 1024),
    )(tok0, *weights)
    return taps                                                    # (4,B,T,D)


def decoder_head_forward(feats, pdec, phead, bsz):
    """Fused DPTDecoder + DepthPredictionHead (scale_factor=1), batch-parallel."""
    args = [feats, pdec["w"], pdec["b"], pdec["gamma"], pdec["beta"],
            pdec["upM"], phead["xmask"],
            phead["c1_w"], phead["c1_b"], phead["c2_w"], phead["c2_b"],
            phead["c3_w"], phead["c3_b"]]

    def fullspec(a):
        return pl.BlockSpec(a.shape, lambda b, _n=a.ndim: (0,) * _n)

    out = pl.pallas_call(
        functools.partial(_decoder_head_kernel, out_hw=OUT_HW, feat_hw=FEAT_HW),
        out_shape=jax.ShapeDtypeStruct((bsz, 1, NPIX), jnp.float32),
        grid_spec=pltpu.PrefetchScalarGridSpec(
            num_scalar_prefetch=0,
            grid=(bsz,),
            in_specs=[fullspec(a) for a in args],
            out_specs=pl.BlockSpec((None, 1, NPIX), lambda b: (b, 0, 0)),
            scratch_shapes=[pltpu.VMEM((PAD_ROWS, D_DEC), jnp.float32)]),
        compiler_params=pltpu.CompilerParams(
            dimension_semantics=("parallel",)),
    )(*args)
    # (B, 1, Ho*Wo) has the same linear order as NCHW (B, 1, Ho, Wo)
    return out.reshape(bsz, 1, OUT_HW, OUT_HW)


def depth_estimator_forward(x_nchw, params):
    bsz = x_nchw.shape[0]
    taps = encoder_forward(x_nchw, params["encoder"])              # (4,B,T,D)
    # drop cls token; lay features out as (scale, B*H*W, Cenc) for the decoder
    feats = taps[:, :, 1:, :].reshape(len(TAPS), bsz * FEAT_HW * FEAT_HW, D_ENC)
    return decoder_head_forward(feats, params["decoder"], params["head"], bsz)


# ============================ deterministic params ===========================
def _interp_matrix(n_out, n_in):
    """Row-interp matrix for bilinear resize, align_corners=True."""
    a = np.zeros((n_out, n_in), np.float32)
    if n_in == 1 or n_out == 1:
        a[:, 0] = 1.0
        return a
    scale = (n_in - 1) / (n_out - 1)
    for i in range(n_out):
        src = i * scale
        i0 = min(int(np.floor(src)), n_in - 1)
        i1 = min(i0 + 1, n_in - 1)
        f = src - i0
        a[i, i0] += 1.0 - f
        a[i, i1] += f
    return a


def init_params(key):
    keys = iter(jax.random.split(key, 64))

    def nrm(shape, dtype=jnp.float32, scale=0.02):
        v = scale * jax.random.normal(next(keys), shape, dtype=jnp.float32)
        return v.astype(dtype)

    zeros = lambda s: jnp.zeros(s, jnp.float32)
    ones = lambda s: jnp.ones(s, jnp.float32)
    bf16 = jnp.bfloat16

    # pack the 10 small per-block vectors into one (DEPTH, 10, MLP_DIM) slab so
    # a single BlockSpec streams them (5 DMA streams per step instead of 14).
    def pad_to(a, w):
        return jnp.pad(a, ((0, 0), (0, w - a.shape[-1])))
    vec = jnp.stack([pad_to(v, MLP_DIM) for v in (
        ones((DEPTH, D_ENC)), zeros((DEPTH, D_ENC)),          # ln1 g/b
        zeros((DEPTH, 3 * D_ENC)),                            # qkv_b
        zeros((DEPTH, D_ENC)),                                # proj_b
        jnp.full((DEPTH, D_ENC), 1e-5, jnp.float32),          # ls1
        ones((DEPTH, D_ENC)), zeros((DEPTH, D_ENC)),          # ln2 g/b
        zeros((DEPTH, MLP_DIM)),                              # fc1_b
        zeros((DEPTH, D_ENC)),                                # fc2_b
        jnp.full((DEPTH, D_ENC), 1e-5, jnp.float32),          # ls2
    )], axis=1)                                               # (DEPTH,10,128)

    encoder = dict(
        patch_w=nrm((PATCH * PATCH * IN_CH, D_ENC)),
        patch_b=zeros((D_ENC,)),
        cls=nrm((1, 1, D_ENC)),
        pos=nrm((1, TOKENS, D_ENC)),
        qkv_w=nrm((DEPTH, D_ENC, 3 * D_ENC), bf16),
        proj_w=nrm((DEPTH, D_ENC, D_ENC), bf16),
        fc1_w=nrm((DEPTH, D_ENC, MLP_DIM), bf16),
        fc2_w=nrm((DEPTH, MLP_DIM, D_ENC), bf16),
        vec=vec,
    )

    # bilinear (align_corners=True) 4x4 -> 16x16 as one kron matrix
    a = _interp_matrix(OUT_HW, FEAT_HW)
    decoder = dict(
        w=nrm((len(TAPS), D_ENC, D_DEC), bf16),
        b=nrm((len(TAPS), 1, D_DEC)),
        gamma=ones((len(TAPS), 1, D_DEC)),
        beta=zeros((len(TAPS), 1, D_DEC)),
        upM=jnp.asarray(np.kron(a, a)),                        # (npix, hw)
    )

    # left / center / right image-edge masks for the 3x3 "same" conv taps
    xs = np.arange(NPIX) % OUT_HW
    xmask = np.stack([(xs >= 1), np.ones_like(xs, dtype=bool),
                      (xs <= OUT_HW - 2)]).astype(np.float32)[:, :, None]
    head = dict(
        c1_w=nrm((3, 3, D_DEC, D_DEC // 2), bf16), c1_b=nrm((1, D_DEC // 2)),
        c2_w=nrm((3, 3, D_DEC // 2, 32), bf16), c2_b=nrm((1, 32)),
        c3_w=nrm((1, 32)), c3_b=zeros((1, 1)),
        xmask=jnp.asarray(xmask),                              # (3, npix, 1)
    )
    return dict(encoder=encoder, decoder=decoder, head=head)


# ==================================== main ===================================
if __name__ == "__main__":
    params = init_params(jax.random.PRNGKey(42))
    x = jax.random.normal(jax.random.PRNGKey(0), (B, IN_CH, IMG, IMG),
                          dtype=jnp.float32)                       # NCHW input
    fwd = jax.jit(depth_estimator_forward)
    disparity = fwd(x, params)
    jax.block_until_ready(disparity)
    assert disparity.shape == (B, 1, OUT_HW, OUT_HW), disparity.shape
    assert disparity.dtype == jnp.float32
    print("KERNEL_OK")
</pallas_src>

<mosaic_0001>
module attributes {stable_mosaic.version = 11 : i64} {
  func.func @_vit_blocks_kernel(%arg0: i32, %arg1: memref<2x17x32xf32, #tpu.memory_space<vmem>>, %arg2: memref<1x32x96xbf16, #tpu.memory_space<vmem>>, %arg3: memref<1x32x32xbf16, #tpu.memory_space<vmem>>, %arg4: memref<1x32x128xbf16, #tpu.memory_space<vmem>>, %arg5: memref<1x128x32xbf16, #tpu.memory_space<vmem>>, %arg6: memref<1x10x128xf32, #tpu.memory_space<vmem>>, %arg7: memref<4x2x17x32xf32, #tpu.memory_space<vmem>>, %arg8: memref<2x17x32xf32, #tpu.memory_space<vmem>>) attributes {dimension_semantics = [#tpu.dimension_semantics<arbitrary>], iteration_bounds = array<i64: 24>, scalar_prefetch = 0 : i64, scratch_operands = 1 : i64, tpu.core_type = #tpu.core_type<tc>, window_params = [{pipeline_mode = #tpu.pipeline_mode<synchronous>, transform_indices = @transform_0, window_bounds = array<i64: 2, 17, 32>}, {transform_indices = @transform_1, window_bounds = array<i64: 1, 32, 96>}, {transform_indices = @transform_2, window_bounds = array<i64: 1, 32, 32>}, {transform_indices = @transform_3, window_bounds = array<i64: 1, 32, 128>}, {transform_indices = @transform_4, window_bounds = array<i64: 1, 128, 32>}, {transform_indices = @transform_5, window_bounds = array<i64: 1, 10, 128>}, {pipeline_mode = #tpu.pipeline_mode<synchronous>, transform_indices = @transform_6, window_bounds = array<i64: 4, 2, 17, 32>}]} {
    %c0_i32 = arith.constant 0 : i32
    %0 = arith.cmpi eq, %arg0, %c0_i32 : i32
    %1 = arith.extui %0 : i1 to i32
    %c0_i32_0 = arith.constant 0 : i32
    %2 = arith.cmpi ne, %1, %c0_i32_0 : i32
    scf.if %2 {
      %c0_107 = arith.constant 0 : index
      %c0_108 = arith.constant 0 : index
      %c0_109 = arith.constant 0 : index
      %379 = vector.load %arg1[%c0_107, %c0_108, %c0_109] : memref<2x17x32xf32, #tpu.memory_space<vmem>>, vector<2x17x32xf32>
      %c0_110 = arith.constant 0 : index
      %c0_111 = arith.constant 0 : index
      %c0_112 = arith.constant 0 : index
      %380 = vector.load %arg8[%c0_110, %c0_111, %c0_112] : memref<2x17x32xf32, #tpu.memory_space<vmem>>, vector<2x17x32xf32>
      tpu.vector_store %arg8[%c0_110, %c0_111, %c0_112], %379 {strides = array<i32>} : memref<2x17x32xf32, #tpu.memory_space<vmem>>, vector<2x17x32xf32>,
    } else {
    }
    %c0 = arith.constant 0 : index
    %c0_1 = arith.constant 0 : index
    %c0_2 = arith.constant 0 : index
    %3 = vector.load %arg6[%c0, %c0_1, %c0_2] : memref<1x10x128xf32, #tpu.memory_space<vmem>>, vector<1x10x128xf32>
    %4 = vector.shape_cast %3 : vector<1x10x128xf32> to vector<10x128xf32>
    %5 = vector.extract_strided_slice %4 {offsets = [0, 0], sizes = [1, 32], strides = [1, 1]} : vector<10x128xf32> to vector<1x32xf32>
    %6 = vector.extract_strided_slice %4 {offsets = [1, 0], sizes = [1, 32], strides = [1, 1]} : vector<10x128xf32> to vector<1x32xf32>
    %7 = vector.extract_strided_slice %4 {offsets = [2, 0], sizes = [1, 96], strides = [1, 1]} : vector<10x128xf32> to vector<1x96xf32>
    %8 = vector.extract_strided_slice %4 {offsets = [3, 0], sizes = [1, 32], strides = [1, 1]} : vector<10x128xf32> to vector<1x32xf32>
    %9 = vector.extract_strided_slice %4 {offsets = [4, 0], sizes = [1, 32], strides = [1, 1]} : vector<10x128xf32> to vector<1x32xf32>
    %10 = vector.extract_strided_slice %4 {offsets = [5, 0], sizes = [1, 32], strides = [1, 1]} : vector<10x128xf32> to vector<1x32xf32>
    %11 = vector.extract_strided_slice %4 {offsets = [6, 0], sizes = [1, 32], strides = [1, 1]} : vector<10x128xf32> to vector<1x32xf32>
    %12 = vector.extract_strided_slice %4 {offsets = [7, 0], sizes = [1, 128], strides = [1, 1]} : vector<10x128xf32> to vector<1x128xf32>
    %13 = vector.extract_strided_slice %4 {offsets = [8, 0], sizes = [1, 32], strides = [1, 1]} : vector<10x128xf32> to vector<1x32xf32>
    %14 = vector.extract_strided_slice %4 {offsets = [9, 0], sizes = [1, 32], strides = [1, 1]} : vector<10x128xf32> to vector<1x32xf32>
    %c0_3 = arith.constant 0 : index
    %c0_4 = arith.constant 0 : index
    %c0_5 = arith.constant 0 : index
    %15 = vector.load %arg2[%c0_3, %c0_4, %c0_5] : memref<1x32x96xbf16, #tpu.memory_space<vmem>>, vector<1x32x96xbf16>
    %16 = vector.shape_cast %15 : vector<1x32x96xbf16> to vector<32x96xbf16>
    %c0_6 = arith.constant 0 : index
    %c0_7 = arith.constant 0 : index
    %c0_8 = arith.constant 0 : index
    %17 = vector.load %arg3[%c0_6, %c0_7, %c0_8] : memref<1x32x32xbf16, #tpu.memory_space<vmem>>, vector<1x32x32xbf16>
    %18 = vector.shape_cast %17 : vector<1x32x32xbf16> to vector<32x32xbf16>
    %c0_9 = arith.constant 0 : index
    %c0_10 = arith.constant 0 : index
    %c0_11 = arith.constant 0 : index
    %19 = vector.load %arg4[%c0_9, %c0_10, %c0_11] : memref<1x32x128xbf16, #tpu.memory_space<vmem>>, vector<1x32x128xbf16>
    %20 = vector.shape_cast %19 : vector<1x32x128xbf16> to vector<32x128xbf16>
    %c0_12 = arith.constant 0 : index
    %c0_13 = arith.constant 0 : index
    %c0_14 = arith.constant 0 : index
    %21 = vector.load %arg5[%c0_12, %c0_13, %c0_14] : memref<1x128x32xbf16, #tpu.memory_space<vmem>>, vector<1x128x32xbf16>
    %22 = vector.shape_cast %21 : vector<1x128x32xbf16> to vector<128x32xbf16>
    %c0_15 = arith.constant 0 : index
    %c0_16 = arith.constant 0 : index
    %c0_17 = arith.constant 0 : index
    %23 = vector.load %arg8[%c0_15, %c0_16, %c0_17] : memref<2x17x32xf32, #tpu.memory_space<vmem>>, vector<1x17x32xf32>
    %24 = vector.shape_cast %23 : vector<1x17x32xf32> to vector<17x32xf32>
    %cst = arith.constant dense<0.000000e+00> : vector<17xf32>
    %25 = vector.multi_reduction <add>, %24, %cst [1] : vector<17x32xf32> to vector<17xf32>
    %26 = vector.shape_cast %25 : vector<17xf32> to vector<17x1xf32>
    %cst_18 = arith.constant 3.200000e+01 : f32
    %27 = vector.broadcast %cst_18 : f32 to vector<17x1xf32>
    %28 = arith.divf %26, %27 : vector<17x1xf32>
    %29 = vector.broadcast %28 : vector<17x1xf32> to vector<17x32xf32>
    %30 = arith.subf %24, %29 : vector<17x32xf32>
    %31 = arith.mulf %30, %30 : vector<17x32xf32>
    %cst_19 = arith.constant dense<0.000000e+00> : vector<17xf32>
    %32 = vector.multi_reduction <add>, %31, %cst_19 [1] : vector<17x32xf32> to vector<17xf32>
    %33 = vector.shape_cast %32 : vector<17xf32> to vector<17x1xf32>
    %cst_20 = arith.constant 3.200000e+01 : f32
    %34 = vector.broadcast %cst_20 : f32 to vector<17x1xf32>
    %35 = arith.divf %33, %34 : vector<17x1xf32>
    %36 = vector.broadcast %28 : vector<17x1xf32> to vector<17x32xf32>
    %37 = arith.subf %24, %36 : vector<17x32xf32>
    %cst_21 = arith.constant 9.99999997E-7 : f32
    %38 = vector.broadcast %cst_21 : f32 to vector<17x1xf32>
    %39 = arith.addf %35, %38 : vector<17x1xf32>
    %40 = math.rsqrt %39 : vector<17x1xf32>
    %41 = vector.broadcast %40 : vector<17x1xf32> to vector<17x32xf32>
    %42 = arith.mulf %37, %41 : vector<17x32xf32>
    %43 = vector.broadcast %5 : vector<1x32xf32> to vector<17x32xf32>
    %44 = arith.mulf %42, %43 : vector<17x32xf32>
    %45 = vector.broadcast %6 : vector<1x32xf32> to vector<17x32xf32>
    %46 = arith.addf %44, %45 : vector<17x32xf32>
    %47 = arith.truncf %46 : vector<17x32xf32> to vector<17x32xbf16>
    %cst_22 = arith.constant dense<0.000000e+00> : vector<17x96xf32>
    %48 = tpu.matmul %47, %16, %cst_22 {dimension_numbers = #tpu.dot_dimension_numbers<[1], [0], [0], [1], [0, 0, 1, 1], [], []>} : vector<17x32xbf16>, vector<32x96xbf16>, vector<17x96xf32> -> vector<17x96xf32>
    %49 = vector.broadcast %7 : vector<1x96xf32> to vector<17x96xf32>
    %50 = arith.addf %48, %49 : vector<17x96xf32>
    %51 = vector.extract_strided_slice %50 {offsets = [0, 0], sizes = [17, 32], strides = [1, 1]} : vector<17x96xf32> to vector<17x32xf32>
    %cst_23 = arith.constant 0.353553385 : f32
    %52 = vector.broadcast %cst_23 : f32 to vector<17x32xf32>
    %53 = arith.mulf %51, %52 : vector<17x32xf32>
    %54 = vector.extract_strided_slice %50 {offsets = [0, 32], sizes = [17, 32], strides = [1, 1]} : vector<17x96xf32> to vector<17x32xf32>
    %55 = vector.extract_strided_slice %50 {offsets = [0, 64], sizes = [17, 32], strides = [1, 1]} : vector<17x96xf32> to vector<17x32xf32>
    %56 = vector.extract_strided_slice %53 {offsets = [0, 0], sizes = [17, 8], strides = [1, 1]} : vector<17x32xf32> to vector<17x8xf32>
    %57 = arith.truncf %56 : vector<17x8xf32> to vector<17x8xbf16>
    %58 = vector.extract_strided_slice %54 {offsets = [0, 0], sizes = [17, 8], strides = [1, 1]} : vector<17x32xf32> to vector<17x8xf32>
    %59 = arith.truncf %58 : vector<17x8xf32> to vector<17x8xbf16>
    %60 = vector.extract_strided_slice %55 {offsets = [0, 0], sizes = [17, 8], strides = [1, 1]} : vector<17x32xf32> to vector<17x8xf32>
    %61 = arith.truncf %60 : vector<17x8xf32> to vector<17x8xbf16>
    %cst_24 = arith.constant dense<0.000000e+00> : vector<17x17xf32>
    %62 = tpu.matmul %57, %59, %cst_24 {dimension_numbers = #tpu.dot_dimension_numbers<[1], [1], [0], [0], [0, 0, 1, 0], [], []>} : vector<17x8xbf16>, vector<17x8xbf16>, vector<17x17xf32> -> vector<17x17xf32>
    %cst_25 = arith.constant dense<0xFF800000> : vector<17xf32>
    %63 = vector.multi_reduction <maximumf>, %62, %cst_25 [1] : vector<17x17xf32> to vector<17xf32>
    %64 = vector.shape_cast %63 : vector<17xf32> to vector<17x1xf32>
    %65 = vector.broadcast %64 : vector<17x1xf32> to vector<17x17xf32>
    %66 = arith.subf %62, %65 : vector<17x17xf32>
    %67 = math.exp %66 : vector<17x17xf32>
    %cst_26 = arith.constant dense<0.000000e+00> : vector<17xf32>
    %68 = vector.multi_reduction <add>, %67, %cst_26 [1] : vector<17x17xf32> to vector<17xf32>
    %69 = vector.shape_cast %68 : vector<17xf32> to vector<17x1xf32>
    %70 = tpu.reciprocal %69 {approx = true} : vector<17x1xf32> -> vector<17x1xf32>
    %71 = vector.broadcast %70 : vector<17x1xf32> to vector<17x17xf32>
    %72 = arith.mulf %67, %71 : vector<17x17xf32>
    %73 = arith.truncf %72 : vector<17x17xf32> to vector<17x17xbf16>
    %cst_27 = arith.constant dense<0.000000e+00> : vector<17x8xf32>
    %74 = tpu.matmul %73, %61, %cst_27 {dimension_numbers = #tpu.dot_dimension_numbers<[1], [0], [0], [1], [0, 0, 1, 1], [], []>} : vector<17x17xbf16>, vector<17x8xbf16>, vector<17x8xf32> -> vector<17x8xf32>
    %75 = vector.extract_strided_slice %53 {offsets = [0, 8], sizes = [17, 8], strides = [1, 1]} : vector<17x32xf32> to vector<17x8xf32>
    %76 = arith.truncf %75 : vector<17x8xf32> to vector<17x8xbf16>
    %77 = vector.extract_strided_slice %54 {offsets = [0, 8], sizes = [17, 8], strides = [1, 1]} : vector<17x32xf32> to vector<17x8xf32>
    %78 = arith.truncf %77 : vector<17x8xf32> to vector<17x8xbf16>
    %79 = vector.extract_strided_slice %55 {offsets = [0, 8], sizes = [17, 8], strides = [1, 1]} : vector<17x32xf32> to vector<17x8xf32>
    %80 = arith.truncf %79 : vector<17x8xf32> to vector<17x8xbf16>
    %cst_28 = arith.constant dense<0.000000e+00> : vector<17x17xf32>
    %81 = tpu.matmul %76, %78, %cst_28 {dimension_numbers = #tpu.dot_dimension_numbers<[1], [1], [0], [0], [0, 0, 1, 0], [], []>} : vector<17x8xbf16>, vector<17x8xbf16>, vector<17x17xf32> -> vector<17x17xf32>
    %cst_29 = arith.constant dense<0xFF800000> : vector<17xf32>
    %82 = vector.multi_reduction <maximumf>, %81, %cst_29 [1] : vector<17x17xf32> to vector<17xf32>
    %83 = vector.shape_cast %82 : vector<17xf32> to vector<17x1xf32>
    %84 = vector.broadcast %83 : vector<17x1xf32> to vector<17x17xf32>
    %85 = arith.subf %81, %84 : vector<17x17xf32>
    %86 = math.exp %85 : vector<17x17xf32>
    %cst_30 = arith.constant dense<0.000000e+00> : vector<17xf32>
    %87 = vector.multi_reduction <add>, %86, %cst_30 [1] : vector<17x17xf32> to vector<17xf32>
    %88 = vector.shape_cast %87 : vector<17xf32> to vector<17x1xf32>
    %89 = tpu.reciprocal %88 {approx = true} : vector<17x1xf32> -> vector<17x1xf32>
    %90 = vector.broadcast %89 : vector<17x1xf32> to vector<17x17xf32>
    %91 = arith.mulf %86, %90 : vector<17x17xf32>
    %92 = arith.truncf %91 : vector<17x17xf32> to vector<17x17xbf16>
    %cst_31 = arith.constant dense<0.000000e+00> : vector<17x8xf32>
    %93 = tpu.matmul %92, %80, %cst_31 {dimension_numbers = #tpu.dot_dimension_numbers<[1], [0], [0], [1], [0, 0, 1, 1], [], []>} : vector<17x17xbf16>, vector<17x8xbf16>, vector<17x8xf32> -> vector<17x8xf32>
    %94 = vector.extract_strided_slice %53 {offsets = [0, 16], sizes = [17, 8], strides = [1, 1]} : vector<17x32xf32> to vector<17x8xf32>
    %95 = arith.truncf %94 : vector<17x8xf32> to vector<17x8xbf16>
    %96 = vector.extract_strided_slice %54 {offsets = [0, 16], sizes = [17, 8], strides = [1, 1]} : vector<17x32xf32> to vector<17x8xf32>
    %97 = arith.truncf %96 : vector<17x8xf32> to vector<17x8xbf16>
    %98 = vector.extract_strided_slice %55 {offsets = [0, 16], sizes = [17, 8], strides = [1, 1]} : vector<17x32xf32> to vector<17x8xf32>
    %99 = arith.truncf %98 : vector<17x8xf32> to vector<17x8xbf16>
    %cst_32 = arith.constant dense<0.000000e+00> : vector<17x17xf32>
    %100 = tpu.matmul %95, %97, %cst_32 {dimension_numbers = #tpu.dot_dimension_numbers<[1], [1], [0], [0], [0, 0, 1, 0], [], []>} : vector<17x8xbf16>, vector<17x8xbf16>, vector<17x17xf32> -> vector<17x17xf32>
    %cst_33 = arith.constant dense<0xFF800000> : vector<17xf32>
    %101 = vector.multi_reduction <maximumf>, %100, %cst_33 [1] : vector<17x17xf32> to vector<17xf32>
    %102 = vector.shape_cast %101 : vector<17xf32> to vector<17x1xf32>
    %103 = vector.broadcast %102 : vector<17x1xf32> to vector<17x17xf32>
    %104 = arith.subf %100, %103 : vector<17x17xf32>
    %105 = math.exp %104 : vector<17x17xf32>
    %cst_34 = arith.constant dense<0.000000e+00> : vector<17xf32>
    %106 = vector.multi_reduction <add>, %105, %cst_34 [1] : vector<17x17xf32> to vector<17xf32>
    %107 = vector.shape_cast %106 : vector<17xf32> to vector<17x1xf32>
    %108 = tpu.reciprocal %107 {approx = true} : vector<17x1xf32> -> vector<17x1xf32>
    %109 = vector.broadcast %108 : vector<17x1xf32> to vector<17x17xf32>
    %110 = arith.mulf %105, %109 : vector<17x17xf32>
    %111 = arith.truncf %110 : vector<17x17xf32> to vector<17x17xbf16>
    %cst_35 = arith.constant dense<0.000000e+00> : vector<17x8xf32>
    %112 = tpu.matmul %111, %99, %cst_35 {dimension_numbers = #tpu.dot_dimension_numbers<[1], [0], [0], [1], [0, 0, 1, 1], [], []>} : vector<17x17xbf16>, vector<17x8xbf16>, vector<17x8xf32> -> vector<17x8xf32>
    %113 = vector.extract_strided_slice %53 {offsets = [0, 24], sizes = [17, 8], strides = [1, 1]} : vector<17x32xf32> to vector<17x8xf32>
    %114 = arith.truncf %113 : vector<17x8xf32> to vector<17x8xbf16>
    %115 = vector.extract_strided_slice %54 {offsets = [0, 24], sizes = [17, 8], strides = [1, 1]} : vector<17x32xf32> to vector<17x8xf32>
    %116 = arith.truncf %115 : vector<17x8xf32> to vector<17x8xbf16>
    %117 = vector.extract_strided_slice %55 {offsets = [0, 24], sizes = [17, 8], strides = [1, 1]} : vector<17x32xf32> to vector<17x8xf32>
    %118 = arith.truncf %117 : vector<17x8xf32> to vector<17x8xbf16>
    %cst_36 = arith.constant dense<0.000000e+00> : vector<17x17xf32>
    %119 = tpu.matmul %114, %116, %cst_36 {dimension_numbers = #tpu.dot_dimension_numbers<[1], [1], [0], [0], [0, 0, 1, 0], [], []>} : vector<17x8xbf16>, vector<17x8xbf16>, vector<17x17xf32> -> vector<17x17xf32>
    %cst_37 = arith.constant dense<0xFF800000> : vector<17xf32>
    %120 = vector.multi_reduction <maximumf>, %119, %cst_37 [1] : vector<17x17xf32> to vector<17xf32>
    %121 = vector.shape_cast %120 : vector<17xf32> to vector<17x1xf32>
    %122 = vector.broadcast %121 : vector<17x1xf32> to vector<17x17xf32>
    %123 = arith.subf %119, %122 : vector<17x17xf32>
    %124 = math.exp %123 : vector<17x17xf32>
    %cst_38 = arith.constant dense<0.000000e+00> : vector<17xf32>
    %125 = vector.multi_reduction <add>, %124, %cst_38 [1] : vector<17x17xf32> to vector<17xf32>
    %126 = vector.shape_cast %125 : vector<17xf32> to vector<17x1xf32>
    %127 = tpu.reciprocal %126 {approx = true} : vector<17x1xf32> -> vector<17x1xf32>
    %128 = vector.broadcast %127 : vector<17x1xf32> to vector<17x17xf32>
    %129 = arith.mulf %124, %128 : vector<17x17xf32>
    %130 = arith.truncf %129 : vector<17x17xf32> to vector<17x17xbf16>
    %cst_39 = arith.constant dense<0.000000e+00> : vector<17x8xf32>
    %131 = tpu.matmul %130, %118, %cst_39 {dimension_numbers = #tpu.dot_dimension_numbers<[1], [0], [0], [1], [0, 0, 1, 1], [], []>} : vector<17x17xbf16>, vector<17x8xbf16>, vector<17x8xf32> -> vector<17x8xf32>
    %132 = tpu.concatenate %74, %93, %112, %131 in 1 : vector<17x8xf32>, vector<17x8xf32>, vector<17x8xf32>, vector<17x8xf32> -> vector<17x32xf32>
    %133 = arith.truncf %132 : vector<17x32xf32> to vector<17x32xbf16>
    %cst_40 = arith.constant dense<0.000000e+00> : vector<17x32xf32>
    %134 = tpu.matmul %133, %18, %cst_40 {dimension_numbers = #tpu.dot_dimension_numbers<[1], [0], [0], [1], [0, 0, 1, 1], [], []>} : vector<17x32xbf16>, vector<32x32xbf16>, vector<17x32xf32> -> vector<17x32xf32>
    %135 = vector.broadcast %8 : vector<1x32xf32> to vector<17x32xf32>
    %136 = arith.addf %134, %135 : vector<17x32xf32>
    %137 = vector.broadcast %9 : vector<1x32xf32> to vector<17x32xf32>
    %138 = arith.mulf %137, %136 : vector<17x32xf32>
    %139 = arith.addf %24, %138 : vector<17x32xf32>
    %cst_41 = arith.constant dense<0.000000e+00> : vector<17xf32>
    %140 = vector.multi_reduction <add>, %139, %cst_41 [1] : vector<17x32xf32> to vector<17xf32>
    %141 = vector.shape_cast %140 : vector<17xf32> to vector<17x1xf32>
    %cst_42 = arith.constant 3.200000e+01 : f32
    %142 = vector.broadcast %cst_42 : f32 to vector<17x1xf32>
    %143 = arith.divf %141, %142 : vector<17x1xf32>
    %144 = vector.broadcast %143 : vector<17x1xf32> to vector<17x32xf32>
    %145 = arith.subf %139, %144 : vector<17x32xf32>
    %146 = arith.mulf %145, %145 : vector<17x32xf32>
    %cst_43 = arith.constant dense<0.000000e+00> : vector<17xf32>
    %147 = vector.multi_reduction <add>, %146, %cst_43 [1] : vector<17x32xf32> to vector<17xf32>
    %148 = vector.shape_cast %147 : vector<17xf32> to vector<17x1xf32>
    %cst_44 = arith.constant 3.200000e+01 : f32
    %149 = vector.broadcast %cst_44 : f32 to vector<17x1xf32>
    %150 = arith.divf %148, %149 : vector<17x1xf32>
    %151 = vector.broadcast %143 : vector<17x1xf32> to vector<17x32xf32>
    %152 = arith.subf %139, %151 : vector<17x32xf32>
    %cst_45 = arith.constant 9.99999997E-7 : f32
    %153 = vector.broadcast %cst_45 : f32 to vector<17x1xf32>
    %154 = arith.addf %150, %153 : vector<17x1xf32>
    %155 = math.rsqrt %154 : vector<17x1xf32>
    %156 = vector.broadcast %155 : vector<17x1xf32> to vector<17x32xf32>
    %157 = arith.mulf %152, %156 : vector<17x32xf32>
    %158 = vector.broadcast %10 : vector<1x32xf32> to vector<17x32xf32>
    %159 = arith.mulf %157, %158 : vector<17x32xf32>
    %160 = vector.broadcast %11 : vector<1x32xf32> to vector<17x32xf32>
    %161 = arith.addf %159, %160 : vector<17x32xf32>
    %162 = arith.truncf %161 : vector<17x32xf32> to vector<17x32xbf16>
    %cst_46 = arith.constant dense<0.000000e+00> : vector<17x128xf32>
    %163 = tpu.matmul %162, %20, %cst_46 {dimension_numbers = #tpu.dot_dimension_numbers<[1], [0], [0], [1], [0, 0, 1, 1], [], []>} : vector<17x32xbf16>, vector<32x128xbf16>, vector<17x128xf32> -> vector<17x128xf32>
    %164 = vector.broadcast %12 : vector<1x128xf32> to vector<17x128xf32>
    %165 = arith.addf %163, %164 : vector<17x128xf32>
    %166 = arith.mulf %165, %165 : vector<17x128xf32>
    %167 = arith.mulf %165, %166 : vector<17x128xf32>
    %cst_47 = arith.constant 4.471500e-02 : f32
    %168 = vector.broadcast %cst_47 : f32 to vector<17x128xf32>
    %169 = arith.mulf %168, %167 : vector<17x128xf32>
    %170 = arith.addf %165, %169 : vector<17x128xf32>
    %cst_48 = arith.constant 0.797884583 : f32
    %171 = vector.broadcast %cst_48 : f32 to vector<17x128xf32>
    %172 = arith.mulf %171, %170 : vector<17x128xf32>
    %173 = math.tanh %172 : vector<17x128xf32>
    %cst_49 = arith.constant 1.000000e+00 : f32
    %174 = vector.broadcast %cst_49 : f32 to vector<17x128xf32>
    %175 = arith.addf %174, %173 : vector<17x128xf32>
    %cst_50 = arith.constant 5.000000e-01 : f32
    %176 = vector.broadcast %cst_50 : f32 to vector<17x128xf32>
    %177 = arith.mulf %176, %175 : vector<17x128xf32>
    %178 = arith.mulf %165, %177 : vector<17x128xf32>
    %179 = arith.truncf %178 : vector<17x128xf32> to vector<17x128xbf16>
    %cst_51 = arith.constant dense<0.000000e+00> : vector<17x32xf32>
    %180 = tpu.matmul %179, %22, %cst_51 {dimension_numbers = #tpu.dot_dimension_numbers<[1], [0], [0], [1], [0, 0, 1, 1], [], []>} : vector<17x128xbf16>, vector<128x32xbf16>, vector<17x32xf32> -> vector<17x32xf32>
    %181 = vector.broadcast %13 : vector<1x32xf32> to vector<17x32xf32>
    %182 = arith.addf %180, %181 : vector<17x32xf32>
    %183 = vector.broadcast %14 : vector<1x32xf32> to vector<17x32xf32>
    %184 = arith.mulf %183, %182 : vector<17x32xf32>
    %185 = arith.addf %139, %184 : vector<17x32xf32>
    %c0_52 = arith.constant 0 : index
    %c0_53 = arith.constant 0 : index
    %c0_54 = arith.constant 0 : index
    %186 = vector.load %arg8[%c0_52, %c0_53, %c0_54] : memref<2x17x32xf32, #tpu.memory_space<vmem>>, vector<1x17x32xf32>
    %187 = vector.shape_cast %186 : vector<1x17x32xf32> to vector<17x32xf32>
    %188 = vector.shape_cast %185 : vector<17x32xf32> to vector<1x17x32xf32>
    tpu.vector_store %arg8[%c0_52, %c0_53, %c0_54], %188 {strides = array<i32>} : memref<2x17x32xf32, #tpu.memory_space<vmem>>, vector<1x17x32xf32>,
    %c5_i32 = arith.constant 5 : i32
    %189 = arith.cmpi eq, %arg0, %c5_i32 : i32
    %190 = arith.extui %189 : i1 to i32
    %c0_i32_55 = arith.constant 0 : i32
    %191 = arith.cmpi ne, %190, %c0_i32_55 : i32
    scf.if %191 {
      %c0_107 = arith.constant 0 : index
      %c0_108 = arith.constant 0 : index
      %c0_109 = arith.constant 0 : index
      %c0_110 = arith.constant 0 : index
      %379 = vector.load %arg7[%c0_107, %c0_108, %c0_109, %c0_110] : memref<4x2x17x32xf32, #tpu.memory_space<vmem>>, vector<1x1x17x32xf32>
      %380 = vector.shape_cast %379 : vector<1x1x17x32xf32> to vector<17x32xf32>
      %381 = vector.shape_cast %185 : vector<17x32xf32> to vector<1x1x17x32xf32>
      tpu.vector_store %arg7[%c0_107, %c0_108, %c0_109, %c0_110], %381 {strides = array<i32>} : memref<4x2x17x32xf32, #tpu.memory_space<vmem>>, vector<1x1x17x32xf32>,
    } else {
    }
    %c11_i32 = arith.constant 11 : i32
    %192 = arith.cmpi eq, %arg0, %c11_i32 : i32
    %193 = arith.extui %192 : i1 to i32
    %c0_i32_56 = arith.constant 0 : i32
    %194 = arith.cmpi ne, %193, %c0_i32_56 : i32
    scf.if %194 {
      %c1_107 = arith.constant 1 : index
      %c0_108 = arith.constant 0 : index
      %c0_109 = arith.constant 0 : index
      %c0_110 = arith.constant 0 : index
      %379 = vector.load %arg7[%c1_107, %c0_108, %c0_109, %c0_110] : memref<4x2x17x32xf32, #tpu.memory_space<vmem>>, vector<1x1x17x32xf32>
      %380 = vector.shape_cast %379 : vector<1x1x17x32xf32> to vector<17x32xf32>
      %381 = vector.shape_cast %185 : vector<17x32xf32> to vector<1x1x17x32xf32>
      tpu.vector_store %arg7[%c1_107, %c0_108, %c0_109, %c0_110], %381 {strides = array<i32>} : memref<4x2x17x32xf32, #tpu.memory_space<vmem>>, vector<1x1x17x32xf32>,
    } else {
    }
    %c17_i32 = arith.constant 17 : i32
    %195 = arith.cmpi eq, %arg0, %c17_i32 : i32
    %196 = arith.extui %195 : i1 to i32
    %c0_i32_57 = arith.constant 0 : i32
    %197 = arith.cmpi ne, %196, %c0_i32_57 : i32
    scf.if %197 {
      %c2 = arith.constant 2 : index
      %c0_107 = arith.constant 0 : index
      %c0_108 = arith.constant 0 : index
      %c0_109 = arith.constant 0 : index
      %379 = vector.load %arg7[%c2, %c0_107, %c0_108, %c0_109] : memref<4x2x17x32xf32, #tpu.memory_space<vmem>>, vector<1x1x17x32xf32>
      %380 = vector.shape_cast %379 : vector<1x1x17x32xf32> to vector<17x32xf32>
      %381 = vector.shape_cast %185 : vector<17x32xf32> to vector<1x1x17x32xf32>
      tpu.vector_store %arg7[%c2, %c0_107, %c0_108, %c0_109], %381 {strides = array<i32>} : memref<4x2x17x32xf32, #tpu.memory_space<vmem>>, vector<1x1x17x32xf32>,
    } else {
    }
    %c23_i32 = arith.constant 23 : i32
    %198 = arith.cmpi eq, %arg0, %c23_i32 : i32
    %199 = arith.extui %198 : i1 to i32
    %c0_i32_58 = arith.constant 0 : i32
    %200 = arith.cmpi ne, %199, %c0_i32_58 : i32
    scf.if %200 {
      %c3 = arith.constant 3 : index
      %c0_107 = arith.constant 0 : index
      %c0_108 = arith.constant 0 : index
      %c0_109 = arith.constant 0 : index
      %379 = vector.load %arg7[%c3, %c0_107, %c0_108, %c0_109] : memref<4x2x17x32xf32, #tpu.memory_space<vmem>>, vector<1x1x17x32xf32>
      %380 = vector.shape_cast %379 : vector<1x1x17x32xf32> to vector<17x32xf32>
      %381 = vector.shape_cast %185 : vector<17x32xf32> to vector<1x1x17x32xf32>
      tpu.vector_store %arg7[%c3, %c0_107, %c0_108, %c0_109], %381 {strides = array<i32>} : memref<4x2x17x32xf32, #tpu.memory_space<vmem>>, vector<1x1x17x32xf32>,
    } else {
    }
    %c1 = arith.constant 1 : index
    %c0_59 = arith.constant 0 : index
    %c0_60 = arith.constant 0 : index
    %201 = vector.load %arg8[%c1, %c0_59, %c0_60] : memref<2x17x32xf32, #tpu.memory_space<vmem>>, vector<1x17x32xf32>
    %202 = vector.shape_cast %201 : vector<1x17x32xf32> to vector<17x32xf32>
    %cst_61 = arith.constant dense<0.000000e+00> : vector<17xf32>
    %203 = vector.multi_reduction <add>, %202, %cst_61 [1] : vector<17x32xf32> to vector<17xf32>
    %204 = vector.shape_cast %203 : vector<17xf32> to vector<17x1xf32>
    %cst_62 = arith.constant 3.200000e+01 : f32
    %205 = vector.broadcast %cst_62 : f32 to vector<17x1xf32>
    %206 = arith.divf %204, %205 : vector<17x1xf32>
    %207 = vector.broadcast %206 : vector<17x1xf32> to vector<17x32xf32>
    %208 = arith.subf %202, %207 : vector<17x32xf32>
    %209 = arith.mulf %208, %208 : vector<17x32xf32>
    %cst_63 = arith.constant dense<0.000000e+00> : vector<17xf32>
    %210 = vector.multi_reduction <add>, %209, %cst_63 [1] : vector<17x32xf32> to vector<17xf32>
    %211 = vector.shape_cast %210 : vector<17xf32> to vector<17x1xf32>
    %cst_64 = arith.constant 3.200000e+01 : f32
    %212 = vector.broadcast %cst_64 : f32 to vector<17x1xf32>
    %213 = arith.divf %211, %212 : vector<17x1xf32>
    %214 = vector.broadcast %206 : vector<17x1xf32> to vector<17x32xf32>
    %215 = arith.subf %202, %214 : vector<17x32xf32>
    %cst_65 = arith.constant 9.99999997E-7 : f32
    %216 = vector.broadcast %cst_65 : f32 to vector<17x1xf32>
    %217 = arith.addf %213, %216 : vector<17x1xf32>
    %218 = math.rsqrt %217 : vector<17x1xf32>
    %219 = vector.broadcast %218 : vector<17x1xf32> to vector<17x32xf32>
    %220 = arith.mulf %215, %219 : vector<17x32xf32>
    %221 = vector.broadcast %5 : vector<1x32xf32> to vector<17x32xf32>
    %222 = arith.mulf %220, %221 : vector<17x32xf32>
    %223 = vector.broadcast %6 : vector<1x32xf32> to vector<17x32xf32>
    %224 = arith.addf %222, %223 : vector<17x32xf32>
    %225 = arith.truncf %224 : vector<17x32xf32> to vector<17x32xbf16>
    %cst_66 = arith.constant dense<0.000000e+00> : vector<17x96xf32>
    %226 = tpu.matmul %225, %16, %cst_66 {dimension_numbers = #tpu.dot_dimension_numbers<[1], [0], [0], [1], [0, 0, 1, 1], [], []>} : vector<17x32xbf16>, vector<32x96xbf16>, vector<17x96xf32> -> vector<17x96xf32>
    %227 = vector.broadcast %7 : vector<1x96xf32> to vector<17x96xf32>
    %228 = arith.addf %226, %227 : vector<17x96xf32>
    %229 = vector.extract_strided_slice %228 {offsets = [0, 0], sizes = [17, 32], strides = [1, 1]} : vector<17x96xf32> to vector<17x32xf32>
    %cst_67 = arith.constant 0.353553385 : f32
    %230 = vector.broadcast %cst_67 : f32 to vector<17x32xf32>
    %231 = arith.mulf %229, %230 : vector<17x32xf32>
    %232 = vector.extract_strided_slice %228 {offsets = [0, 32], sizes = [17, 32], strides = [1, 1]} : vector<17x96xf32> to vector<17x32xf32>
    %233 = vector.extract_strided_slice %228 {offsets = [0, 64], sizes = [17, 32], strides = [1, 1]} : vector<17x96xf32> to vector<17x32xf32>
    %234 = vector.extract_strided_slice %231 {offsets = [0, 0], sizes = [17, 8], strides = [1, 1]} : vector<17x32xf32> to vector<17x8xf32>
    %235 = arith.truncf %234 : vector<17x8xf32> to vector<17x8xbf16>
    %236 = vector.extract_strided_slice %232 {offsets = [0, 0], sizes = [17, 8], strides = [1, 1]} : vector<17x32xf32> to vector<17x8xf32>
    %237 = arith.truncf %236 : vector<17x8xf32> to vector<17x8xbf16>
    %238 = vector.extract_strided_slice %233 {offsets = [0, 0], sizes = [17, 8], strides = [1, 1]} : vector<17x32xf32> to vector<17x8xf32>
    %239 = arith.truncf %238 : vector<17x8xf32> to vector<17x8xbf16>
    %cst_68 = arith.constant dense<0.000000e+00> : vector<17x17xf32>
    %240 = tpu.matmul %235, %237, %cst_68 {dimension_numbers = #tpu.dot_dimension_numbers<[1], [1], [0], [0], [0, 0, 1, 0], [], []>} : vector<17x8xbf16>, vector<17x8xbf16>, vector<17x17xf32> -> vector<17x17xf32>
    %cst_69 = arith.constant dense<0xFF800000> : vector<17xf32>
    %241 = vector.multi_reduction <maximumf>, %240, %cst_69 [1] : vector<17x17xf32> to vector<17xf32>
    %242 = vector.shape_cast %241 : vector<17xf32> to vector<17x1xf32>
    %243 = vector.broadcast %242 : vector<17x1xf32> to vector<17x17xf32>
    %244 = arith.subf %240, %243 : vector<17x17xf32>
    %245 = math.exp %244 : vector<17x17xf32>
    %cst_70 = arith.constant dense<0.000000e+00> : vector<17xf32>
    %246 = vector.multi_reduction <add>, %245, %cst_70 [1] : vector<17x17xf32> to vector<17xf32>
    %247 = vector.shape_cast %246 : vector<17xf32> to vector<17x1xf32>
    %248 = tpu.reciprocal %247 {approx = true} : vector<17x1xf32> -> vector<17x1xf32>
    %249 = vector.broadcast %248 : vector<17x1xf32> to vector<17x17xf32>
    %250 = arith.mulf %245, %249 : vector<17x17xf32>
    %251 = arith.truncf %250 : vector<17x17xf32> to vector<17x17xbf16>
    %cst_71 = arith.constant dense<0.000000e+00> : vector<17x8xf32>
    %252 = tpu.matmul %251, %239, %cst_71 {dimension_numbers = #tpu.dot_dimension_numbers<[1], [0], [0], [1], [0, 0, 1, 1], [], []>} : vector<17x17xbf16>, vector<17x8xbf16>, vector<17x8xf32> -> vector<17x8xf32>
    %253 = vector.extract_strided_slice %231 {offsets = [0, 8], sizes = [17, 8], strides = [1, 1]} : vector<17x32xf32> to vector<17x8xf32>
    %254 = arith.truncf %253 : vector<17x8xf32> to vector<17x8xbf16>
    %255 = vector.extract_strided_slice %232 {offsets = [0, 8], sizes = [17, 8], strides = [1, 1]} : vector<17x32xf32> to vector<17x8xf32>
    %256 = arith.truncf %255 : vector<17x8xf32> to vector<17x8xbf16>
    %257 = vector.extract_strided_slice %233 {offsets = [0, 8], sizes = [17, 8], strides = [1, 1]} : vector<17x32xf32> to vector<17x8xf32>
    %258 = arith.truncf %257 : vector<17x8xf32> to vector<17x8xbf16>
    %cst_72 = arith.constant dense<0.000000e+00> : vector<17x17xf32>
    %259 = tpu.matmul %254, %256, %cst_72 {dimension_numbers = #tpu.dot_dimension_numbers<[1], [1], [0], [0], [0, 0, 1, 0], [], []>} : vector<17x8xbf16>, vector<17x8xbf16>, vector<17x17xf32> -> vector<17x17xf32>
    %cst_73 = arith.constant dense<0xFF800000> : vector<17xf32>
    %260 = vector.multi_reduction <maximumf>, %259, %cst_73 [1] : vector<17x17xf32> to vector<17xf32>
    %261 = vector.shape_cast %260 : vector<17xf32> to vector<17x1xf32>
    %262 = vector.broadcast %261 : vector<17x1xf32> to vector<17x17xf32>
    %263 = arith.subf %259, %262 : vector<17x17xf32>
    %264 = math.exp %263 : vector<17x17xf32>
    %cst_74 = arith.constant dense<0.000000e+00> : vector<17xf32>
    %265 = vector.multi_reduction <add>, %264, %cst_74 [1] : vector<17x17xf32> to vector<17xf32>
    %266 = vector.shape_cast %265 : vector<17xf32> to vector<17x1xf32>
    %267 = tpu.reciprocal %266 {approx = true} : vector<17x1xf32> -> vector<17x1xf32>
    %268 = vector.broadcast %267 : vector<17x1xf32> to vector<17x17xf32>
    %269 = arith.mulf %264, %268 : vector<17x17xf32>
    %270 = arith.truncf %269 : vector<17x17xf32> to vector<17x17xbf16>
    %cst_75 = arith.constant dense<0.000000e+00> : vector<17x8xf32>
    %271 = tpu.matmul %270, %258, %cst_75 {dimension_numbers = #tpu.dot_dimension_numbers<[1], [0], [0], [1], [0, 0, 1, 1], [], []>} : vector<17x17xbf16>, vector<17x8xbf16>, vector<17x8xf32> -> vector<17x8xf32>
    %272 = vector.extract_strided_slice %231 {offsets = [0, 16], sizes = [17, 8], strides = [1, 1]} : vector<17x32xf32> to vector<17x8xf32>
    %273 = arith.truncf %272 : vector<17x8xf32> to vector<17x8xbf16>
    %274 = vector.extract_strided_slice %232 {offsets = [0, 16], sizes = [17, 8], strides = [1, 1]} : vector<17x32xf32> to vector<17x8xf32>
    %275 = arith.truncf %274 : vector<17x8xf32> to vector<17x8xbf16>
    %276 = vector.extract_strided_slice %233 {offsets = [0, 16], sizes = [17, 8], strides = [1, 1]} : vector<17x32xf32> to vector<17x8xf32>
    %277 = arith.truncf %276 : vector<17x8xf32> to vector<17x8xbf16>
    %cst_76 = arith.constant dense<0.000000e+00> : vector<17x17xf32>
    %278 = tpu.matmul %273, %275, %cst_76 {dimension_numbers = #tpu.dot_dimension_numbers<[1], [1], [0], [0], [0, 0, 1, 0], [], []>} : vector<17x8xbf16>, vector<17x8xbf16>, vector<17x17xf32> -> vector<17x17xf32>
    %cst_77 = arith.constant dense<0xFF800000> : vector<17xf32>
    %279 = vector.multi_reduction <maximumf>, %278, %cst_77 [1] : vector<17x17xf32> to vector<17xf32>
    %280 = vector.shape_cast %279 : vector<17xf32> to vector<17x1xf32>
    %281 = vector.broadcast %280 : vector<17x1xf32> to vector<17x17xf32>
    %282 = arith.subf %278, %281 : vector<17x17xf32>
    %283 = math.exp %282 : vector<17x17xf32>
    %cst_78 = arith.constant dense<0.000000e+00> : vector<17xf32>
    %284 = vector.multi_reduction <add>, %283, %cst_78 [1] : vector<17x17xf32> to vector<17xf32>
    %285 = vector.shape_cast %284 : vector<17xf32> to vector<17x1xf32>
    %286 = tpu.reciprocal %285 {approx = true} : vector<17x1xf32> -> vector<17x1xf32>
    %287 = vector.broadcast %286 : vector<17x1xf32> to vector<17x17xf32>
    %288 = arith.mulf %283, %287 : vector<17x17xf32>
    %289 = arith.truncf %288 : vector<17x17xf32> to vector<17x17xbf16>
    %cst_79 = arith.constant dense<0.000000e+00> : vector<17x8xf32>
    %290 = tpu.matmul %289, %277, %cst_79 {dimension_numbers = #tpu.dot_dimension_numbers<[1], [0], [0], [1], [0, 0, 1, 1], [], []>} : vector<17x17xbf16>, vector<17x8xbf16>, vector<17x8xf32> -> vector<17x8xf32>
    %291 = vector.extract_strided_slice %231 {offsets = [0, 24], sizes = [17, 8], strides = [1, 1]} : vector<17x32xf32> to vector<17x8xf32>
    %292 = arith.truncf %291 : vector<17x8xf32> to vector<17x8xbf16>
    %293 = vector.extract_strided_slice %232 {offsets = [0, 24], sizes = [17, 8], strides = [1, 1]} : vector<17x32xf32> to vector<17x8xf32>
    %294 = arith.truncf %293 : vector<17x8xf32> to vector<17x8xbf16>
    %295 = vector.extract_strided_slice %233 {offsets = [0, 24], sizes = [17, 8], strides = [1, 1]} : vector<17x32xf32> to vector<17x8xf32>
    %296 = arith.truncf %295 : vector<17x8xf32> to vector<17x8xbf16>
    %cst_80 = arith.constant dense<0.000000e+00> : vector<17x17xf32>
    %297 = tpu.matmul %292, %294, %cst_80 {dimension_numbers = #tpu.dot_dimension_numbers<[1], [1], [0], [0], [0, 0, 1, 0], [], []>} : vector<17x8xbf16>, vector<17x8xbf16>, vector<17x17xf32> -> vector<17x17xf32>
    %cst_81 = arith.constant dense<0xFF800000> : vector<17xf32>
    %298 = vector.multi_reduction <maximumf>, %297, %cst_81 [1] : vector<17x17xf32> to vector<17xf32>
    %299 = vector.shape_cast %298 : vector<17xf32> to vector<17x1xf32>
    %300 = vector.broadcast %299 : vector<17x1xf32> to vector<17x17xf32>
    %301 = arith.subf %297, %300 : vector<17x17xf32>
    %302 = math.exp %301 : vector<17x17xf32>
    %cst_82 = arith.constant dense<0.000000e+00> : vector<17xf32>
    %303 = vector.multi_reduction <add>, %302, %cst_82 [1] : vector<17x17xf32> to vector<17xf32>
    %304 = vector.shape_cast %303 : vector<17xf32> to vector<17x1xf32>
    %305 = tpu.reciprocal %304 {approx = true} : vector<17x1xf32> -> vector<17x1xf32>
    %306 = vector.broadcast %305 : vector<17x1xf32> to vector<17x17xf32>
    %307 = arith.mulf %302, %306 : vector<17x17xf32>
    %308 = arith.truncf %307 : vector<17x17xf32> to vector<17x17xbf16>
    %cst_83 = arith.constant dense<0.000000e+00> : vector<17x8xf32>
    %309 = tpu.matmul %308, %296, %cst_83 {dimension_numbers = #tpu.dot_dimension_numbers<[1], [0], [0], [1], [0, 0, 1, 1], [], []>} : vector<17x17xbf16>, vector<17x8xbf16>, vector<17x8xf32> -> vector<17x8xf32>
    %310 = tpu.concatenate %252, %271, %290, %309 in 1 : vector<17x8xf32>, vector<17x8xf32>, vector<17x8xf32>, vector<17x8xf32> -> vector<17x32xf32>
    %311 = arith.truncf %310 : vector<17x32xf32> to vector<17x32xbf16>
    %cst_84 = arith.constant dense<0.000000e+00> : vector<17x32xf32>
    %312 = tpu.matmul %311, %18, %cst_84 {dimension_numbers = #tpu.dot_dimension_numbers<[1], [0], [0], [1], [0, 0, 1, 1], [], []>} : vector<17x32xbf16>, vector<32x32xbf16>, vector<17x32xf32> -> vector<17x32xf32>
    %313 = vector.broadcast %8 : vector<1x32xf32> to vector<17x32xf32>
    %314 = arith.addf %312, %313 : vector<17x32xf32>
    %315 = vector.broadcast %9 : vector<1x32xf32> to vector<17x32xf32>
    %316 = arith.mulf %315, %314 : vector<17x32xf32>
    %317 = arith.addf %202, %316 : vector<17x32xf32>
    %cst_85 = arith.constant dense<0.000000e+00> : vector<17xf32>
    %318 = vector.multi_reduction <add>, %317, %cst_85 [1] : vector<17x32xf32> to vector<17xf32>
    %319 = vector.shape_cast %318 : vector<17xf32> to vector<17x1xf32>
    %cst_86 = arith.constant 3.200000e+01 : f32
    %320 = vector.broadcast %cst_86 : f32 to vector<17x1xf32>
    %321 = arith.divf %319, %320 : vector<17x1xf32>
    %322 = vector.broadcast %321 : vector<17x1xf32> to vector<17x32xf32>
    %323 = arith.subf %317, %322 : vector<17x32xf32>
    %324 = arith.mulf %323, %323 : vector<17x32xf32>
    %cst_87 = arith.constant dense<0.000000e+00> : vector<17xf32>
    %325 = vector.multi_reduction <add>, %324, %cst_87 [1] : vector<17x32xf32> to vector<17xf32>
    %326 = vector.shape_cast %325 : vector<17xf32> to vector<17x1xf32>
    %cst_88 = arith.constant 3.200000e+01 : f32
    %327 = vector.broadcast %cst_88 : f32 to vector<17x1xf32>
    %328 = arith.divf %326, %327 : vector<17x1xf32>
    %329 = vector.broadcast %321 : vector<17x1xf32> to vector<17x32xf32>
    %330 = arith.subf %317, %329 : vector<17x32xf32>
    %cst_89 = arith.constant 9.99999997E-7 : f32
    %331 = vector.broadcast %cst_89 : f32 to vector<17x1xf32>
    %332 = arith.addf %328, %331 : vector<17x1xf32>
    %333 = math.rsqrt %332 : vector<17x1xf32>
    %334 = vector.broadcast %333 : vector<17x1xf32> to vector<17x32xf32>
    %335 = arith.mulf %330, %334 : vector<17x32xf32>
    %336 = vector.broadcast %10 : vector<1x32xf32> to vector<17x32xf32>
    %337 = arith.mulf %335, %336 : vector<17x32xf32>
    %338 = vector.broadcast %11 : vector<1x32xf32> to vector<17x32xf32>
    %339 = arith.addf %337, %338 : vector<17x32xf32>
    %340 = arith.truncf %339 : vector<17x32xf32> to vector<17x32xbf16>
    %cst_90 = arith.constant dense<0.000000e+00> : vector<17x128xf32>
    %341 = tpu.matmul %340, %20, %cst_90 {dimension_numbers = #tpu.dot_dimension_numbers<[1], [0], [0], [1], [0, 0, 1, 1], [], []>} : vector<17x32xbf16>, vector<32x128xbf16>, vector<17x128xf32> -> vector<17x128xf32>
    %342 = vector.broadcast %12 : vector<1x128xf32> to vector<17x128xf32>
    %343 = arith.addf %341, %342 : vector<17x128xf32>
    %344 = arith.mulf %343, %343 : vector<17x128xf32>
    %345 = arith.mulf %343, %344 : vector<17x128xf32>
    %cst_91 = arith.constant 4.471500e-02 : f32
    %346 = vector.broadcast %cst_91 : f32 to vector<17x128xf32>
    %347 = arith.mulf %346, %345 : vector<17x128xf32>
    %348 = arith.addf %343, %347 : vector<17x128xf32>
    %cst_92 = arith.constant 0.797884583 : f32
    %349 = vector.broadcast %cst_92 : f32 to vector<17x128xf32>
    %350 = arith.mulf %349, %348 : vector<17x128xf32>
    %351 = math.tanh %350 : vector<17x128xf32>
    %cst_93 = arith.constant 1.000000e+00 : f32
    %352 = vector.broadcast %cst_93 : f32 to vector<17x128xf32>
    %353 = arith.addf %352, %351 : vector<17x128xf32>
    %cst_94 = arith.constant 5.000000e-01 : f32
    %354 = vector.broadcast %cst_94 : f32 to vector<17x128xf32>
    %355 = arith.mulf %354, %353 : vector<17x128xf32>
    %356 = arith.mulf %343, %355 : vector<17x128xf32>
    %357 = arith.truncf %356 : vector<17x128xf32> to vector<17x128xbf16>
    %cst_95 = arith.constant dense<0.000000e+00> : vector<17x32xf32>
    %358 = tpu.matmul %357, %22, %cst_95 {dimension_numbers = #tpu.dot_dimension_numbers<[1], [0], [0], [1], [0, 0, 1, 1], [], []>} : vector<17x128xbf16>, vector<128x32xbf16>, vector<17x32xf32> -> vector<17x32xf32>
    %359 = vector.broadcast %13 : vector<1x32xf32> to vector<17x32xf32>
    %360 = arith.addf %358, %359 : vector<17x32xf32>
    %361 = vector.broadcast %14 : vector<1x32xf32> to vector<17x32xf32>
    %362 = arith.mulf %361, %360 : vector<17x32xf32>
    %363 = arith.addf %317, %362 : vector<17x32xf32>
    %c1_96 = arith.constant 1 : index
    %c0_97 = arith.constant 0 : index
    %c0_98 = arith.constant 0 : index
    %364 = vector.load %arg8[%c1_96, %c0_97, %c0_98] : memref<2x17x32xf32, #tpu.memory_space<vmem>>, vector<1x17x32xf32>
    %365 = vector.shape_cast %364 : vector<1x17x32xf32> to vector<17x32xf32>
    %366 = vector.shape_cast %363 : vector<17x32xf32> to vector<1x17x32xf32>
    tpu.vector_store %arg8[%c1_96, %c0_97, %c0_98], %366 {strides = array<i32>} : memref<2x17x32xf32, #tpu.memory_space<vmem>>, vector<1x17x32xf32>,
    %c5_i32_99 = arith.constant 5 : i32
    %367 = arith.cmpi eq, %arg0, %c5_i32_99 : i32
    %368 = arith.extui %367 : i1 to i32
    %c0_i32_100 = arith.constant 0 : i32
    %369 = arith.cmpi ne, %368, %c0_i32_100 : i32
    scf.if %369 {
      %c0_107 = arith.constant 0 : index
      %c1_108 = arith.constant 1 : index
      %c0_109 = arith.constant 0 : index
      %c0_110 = arith.constant 0 : index
      %379 = vector.load %arg7[%c0_107, %c1_108, %c0_109, %c0_110] : memref<4x2x17x32xf32, #tpu.memory_space<vmem>>, vector<1x1x17x32xf32>
      %380 = vector.shape_cast %379 : vector<1x1x17x32xf32> to vector<17x32xf32>
      %381 = vector.shape_cast %363 : vector<17x32xf32> to vector<1x1x17x32xf32>
      tpu.vector_store %arg7[%c0_107, %c1_108, %c0_109, %c0_110], %381 {strides = array<i32>} : memref<4x2x17x32xf32, #tpu.memory_space<vmem>>, vector<1x1x17x32xf32>,
    } else {
    }
    %c11_i32_101 = arith.constant 11 : i32
    %370 = arith.cmpi eq, %arg0, %c11_i32_101 : i32
    %371 = arith.extui %370 : i1 to i32
    %c0_i32_102 = arith.constant 0 : i32
    %372 = arith.cmpi ne, %371, %c0_i32_102 : i32
    scf.if %372 {
      %c1_107 = arith.constant 1 : index
      %c1_108 = arith.constant 1 : index
      %c0_109 = arith.constant 0 : index
      %c0_110 = arith.constant 0 : index
      %379 = vector.load %arg7[%c1_107, %c1_108, %c0_109, %c0_110] : memref<4x2x17x32xf32, #tpu.memory_space<vmem>>, vector<1x1x17x32xf32>
      %380 = vector.shape_cast %379 : vector<1x1x17x32xf32> to vector<17x32xf32>
      %381 = vector.shape_cast %363 : vector<17x32xf32> to vector<1x1x17x32xf32>
      tpu.vector_store %arg7[%c1_107, %c1_108, %c0_109, %c0_110], %381 {strides = array<i32>} : memref<4x2x17x32xf32, #tpu.memory_space<vmem>>, vector<1x1x17x32xf32>,
    } else {
    }
    %c17_i32_103 = arith.constant 17 : i32
    %373 = arith.cmpi eq, %arg0, %c17_i32_103 : i32
    %374 = arith.extui %373 : i1 to i32
    %c0_i32_104 = arith.constant 0 : i32
    %375 = arith.cmpi ne, %374, %c0_i32_104 : i32
    scf.if %375 {
      %c2 = arith.constant 2 : index
      %c1_107 = arith.constant 1 : index
      %c0_108 = arith.constant 0 : index
      %c0_109 = arith.constant 0 : index
      %379 = vector.load %arg7[%c2, %c1_107, %c0_108, %c0_109] : memref<4x2x17x32xf32, #tpu.memory_space<vmem>>, vector<1x1x17x32xf32>
      %380 = vector.shape_cast %379 : vector<1x1x17x32xf32> to vector<17x32xf32>
      %381 = vector.shape_cast %363 : vector<17x32xf32> to vector<1x1x17x32xf32>
      tpu.vector_store %arg7[%c2, %c1_107, %c0_108, %c0_109], %381 {strides = array<i32>} : memref<4x2x17x32xf32, #tpu.memory_space<vmem>>, vector<1x1x17x32xf32>,
    } else {
    }
    %c23_i32_105 = arith.constant 23 : i32
    %376 = arith.cmpi eq, %arg0, %c23_i32_105 : i32
    %377 = arith.extui %376 : i1 to i32
    %c0_i32_106 = arith.constant 0 : i32
    %378 = arith.cmpi ne, %377, %c0_i32_106 : i32
    scf.if %378 {
      %c3 = arith.constant 3 : index
      %c1_107 = arith.constant 1 : index
      %c0_108 = arith.constant 0 : index
      %c0_109 = arith.constant 0 : index
      %379 = vector.load %arg7[%c3, %c1_107, %c0_108, %c0_109] : memref<4x2x17x32xf32, #tpu.memory_space<vmem>>, vector<1x1x17x32xf32>
      %380 = vector.shape_cast %379 : vector<1x1x17x32xf32> to vector<17x32xf32>
      %381 = vector.shape_cast %363 : vector<17x32xf32> to vector<1x1x17x32xf32>
      tpu.vector_store %arg7[%c3, %c1_107, %c0_108, %c0_109], %381 {strides = array<i32>} : memref<4x2x17x32xf32, #tpu.memory_space<vmem>>, vector<1x1x17x32xf32>,
    } else {
    }
    return
  }
  func.func @transform_0(%arg0: i32) -> (i32, i32, i32) {
    %c0_i32 = arith.constant 0 : i32
    %c0_i32_0 = arith.constant 0 : i32
    %c0_i32_1 = arith.constant 0 : i32
    %c0_i32_2 = arith.constant 0 : i32
    return %c0_i32, %c0_i32_0, %c0_i32_1 : i32, i32, i32
  }
  func.func @transform_1(%arg0: i32) -> (i32, i32, i32) {
    %c0_i32 = arith.constant 0 : i32
    %c0_i32_0 = arith.constant 0 : i32
    %c0_i32_1 = arith.constant 0 : i32
    return %arg0, %c0_i32, %c0_i32_0 : i32, i32, i32
  }
  func.func @transform_2(%arg0: i32) -> (i32, i32, i32) {
    %c0_i32 = arith.constant 0 : i32
    %c0_i32_0 = arith.constant 0 : i32
    %c0_i32_1 = arith.constant 0 : i32
    return %arg0, %c0_i32, %c0_i32_0 : i32, i32, i32
  }
  func.func @transform_3(%arg0: i32) -> (i32, i32, i32) {
    %c0_i32 = arith.constant 0 : i32
    %c0_i32_0 = arith.constant 0 : i32
    %c0_i32_1 = arith.constant 0 : i32
    return %arg0, %c0_i32, %c0_i32_0 : i32, i32, i32
  }
  func.func @transform_4(%arg0: i32) -> (i32, i32, i32) {
    %c0_i32 = arith.constant 0 : i32
    %c0_i32_0 = arith.constant 0 : i32
    %c0_i32_1 = arith.constant 0 : i32
    return %arg0, %c0_i32, %c0_i32_0 : i32, i32, i32
  }
  func.func @transform_5(%arg0: i32) -> (i32, i32, i32) {
    %c0_i32 = arith.constant 0 : i32
    %c0_i32_0 = arith.constant 0 : i32
    %c0_i32_1 = arith.constant 0 : i32
    return %arg0, %c0_i32, %c0_i32_0 : i32, i32, i32
  }
  func.func @transform_6(%arg0: i32) -> (i32, i32, i32, i32) {
    %c0_i32 = arith.constant 0 : i32
    %c0_i32_0 = arith.constant 0 : i32
    %c0_i32_1 = arith.constant 0 : i32
    %c0_i32_2 = arith.constant 0 : i32
    %c0_i32_3 = arith.constant 0 : i32
    return %c0_i32, %c0_i32_0, %c0_i32_1, %c0_i32_2 : i32, i32, i32, i32
  }
}

module attributes {stable_mosaic.version = 11 : i64} {
  func.func @_decoder_head_kernel(%arg0: i32, %arg1: memref<4x32x32xf32, #tpu.memory_space<vmem>>, %arg2: memref<4x32x64xbf16, #tpu.memory_space<vmem>>, %arg3: memref<4x1x64xf32, #tpu.memory_space<vmem>>, %arg4: memref<4x1x64xf32, #tpu.memory_space<vmem>>, %arg5: memref<4x1x64xf32, #tpu.memory_space<vmem>>, %arg6: memref<256x16xf32, #tpu.memory_space<vmem>>, %arg7: memref<3x256x1xf32, #tpu.memory_space<vmem>>, %arg8: memref<3x3x64x32xbf16, #tpu.memory_space<vmem>>, %arg9: memref<1x32xf32, #tpu.memory_space<vmem>>, %arg10: memref<3x3x32x32xbf16, #tpu.memory_space<vmem>>, %arg11: memref<1x32xf32, #tpu.memory_space<vmem>>, %arg12: memref<1x32xf32, #tpu.memory_space<vmem>>, %arg13: memref<1x1xf32, #tpu.memory_space<vmem>>, %arg14: memref<1x1x256xf32, #tpu.memory_space<vmem>>, %arg15: memref<304x64xf32, #tpu.memory_space<vmem>>) attributes {dimension_semantics = [#tpu.dimension_semantics<parallel>], iteration_bounds = array<i64: 2>, scalar_prefetch = 0 : i64, scratch_operands = 1 : i64, tpu.core_type = #tpu.core_type<tc>, window_params = [{pipeline_mode = #tpu.pipeline_mode<synchronous>, transform_indices = @transform_0, window_bounds = array<i64: 4, 32, 32>}, {pipeline_mode = #tpu.pipeline_mode<synchronous>, transform_indices = @transform_1, window_bounds = array<i64: 4, 32, 64>}, {pipeline_mode = #tpu.pipeline_mode<synchronous>, transform_indices = @transform_2, window_bounds = array<i64: 4, 1, 64>}, {pipeline_mode = #tpu.pipeline_mode<synchronous>, transform_indices = @transform_3, window_bounds = array<i64: 4, 1, 64>}, {pipeline_mode = #tpu.pipeline_mode<synchronous>, transform_indices = @transform_4, window_bounds = array<i64: 4, 1, 64>}, {pipeline_mode = #tpu.pipeline_mode<synchronous>, transform_indices = @transform_5, window_bounds = array<i64: 256, 16>}, {pipeline_mode = #tpu.pipeline_mode<synchronous>, transform_indices = @transform_6, window_bounds = array<i64: 3, 256, 1>}, {pipeline_mode = #tpu.pipeline_mode<synchronous>, transform_indices = @transform_7, window_bounds = array<i64: 3, 3, 64, 32>}, {pipeline_mode = #tpu.pipeline_mode<synchronous>, transform_indices = @transform_8, window_bounds = array<i64: 1, 32>}, {pipeline_mode = #tpu.pipeline_mode<synchronous>, transform_indices = @transform_9, window_bounds = array<i64: 3, 3, 32, 32>}, {pipeline_mode = #tpu.pipeline_mode<synchronous>, transform_indices = @transform_10, window_bounds = array<i64: 1, 32>}, {pipeline_mode = #tpu.pipeline_mode<synchronous>, transform_indices = @transform_11, window_bounds = array<i64: 1, 32>}, {pipeline_mode = #tpu.pipeline_mode<synchronous>, transform_indices = @transform_12, window_bounds = array<i64: 1, 1>}, {transform_indices = @transform_13, window_bounds = array<i64: 1, 1, 256>}]} {
    %cst = arith.constant 0.000000e+00 : f32
    %0 = vector.broadcast %cst : f32 to vector<304x64xf32>
    %c0 = arith.constant 0 : index
    %c0_0 = arith.constant 0 : index
    %1 = vector.load %arg15[%c0, %c0_0] : memref<304x64xf32, #tpu.memory_space<vmem>>, vector<304x64xf32>
    tpu.vector_store %arg15[%c0, %c0_0], %0 {strides = array<i32>} : memref<304x64xf32, #tpu.memory_space<vmem>>, vector<304x64xf32>,
    %c0_1 = arith.constant 0 : index
    %c0_2 = arith.constant 0 : index
    %2 = vector.load %arg6[%c0_1, %c0_2] : memref<256x16xf32, #tpu.memory_space<vmem>>, vector<256x16xf32>
    %cst_3 = arith.constant 0.000000e+00 : f32
    %3 = vector.broadcast %cst_3 : f32 to vector<256x64xf32>
    %c3 = arith.constant 3 : index
    %c0_4 = arith.constant 0 : index
    %c0_5 = arith.constant 0 : index
    %4 = vector.load %arg1[%c3, %c0_4, %c0_5] : memref<4x32x32xf32, #tpu.memory_space<vmem>>, vector<1x32x32xf32>
    %5 = vector.shape_cast %4 : vector<1x32x32xf32> to vector<32x32xf32>
    %6 = arith.truncf %5 : vector<32x32xf32> to vector<32x32xbf16>
    %c3_6 = arith.constant 3 : index
    %c0_7 = arith.constant 0 : index
    %c0_8 = arith.constant 0 : index
    %7 = vector.load %arg2[%c3_6, %c0_7, %c0_8] : memref<4x32x64xbf16, #tpu.memory_space<vmem>>, vector<1x32x64xbf16>
    %8 = vector.shape_cast %7 : vector<1x32x64xbf16> to vector<32x64xbf16>
    %cst_9 = arith.constant dense<0.000000e+00> : vector<32x64xf32>
    %9 = tpu.matmul %6, %8, %cst_9 {dimension_numbers = #tpu.dot_dimension_numbers<[1], [0], [0], [1], [0, 0, 1, 1], [], []>} : vector<32x32xbf16>, vector<32x64xbf16>, vector<32x64xf32> -> vector<32x64xf32>
    %c3_10 = arith.constant 3 : index
    %c0_11 = arith.constant 0 : index
    %c0_12 = arith.constant 0 : index
    %10 = vector.load %arg3[%c3_10, %c0_11, %c0_12] : memref<4x1x64xf32, #tpu.memory_space<vmem>>, vector<1x1x64xf32>
    %11 = vector.shape_cast %10 : vector<1x1x64xf32> to vector<1x64xf32>
    %12 = vector.broadcast %11 : vector<1x64xf32> to vector<32x64xf32>
    %13 = arith.addf %9, %12 : vector<32x64xf32>
    %cst_13 = arith.constant dense<0.000000e+00> : vector<64xf32>
    %14 = vector.multi_reduction <add>, %13, %cst_13 [0] : vector<32x64xf32> to vector<64xf32>
    %15 = vector.shape_cast %14 : vector<64xf32> to vector<1x64xf32>
    %cst_14 = arith.constant 3.200000e+01 : f32
    %16 = vector.broadcast %cst_14 : f32 to vector<1x64xf32>
    %17 = arith.divf %15, %16 : vector<1x64xf32>
    %18 = vector.broadcast %17 : vector<1x64xf32> to vector<32x64xf32>
    %19 = arith.subf %13, %18 : vector<32x64xf32>
    %20 = arith.mulf %19, %19 : vector<32x64xf32>
    %cst_15 = arith.constant dense<0.000000e+00> : vector<64xf32>
    %21 = vector.multi_reduction <add>, %20, %cst_15 [0] : vector<32x64xf32> to vector<64xf32>
    %22 = vector.shape_cast %21 : vector<64xf32> to vector<1x64xf32>
    %cst_16 = arith.constant 3.200000e+01 : f32
    %23 = vector.broadcast %cst_16 : f32 to vector<1x64xf32>
    %24 = arith.divf %22, %23 : vector<1x64xf32>
    %25 = vector.broadcast %17 : vector<1x64xf32> to vector<32x64xf32>
    %26 = arith.subf %13, %25 : vector<32x64xf32>
    %cst_17 = arith.constant 9.99999974E-6 : f32
    %27 = vector.broadcast %cst_17 : f32 to vector<1x64xf32>
    %28 = arith.addf %24, %27 : vector<1x64xf32>
    %29 = math.rsqrt %28 : vector<1x64xf32>
    %30 = vector.broadcast %29 : vector<1x64xf32> to vector<32x64xf32>
    %31 = arith.mulf %26, %30 : vector<32x64xf32>
    %c3_18 = arith.constant 3 : index
    %c0_19 = arith.constant 0 : index
    %c0_20 = arith.constant 0 : index
    %32 = vector.load %arg4[%c3_18, %c0_19, %c0_20] : memref<4x1x64xf32, #tpu.memory_space<vmem>>, vector<1x1x64xf32>
    %33 = vector.shape_cast %32 : vector<1x1x64xf32> to vector<1x64xf32>
    %34 = vector.broadcast %33 : vector<1x64xf32> to vector<32x64xf32>
    %35 = arith.mulf %31, %34 : vector<32x64xf32>
    %c3_21 = arith.constant 3 : index
    %c0_22 = arith.constant 0 : index
    %c0_23 = arith.constant 0 : index
    %36 = vector.load %arg5[%c3_21, %c0_22, %c0_23] : memref<4x1x64xf32, #tpu.memory_space<vmem>>, vector<1x1x64xf32>
    %37 = vector.shape_cast %36 : vector<1x1x64xf32> to vector<1x64xf32>
    %38 = vector.broadcast %37 : vector<1x64xf32> to vector<32x64xf32>
    %39 = arith.addf %35, %38 : vector<32x64xf32>
    %cst_24 = arith.constant 0.000000e+00 : f32
    %40 = vector.broadcast %cst_24 : f32 to vector<32x64xf32>
    %41 = arith.maximumf %39, %40 : vector<32x64xf32>
    %42 = vector.extract_strided_slice %41 {offsets = [0, 0], sizes = [16, 64], strides = [1, 1]} : vector<32x64xf32> to vector<16x64xf32>
    %c1_i32 = arith.constant 1 : i32
    %43 = arith.cmpi eq, %arg0, %c1_i32 : i32
    %44 = vector.extract_strided_slice %41 {offsets = [16, 0], sizes = [16, 64], strides = [1, 1]} : vector<32x64xf32> to vector<16x64xf32>
    %45 = arith.select %43, %44, %42 : vector<16x64xf32>
    %cst_25 = arith.constant dense<0.000000e+00> : vector<256x64xf32>
    %46 = tpu.matmul %2, %45, %cst_25 {dimension_numbers = #tpu.dot_dimension_numbers<[1], [0], [0], [1], [0, 0, 1, 1], [], []>} : vector<256x16xf32>, vector<16x64xf32>, vector<256x64xf32> -> vector<256x64xf32>
    %47 = arith.addf %3, %46 : vector<256x64xf32>
    %c2 = arith.constant 2 : index
    %c0_26 = arith.constant 0 : index
    %c0_27 = arith.constant 0 : index
    %48 = vector.load %arg1[%c2, %c0_26, %c0_27] : memref<4x32x32xf32, #tpu.memory_space<vmem>>, vector<1x32x32xf32>
    %49 = vector.shape_cast %48 : vector<1x32x32xf32> to vector<32x32xf32>
    %50 = arith.truncf %49 : vector<32x32xf32> to vector<32x32xbf16>
    %c2_28 = arith.constant 2 : index
    %c0_29 = arith.constant 0 : index
    %c0_30 = arith.constant 0 : index
    %51 = vector.load %arg2[%c2_28, %c0_29, %c0_30] : memref<4x32x64xbf16, #tpu.memory_space<vmem>>, vector<1x32x64xbf16>
    %52 = vector.shape_cast %51 : vector<1x32x64xbf16> to vector<32x64xbf16>
    %cst_31 = arith.constant dense<0.000000e+00> : vector<32x64xf32>
    %53 = tpu.matmul %50, %52, %cst_31 {dimension_numbers = #tpu.dot_dimension_numbers<[1], [0], [0], [1], [0, 0, 1, 1], [], []>} : vector<32x32xbf16>, vector<32x64xbf16>, vector<32x64xf32> -> vector<32x64xf32>
    %c2_32 = arith.constant 2 : index
    %c0_33 = arith.constant 0 : index
    %c0_34 = arith.constant 0 : index
    %54 = vector.load %arg3[%c2_32, %c0_33, %c0_34] : memref<4x1x64xf32, #tpu.memory_space<vmem>>, vector<1x1x64xf32>
    %55 = vector.shape_cast %54 : vector<1x1x64xf32> to vector<1x64xf32>
    %56 = vector.broadcast %55 : vector<1x64xf32> to vector<32x64xf32>
    %57 = arith.addf %53, %56 : vector<32x64xf32>
    %cst_35 = arith.constant dense<0.000000e+00> : vector<64xf32>
    %58 = vector.multi_reduction <add>, %57, %cst_35 [0] : vector<32x64xf32> to vector<64xf32>
    %59 = vector.shape_cast %58 : vector<64xf32> to vector<1x64xf32>
    %cst_36 = arith.constant 3.200000e+01 : f32
    %60 = vector.broadcast %cst_36 : f32 to vector<1x64xf32>
    %61 = arith.divf %59, %60 : vector<1x64xf32>
    %62 = vector.broadcast %61 : vector<1x64xf32> to vector<32x64xf32>
    %63 = arith.subf %57, %62 : vector<32x64xf32>
    %64 = arith.mulf %63, %63 : vector<32x64xf32>
    %cst_37 = arith.constant dense<0.000000e+00> : vector<64xf32>
    %65 = vector.multi_reduction <add>, %64, %cst_37 [0] : vector<32x64xf32> to vector<64xf32>
    %66 = vector.shape_cast %65 : vector<64xf32> to vector<1x64xf32>
    %cst_38 = arith.constant 3.200000e+01 : f32
    %67 = vector.broadcast %cst_38 : f32 to vector<1x64xf32>
    %68 = arith.divf %66, %67 : vector<1x64xf32>
    %69 = vector.broadcast %61 : vector<1x64xf32> to vector<32x64xf32>
    %70 = arith.subf %57, %69 : vector<32x64xf32>
    %cst_39 = arith.constant 9.99999974E-6 : f32
    %71 = vector.broadcast %cst_39 : f32 to vector<1x64xf32>
    %72 = arith.addf %68, %71 : vector<1x64xf32>
    %73 = math.rsqrt %72 : vector<1x64xf32>
    %74 = vector.broadcast %73 : vector<1x64xf32> to vector<32x64xf32>
    %75 = arith.mulf %70, %74 : vector<32x64xf32>
    %c2_40 = arith.constant 2 : index
    %c0_41 = arith.constant 0 : index
    %c0_42 = arith.constant 0 : index
    %76 = vector.load %arg4[%c2_40, %c0_41, %c0_42] : memref<4x1x64xf32, #tpu.memory_space<vmem>>, vector<1x1x64xf32>
    %77 = vector.shape_cast %76 : vector<1x1x64xf32> to vector<1x64xf32>
    %78 = vector.broadcast %77 : vector<1x64xf32> to vector<32x64xf32>
    %79 = arith.mulf %75, %78 : vector<32x64xf32>
    %c2_43 = arith.constant 2 : index
    %c0_44 = arith.constant 0 : index
    %c0_45 = arith.constant 0 : index
    %80 = vector.load %arg5[%c2_43, %c0_44, %c0_45] : memref<4x1x64xf32, #tpu.memory_space<vmem>>, vector<1x1x64xf32>
    %81 = vector.shape_cast %80 : vector<1x1x64xf32> to vector<1x64xf32>
    %82 = vector.broadcast %81 : vector<1x64xf32> to vector<32x64xf32>
    %83 = arith.addf %79, %82 : vector<32x64xf32>
    %cst_46 = arith.constant 0.000000e+00 : f32
    %84 = vector.broadcast %cst_46 : f32 to vector<32x64xf32>
    %85 = arith.maximumf %83, %84 : vector<32x64xf32>
    %86 = vector.extract_strided_slice %85 {offsets = [0, 0], sizes = [16, 64], strides = [1, 1]} : vector<32x64xf32> to vector<16x64xf32>
    %c1_i32_47 = arith.constant 1 : i32
    %87 = arith.cmpi eq, %arg0, %c1_i32_47 : i32
    %88 = vector.extract_strided_slice %85 {offsets = [16, 0], sizes = [16, 64], strides = [1, 1]} : vector<32x64xf32> to vector<16x64xf32>
    %89 = arith.select %87, %88, %86 : vector<16x64xf32>
    %cst_48 = arith.constant dense<0.000000e+00> : vector<256x64xf32>
    %90 = tpu.matmul %2, %89, %cst_48 {dimension_numbers = #tpu.dot_dimension_numbers<[1], [0], [0], [1], [0, 0, 1, 1], [], []>} : vector<256x16xf32>, vector<16x64xf32>, vector<256x64xf32> -> vector<256x64xf32>
    %91 = arith.addf %47, %90 : vector<256x64xf32>
    %c1 = arith.constant 1 : index
    %c0_49 = arith.constant 0 : index
    %c0_50 = arith.constant 0 : index
    %92 = vector.load %arg1[%c1, %c0_49, %c0_50] : memref<4x32x32xf32, #tpu.memory_space<vmem>>, vector<1x32x32xf32>
    %93 = vector.shape_cast %92 : vector<1x32x32xf32> to vector<32x32xf32>
    %94 = arith.truncf %93 : vector<32x32xf32> to vector<32x32xbf16>
    %c1_51 = arith.constant 1 : index
    %c0_52 = arith.constant 0 : index
    %c0_53 = arith.constant 0 : index
    %95 = vector.load %arg2[%c1_51, %c0_52, %c0_53] : memref<4x32x64xbf16, #tpu.memory_space<vmem>>, vector<1x32x64xbf16>
    %96 = vector.shape_cast %95 : vector<1x32x64xbf16> to vector<32x64xbf16>
    %cst_54 = arith.constant dense<0.000000e+00> : vector<32x64xf32>
    %97 = tpu.matmul %94, %96, %cst_54 {dimension_numbers = #tpu.dot_dimension_numbers<[1], [0], [0], [1], [0, 0, 1, 1], [], []>} : vector<32x32xbf16>, vector<32x64xbf16>, vector<32x64xf32> -> vector<32x64xf32>
    %c1_55 = arith.constant 1 : index
    %c0_56 = arith.constant 0 : index
    %c0_57 = arith.constant 0 : index
    %98 = vector.load %arg3[%c1_55, %c0_56, %c0_57] : memref<4x1x64xf32, #tpu.memory_space<vmem>>, vector<1x1x64xf32>
    %99 = vector.shape_cast %98 : vector<1x1x64xf32> to vector<1x64xf32>
    %100 = vector.broadcast %99 : vector<1x64xf32> to vector<32x64xf32>
    %101 = arith.addf %97, %100 : vector<32x64xf32>
    %cst_58 = arith.constant dense<0.000000e+00> : vector<64xf32>
    %102 = vector.multi_reduction <add>, %101, %cst_58 [0] : vector<32x64xf32> to vector<64xf32>
    %103 = vector.shape_cast %102 : vector<64xf32> to vector<1x64xf32>
    %cst_59 = arith.constant 3.200000e+01 : f32
    %104 = vector.broadcast %cst_59 : f32 to vector<1x64xf32>
    %105 = arith.divf %103, %104 : vector<1x64xf32>
    %106 = vector.broadcast %105 : vector<1x64xf32> to vector<32x64xf32>
    %107 = arith.subf %101, %106 : vector<32x64xf32>
    %108 = arith.mulf %107, %107 : vector<32x64xf32>
    %cst_60 = arith.constant dense<0.000000e+00> : vector<64xf32>
    %109 = vector.multi_reduction <add>, %108, %cst_60 [0] : vector<32x64xf32> to vector<64xf32>
    %110 = vector.shape_cast %109 : vector<64xf32> to vector<1x64xf32>
    %cst_61 = arith.constant 3.200000e+01 : f32
    %111 = vector.broadcast %cst_61 : f32 to vector<1x64xf32>
    %112 = arith.divf %110, %111 : vector<1x64xf32>
    %113 = vector.broadcast %105 : vector<1x64xf32> to vector<32x64xf32>
    %114 = arith.subf %101, %113 : vector<32x64xf32>
    %cst_62 = arith.constant 9.99999974E-6 : f32
    %115 = vector.broadcast %cst_62 : f32 to vector<1x64xf32>
    %116 = arith.addf %112, %115 : vector<1x64xf32>
    %117 = math.rsqrt %116 : vector<1x64xf32>
    %118 = vector.broadcast %117 : vector<1x64xf32> to vector<32x64xf32>
    %119 = arith.mulf %114, %118 : vector<32x64xf32>
    %c1_63 = arith.constant 1 : index
    %c0_64 = arith.constant 0 : index
    %c0_65 = arith.constant 0 : index
    %120 = vector.load %arg4[%c1_63, %c0_64, %c0_65] : memref<4x1x64xf32, #tpu.memory_space<vmem>>, vector<1x1x64xf32>
    %121 = vector.shape_cast %120 : vector<1x1x64xf32> to vector<1x64xf32>
    %122 = vector.broadcast %121 : vector<1x64xf32> to vector<32x64xf32>
    %123 = arith.mulf %119, %122 : vector<32x64xf32>
    %c1_66 = arith.constant 1 : index
    %c0_67 = arith.constant 0 : index
    %c0_68 = arith.constant 0 : index
    %124 = vector.load %arg5[%c1_66, %c0_67, %c0_68] : memref<4x1x64xf32, #tpu.memory_space<vmem>>, vector<1x1x64xf32>
    %125 = vector.shape_cast %124 : vector<1x1x64xf32> to vector<1x64xf32>
    %126 = vector.broadcast %125 : vector<1x64xf32> to vector<32x64xf32>
    %127 = arith.addf %123, %126 : vector<32x64xf32>
    %cst_69 = arith.constant 0.000000e+00 : f32
    %128 = vector.broadcast %cst_69 : f32 to vector<32x64xf32>
    %129 = arith.maximumf %127, %128 : vector<32x64xf32>
    %130 = vector.extract_strided_slice %129 {offsets = [0, 0], sizes = [16, 64], strides = [1, 1]} : vector<32x64xf32> to vector<16x64xf32>
    %c1_i32_70 = arith.constant 1 : i32
    %131 = arith.cmpi eq, %arg0, %c1_i32_70 : i32
    %132 = vector.extract_strided_slice %129 {offsets = [16, 0], sizes = [16, 64], strides = [1, 1]} : vector<32x64xf32> to vector<16x64xf32>
    %133 = arith.select %131, %132, %130 : vector<16x64xf32>
    %cst_71 = arith.constant dense<0.000000e+00> : vector<256x64xf32>
    %134 = tpu.matmul %2, %133, %cst_71 {dimension_numbers = #tpu.dot_dimension_numbers<[1], [0], [0], [1], [0, 0, 1, 1], [], []>} : vector<256x16xf32>, vector<16x64xf32>, vector<256x64xf32> -> vector<256x64xf32>
    %135 = arith.addf %91, %134 : vector<256x64xf32>
    %c0_72 = arith.constant 0 : index
    %c0_73 = arith.constant 0 : index
    %c0_74 = arith.constant 0 : index
    %136 = vector.load %arg1[%c0_72, %c0_73, %c0_74] : memref<4x32x32xf32, #tpu.memory_space<vmem>>, vector<1x32x32xf32>
    %137 = vector.shape_cast %136 : vector<1x32x32xf32> to vector<32x32xf32>
    %138 = arith.truncf %137 : vector<32x32xf32> to vector<32x32xbf16>
    %c0_75 = arith.constant 0 : index
    %c0_76 = arith.constant 0 : index
    %c0_77 = arith.constant 0 : index
    %139 = vector.load %arg2[%c0_75, %c0_76, %c0_77] : memref<4x32x64xbf16, #tpu.memory_space<vmem>>, vector<1x32x64xbf16>
    %140 = vector.shape_cast %139 : vector<1x32x64xbf16> to vector<32x64xbf16>
    %cst_78 = arith.constant dense<0.000000e+00> : vector<32x64xf32>
    %141 = tpu.matmul %138, %140, %cst_78 {dimension_numbers = #tpu.dot_dimension_numbers<[1], [0], [0], [1], [0, 0, 1, 1], [], []>} : vector<32x32xbf16>, vector<32x64xbf16>, vector<32x64xf32> -> vector<32x64xf32>
    %c0_79 = arith.constant 0 : index
    %c0_80 = arith.constant 0 : index
    %c0_81 = arith.constant 0 : index
    %142 = vector.load %arg3[%c0_79, %c0_80, %c0_81] : memref<4x1x64xf32, #tpu.memory_space<vmem>>, vector<1x1x64xf32>
    %143 = vector.shape_cast %142 : vector<1x1x64xf32> to vector<1x64xf32>
    %144 = vector.broadcast %143 : vector<1x64xf32> to vector<32x64xf32>
    %145 = arith.addf %141, %144 : vector<32x64xf32>
    %cst_82 = arith.constant dense<0.000000e+00> : vector<64xf32>
    %146 = vector.multi_reduction <add>, %145, %cst_82 [0] : vector<32x64xf32> to vector<64xf32>
    %147 = vector.shape_cast %146 : vector<64xf32> to vector<1x64xf32>
    %cst_83 = arith.constant 3.200000e+01 : f32
    %148 = vector.broadcast %cst_83 : f32 to vector<1x64xf32>
    %149 = arith.divf %147, %148 : vector<1x64xf32>
    %150 = vector.broadcast %149 : vector<1x64xf32> to vector<32x64xf32>
    %151 = arith.subf %145, %150 : vector<32x64xf32>
    %152 = arith.mulf %151, %151 : vector<32x64xf32>
    %cst_84 = arith.constant dense<0.000000e+00> : vector<64xf32>
    %153 = vector.multi_reduction <add>, %152, %cst_84 [0] : vector<32x64xf32> to vector<64xf32>
    %154 = vector.shape_cast %153 : vector<64xf32> to vector<1x64xf32>
    %cst_85 = arith.constant 3.200000e+01 : f32
    %155 = vector.broadcast %cst_85 : f32 to vector<1x64xf32>
    %156 = arith.divf %154, %155 : vector<1x64xf32>
    %157 = vector.broadcast %149 : vector<1x64xf32> to vector<32x64xf32>
    %158 = arith.subf %145, %157 : vector<32x64xf32>
    %cst_86 = arith.constant 9.99999974E-6 : f32
    %159 = vector.broadcast %cst_86 : f32 to vector<1x64xf32>
    %160 = arith.addf %156, %159 : vector<1x64xf32>
    %161 = math.rsqrt %160 : vector<1x64xf32>
    %162 = vector.broadcast %161 : vector<1x64xf32> to vector<32x64xf32>
    %163 = arith.mulf %158, %162 : vector<32x64xf32>
    %c0_87 = arith.constant 0 : index
    %c0_88 = arith.constant 0 : index
    %c0_89 = arith.constant 0 : index
    %164 = vector.load %arg4[%c0_87, %c0_88, %c0_89] : memref<4x1x64xf32, #tpu.memory_space<vmem>>, vector<1x1x64xf32>
    %165 = vector.shape_cast %164 : vector<1x1x64xf32> to vector<1x64xf32>
    %166 = vector.broadcast %165 : vector<1x64xf32> to vector<32x64xf32>
    %167 = arith.mulf %163, %166 : vector<32x64xf32>
    %c0_90 = arith.constant 0 : index
    %c0_91 = arith.constant 0 : index
    %c0_92 = arith.constant 0 : index
    %168 = vector.load %arg5[%c0_90, %c0_91, %c0_92] : memref<4x1x64xf32, #tpu.memory_space<vmem>>, vector<1x1x64xf32>
    %169 = vector.shape_cast %168 : vector<1x1x64xf32> to vector<1x64xf32>
    %170 = vector.broadcast %169 : vector<1x64xf32> to vector<32x64xf32>
    %171 = arith.addf %167, %170 : vector<32x64xf32>
    %cst_93 = arith.constant 0.000000e+00 : f32
    %172 = vector.broadcast %cst_93 : f32 to vector<32x64xf32>
    %173 = arith.maximumf %171, %172 : vector<32x64xf32>
    %174 = vector.extract_strided_slice %173 {offsets = [0, 0], sizes = [16, 64], strides = [1, 1]} : vector<32x64xf32> to vector<16x64xf32>
    %c1_i32_94 = arith.constant 1 : i32
    %175 = arith.cmpi eq, %arg0, %c1_i32_94 : i32
    %176 = vector.extract_strided_slice %173 {offsets = [16, 0], sizes = [16, 64], strides = [1, 1]} : vector<32x64xf32> to vector<16x64xf32>
    %177 = arith.select %175, %176, %174 : vector<16x64xf32>
    %cst_95 = arith.constant dense<0.000000e+00> : vector<256x64xf32>
    %178 = tpu.matmul %2, %177, %cst_95 {dimension_numbers = #tpu.dot_dimension_numbers<[1], [0], [0], [1], [0, 0, 1, 1], [], []>} : vector<256x16xf32>, vector<16x64xf32>, vector<256x64xf32> -> vector<256x64xf32>
    %179 = arith.addf %135, %178 : vector<256x64xf32>
    %c0_96 = arith.constant 0 : index
    %c0_97 = arith.constant 0 : index
    %180 = vector.load %arg9[%c0_96, %c0_97] : memref<1x32xf32, #tpu.memory_space<vmem>>, vector<1x32xf32>
    %c24 = arith.constant 24 : index
    %c0_98 = arith.constant 0 : index
    %181 = vector.load %arg15[%c24, %c0_98] : memref<304x64xf32, #tpu.memory_space<vmem>>, vector<256x64xf32>
    tpu.vector_store %arg15[%c24, %c0_98], %179 {strides = array<i32>} : memref<304x64xf32, #tpu.memory_space<vmem>>, vector<256x64xf32>,
    %cst_99 = arith.constant 0.000000e+00 : f32
    %182 = vector.broadcast %cst_99 : f32 to vector<256x32xf32>
    %c7 = arith.constant 7 : index
    %c0_100 = arith.constant 0 : index
    %183 = vector.load %arg15[%c7, %c0_100] : memref<304x64xf32, #tpu.memory_space<vmem>>, vector<256x64xf32>
    %c0_101 = arith.constant 0 : index
    %c0_102 = arith.constant 0 : index
    %c0_103 = arith.constant 0 : index
    %184 = vector.load %arg7[%c0_101, %c0_102, %c0_103] : memref<3x256x1xf32, #tpu.memory_space<vmem>>, vector<1x256x1xf32>
    %185 = vector.shape_cast %184 : vector<1x256x1xf32> to vector<256x1xf32>
    %186 = vector.broadcast %185 : vector<256x1xf32> to vector<256x64xf32>
    %187 = arith.mulf %183, %186 : vector<256x64xf32>
    %188 = arith.truncf %187 : vector<256x64xf32> to vector<256x64xbf16>
    %c0_104 = arith.constant 0 : index
    %c0_105 = arith.constant 0 : index
    %c0_106 = arith.constant 0 : index
    %c0_107 = arith.constant 0 : index
    %189 = vector.load %arg8[%c0_104, %c0_105, %c0_106, %c0_107] : memref<3x3x64x32xbf16, #tpu.memory_space<vmem>>, vector<1x1x64x32xbf16>
    %190 = vector.shape_cast %189 : vector<1x1x64x32xbf16> to vector<64x32xbf16>
    %cst_108 = arith.constant dense<0.000000e+00> : vector<256x32xf32>
    %191 = tpu.matmul %188, %190, %cst_108 {dimension_numbers = #tpu.dot_dimension_numbers<[1], [0], [0], [1], [0, 0, 1, 1], [], []>} : vector<256x64xbf16>, vector<64x32xbf16>, vector<256x32xf32> -> vector<256x32xf32>
    %192 = arith.addf %182, %191 : vector<256x32xf32>
    %c8 = arith.constant 8 : index
    %c0_109 = arith.constant 0 : index
    %193 = vector.load %arg15[%c8, %c0_109] : memref<304x64xf32, #tpu.memory_space<vmem>>, vector<256x64xf32>
    %c1_110 = arith.constant 1 : index
    %c0_111 = arith.constant 0 : index
    %c0_112 = arith.constant 0 : index
    %194 = vector.load %arg7[%c1_110, %c0_111, %c0_112] : memref<3x256x1xf32, #tpu.memory_space<vmem>>, vector<1x256x1xf32>
    %195 = vector.shape_cast %194 : vector<1x256x1xf32> to vector<256x1xf32>
    %196 = vector.broadcast %195 : vector<256x1xf32> to vector<256x64xf32>
    %197 = arith.mulf %193, %196 : vector<256x64xf32>
    %198 = arith.truncf %197 : vector<256x64xf32> to vector<256x64xbf16>
    %c0_113 = arith.constant 0 : index
    %c1_114 = arith.constant 1 : index
    %c0_115 = arith.constant 0 : index
    %c0_116 = arith.constant 0 : index
    %199 = vector.load %arg8[%c0_113, %c1_114, %c0_115, %c0_116] : memref<3x3x64x32xbf16, #tpu.memory_space<vmem>>, vector<1x1x64x32xbf16>
    %200 = vector.shape_cast %199 : vector<1x1x64x32xbf16> to vector<64x32xbf16>
    %cst_117 = arith.constant dense<0.000000e+00> : vector<256x32xf32>
    %201 = tpu.matmul %198, %200, %cst_117 {dimension_numbers = #tpu.dot_dimension_numbers<[1], [0], [0], [1], [0, 0, 1, 1], [], []>} : vector<256x64xbf16>, vector<64x32xbf16>, vector<256x32xf32> -> vector<256x32xf32>
    %202 = arith.addf %192, %201 : vector<256x32xf32>
    %c9 = arith.constant 9 : index
    %c0_118 = arith.constant 0 : index
    %203 = vector.load %arg15[%c9, %c0_118] : memref<304x64xf32, #tpu.memory_space<vmem>>, vector<256x64xf32>
    %c2_119 = arith.constant 2 : index
    %c0_120 = arith.constant 0 : index
    %c0_121 = arith.constant 0 : index
    %204 = vector.load %arg7[%c2_119, %c0_120, %c0_121] : memref<3x256x1xf32, #tpu.memory_space<vmem>>, vector<1x256x1xf32>
    %205 = vector.shape_cast %204 : vector<1x256x1xf32> to vector<256x1xf32>
    %206 = vector.broadcast %205 : vector<256x1xf32> to vector<256x64xf32>
    %207 = arith.mulf %203, %206 : vector<256x64xf32>
    %208 = arith.truncf %207 : vector<256x64xf32> to vector<256x64xbf16>
    %c0_122 = arith.constant 0 : index
    %c2_123 = arith.constant 2 : index
    %c0_124 = arith.constant 0 : index
    %c0_125 = arith.constant 0 : index
    %209 = vector.load %arg8[%c0_122, %c2_123, %c0_124, %c0_125] : memref<3x3x64x32xbf16, #tpu.memory_space<vmem>>, vector<1x1x64x32xbf16>
    %210 = vector.shape_cast %209 : vector<1x1x64x32xbf16> to vector<64x32xbf16>
    %cst_126 = arith.constant dense<0.000000e+00> : vector<256x32xf32>
    %211 = tpu.matmul %208, %210, %cst_126 {dimension_numbers = #tpu.dot_dimension_numbers<[1], [0], [0], [1], [0, 0, 1, 1], [], []>} : vector<256x64xbf16>, vector<64x32xbf16>, vector<256x32xf32> -> vector<256x32xf32>
    %212 = arith.addf %202, %211 : vector<256x32xf32>
    %c23 = arith.constant 23 : index
    %c0_127 = arith.constant 0 : index
    %213 = vector.load %arg15[%c23, %c0_127] : memref<304x64xf32, #tpu.memory_space<vmem>>, vector<256x64xf32>
    %c0_128 = arith.constant 0 : index
    %c0_129 = arith.constant 0 : index
    %c0_130 = arith.constant 0 : index
    %214 = vector.load %arg7[%c0_128, %c0_129, %c0_130] : memref<3x256x1xf32, #tpu.memory_space<vmem>>, vector<1x256x1xf32>
    %215 = vector.shape_cast %214 : vector<1x256x1xf32> to vector<256x1xf32>
    %216 = vector.broadcast %215 : vector<256x1xf32> to vector<256x64xf32>
    %217 = arith.mulf %213, %216 : vector<256x64xf32>
    %218 = arith.truncf %217 : vector<256x64xf32> to vector<256x64xbf16>
    %c1_131 = arith.constant 1 : index
    %c0_132 = arith.constant 0 : index
    %c0_133 = arith.constant 0 : index
    %c0_134 = arith.constant 0 : index
    %219 = vector.load %arg8[%c1_131, %c0_132, %c0_133, %c0_134] : memref<3x3x64x32xbf16, #tpu.memory_space<vmem>>, vector<1x1x64x32xbf16>
    %220 = vector.shape_cast %219 : vector<1x1x64x32xbf16> to vector<64x32xbf16>
    %cst_135 = arith.constant dense<0.000000e+00> : vector<256x32xf32>
    %221 = tpu.matmul %218, %220, %cst_135 {dimension_numbers = #tpu.dot_dimension_numbers<[1], [0], [0], [1], [0, 0, 1, 1], [], []>} : vector<256x64xbf16>, vector<64x32xbf16>, vector<256x32xf32> -> vector<256x32xf32>
    %222 = arith.addf %212, %221 : vector<256x32xf32>
    %c24_136 = arith.constant 24 : index
    %c0_137 = arith.constant 0 : index
    %223 = vector.load %arg15[%c24_136, %c0_137] : memref<304x64xf32, #tpu.memory_space<vmem>>, vector<256x64xf32>
    %c1_138 = arith.constant 1 : index
    %c0_139 = arith.constant 0 : index
    %c0_140 = arith.constant 0 : index
    %224 = vector.load %arg7[%c1_138, %c0_139, %c0_140] : memref<3x256x1xf32, #tpu.memory_space<vmem>>, vector<1x256x1xf32>
    %225 = vector.shape_cast %224 : vector<1x256x1xf32> to vector<256x1xf32>
    %226 = vector.broadcast %225 : vector<256x1xf32> to vector<256x64xf32>
    %227 = arith.mulf %223, %226 : vector<256x64xf32>
    %228 = arith.truncf %227 : vector<256x64xf32> to vector<256x64xbf16>
    %c1_141 = arith.constant 1 : index
    %c1_142 = arith.constant 1 : index
    %c0_143 = arith.constant 0 : index
    %c0_144 = arith.constant 0 : index
    %229 = vector.load %arg8[%c1_141, %c1_142, %c0_143, %c0_144] : memref<3x3x64x32xbf16, #tpu.memory_space<vmem>>, vector<1x1x64x32xbf16>
    %230 = vector.shape_cast %229 : vector<1x1x64x32xbf16> to vector<64x32xbf16>
    %cst_145 = arith.constant dense<0.000000e+00> : vector<256x32xf32>
    %231 = tpu.matmul %228, %230, %cst_145 {dimension_numbers = #tpu.dot_dimension_numbers<[1], [0], [0], [1], [0, 0, 1, 1], [], []>} : vector<256x64xbf16>, vector<64x32xbf16>, vector<256x32xf32> -> vector<256x32xf32>
    %232 = arith.addf %222, %231 : vector<256x32xf32>
    %c25 = arith.constant 25 : index
    %c0_146 = arith.constant 0 : index
    %233 = vector.load %arg15[%c25, %c0_146] : memref<304x64xf32, #tpu.memory_space<vmem>>, vector<256x64xf32>
    %c2_147 = arith.constant 2 : index
    %c0_148 = arith.constant 0 : index
    %c0_149 = arith.constant 0 : index
    %234 = vector.load %arg7[%c2_147, %c0_148, %c0_149] : memref<3x256x1xf32, #tpu.memory_space<vmem>>, vector<1x256x1xf32>
    %235 = vector.shape_cast %234 : vector<1x256x1xf32> to vector<256x1xf32>
    %236 = vector.broadcast %235 : vector<256x1xf32> to vector<256x64xf32>
    %237 = arith.mulf %233, %236 : vector<256x64xf32>
    %238 = arith.truncf %237 : vector<256x64xf32> to vector<256x64xbf16>
    %c1_150 = arith.constant 1 : index
    %c2_151 = arith.constant 2 : index
    %c0_152 = arith.constant 0 : index
    %c0_153 = arith.constant 0 : index
    %239 = vector.load %arg8[%c1_150, %c2_151, %c0_152, %c0_153] : memref<3x3x64x32xbf16, #tpu.memory_space<vmem>>, vector<1x1x64x32xbf16>
    %240 = vector.shape_cast %239 : vector<1x1x64x32xbf16> to vector<64x32xbf16>
    %cst_154 = arith.constant dense<0.000000e+00> : vector<256x32xf32>
    %241 = tpu.matmul %238, %240, %cst_154 {dimension_numbers = #tpu.dot_dimension_numbers<[1], [0], [0], [1], [0, 0, 1, 1], [], []>} : vector<256x64xbf16>, vector<64x32xbf16>, vector<256x32xf32> -> vector<256x32xf32>
    %242 = arith.addf %232, %241 : vector<256x32xf32>
    %c39 = arith.constant 39 : index
    %c0_155 = arith.constant 0 : index
    %243 = vector.load %arg15[%c39, %c0_155] : memref<304x64xf32, #tpu.memory_space<vmem>>, vector<256x64xf32>
    %c0_156 = arith.constant 0 : index
    %c0_157 = arith.constant 0 : index
    %c0_158 = arith.constant 0 : index
    %244 = vector.load %arg7[%c0_156, %c0_157, %c0_158] : memref<3x256x1xf32, #tpu.memory_space<vmem>>, vector<1x256x1xf32>
    %245 = vector.shape_cast %244 : vector<1x256x1xf32> to vector<256x1xf32>
    %246 = vector.broadcast %245 : vector<256x1xf32> to vector<256x64xf32>
    %247 = arith.mulf %243, %246 : vector<256x64xf32>
    %248 = arith.truncf %247 : vector<256x64xf32> to vector<256x64xbf16>
    %c2_159 = arith.constant 2 : index
    %c0_160 = arith.constant 0 : index
    %c0_161 = arith.constant 0 : index
    %c0_162 = arith.constant 0 : index
    %249 = vector.load %arg8[%c2_159, %c0_160, %c0_161, %c0_162] : memref<3x3x64x32xbf16, #tpu.memory_space<vmem>>, vector<1x1x64x32xbf16>
    %250 = vector.shape_cast %249 : vector<1x1x64x32xbf16> to vector<64x32xbf16>
    %cst_163 = arith.constant dense<0.000000e+00> : vector<256x32xf32>
    %251 = tpu.matmul %248, %250, %cst_163 {dimension_numbers = #tpu.dot_dimension_numbers<[1], [0], [0], [1], [0, 0, 1, 1], [], []>} : vector<256x64xbf16>, vector<64x32xbf16>, vector<256x32xf32> -> vector<256x32xf32>
    %252 = arith.addf %242, %251 : vector<256x32xf32>
    %c40 = arith.constant 40 : index
    %c0_164 = arith.constant 0 : index
    %253 = vector.load %arg15[%c40, %c0_164] : memref<304x64xf32, #tpu.memory_space<vmem>>, vector<256x64xf32>
    %c1_165 = arith.constant 1 : index
    %c0_166 = arith.constant 0 : index
    %c0_167 = arith.constant 0 : index
    %254 = vector.load %arg7[%c1_165, %c0_166, %c0_167] : memref<3x256x1xf32, #tpu.memory_space<vmem>>, vector<1x256x1xf32>
    %255 = vector.shape_cast %254 : vector<1x256x1xf32> to vector<256x1xf32>
    %256 = vector.broadcast %255 : vector<256x1xf32> to vector<256x64xf32>
    %257 = arith.mulf %253, %256 : vector<256x64xf32>
    %258 = arith.truncf %257 : vector<256x64xf32> to vector<256x64xbf16>
    %c2_168 = arith.constant 2 : index
    %c1_169 = arith.constant 1 : index
    %c0_170 = arith.constant 0 : index
    %c0_171 = arith.constant 0 : index
    %259 = vector.load %arg8[%c2_168, %c1_169, %c0_170, %c0_171] : memref<3x3x64x32xbf16, #tpu.memory_space<vmem>>, vector<1x1x64x32xbf16>
    %260 = vector.shape_cast %259 : vector<1x1x64x32xbf16> to vector<64x32xbf16>
    %cst_172 = arith.constant dense<0.000000e+00> : vector<256x32xf32>
    %261 = tpu.matmul %258, %260, %cst_172 {dimension_numbers = #tpu.dot_dimension_numbers<[1], [0], [0], [1], [0, 0, 1, 1], [], []>} : vector<256x64xbf16>, vector<64x32xbf16>, vector<256x32xf32> -> vector<256x32xf32>
    %262 = arith.addf %252, %261 : vector<256x32xf32>
    %c41 = arith.constant 41 : index
    %c0_173 = arith.constant 0 : index
    %263 = vector.load %arg15[%c41, %c0_173] : memref<304x64xf32, #tpu.memory_space<vmem>>, vector<256x64xf32>
    %c2_174 = arith.constant 2 : index
    %c0_175 = arith.constant 0 : index
    %c0_176 = arith.constant 0 : index
    %264 = vector.load %arg7[%c2_174, %c0_175, %c0_176] : memref<3x256x1xf32, #tpu.memory_space<vmem>>, vector<1x256x1xf32>
    %265 = vector.shape_cast %264 : vector<1x256x1xf32> to vector<256x1xf32>
    %266 = vector.broadcast %265 : vector<256x1xf32> to vector<256x64xf32>
    %267 = arith.mulf %263, %266 : vector<256x64xf32>
    %268 = arith.truncf %267 : vector<256x64xf32> to vector<256x64xbf16>
    %c2_177 = arith.constant 2 : index
    %c2_178 = arith.constant 2 : index
    %c0_179 = arith.constant 0 : index
    %c0_180 = arith.constant 0 : index
    %269 = vector.load %arg8[%c2_177, %c2_178, %c0_179, %c0_180] : memref<3x3x64x32xbf16, #tpu.memory_space<vmem>>, vector<1x1x64x32xbf16>
    %270 = vector.shape_cast %269 : vector<1x1x64x32xbf16> to vector<64x32xbf16>
    %cst_181 = arith.constant dense<0.000000e+00> : vector<256x32xf32>
    %271 = tpu.matmul %268, %270, %cst_181 {dimension_numbers = #tpu.dot_dimension_numbers<[1], [0], [0], [1], [0, 0, 1, 1], [], []>} : vector<256x64xbf16>, vector<64x32xbf16>, vector<256x32xf32> -> vector<256x32xf32>
    %272 = arith.addf %262, %271 : vector<256x32xf32>
    %273 = vector.broadcast %180 : vector<1x32xf32> to vector<256x32xf32>
    %274 = arith.addf %272, %273 : vector<256x32xf32>
    %cst_182 = arith.constant 0.000000e+00 : f32
    %275 = vector.broadcast %cst_182 : f32 to vector<256x32xf32>
    %276 = arith.maximumf %274, %275 : vector<256x32xf32>
    %c0_183 = arith.constant 0 : index
    %c0_184 = arith.constant 0 : index
    %277 = vector.load %arg11[%c0_183, %c0_184] : memref<1x32xf32, #tpu.memory_space<vmem>>, vector<1x32xf32>
    %c24_185 = arith.constant 24 : index
    %c0_186 = arith.constant 0 : index
    %278 = vector.load %arg15[%c24_185, %c0_186] : memref<304x64xf32, #tpu.memory_space<vmem>>, vector<256x32xf32>
    tpu.vector_store %arg15[%c24_185, %c0_186], %276 {strides = array<i32>} : memref<304x64xf32, #tpu.memory_space<vmem>>, vector<256x32xf32>,
    %cst_187 = arith.constant 0.000000e+00 : f32
    %279 = vector.broadcast %cst_187 : f32 to vector<256x32xf32>
    %c7_188 = arith.constant 7 : index
    %c0_189 = arith.constant 0 : index
    %280 = vector.load %arg15[%c7_188, %c0_189] : memref<304x64xf32, #tpu.memory_space<vmem>>, vector<256x32xf32>
    %c0_190 = arith.constant 0 : index
    %c0_191 = arith.constant 0 : index
    %c0_192 = arith.constant 0 : index
    %281 = vector.load %arg7[%c0_190, %c0_191, %c0_192] : memref<3x256x1xf32, #tpu.memory_space<vmem>>, vector<1x256x1xf32>
    %282 = vector.shape_cast %281 : vector<1x256x1xf32> to vector<256x1xf32>
    %283 = vector.broadcast %282 : vector<256x1xf32> to vector<256x32xf32>
    %284 = arith.mulf %280, %283 : vector<256x32xf32>
    %285 = arith.truncf %284 : vector<256x32xf32> to vector<256x32xbf16>
    %c0_193 = arith.constant 0 : index
    %c0_194 = arith.constant 0 : index
    %c0_195 = arith.constant 0 : index
    %c0_196 = arith.constant 0 : index
    %286 = vector.load %arg10[%c0_193, %c0_194, %c0_195, %c0_196] : memref<3x3x32x32xbf16, #tpu.memory_space<vmem>>, vector<1x1x32x32xbf16>
    %287 = vector.shape_cast %286 : vector<1x1x32x32xbf16> to vector<32x32xbf16>
    %cst_197 = arith.constant dense<0.000000e+00> : vector<256x32xf32>
    %288 = tpu.matmul %285, %287, %cst_197 {dimension_numbers = #tpu.dot_dimension_numbers<[1], [0], [0], [1], [0, 0, 1, 1], [], []>} : vector<256x32xbf16>, vector<32x32xbf16>, vector<256x32xf32> -> vector<256x32xf32>
    %289 = arith.addf %279, %288 : vector<256x32xf32>
    %c8_198 = arith.constant 8 : index
    %c0_199 = arith.constant 0 : index
    %290 = vector.load %arg15[%c8_198, %c0_199] : memref<304x64xf32, #tpu.memory_space<vmem>>, vector<256x32xf32>
    %c1_200 = arith.constant 1 : index
    %c0_201 = arith.constant 0 : index
    %c0_202 = arith.constant 0 : index
    %291 = vector.load %arg7[%c1_200, %c0_201, %c0_202] : memref<3x256x1xf32, #tpu.memory_space<vmem>>, vector<1x256x1xf32>
    %292 = vector.shape_cast %291 : vector<1x256x1xf32> to vector<256x1xf32>
    %293 = vector.broadcast %292 : vector<256x1xf32> to vector<256x32xf32>
    %294 = arith.mulf %290, %293 : vector<256x32xf32>
    %295 = arith.truncf %294 : vector<256x32xf32> to vector<256x32xbf16>
    %c0_203 = arith.constant 0 : index
    %c1_204 = arith.constant 1 : index
    %c0_205 = arith.constant 0 : index
    %c0_206 = arith.constant 0 : index
    %296 = vector.load %arg10[%c0_203, %c1_204, %c0_205, %c0_206] : memref<3x3x32x32xbf16, #tpu.memory_space<vmem>>, vector<1x1x32x32xbf16>
    %297 = vector.shape_cast %296 : vector<1x1x32x32xbf16> to vector<32x32xbf16>
    %cst_207 = arith.constant dense<0.000000e+00> : vector<256x32xf32>
    %298 = tpu.matmul %295, %297, %cst_207 {dimension_numbers = #tpu.dot_dimension_numbers<[1], [0], [0], [1], [0, 0, 1, 1], [], []>} : vector<256x32xbf16>, vector<32x32xbf16>, vector<256x32xf32> -> vector<256x32xf32>
    %299 = arith.addf %289, %298 : vector<256x32xf32>
    %c9_208 = arith.constant 9 : index
    %c0_209 = arith.constant 0 : index
    %300 = vector.load %arg15[%c9_208, %c0_209] : memref<304x64xf32, #tpu.memory_space<vmem>>, vector<256x32xf32>
    %c2_210 = arith.constant 2 : index
    %c0_211 = arith.constant 0 : index
    %c0_212 = arith.constant 0 : index
    %301 = vector.load %arg7[%c2_210, %c0_211, %c0_212] : memref<3x256x1xf32, #tpu.memory_space<vmem>>, vector<1x256x1xf32>
    %302 = vector.shape_cast %301 : vector<1x256x1xf32> to vector<256x1xf32>
    %303 = vector.broadcast %302 : vector<256x1xf32> to vector<256x32xf32>
    %304 = arith.mulf %300, %303 : vector<256x32xf32>
    %305 = arith.truncf %304 : vector<256x32xf32> to vector<256x32xbf16>
    %c0_213 = arith.constant 0 : index
    %c2_214 = arith.constant 2 : index
    %c0_215 = arith.constant 0 : index
    %c0_216 = arith.constant 0 : index
    %306 = vector.load %arg10[%c0_213, %c2_214, %c0_215, %c0_216] : memref<3x3x32x32xbf16, #tpu.memory_space<vmem>>, vector<1x1x32x32xbf16>
    %307 = vector.shape_cast %306 : vector<1x1x32x32xbf16> to vector<32x32xbf16>
    %cst_217 = arith.constant dense<0.000000e+00> : vector<256x32xf32>
    %308 = tpu.matmul %305, %307, %cst_217 {dimension_numbers = #tpu.dot_dimension_numbers<[1], [0], [0], [1], [0, 0, 1, 1], [], []>} : vector<256x32xbf16>, vector<32x32xbf16>, vector<256x32xf32> -> vector<256x32xf32>
    %309 = arith.addf %299, %308 : vector<256x32xf32>
    %c23_218 = arith.constant 23 : index
    %c0_219 = arith.constant 0 : index
    %310 = vector.load %arg15[%c23_218, %c0_219] : memref<304x64xf32, #tpu.memory_space<vmem>>, vector<256x32xf32>
    %c0_220 = arith.constant 0 : index
    %c0_221 = arith.constant 0 : index
    %c0_222 = arith.constant 0 : index
    %311 = vector.load %arg7[%c0_220, %c0_221, %c0_222] : memref<3x256x1xf32, #tpu.memory_space<vmem>>, vector<1x256x1xf32>
    %312 = vector.shape_cast %311 : vector<1x256x1xf32> to vector<256x1xf32>
    %313 = vector.broadcast %312 : vector<256x1xf32> to vector<256x32xf32>
    %314 = arith.mulf %310, %313 : vector<256x32xf32>
    %315 = arith.truncf %314 : vector<256x32xf32> to vector<256x32xbf16>
    %c1_223 = arith.constant 1 : index
    %c0_224 = arith.constant 0 : index
    %c0_225 = arith.constant 0 : index
    %c0_226 = arith.constant 0 : index
    %316 = vector.load %arg10[%c1_223, %c0_224, %c0_225, %c0_226] : memref<3x3x32x32xbf16, #tpu.memory_space<vmem>>, vector<1x1x32x32xbf16>
    %317 = vector.shape_cast %316 : vector<1x1x32x32xbf16> to vector<32x32xbf16>
    %cst_227 = arith.constant dense<0.000000e+00> : vector<256x32xf32>
    %318 = tpu.matmul %315, %317, %cst_227 {dimension_numbers = #tpu.dot_dimension_numbers<[1], [0], [0], [1], [0, 0, 1, 1], [], []>} : vector<256x32xbf16>, vector<32x32xbf16>, vector<256x32xf32> -> vector<256x32xf32>
    %319 = arith.addf %309, %318 : vector<256x32xf32>
    %c24_228 = arith.constant 24 : index
    %c0_229 = arith.constant 0 : index
    %320 = vector.load %arg15[%c24_228, %c0_229] : memref<304x64xf32, #tpu.memory_space<vmem>>, vector<256x32xf32>
    %c1_230 = arith.constant 1 : index
    %c0_231 = arith.constant 0 : index
    %c0_232 = arith.constant 0 : index
    %321 = vector.load %arg7[%c1_230, %c0_231, %c0_232] : memref<3x256x1xf32, #tpu.memory_space<vmem>>, vector<1x256x1xf32>
    %322 = vector.shape_cast %321 : vector<1x256x1xf32> to vector<256x1xf32>
    %323 = vector.broadcast %322 : vector<256x1xf32> to vector<256x32xf32>
    %324 = arith.mulf %320, %323 : vector<256x32xf32>
    %325 = arith.truncf %324 : vector<256x32xf32> to vector<256x32xbf16>
    %c1_233 = arith.constant 1 : index
    %c1_234 = arith.constant 1 : index
    %c0_235 = arith.constant 0 : index
    %c0_236 = arith.constant 0 : index
    %326 = vector.load %arg10[%c1_233, %c1_234, %c0_235, %c0_236] : memref<3x3x32x32xbf16, #tpu.memory_space<vmem>>, vector<1x1x32x32xbf16>
    %327 = vector.shape_cast %326 : vector<1x1x32x32xbf16> to vector<32x32xbf16>
    %cst_237 = arith.constant dense<0.000000e+00> : vector<256x32xf32>
    %328 = tpu.matmul %325, %327, %cst_237 {dimension_numbers = #tpu.dot_dimension_numbers<[1], [0], [0], [1], [0, 0, 1, 1], [], []>} : vector<256x32xbf16>, vector<32x32xbf16>, vector<256x32xf32> -> vector<256x32xf32>
    %329 = arith.addf %319, %328 : vector<256x32xf32>
    %c25_238 = arith.constant 25 : index
    %c0_239 = arith.constant 0 : index
    %330 = vector.load %arg15[%c25_238, %c0_239] : memref<304x64xf32, #tpu.memory_space<vmem>>, vector<256x32xf32>
    %c2_240 = arith.constant 2 : index
    %c0_241 = arith.constant 0 : index
    %c0_242 = arith.constant 0 : index
    %331 = vector.load %arg7[%c2_240, %c0_241, %c0_242] : memref<3x256x1xf32, #tpu.memory_space<vmem>>, vector<1x256x1xf32>
    %332 = vector.shape_cast %331 : vector<1x256x1xf32> to vector<256x1xf32>
    %333 = vector.broadcast %332 : vector<256x1xf32> to vector<256x32xf32>
    %334 = arith.mulf %330, %333 : vector<256x32xf32>
    %335 = arith.truncf %334 : vector<256x32xf32> to vector<256x32xbf16>
    %c1_243 = arith.constant 1 : index
    %c2_244 = arith.constant 2 : index
    %c0_245 = arith.constant 0 : index
    %c0_246 = arith.constant 0 : index
    %336 = vector.load %arg10[%c1_243, %c2_244, %c0_245, %c0_246] : memref<3x3x32x32xbf16, #tpu.memory_space<vmem>>, vector<1x1x32x32xbf16>
    %337 = vector.shape_cast %336 : vector<1x1x32x32xbf16> to vector<32x32xbf16>
    %cst_247 = arith.constant dense<0.000000e+00> : vector<256x32xf32>
    %338 = tpu.matmul %335, %337, %cst_247 {dimension_numbers = #tpu.dot_dimension_numbers<[1], [0], [0], [1], [0, 0, 1, 1], [], []>} : vector<256x32xbf16>, vector<32x32xbf16>, vector<256x32xf32> -> vector<256x32xf32>
    %339 = arith.addf %329, %338 : vector<256x32xf32>
    %c39_248 = arith.constant 39 : index
    %c0_249 = arith.constant 0 : index
    %340 = vector.load %arg15[%c39_248, %c0_249] : memref<304x64xf32, #tpu.memory_space<vmem>>, vector<256x32xf32>
    %c0_250 = arith.constant 0 : index
    %c0_251 = arith.constant 0 : index
    %c0_252 = arith.constant 0 : index
    %341 = vector.load %arg7[%c0_250, %c0_251, %c0_252] : memref<3x256x1xf32, #tpu.memory_space<vmem>>, vector<1x256x1xf32>
    %342 = vector.shape_cast %341 : vector<1x256x1xf32> to vector<256x1xf32>
    %343 = vector.broadcast %342 : vector<256x1xf32> to vector<256x32xf32>
    %344 = arith.mulf %340, %343 : vector<256x32xf32>
    %345 = arith.truncf %344 : vector<256x32xf32> to vector<256x32xbf16>
    %c2_253 = arith.constant 2 : index
    %c0_254 = arith.constant 0 : index
    %c0_255 = arith.constant 0 : index
    %c0_256 = arith.constant 0 : index
    %346 = vector.load %arg10[%c2_253, %c0_254, %c0_255, %c0_256] : memref<3x3x32x32xbf16, #tpu.memory_space<vmem>>, vector<1x1x32x32xbf16>
    %347 = vector.shape_cast %346 : vector<1x1x32x32xbf16> to vector<32x32xbf16>
    %cst_257 = arith.constant dense<0.000000e+00> : vector<256x32xf32>
    %348 = tpu.matmul %345, %347, %cst_257 {dimension_numbers = #tpu.dot_dimension_numbers<[1], [0], [0], [1], [0, 0, 1, 1], [], []>} : vector<256x32xbf16>, vector<32x32xbf16>, vector<256x32xf32> -> vector<256x32xf32>
    %349 = arith.addf %339, %348 : vector<256x32xf32>
    %c40_258 = arith.constant 40 : index
    %c0_259 = arith.constant 0 : index
    %350 = vector.load %arg15[%c40_258, %c0_259] : memref<304x64xf32, #tpu.memory_space<vmem>>, vector<256x32xf32>
    %c1_260 = arith.constant 1 : index
    %c0_261 = arith.constant 0 : index
    %c0_262 = arith.constant 0 : index
    %351 = vector.load %arg7[%c1_260, %c0_261, %c0_262] : memref<3x256x1xf32, #tpu.memory_space<vmem>>, vector<1x256x1xf32>
    %352 = vector.shape_cast %351 : vector<1x256x1xf32> to vector<256x1xf32>
    %353 = vector.broadcast %352 : vector<256x1xf32> to vector<256x32xf32>
    %354 = arith.mulf %350, %353 : vector<256x32xf32>
    %355 = arith.truncf %354 : vector<256x32xf32> to vector<256x32xbf16>
    %c2_263 = arith.constant 2 : index
    %c1_264 = arith.constant 1 : index
    %c0_265 = arith.constant 0 : index
    %c0_266 = arith.constant 0 : index
    %356 = vector.load %arg10[%c2_263, %c1_264, %c0_265, %c0_266] : memref<3x3x32x32xbf16, #tpu.memory_space<vmem>>, vector<1x1x32x32xbf16>
    %357 = vector.shape_cast %356 : vector<1x1x32x32xbf16> to vector<32x32xbf16>
    %cst_267 = arith.constant dense<0.000000e+00> : vector<256x32xf32>
    %358 = tpu.matmul %355, %357, %cst_267 {dimension_numbers = #tpu.dot_dimension_numbers<[1], [0], [0], [1], [0, 0, 1, 1], [], []>} : vector<256x32xbf16>, vector<32x32xbf16>, vector<256x32xf32> -> vector<256x32xf32>
    %359 = arith.addf %349, %358 : vector<256x32xf32>
    %c41_268 = arith.constant 41 : index
    %c0_269 = arith.constant 0 : index
    %360 = vector.load %arg15[%c41_268, %c0_269] : memref<304x64xf32, #tpu.memory_space<vmem>>, vector<256x32xf32>
    %c2_270 = arith.constant 2 : index
    %c0_271 = arith.constant 0 : index
    %c0_272 = arith.constant 0 : index
    %361 = vector.load %arg7[%c2_270, %c0_271, %c0_272] : memref<3x256x1xf32, #tpu.memory_space<vmem>>, vector<1x256x1xf32>
    %362 = vector.shape_cast %361 : vector<1x256x1xf32> to vector<256x1xf32>
    %363 = vector.broadcast %362 : vector<256x1xf32> to vector<256x32xf32>
    %364 = arith.mulf %360, %363 : vector<256x32xf32>
    %365 = arith.truncf %364 : vector<256x32xf32> to vector<256x32xbf16>
    %c2_273 = arith.constant 2 : index
    %c2_274 = arith.constant 2 : index
    %c0_275 = arith.constant 0 : index
    %c0_276 = arith.constant 0 : index
    %366 = vector.load %arg10[%c2_273, %c2_274, %c0_275, %c0_276] : memref<3x3x32x32xbf16, #tpu.memory_space<vmem>>, vector<1x1x32x32xbf16>
    %367 = vector.shape_cast %366 : vector<1x1x32x32xbf16> to vector<32x32xbf16>
    %cst_277 = arith.constant dense<0.000000e+00> : vector<256x32xf32>
    %368 = tpu.matmul %365, %367, %cst_277 {dimension_numbers = #tpu.dot_dimension_numbers<[1], [0], [0], [1], [0, 0, 1, 1], [], []>} : vector<256x32xbf16>, vector<32x32xbf16>, vector<256x32xf32> -> vector<256x32xf32>
    %369 = arith.addf %359, %368 : vector<256x32xf32>
    %370 = vector.broadcast %277 : vector<1x32xf32> to vector<256x32xf32>
    %371 = arith.addf %369, %370 : vector<256x32xf32>
    %cst_278 = arith.constant 0.000000e+00 : f32
    %372 = vector.broadcast %cst_278 : f32 to vector<256x32xf32>
    %373 = arith.maximumf %371, %372 : vector<256x32xf32>
    %c0_279 = arith.constant 0 : index
    %c0_280 = arith.constant 0 : index
    %374 = vector.load %arg12[%c0_279, %c0_280] : memref<1x32xf32, #tpu.memory_space<vmem>>, vector<1x32xf32>
    %cst_281 = arith.constant dense<0.000000e+00> : vector<1x256xf32>
    %375 = tpu.matmul %374, %373, %cst_281 {dimension_numbers = #tpu.dot_dimension_numbers<[1], [1], [0], [0], [0, 0, 1, 0], [], []>} : vector<1x32xf32>, vector<256x32xf32>, vector<1x256xf32> -> vector<1x256xf32>
    %c0_282 = arith.constant 0 : index
    %c0_283 = arith.constant 0 : index
    %376 = vector.load %arg13[%c0_282, %c0_283] : memref<1x1xf32, #tpu.memory_space<vmem>>, vector<1x1xf32>
    %377 = vector.broadcast %376 : vector<1x1xf32> to vector<1x256xf32>
    %378 = arith.addf %375, %377 : vector<1x256xf32>
    %c0_284 = arith.constant 0 : index
    %c0_285 = arith.constant 0 : index
    %c0_286 = arith.constant 0 : index
    %379 = vector.load %arg14[%c0_284, %c0_285, %c0_286] : memref<1x1x256xf32, #tpu.memory_space<vmem>>, vector<1x1x256xf32>
    %380 = vector.shape_cast %379 : vector<1x1x256xf32> to vector<1x256xf32>
    %381 = vector.shape_cast %378 : vector<1x256xf32> to vector<1x1x256xf32>
    tpu.vector_store %arg14[%c0_284, %c0_285, %c0_286], %381 {strides = array<i32>} : memref<1x1x256xf32, #tpu.memory_space<vmem>>, vector<1x1x256xf32>,
    return
  }
  func.func @transform_0(%arg0: i32) -> (i32, i32, i32) {
    %c0_i32 = arith.constant 0 : i32
    %c0_i32_0 = arith.constant 0 : i32
    %c0_i32_1 = arith.constant 0 : i32
    %c0_i32_2 = arith.constant 0 : i32
    return %c0_i32, %c0_i32_0, %c0_i32_1 : i32, i32, i32
  }
  func.func @transform_1(%arg0: i32) -> (i32, i32, i32) {
    %c0_i32 = arith.constant 0 : i32
    %c0_i32_0 = arith.constant 0 : i32
    %c0_i32_1 = arith.constant 0 : i32
    %c0_i32_2 = arith.constant 0 : i32
    return %c0_i32, %c0_i32_0, %c0_i32_1 : i32, i32, i32
  }
  func.func @transform_2(%arg0: i32) -> (i32, i32, i32) {
    %c0_i32 = arith.constant 0 : i32
    %c0_i32_0 = arith.constant 0 : i32
    %c0_i32_1 = arith.constant 0 : i32
    %c0_i32_2 = arith.constant 0 : i32
    return %c0_i32, %c0_i32_0, %c0_i32_1 : i32, i32, i32
  }
  func.func @transform_3(%arg0: i32) -> (i32, i32, i32) {
    %c0_i32 = arith.constant 0 : i32
    %c0_i32_0 = arith.constant 0 : i32
    %c0_i32_1 = arith.constant 0 : i32
    %c0_i32_2 = arith.constant 0 : i32
    return %c0_i32, %c0_i32_0, %c0_i32_1 : i32, i32, i32
  }
  func.func @transform_4(%arg0: i32) -> (i32, i32, i32) {
    %c0_i32 = arith.constant 0 : i32
    %c0_i32_0 = arith.constant 0 : i32
    %c0_i32_1 = arith.constant 0 : i32
    %c0_i32_2 = arith.constant 0 : i32
    return %c0_i32, %c0_i32_0, %c0_i32_1 : i32, i32, i32
  }
  func.func @transform_5(%arg0: i32) -> (i32, i32) {
    %c0_i32 = arith.constant 0 : i32
    %c0_i32_0 = arith.constant 0 : i32
    %c0_i32_1 = arith.constant 0 : i32
    return %c0_i32, %c0_i32_0 : i32, i32
  }
  func.func @transform_6(%arg0: i32) -> (i32, i32, i32) {
    %c0_i32 = arith.constant 0 : i32
    %c0_i32_0 = arith.constant 0 : i32
    %c0_i32_1 = arith.constant 0 : i32
    %c0_i32_2 = arith.constant 0 : i32
    return %c0_i32, %c0_i32_0, %c0_i32_1 : i32, i32, i32
  }
  func.func @transform_7(%arg0: i32) -> (i32, i32, i32, i32) {
    %c0_i32 = arith.constant 0 : i32
    %c0_i32_0 = arith.constant 0 : i32
    %c0_i32_1 = arith.constant 0 : i32
    %c0_i32_2 = arith.constant 0 : i32
    %c0_i32_3 = arith.constant 0 : i32
    return %c0_i32, %c0_i32_0, %c0_i32_1, %c0_i32_2 : i32, i32, i32, i32
  }
  func.func @transform_8(%arg0: i32) -> (i32, i32) {
    %c0_i32 = arith.constant 0 : i32
    %c0_i32_0 = arith.constant 0 : i32
    %c0_i32_1 = arith.constant 0 : i32
    return %c0_i32, %c0_i32_0 : i32, i32
  }
  func.func @transform_9(%arg0: i32) -> (i32, i32, i32, i32) {
    %c0_i32 = arith.constant 0 : i32
    %c0_i32_0 = arith.constant 0 : i32
    %c0_i32_1 = arith.constant 0 : i32
    %c0_i32_2 = arith.constant 0 : i32
    %c0_i32_3 = arith.constant 0 : i32
    return %c0_i32, %c0_i32_0, %c0_i32_1, %c0_i32_2 : i32, i32, i32, i32
  }
  func.func @transform_10(%arg0: i32) -> (i32, i32) {
    %c0_i32 = arith.constant 0 : i32
    %c0_i32_0 = arith.constant 0 : i32
    %c0_i32_1 = arith.constant 0 : i32
    return %c0_i32, %c0_i32_0 : i32, i32
  }
  func.func @transform_11(%arg0: i32) -> (i32, i32) {
    %c0_i32 = arith.constant 0 : i32
    %c0_i32_0 = arith.constant 0 : i32
    %c0_i32_1 = arith.constant 0 : i32
    return %c0_i32, %c0_i32_0 : i32, i32
  }
  func.func @transform_12(%arg0: i32) -> (i32, i32) {
    %c0_i32 = arith.constant 0 : i32
    %c0_i32_0 = arith.constant 0 : i32
    %c0_i32_1 = arith.constant 0 : i32
    return %c0_i32, %c0_i32_0 : i32, i32
  }
  func.func @transform_13(%arg0: i32) -> (i32, i32, i32) {
    %c0_i32 = arith.constant 0 : i32
    %c0_i32_0 = arith.constant 0 : i32
    %c0_i32_1 = arith.constant 0 : i32
    return %arg0, %c0_i32, %c0_i32_0 : i32, i32, i32
  }
}

</mosaic_0001>

<llo_original>
// kernel: depth_estimator_forward.2
$region0: #{depth_estimator_forward.2}
  #allocation0 [shape = 'u32[]', space=smem, size = 0x4, offset = 0x4, fixed_abs, tag = 'smem constant byte address 0x4 - core index']
  #allocation1 [shape = 'u32[72,128]{1,0:T(1,128)}', space=vmem, size = 0x9000, scoped, tag = 'internal scratch']
  #allocation2 [shape = 'f32[2,17,32]{2,1,0:T(8,128)}', space=vmem, size = 0x6000, scoped, tag = 'scratch operand']
  %s0 = inlined_call_operand.vmem [shape: f32[2,17,32], index: 0, kind: input, shape index: {}]
  %s1 = inlined_call_operand.vmem [shape: bf16[24,32,96], index: 1, kind: input, shape index: {}]
  %s2 = inlined_call_operand.vmem [shape: bf16[24,32,32], index: 2, kind: input, shape index: {}]
  %s3 = inlined_call_operand.vmem [shape: bf16[24,32,128], index: 3, kind: input, shape index: {}]
  %s4 = inlined_call_operand.vmem [shape: bf16[24,128,32], index: 4, kind: input, shape index: {}]
  %s5 = inlined_call_operand.vmem [shape: f32[24,10,128], index: 5, kind: input, shape index: {}]
  %s6 = inlined_call_operand.vmem [shape: f32[4,2,17,32], index: 6, kind: output, shape index: {}]
  %s7 = sld [smem:[#allocation0]]
  $region93: #{depth_estimator_forward.2} parent=0
    _
  %s9 = ssub.s32 1, %s7
  %s10 = scalar_select 0, %s9, %s7
  loop: start=0, step=1, limit=26
  $region2: #{depth_estimator_forward.2} parent=0 // loop_pre_header
    _
  $region3: #{depth_estimator_forward.2} parent=0 // loop_header
    %s12 = sphi 0, %s16
    %p13 = scmp.ge.s32.totalorder %s12, 26
    %s20 = sphi 0, %s20
    %s22 = sphi 0, %s20
    %s23 = sphi 0, %s22
    %s37 = sphi 0, %s23
    %s43 = sphi 0, %s45
    %s46 = sphi 0, %s43
    %s47 = sphi 0, %s46
    %s63 = sphi 0, %s47
    %s69 = sphi 0, %s71
    %s72 = sphi 0, %s69
    %s73 = sphi 0, %s72
    %s89 = sphi 0, %s73
    %s95 = sphi 0, %s97
    %s98 = sphi 0, %s95
    %s99 = sphi 0, %s98
    %s115 = sphi 0, %s99
    %s121 = sphi 0, %s123
    %s124 = sphi 0, %s121
    %s125 = sphi 0, %s124
    %s141 = sphi 0, %s125
    %s147 = sphi 0, %s149
    %s150 = sphi 0, %s147
    %s151 = sphi 0, %s150
    %s167 = sphi 0, %s151
    %s171 = sphi 0, %s171
    %s173 = sphi 0, %s171
    %s174 = sphi 0, %s173
    %s188 = sphi 0, %s174
  $region4: #{depth_estimator_forward.2} parent=0 // loop_header_branch
    %15 = sbr.rel (%p13) target = $region8
  $region5: #{depth_estimator_forward.2} parent=0 // loop_body
    %s17 = ssub.s32 %s12, 1
    %s18 = ssub.s32 %s12, 2
    %s19 = sadd.s32 %s12, 1
    %s21 = sadd.s32 %s20, 1
    %p24 = scmp.eq.s32.totalorder %s12, 23
    %p25 = scmp.ne.s32.totalorder %s20, %s22
    %p26 = scmp.eq.s32.totalorder %s12, 0
    %p27 = por %p25, %p26
    %p28 = scmp.ne.s32.totalorder %s20, %s22
    %p29 = scmp.eq.s32.totalorder %s17, 23
    %p30 = por %p28, %p29
    %p31 = scmp.ne.s32.totalorder %s22, %s23
    %p32 = scmp.eq.s32.totalorder %s17, 0
    %p33 = por %p31, %p32
    %p34 = scmp.ne.s32.totalorder %s22, %s23
    %p35 = scmp.eq.s32.totalorder %s18, 23
    %p36 = por %p34, %p35
    %p38 = scmp.ne.s32.totalorder %s23, %s37
    %p39 = scmp.eq.s32.totalorder %s18, 0
    %p40 = por %p38, %p39
    %s41 = ssub.s32 %s12, %s19
    %p42 = scmp.eq.s32.totalorder %s41, 0
    %s44 = sadd.s32 %s43, 1
    %s45 = scalar_select %p42, %s43, %s44
    %p48 = pneg %p42
    %p49 = scmp.eq.s32.totalorder %s12, 23
    %p50 = por %p48, %p49
    %p51 = scmp.ne.s32.totalorder %s43, %s46
    %p52 = scmp.eq.s32.totalorder %s12, 0
    %p53 = por %p51, %p52
    %p54 = scmp.ne.s32.totalorder %s43, %s46
    %p55 = scmp.eq.s32.totalorder %s17, 23
    %p56 = por %p54, %p55
    %p57 = scmp.ne.s32.totalorder %s46, %s47
    %p58 = scmp.eq.s32.totalorder %s17, 0
    %p59 = por %p57, %p58
    %p60 = scmp.ne.s32.totalorder %s46, %s47
    %p61 = scmp.eq.s32.totalorder %s18, 23
    %p62 = por %p60, %p61
    %p64 = scmp.ne.s32.totalorder %s47, %s63
    %p65 = scmp.eq.s32.totalorder %s18, 0
    %p66 = por %p64, %p65
    %s67 = ssub.s32 %s12, %s19
    %p68 = scmp.eq.s32.totalorder %s67, 0
    %s70 = sadd.s32 %s69, 1
    %s71 = scalar_select %p68, %s69, %s70
    %p74 = pneg %p68
    %p75 = scmp.eq.s32.totalorder %s12, 23
    %p76 = por %p74, %p75
    %p77 = scmp.ne.s32.totalorder %s69, %s72
    %p78 = scmp.eq.s32.totalorder %s12, 0
    %p79 = por %p77, %p78
    %p80 = scmp.ne.s32.totalorder %s69, %s72
    %p81 = scmp.eq.s32.totalorder %s17, 23
    %p82 = por %p80, %p81
    %p83 = scmp.ne.s32.totalorder %s72, %s73
    %p84 = scmp.eq.s32.totalorder %s17, 0
    %p85 = por %p83, %p84
    %p86 = scmp.ne.s32.totalorder %s72, %s73
    %p87 = scmp.eq.s32.totalorder %s18, 23
    %p88 = por %p86, %p87
    %p90 = scmp.ne.s32.totalorder %s73, %s89
    %p91 = scmp.eq.s32.totalorder %s18, 0
    %p92 = por %p90, %p91
    %s93 = ssub.s32 %s12, %s19
    %p94 = scmp.eq.s32.totalorder %s93, 0
    %s96 = sadd.s32 %s95, 1
    %s97 = scalar_select %p94, %s95, %s96
    %p100 = pneg %p94
    %p101 = scmp.eq.s32.totalorder %s12, 23
    %p102 = por %p100, %p101
    %p103 = scmp.ne.s32.totalorder %s95, %s98
    %p104 = scmp.eq.s32.totalorder %s12, 0
    %p105 = por %p103, %p104
    %p106 = scmp.ne.s32.totalorder %s95, %s98
    %p107 = scmp.eq.s32.totalorder %s17, 23
    %p108 = por %p106, %p107
    %p109 = scmp.ne.s32.totalorder %s98, %s99
    %p110 = scmp.eq.s32.totalorder %s17, 0
    %p111 = por %p109, %p110
    %p112 = scmp.ne.s32.totalorder %s98, %s99
    %p113 = scmp.eq.s32.totalorder %s18, 23
    %p114 = por %p112, %p113
    %p116 = scmp.ne.s32.totalorder %s99, %s115
    %p117 = scmp.eq.s32.totalorder %s18, 0
    %p118 = por %p116, %p117
    %s119 = ssub.s32 %s12, %s19
    %p120 = scmp.eq.s32.totalorder %s119, 0
    %s122 = sadd.s32 %s121, 1
    %s123 = scalar_select %p120, %s121, %s122
    %p126 = pneg %p120
    %p127 = scmp.eq.s32.totalorder %s12, 23
    %p128 = por %p126, %p127
    %p129 = scmp.ne.s32.totalorder %s121, %s124
    %p130 = scmp.eq.s32.totalorder %s12, 0
    %p131 = por %p129, %p130
    %p132 = scmp.ne.s32.totalorder %s121, %s124
    %p133 = scmp.eq.s32.totalorder %s17, 23
    %p134 = por %p132, %p133
    %p135 = scmp.ne.s32.totalorder %s124, %s125
    %p136 = scmp.eq.s32.totalorder %s17, 0
    %p137 = por %p135, %p136
    %p138 = scmp.ne.s32.totalorder %s124, %s125
    %p139 = scmp.eq.s32.totalorder %s18, 23
    %p140 = por %p138, %p139
    %p142 = scmp.ne.s32.totalorder %s125, %s141
    %p143 = scmp.eq.s32.totalorder %s18, 0
    %p144 = por %p142, %p143
    %s145 = ssub.s32 %s12, %s19
    %p146 = scmp.eq.s32.totalorder %s145, 0
    %s148 = sadd.s32 %s147, 1
    %s149 = scalar_select %p146, %s147, %s148
    %p152 = pneg %p146
    %p153 = scmp.eq.s32.totalorder %s12, 23
    %p154 = por %p152, %p153
    %p155 = scmp.ne.s32.totalorder %s147, %s150
    %p156 = scmp.eq.s32.totalorder %s12, 0
    %p157 = por %p155, %p156
    %p158 = scmp.ne.s32.totalorder %s147, %s150
    %p159 = scmp.eq.s32.totalorder %s17, 23
    %p160 = por %p158, %p159
    %p161 = scmp.ne.s32.totalorder %s150, %s151
    %p162 = scmp.eq.s32.totalorder %s17, 0
    %p163 = por %p161, %p162
    %p164 = scmp.ne.s32.totalorder %s150, %s151
    %p165 = scmp.eq.s32.totalorder %s18, 23
    %p166 = por %p164, %p165
    %p168 = scmp.ne.s32.totalorder %s151, %s167
    %p169 = scmp.eq.s32.totalorder %s18, 0
    %p170 = por %p168, %p169
    %s172 = sadd.s32 %s171, 1
    %p175 = scmp.eq.s32.totalorder %s12, 23
    %p176 = scmp.ne.s32.totalorder %s171, %s173
    %p177 = scmp.eq.s32.totalorder %s12, 0
    %p178 = por %p176, %p177
    %p179 = scmp.ne.s32.totalorder %s171, %s173
    %p180 = scmp.eq.s32.totalorder %s17, 23
    %p181 = por %p179, %p180
    %p182 = scmp.ne.s32.totalorder %s173, %s174
    %p183 = scmp.eq.s32.totalorder %s17, 0
    %p184 = por %p182, %p183
    %p185 = scmp.ne.s32.totalorder %s173, %s174
    %p186 = scmp.eq.s32.totalorder %s18, 23
    %p187 = por %p185, %p186
    %p189 = scmp.ne.s32.totalorder %s174, %s188
    %p190 = scmp.eq.s32.totalorder %s18, 0
    %p191 = por %p189, %p190
    %p192 = scmp.le.s32.totalorder 1, %s12
    %p193 = scmp.lt.s32.totalorder %s12, 25
    %p194 = pnand %p192, %p193
    %p195 = pneg %p194
    // Predicated region
    $region9: #{depth_estimator_forward.2} parent=5 // pred_check
      _
    $region10: #{depth_estimator_forward.2} parent=5 // pred_check_branch
      %197 = sbr.rel (%p194) target = $region12
    $region11: #{depth_estimator_forward.2} parent=5 // pred_region
      %s198 = ssub.s32 %s12, 1
      // Predicated region
      $region13: #{depth_estimator_forward.2} parent=11 // pred_check
        %p199 = pneg %p33
      $region14: #{depth_estimator_forward.2} parent=11 // pred_check_branch
        %201 = sbr.rel (%p199) target = $region16
      $region15: #{depth_estimator_forward.2} parent=11 // pred_region
        _
      $region16: #{depth_estimator_forward.2} parent=11 // pred_fallthru
        _
    $region12: #{depth_estimator_forward.2} parent=5 // pred_fallthru
      _
    %p202 = scmp.lt.s32.totalorder %s12, 24
    // Predicated region
    $region17: #{depth_estimator_forward.2} parent=5 // pred_check
      %p203 = pneg %p202
    $region18: #{depth_estimator_forward.2} parent=5 // pred_check_branch
      %205 = sbr.rel (%p203) target = $region20
    $region19: #{depth_estimator_forward.2} parent=5 // pred_region
      // Predicated region
      $region21: #{depth_estimator_forward.2} parent=19 // pred_check
        %p206 = pneg %p53
      $region22: #{depth_estimator_forward.2} parent=19 // pred_check_branch
        %208 = sbr.rel (%p206) target = $region24
      $region23: #{depth_estimator_forward.2} parent=19 // pred_region
        %p209 = scmp.lt.s32.totalorder %s12, 23
        %s210 = scalar_select %p209, %s12, 23
        %s211 = smul.addr %s210, 4
        %s212 = smul.addr %s211, 4
        %s213 = scalar_lea.vmem %s1, %s212
      $region24: #{depth_estimator_forward.2} parent=19 // pred_fallthru
        _
      // Predicated region
      $region25: #{depth_estimator_forward.2} parent=19 // pred_check
        %p214 = pneg %p79
      $region26: #{depth_estimator_forward.2} parent=19 // pred_check_branch
        %216 = sbr.rel (%p214) target = $region28
      $region27: #{depth_estimator_forward.2} parent=19 // pred_region
        %p217 = scmp.lt.s32.totalorder %s12, 23
        %s218 = scalar_select %p217, %s12, 23
        %s219 = smul.addr %s218, 4
        %s220 = smul.addr %s219, 4
        %s221 = scalar_lea.vmem %s2, %s220
      $region28: #{depth_estimator_forward.2} parent=19 // pred_fallthru
        _
      // Predicated region
      $region29: #{depth_estimator_forward.2} parent=19 // pred_check
        %p222 = pneg %p105
      $region30: #{depth_estimator_forward.2} parent=19 // pred_check_branch
        %224 = sbr.rel (%p222) target = $region32
      $region31: #{depth_estimator_forward.2} parent=19 // pred_region
        %p225 = scmp.lt.s32.totalorder %s12, 23
        %s226 = scalar_select %p225, %s12, 23
        %s227 = smul.addr %s226, 4
        %s228 = smul.addr %s227, 4
        %s229 = scalar_lea.vmem %s3, %s228
      $region32: #{depth_estimator_forward.2} parent=19 // pred_fallthru
        _
      // Predicated region
      $region33: #{depth_estimator_forward.2} parent=19 // pred_check
        %p230 = pneg %p131
      $region34: #{depth_estimator_forward.2} parent=19 // pred_check_branch
        %232 = sbr.rel (%p230) target = $region36
      $region35: #{depth_estimator_forward.2} parent=19 // pred_region
        %p233 = scmp.lt.s32.totalorder %s12, 23
        %s234 = scalar_select %p233, %s12, 23
        %s235 = smul.addr %s234, 16
        %s236 = smul.addr %s235, 4
        %s237 = scalar_lea.vmem %s4, %s236
      $region36: #{depth_estimator_forward.2} parent=19 // pred_fallthru
        _
      // Predicated region
      $region37: #{depth_estimator_forward.2} parent=19 // pred_check
        %p238 = pneg %p157
      $region38: #{depth_estimator_forward.2} parent=19 // pred_check_branch
        %240 = sbr.rel (%p238) target = $region40
      $region39: #{depth_estimator_forward.2} parent=19 // pred_region
        %p241 = scmp.lt.s32.totalorder %s12, 23
        %s242 = scalar_select %p241, %s12, 23
        %s243 = smul.addr %s242, 2
        %s244 = smul.addr %s243, 8
        %s245 = scalar_lea.vmem %s5, %s244
      $region40: #{depth_estimator_forward.2} parent=19 // pred_fallthru
        _
    $region20: #{depth_estimator_forward.2} parent=5 // pred_fallthru
      _
    %p246 = scmp.le.s32.totalorder 1, %s12
    %p247 = scmp.lt.s32.totalorder %s12, 25
    %p248 = pnand %p246, %p247
    %p249 = pneg %p248
    // Predicated region
    $region41: #{depth_estimator_forward.2} parent=5 // pred_check
      _
    $region42: #{depth_estimator_forward.2} parent=5 // pred_check_branch
      %251 = sbr.rel (%p248) target = $region44
    $region43: #{depth_estimator_forward.2} parent=5 // pred_region
      %s252 = ssub.s32 %s12, 1
      %p253 = pneg %p33
      %p254 = pneg %p30
      %p255 = scmp.lt.s32.totalorder %s17, 23
      %s256 = scalar_select %p255, %s17, 23
      %s257 = smul.addr %s256, 4
      %s258 = smul.addr %s257, 4
      %s259 = scalar_lea.vmem %s1, %s258
      %p260 = pneg %p59
      %p261 = pneg %p56
      %p262 = scmp.lt.s32.totalorder %s17, 23
      %s263 = scalar_select %p262, %s17, 23
      %s264 = smul.addr %s263, 4
      %s265 = smul.addr %s264, 4
      %s266 = scalar_lea.vmem %s2, %s265
      %p267 = pneg %p85
      %p268 = pneg %p82
      %p269 = scmp.lt.s32.totalorder %s17, 23
      %s270 = scalar_select %p269, %s17, 23
      %s271 = smul.addr %s270, 4
      %s272 = smul.addr %s271, 4
      %s273 = scalar_lea.vmem %s3, %s272
      %p274 = pneg %p111
      %p275 = pneg %p108
      %p276 = scmp.lt.s32.totalorder %s17, 23
      %s277 = scalar_select %p276, %s17, 23
      %s278 = smul.addr %s277, 16
      %s279 = smul.addr %s278, 4
      %s280 = scalar_lea.vmem %s4, %s279
      %p281 = pneg %p137
      %p282 = pneg %p134
      %p283 = scmp.lt.s32.totalorder %s17, 23
      %s284 = scalar_select %p283, %s17, 23
      %s285 = smul.addr %s284, 2
      %s286 = smul.addr %s285, 8
      %s287 = scalar_lea.vmem %s5, %s286
      %p288 = pneg %p163
      %p289 = pneg %p160
      %p290 = pneg %p184
      %p291 = pneg %p181
      %p292 = scmp.lt.s32.totalorder %s17, 23
      %s293 = scalar_select %p292, %s17, 23
      %s294 = smul.addr %s293, 4
      %s295 = smul.addr %s294, 4
      %s296 = scalar_lea.vmem %s1, %s295
      %p297 = scmp.lt.s32.totalorder %s17, 23
      %s298 = scalar_select %p297, %s17, 23
      %s299 = smul.addr %s298, 4
      %s300 = smul.addr %s299, 4
      %s301 = scalar_lea.vmem %s2, %s300
      %p302 = scmp.lt.s32.totalorder %s17, 23
      %s303 = scalar_select %p302, %s17, 23
      %s304 = smul.addr %s303, 4
      %s305 = smul.addr %s304, 4
      %s306 = scalar_lea.vmem %s3, %s305
      %p307 = scmp.lt.s32.totalorder %s17, 23
      %s308 = scalar_select %p307, %s17, 23
      %s309 = smul.addr %s308, 16
      %s310 = smul.addr %s309, 4
      %s311 = scalar_lea.vmem %s4, %s310
      %p312 = scmp.lt.s32.totalorder %s17, 23
      %s313 = scalar_select %p312, %s17, 23
      %s314 = smul.addr %s313, 2
      %s315 = smul.addr %s314, 8
      %s316 = scalar_lea.vmem %s5, %s315
      %p318 = scmp.eq.s32.totalorder %s17, 0
      // Predicated region
      $region45: #{depth_estimator_forward.2} parent=43 // pred_check
        %p319 = pneg %p318
      $region46: #{depth_estimator_forward.2} parent=43 // pred_check_branch
        %321 = sbr.rel (%p319) target = $region48
      $region47: #{depth_estimator_forward.2} parent=43 // pred_region
        %v322 = vld [vmem:[%s0] sm:$0xff]
        %v323 = vld [vmem:[%s0 + $0x8] sm:$0xff]
        %v324 = vld [vmem:[%s0 + $0x10] sm:$0x1]
        %v325 = vld [vmem:[%s0 + $0x18] sm:$0xff]
        %v326 = vld [vmem:[%s0 + $0x20] sm:$0xff]
        %v327 = vld [vmem:[%s0 + $0x28] sm:$0x1]
        %vm328 = vcmask 261120
        %329 = vst.msk [vmem:[#allocation2] sm:$0xff] %vm328, %v322
        %330 = vst.msk [vmem:[#allocation2 + $0x8] sm:$0xff] %vm328, %v323
        %vm331 = vcmask 253952
        %332 = vst.msk [vmem:[#allocation2 + $0x10] sm:$0x1] %vm331, %v324
        %333 = vst.msk [vmem:[#allocation2 + $0x18] sm:$0xff] %vm328, %v325
        %334 = vst.msk [vmem:[#allocation2 + $0x20] sm:$0xff] %vm328, %v326
        %335 = vst.msk [vmem:[#allocation2 + $0x28] sm:$0x1] %vm331, %v327
      $region48: #{depth_estimator_forward.2} parent=43 // pred_fallthru
        _
      %v336 = vld [vmem:[%s316] sm:$0xff]
      %v337 = vld [vmem:[%s316 + $0x8] sm:$0x3]
      %v338 = vld [vmem:[%s296] sm:$0xf]
      %v339 = vld [vmem:[%s296 + $0x4] sm:$0xf]
      %v340 = vld [vmem:[%s296 + $0x8] sm:$0xf]
      %v341 = vld [vmem:[%s296 + $0xc] sm:$0xf]
      %v342 = vld [vmem:[%s301] sm:$0xf]
      %v343 = vld [vmem:[%s301 + $0x4] sm:$0xf]
      %v344 = vld [vmem:[%s301 + $0x8] sm:$0xf]
      %v345 = vld [vmem:[%s301 + $0xc] sm:$0xf]
      %v346 = vld [vmem:[%s306] sm:$0xf]
      %v347 = vld [vmem:[%s306 + $0x4] sm:$0xf]
      %v348 = vld [vmem:[%s306 + $0x8] sm:$0xf]
      %v349 = vld [vmem:[%s306 + $0xc] sm:$0xf]
      %v350 = vld [vmem:[%s311] sm:$0xf]
      %v351 = vld [vmem:[%s311 + $0x4] sm:$0xf]
      %v352 = vld [vmem:[%s311 + $0x8] sm:$0xf]
      %v353 = vld [vmem:[%s311 + $0xc] sm:$0xf]
      %v354 = vld [vmem:[%s311 + $0x10] sm:$0xf]
      %v355 = vld [vmem:[%s311 + $0x14] sm:$0xf]
      %v356 = vld [vmem:[%s311 + $0x18] sm:$0xf]
      %v357 = vld [vmem:[%s311 + $0x1c] sm:$0xf]
      %v358 = vld [vmem:[%s311 + $0x20] sm:$0xf]
      %v359 = vld [vmem:[%s311 + $0x24] sm:$0xf]
      %v360 = vld [vmem:[%s311 + $0x28] sm:$0xf]
      %v361 = vld [vmem:[%s311 + $0x2c] sm:$0xf]
      %v362 = vld [vmem:[%s311 + $0x30] sm:$0xf]
      %v363 = vld [vmem:[%s311 + $0x34] sm:$0xf]
      %v364 = vld [vmem:[%s311 + $0x38] sm:$0xf]
      %v365 = vld [vmem:[%s311 + $0x3c] sm:$0xf]
      %v366 = vld [vmem:[#allocation2] sm:$0xff]
      %v367 = vld [vmem:[#allocation2 + $0x8] sm:$0xff]
      %v368 = vld [vmem:[#allocation2 + $0x10] sm:$0x1]
      %vm369 = vcmask 261120
      %v370 = vsel %vm369, %v366, 0.0
      %371 = vadd.xlane.f32.xlu0 %v370
      %v372 = vpop.xlane.xlu0 %371
      %v373 = vsel %vm369, %v367, 0.0
      %374 = vadd.xlane.f32.xlu0 %v373
      %v375 = vpop.xlane.xlu0 %374
      %vm376 = vcmask 253952
      %v377 = vsel %vm376, %v368, 0.0
      %378 = vadd.xlane.f32.xlu0 %v377
      %v379 = vpop.xlane.xlu0 %378
      %v380 = vrcp.pop 32.0
      %v381 = vmul.f32 32.0, %v380
      %v382 = vsub.f32 1.0, %v381
      %v383 = vmul.f32 %v380, %v382
      %v384 = vadd.f32 %v380, %v383
      %vm385 = vweird.f32 %v380
      %v386 = vsel %vm385, %v380, %v384
      %v387 = vmul.f32 %v372, %v386
      %v388 = vmul.f32 %v375, %v386
      %v389 = vmul.f32 %v379, %v386
      %v390 = vsub.f32 %v366, %v387
      %v391 = vsub.f32 %v367, %v388
      %v392 = vsub.f32 %v368, %v389
      %v393 = vmul.f32 %v390, %v390
      %v394 = vmul.f32 %v391, %v391
      %v395 = vmul.f32 %v392, %v392
      %v396 = vsel %vm369, %v393, 0.0
      %397 = vadd.xlane.f32.xlu0 %v396
      %v398 = vpop.xlane.xlu0 %397
      %v399 = vsel %vm369, %v394, 0.0
      %400 = vadd.xlane.f32.xlu0 %v399
      %v401 = vpop.xlane.xlu0 %400
      %v402 = vsel %vm376, %v395, 0.0
      %403 = vadd.xlane.f32.xlu0 %v402
      %v404 = vpop.xlane.xlu0 %403
      %v405 = vmul.f32 %v398, %v386
      %v406 = vmul.f32 %v401, %v386
      %v407 = vmul.f32 %v404, %v386
      %v408 = vadd.f32 %v405, 1e-06
      %v409 = vadd.f32 %v406, 1e-06
      %v410 = vadd.f32 %v407, 1e-06
      %v411 = vrsqrt.pop %v408
      %v412 = vmul.f32 %v411, %v408
      %v413 = vmul.f32 %v412, %v411
      %v414 = vmul.f32 0.5, %v413
      %v415 = vsub.f32 1.5, %v414
      %v416 = vmul.f32 %v411, %v415
      %vm417 = vweird.f32 %v408
      %vm418 = vweird.f32 %v411
      %vm419 = vmor %vm417, %vm418
      %v420 = vsel %vm419, %v411, %v416
      %v421 = vrsqrt.pop %v409
      %v422 = vmul.f32 %v421, %v409
      %v423 = vmul.f32 %v422, %v421
      %v424 = vmul.f32 0.5, %v423
      %v425 = vsub.f32 1.5, %v424
      %v426 = vmul.f32 %v421, %v425
      %vm427 = vweird.f32 %v409
      %vm428 = vweird.f32 %v421
      %vm429 = vmor %vm427, %vm428
      %v430 = vsel %vm429, %v421, %v426
      %v431 = vrsqrt.pop %v410
      %v432 = vmul.f32 %v431, %v410
      %v433 = vmul.f32 %v432, %v431
      %v434 = vmul.f32 0.5, %v433
      %v435 = vsub.f32 1.5, %v434
      %v436 = vmul.f32 %v431, %v435
      %vm437 = vweird.f32 %v410
      %vm438 = vweird.f32 %v431
      %vm439 = vmor %vm437, %vm438
      %v440 = vsel %vm439, %v431, %v436
      %v441 = vmul.f32 %v390, %v420
      %v442 = vmul.f32 %v391, %v430
      %v443 = vmul.f32 %v392, %v440
      %v444 = vperm.slane %v336, 0
      %v445 = vmul.f32 %v441, %v444
      %v446 = vmul.f32 %v442, %v444
      %v447 = vmul.f32 %v443, %v444
      %v448 = vperm.slane %v336, 1
      %v449 = vadd.f32 %v445, %v448
      %v450 = vadd.f32 %v446, %v448
      %v451 = vadd.f32 %v447, %v448
      %v452 = vpack.c.bf16 %v450, %v449
      %v453 = vpack.c.bf16 %v451, %v451
      %v454 = vperm.slane %v336, 2
      %v459 = vunpack.c.l.b16 %v338
      %v460 = vunpack.c.l.b16 %v339
      %v461 = vunpack.c.l.b16 %v340
      %v462 = vunpack.c.l.b16 %v341
      %v463 = vpack.c.b16 %v460, %v459
      %v464 = vpack.c.b16 %v462, %v461
      %v468 = vsel %vm369, %v452, 0
      %v471 = vsel %vm369, %v453, 0
      %473 = vmatpush.bf16.msra.mxu0 0
      %474 = vmatpush.bf16.msra.mxu0 0
      %475 = vmatpush.bf16.msra.mxu0 0
      %476 = vmatpush.bf16.msra.mxu0 0
      %477 = vmatpush.bf16.msra.mxu0 0
      %478 = vmatpush.bf16.msra.mxu0 0
      %479 = vmatpush.bf16.msra.mxu0 %v464
      %480 = vmatpush.bf16.msra.mxu0 %v463
      %481 = vmatmul.bf16.gmra.mxu0 %v468
      %v482 = vpop.f32.mrf.mxu0
      %v483 = vadd.f32 %v454, %v482
      %v484 = vpop.f32.mrf.mxu0
      %v485 = vadd.f32 %v454, %v484
      %486 = vmatmul.bf16.gmra.mxu0 %v471
      %v487 = vpop.f32.mrf.mxu0
      %v488 = vadd.f32 %v454, %v487
      %v489 = vpop.f32.mrf.mxu0
      %490 = vdwg.mxu0
      %v491 = vmul.f32 %v483, 0.35355338
      %v492 = vmul.f32 %v485, 0.35355338
      %v493 = vmul.f32 %v488, 0.35355338
      %v494 = vpack.c.bf16 %v492, %v491
      %v495 = vpack.c.bf16 %v493, %v493
      %v496 = vpack.c.bf16 %v485, %v483
      %v497 = vpack.c.bf16 %v488, %v488
      %500 = vrot.lane.b32.xlu0 %v496, 96
      %v501 = vpop.permute.xlu0 %500
      %502 = vrot.lane.b32.xlu0 %v497, 96
      %v503 = vpop.permute.xlu0 %502
      %vm504 = vcmask 64512
      %v506 = vsel %vm504, %v494, 0
      %v509 = vsel %vm504, %v495, 0
      %v512 = vsel %vm504, %v501, 0
      %v515 = vsel %vm504, %v503, 0
      %517 = vmatpush.bf16.xpose.msra.mxu0 0
      %518 = vmatpush.bf16.xpose.msra.mxu0 0
      %519 = vmatpush.bf16.xpose.msra.mxu0 0
      %520 = vmatpush.bf16.xpose.msra.mxu0 0
      %521 = vmatpush.bf16.xpose.msra.mxu0 0
      %522 = vmatpush.bf16.xpose.msra.mxu0 0
      %523 = vmatpush.bf16.xpose.msra.mxu0 %v515
      %524 = vmatpush.bf16.xpose.msra.mxu0 %v512
      %525 = vmatmul.bf16.gmra.mxu0 %v506
      %v526 = vpop.f32.mrf.mxu0
      %v527 = vadd.f32 0.0, %v526
      %v528 = vpop.f32.mrf.mxu0
      %v529 = vadd.f32 0.0, %v528
      %530 = vmatmul.bf16.gmra.mxu0 %v509
      %v531 = vpop.f32.mrf.mxu0
      %v532 = vadd.f32 0.0, %v531
      %v533 = vpop.f32.mrf.mxu0
      %534 = vdwg.mxu0
      %vm535 = vcmask 138240
      %v536 = vsel %vm535, %v527, -inf
      %537 = vmax.xlane.f32.xlu0 %v536
      %v538 = vpop.xlane.xlu0 %537
      %v539 = vsel %vm535, %v529, -inf
      %540 = vmax.xlane.f32.xlu0 %v539
      %v541 = vpop.xlane.xlu0 %540
      %vm542 = vcmask 131072
      %v543 = vsel %vm542, %v532, -inf
      %544 = vmax.xlane.f32.xlu0 %v543
      %v545 = vpop.xlane.xlu0 %544
      %v546 = vsub.f32 %v527, %v538
      %v547 = vsub.f32 %v529, %v541
      %v548 = vsub.f32 %v532, %v545
      %v549 = vmul.f32 %v546, 1.442695
      %v550 = vpow.pop %v549
      %v551 = vmul.f32 %v547, 1.442695
      %v552 = vpow.pop %v551
      %v553 = vmul.f32 %v548, 1.442695
      %v554 = vpow.pop %v553
      %v555 = vsel %vm535, %v550, 0.0
      %556 = vadd.xlane.f32.xlu0 %v555
      %v557 = vpop.xlane.xlu0 %556
      %v558 = vsel %vm535, %v552, 0.0
      %559 = vadd.xlane.f32.xlu0 %v558
      %v560 = vpop.xlane.xlu0 %559
      %v561 = vsel %vm542, %v554, 0.0
      %562 = vadd.xlane.f32.xlu0 %v561
      %v563 = vpop.xlane.xlu0 %562
      %v564 = vrcp.pop %v557
      %v565 = vrcp.pop %v560
      %v566 = vrcp.pop %v563
      %v567 = vmul.f32 %v550, %v564
      %v568 = vmul.f32 %v552, %v565
      %v569 = vmul.f32 %v554, %v566
      %v570 = vpack.c.bf16 %v568, %v567
      %v571 = vpack.c.bf16 %v569, %v569
      %572 = vrot.lane.b32.xlu0 %v496, 64
      %v573 = vpop.permute.xlu0 %572
      %574 = vrot.lane.b32.xlu0 %v497, 64
      %v575 = vpop.permute.xlu0 %574
      %v578 = vsel %vm535, %v570, 0
      %v581 = vsel %vm535, %v571, 0
      %vm583 = vcmask 1040384
      %v584 = vsel 0, 4294967295, 65535
      %v585 = vsel %vm583, %v584, 0
      %v587 = vand.u32 %v575, %v585
      %589 = vmatpush.bf16.msra.mxu0 0
      %590 = vmatpush.bf16.msra.mxu0 0
      %591 = vmatpush.bf16.msra.mxu0 0
      %592 = vmatpush.bf16.msra.mxu0 0
      %593 = vmatpush.bf16.msra.mxu0 0
      %594 = vmatpush.bf16.msra.mxu0 0
      %595 = vmatpush.bf16.msra.mxu0 %v587
      %596 = vmatpush.bf16.msra.mxu0 %v573
      %597 = vmatmul.bf16.gmra.mxu0 %v578
      %v598 = vpop.f32.mrf.mxu0
      %v599 = vadd.f32 0.0, %v598
      %v600 = vpop.f32.mrf.mxu0
      %v601 = vadd.f32 0.0, %v600
      %602 = vmatmul.bf16.gmra.mxu0 %v581
      %v603 = vpop.f32.mrf.mxu0
      %v604 = vadd.f32 0.0, %v603
      %v605 = vpop.f32.mrf.mxu0
      %606 = vdwg.mxu0
      %609 = vrot.lane.b32.xlu0 %v494, 120
      %v610 = vpop.permute.xlu0 %609
      %611 = vrot.lane.b32.xlu0 %v495, 120
      %v612 = vpop.permute.xlu0 %611
      %613 = vrot.lane.b32.xlu0 %v496, 88
      %v614 = vpop.permute.xlu0 %613
      %615 = vrot.lane.b32.xlu0 %v497, 88
      %v616 = vpop.permute.xlu0 %615
      %v618 = vsel %vm504, %v610, 0
      %v621 = vsel %vm504, %v612, 0
      %v624 = vsel %vm504, %v614, 0
      %v627 = vsel %vm504, %v616, 0
      %629 = vmatpush.bf16.xpose.msra.mxu0 0
      %630 = vmatpush.bf16.xpose.msra.mxu0 0
      %631 = vmatpush.bf16.xpose.msra.mxu0 0
      %632 = vmatpush.bf16.xpose.msra.mxu0 0
      %633 = vmatpush.bf16.xpose.msra.mxu0 0
      %634 = vmatpush.bf16.xpose.msra.mxu0 0
      %635 = vmatpush.bf16.xpose.msra.mxu0 %v627
      %636 = vmatpush.bf16.xpose.msra.mxu0 %v624
      %637 = vmatmul.bf16.gmra.mxu0 %v618
      %v638 = vpop.f32.mrf.mxu0
      %v639 = vadd.f32 0.0, %v638
      %v640 = vpop.f32.mrf.mxu0
      %v641 = vadd.f32 0.0, %v640
      %642 = vmatmul.bf16.gmra.mxu0 %v621
      %v643 = vpop.f32.mrf.mxu0
      %v644 = vadd.f32 0.0, %v643
      %v645 = vpop.f32.mrf.mxu0
      %646 = vdwg.mxu0
      %v647 = vsel %vm535, %v639, -inf
      %648 = vmax.xlane.f32.xlu0 %v647
      %v649 = vpop.xlane.xlu0 %648
      %v650 = vsel %vm535, %v641, -inf
      %651 = vmax.xlane.f32.xlu0 %v650
      %v652 = vpop.xlane.xlu0 %651
      %v653 = vsel %vm542, %v644, -inf
      %654 = vmax.xlane.f32.xlu0 %v653
      %v655 = vpop.xlane.xlu0 %654
      %v656 = vsub.f32 %v639, %v649
      %v657 = vsub.f32 %v641, %v652
      %v658 = vsub.f32 %v644, %v655
      %v659 = vmul.f32 %v656, 1.442695
      %v660 = vpow.pop %v659
      %v661 = vmul.f32 %v657, 1.442695
      %v662 = vpow.pop %v661
      %v663 = vmul.f32 %v658, 1.442695
      %v664 = vpow.pop %v663
      %v665 = vsel %vm535, %v660, 0.0
      %666 = vadd.xlane.f32.xlu0 %v665
      %v667 = vpop.xlane.xlu0 %666
      %v668 = vsel %vm535, %v662, 0.0
      %669 = vadd.xlane.f32.xlu0 %v668
      %v670 = vpop.xlane.xlu0 %669
      %v671 = vsel %vm542, %v664, 0.0
      %672 = vadd.xlane.f32.xlu0 %v671
      %v673 = vpop.xlane.xlu0 %672
      %v674 = vrcp.pop %v667
      %v675 = vrcp.pop %v670
      %v676 = vrcp.pop %v673
      %v677 = vmul.f32 %v660, %v674
      %v678 = vmul.f32 %v662, %v675
      %v679 = vmul.f32 %v664, %v676
      %v680 = vpack.c.bf16 %v678, %v677
      %v681 = vpack.c.bf16 %v679, %v679
      %682 = vrot.lane.b32.xlu0 %v496, 56
      %v683 = vpop.permute.xlu0 %682
      %684 = vrot.lane.b32.xlu0 %v497, 56
      %v685 = vpop.permute.xlu0 %684
      %v688 = vsel %vm535, %v680, 0
      %v691 = vsel %vm535, %v681, 0
      %v694 = vand.u32 %v685, %v585
      %696 = vmatpush.bf16.msra.mxu0 0
      %697 = vmatpush.bf16.msra.mxu0 0
      %698 = vmatpush.bf16.msra.mxu0 0
      %699 = vmatpush.bf16.msra.mxu0 0
      %700 = vmatpush.bf16.msra.mxu0 0
      %701 = vmatpush.bf16.msra.mxu0 0
      %702 = vmatpush.bf16.msra.mxu0 %v694
      %703 = vmatpush.bf16.msra.mxu0 %v683
      %704 = vmatmul.bf16.gmra.mxu0 %v688
      %v705 = vpop.f32.mrf.mxu0
      %v706 = vadd.f32 0.0, %v705
      %v707 = vpop.f32.mrf.mxu0
      %v708 = vadd.f32 0.0, %v707
      %709 = vmatmul.bf16.gmra.mxu0 %v691
      %v710 = vpop.f32.mrf.mxu0
      %v711 = vadd.f32 0.0, %v710
      %v712 = vpop.f32.mrf.mxu0
      %713 = vdwg.mxu0
      %714 = vrot.lane.b32.xlu0 %v494, 112
      %v715 = vpop.permute.xlu0 %714
      %716 = vrot.lane.b32.xlu0 %v495, 112
      %v717 = vpop.permute.xlu0 %716
      %718 = vrot.lane.b32.xlu0 %v496, 80
      %v719 = vpop.permute.xlu0 %718
      %720 = vrot.lane.b32.xlu0 %v497, 80
      %v721 = vpop.permute.xlu0 %720
      %v723 = vsel %vm504, %v715, 0
      %v726 = vsel %vm504, %v717, 0
      %v729 = vsel %vm504, %v719, 0
      %v732 = vsel %vm504, %v721, 0
      %734 = vmatpush.bf16.xpose.msra.mxu0 0
      %735 = vmatpush.bf16.xpose.msra.mxu0 0
      %736 = vmatpush.bf16.xpose.msra.mxu0 0
      %737 = vmatpush.bf16.xpose.msra.mxu0 0
      %738 = vmatpush.bf16.xpose.msra.mxu0 0
      %739 = vmatpush.bf16.xpose.msra.mxu0 0
      %740 = vmatpush.bf16.xpose.msra.mxu0 %v732
      %741 = vmatpush.bf16.xpose.msra.mxu0 %v729
      %742 = vmatmul.bf16.gmra.mxu0 %v723
      %v743 = vpop.f32.mrf.mxu0
      %v744 = vadd.f32 0.0, %v743
      %v745 = vpop.f32.mrf.mxu0
      %v746 = vadd.f32 0.0, %v745
      %747 = vmatmul.bf16.gmra.mxu0 %v726
      %v748 = vpop.f32.mrf.mxu0
      %v749 = vadd.f32 0.0, %v748
      %v750 = vpop.f32.mrf.mxu0
      %751 = vdwg.mxu0
      %v752 = vsel %vm535, %v744, -inf
      %753 = vmax.xlane.f32.xlu0 %v752
      %v754 = vpop.xlane.xlu0 %753
      %v755 = vsel %vm535, %v746, -inf
      %756 = vmax.xlane.f32.xlu0 %v755
      %v757 = vpop.xlane.xlu0 %756
      %v758 = vsel %vm542, %v749, -inf
      %759 = vmax.xlane.f32.xlu0 %v758
      %v760 = vpop.xlane.xlu0 %759
      %v761 = vsub.f32 %v744, %v754
      %v762 = vsub.f32 %v746, %v757
      %v763 = vsub.f32 %v749, %v760
      %v764 = vmul.f32 %v761, 1.442695
      %v765 = vpow.pop %v764
      %v766 = vmul.f32 %v762, 1.442695
      %v767 = vpow.pop %v766
      %v768 = vmul.f32 %v763, 1.442695
      %v769 = vpow.pop %v768
      %v770 = vsel %vm535, %v765, 0.0
      %771 = vadd.xlane.f32.xlu0 %v770
      %v772 = vpop.xlane.xlu0 %771
      %v773 = vsel %vm535, %v767, 0.0
      %774 = vadd.xlane.f32.xlu0 %v773
      %v775 = vpop.xlane.xlu0 %774
      %v776 = vsel %vm542, %v769, 0.0
      %777 = vadd.xlane.f32.xlu0 %v776
      %v778 = vpop.xlane.xlu0 %777
      %v779 = vrcp.pop %v772
      %v780 = vrcp.pop %v775
      %v781 = vrcp.pop %v778
      %v782 = vmul.f32 %v765, %v779
      %v783 = vmul.f32 %v767, %v780
      %v784 = vmul.f32 %v769, %v781
      %v785 = vpack.c.bf16 %v783, %v782
      %v786 = vpack.c.bf16 %v784, %v784
      %787 = vrot.lane.b32.xlu0 %v496, 48
      %v788 = vpop.permute.xlu0 %787
      %789 = vrot.lane.b32.xlu0 %v497, 48
      %v790 = vpop.permute.xlu0 %789
      %v793 = vsel %vm535, %v785, 0
      %v796 = vsel %vm535, %v786, 0
      %v799 = vand.u32 %v790, %v585
      %801 = vmatpush.bf16.msra.mxu0 0
      %802 = vmatpush.bf16.msra.mxu0 0
      %803 = vmatpush.bf16.msra.mxu0 0
      %804 = vmatpush.bf16.msra.mxu0 0
      %805 = vmatpush.bf16.msra.mxu0 0
      %806 = vmatpush.bf16.msra.mxu0 0
      %807 = vmatpush.bf16.msra.mxu0 %v799
      %808 = vmatpush.bf16.msra.mxu0 %v788
      %809 = vmatmul.bf16.gmra.mxu0 %v793
      %v810 = vpop.f32.mrf.mxu0
      %v811 = vadd.f32 0.0, %v810
      %v812 = vpop.f32.mrf.mxu0
      %v813 = vadd.f32 0.0, %v812
      %814 = vmatmul.bf16.gmra.mxu0 %v796
      %v815 = vpop.f32.mrf.mxu0
      %v816 = vadd.f32 0.0, %v815
      %v817 = vpop.f32.mrf.mxu0
      %818 = vdwg.mxu0
      %819 = vrot.lane.b32.xlu0 %v494, 104
      %v820 = vpop.permute.xlu0 %819
      %821 = vrot.lane.b32.xlu0 %v495, 104
      %v822 = vpop.permute.xlu0 %821
      %823 = vrot.lane.b32.xlu0 %v496, 72
      %v824 = vpop.permute.xlu0 %823
      %825 = vrot.lane.b32.xlu0 %v497, 72
      %v826 = vpop.permute.xlu0 %825
      %v828 = vsel %vm504, %v820, 0
      %v831 = vsel %vm504, %v822, 0
      %v834 = vsel %vm504, %v824, 0
      %v837 = vsel %vm504, %v826, 0
      %839 = vmatpush.bf16.xpose.msra.mxu0 0
      %840 = vmatpush.bf16.xpose.msra.mxu0 0
      %841 = vmatpush.bf16.xpose.msra.mxu0 0
      %842 = vmatpush.bf16.xpose.msra.mxu0 0
      %843 = vmatpush.bf16.xpose.msra.mxu0 0
      %844 = vmatpush.bf16.xpose.msra.mxu0 0
      %845 = vmatpush.bf16.xpose.msra.mxu0 %v837
      %846 = vmatpush.bf16.xpose.msra.mxu0 %v834
      %847 = vmatmul.bf16.gmra.mxu0 %v828
      %v848 = vpop.f32.mrf.mxu0
      %v849 = vadd.f32 0.0, %v848
      %v850 = vpop.f32.mrf.mxu0
      %v851 = vadd.f32 0.0, %v850
      %852 = vmatmul.bf16.gmra.mxu0 %v831
      %v853 = vpop.f32.mrf.mxu0
      %v854 = vadd.f32 0.0, %v853
      %v855 = vpop.f32.mrf.mxu0
      %856 = vdwg.mxu0
      %v857 = vsel %vm535, %v849, -inf
      %858 = vmax.xlane.f32.xlu0 %v857
      %v859 = vpop.xlane.xlu0 %858
      %v860 = vsel %vm535, %v851, -inf
      %861 = vmax.xlane.f32.xlu0 %v860
      %v862 = vpop.xlane.xlu0 %861
      %v863 = vsel %vm542, %v854, -inf
      %864 = vmax.xlane.f32.xlu0 %v863
      %v865 = vpop.xlane.xlu0 %864
      %v866 = vsub.f32 %v849, %v859
      %v867 = vsub.f32 %v851, %v862
      %v868 = vsub.f32 %v854, %v865
      %v869 = vmul.f32 %v866, 1.442695
      %v870 = vpow.pop %v869
      %v871 = vmul.f32 %v867, 1.442695
      %v872 = vpow.pop %v871
      %v873 = vmul.f32 %v868, 1.442695
      %v874 = vpow.pop %v873
      %v875 = vsel %vm535, %v870, 0.0
      %876 = vadd.xlane.f32.xlu0 %v875
      %v877 = vpop.xlane.xlu0 %876
      %v878 = vsel %vm535, %v872, 0.0
      %879 = vadd.xlane.f32.xlu0 %v878
      %v880 = vpop.xlane.xlu0 %879
      %v881 = vsel %vm542, %v874, 0.0
      %882 = vadd.xlane.f32.xlu0 %v881
      %v883 = vpop.xlane.xlu0 %882
      %v884 = vrcp.pop %v877
      %v885 = vrcp.pop %v880
      %v886 = vrcp.pop %v883
      %v887 = vmul.f32 %v870, %v884
      %v888 = vmul.f32 %v872, %v885
      %v889 = vmul.f32 %v874, %v886
      %v890 = vpack.c.bf16 %v888, %v887
      %v891 = vpack.c.bf16 %v889, %v889
      %892 = vrot.lane.b32.xlu0 %v496, 40
      %v893 = vpop.permute.xlu0 %892
      %894 = vrot.lane.b32.xlu0 %v497, 40
      %v895 = vpop.permute.xlu0 %894
      %v898 = vsel %vm535, %v890, 0
      %v901 = vsel %vm535, %v891, 0
      %v904 = vand.u32 %v895, %v585
      %906 = vmatpush.bf16.msra.mxu0 0
      %907 = vmatpush.bf16.msra.mxu0 0
      %908 = vmatpush.bf16.msra.mxu0 0
      %909 = vmatpush.bf16.msra.mxu0 0
      %910 = vmatpush.bf16.msra.mxu0 0
      %911 = vmatpush.bf16.msra.mxu0 0
      %912 = vmatpush.bf16.msra.mxu0 %v904
      %913 = vmatpush.bf16.msra.mxu0 %v893
      %914 = vmatmul.bf16.gmra.mxu0 %v898
      %v915 = vpop.f32.mrf.mxu0
      %v916 = vadd.f32 0.0, %v915
      %v917 = vpop.f32.mrf.mxu0
      %v918 = vadd.f32 0.0, %v917
      %919 = vmatmul.bf16.gmra.mxu0 %v901
      %v920 = vpop.f32.mrf.mxu0
      %v921 = vadd.f32 0.0, %v920
      %v922 = vpop.f32.mrf.mxu0
      %923 = vdwg.mxu0
      %927 = vrot.lane.b32.xlu0 %v706, 8
      %v928 = vpop.permute.xlu0 %927
      %929 = vrot.lane.b32.xlu0 %v708, 8
      %v930 = vpop.permute.xlu0 %929
      %931 = vrot.lane.b32.xlu0 %v711, 8
      %v932 = vpop.permute.xlu0 %931
      %939 = vrot.lane.b32.xlu0 %v811, 16
      %v940 = vpop.permute.xlu0 %939
      %941 = vrot.lane.b32.xlu0 %v813, 16
      %v942 = vpop.permute.xlu0 %941
      %943 = vrot.lane.b32.xlu0 %v816, 16
      %v944 = vpop.permute.xlu0 %943
      %951 = vrot.lane.b32.xlu0 %v916, 24
      %v952 = vpop.permute.xlu0 %951
      %953 = vrot.lane.b32.xlu0 %v918, 24
      %v954 = vpop.permute.xlu0 %953
      %955 = vrot.lane.b32.xlu0 %v921, 24
      %v956 = vpop.permute.xlu0 %955
      %v960 = vsel %vm504, %v599, %v928
      %v961 = vsel %vm504, %v601, %v930
      %v962 = vsel %vm504, %v604, %v932
      %vm963 = vcmask 130048
      %v964 = vsel %vm963, %v960, %v940
      %v965 = vsel %vm963, %v961, %v942
      %v966 = vsel %vm963, %v962, %v944
      %vm967 = vcmask 195584
      %v968 = vsel %vm967, %v964, %v952
      %v969 = vsel %vm967, %v965, %v954
      %v970 = vsel %vm967, %v966, %v956
      %v971 = vpack.c.bf16 %v969, %v968
      %v972 = vpack.c.bf16 %v970, %v970
      %v973 = vperm.slane %v336, 3
      %v978 = vunpack.c.l.b16 %v342
      %v979 = vunpack.c.l.b16 %v343
      %v980 = vunpack.c.l.b16 %v344
      %v981 = vunpack.c.l.b16 %v345
      %v982 = vpack.c.b16 %v979, %v978
      %v983 = vpack.c.b16 %v981, %v980
      %v987 = vsel %vm369, %v971, 0
      %v990 = vsel %vm369, %v972, 0
      %992 = vmatpush.bf16.msra.mxu0 0
      %993 = vmatpush.bf16.msra.mxu0 0
      %994 = vmatpush.bf16.msra.mxu0 0
      %995 = vmatpush.bf16.msra.mxu0 0
      %996 = vmatpush.bf16.msra.mxu0 0
      %997 = vmatpush.bf16.msra.mxu0 0
      %998 = vmatpush.bf16.msra.mxu0 %v983
      %999 = vmatpush.bf16.msra.mxu0 %v982
      %1000 = vmatmul.bf16.gmra.mxu0 %v987
      %v1001 = vpop.f32.mrf.mxu0
      %v1002 = vadd.f32 %v973, %v1001
      %v1003 = vpop.f32.mrf.mxu0
      %v1004 = vadd.f32 %v973, %v1003
      %1005 = vmatmul.bf16.gmra.mxu0 %v990
      %v1006 = vpop.f32.mrf.mxu0
      %v1007 = vadd.f32 %v973, %v1006
      %v1008 = vpop.f32.mrf.mxu0
      %1009 = vdwg.mxu0
      %v1010 = vperm.slane %v336, 4
      %v1011 = vmul.f32 %v1010, %v1002
      %v1012 = vmul.f32 %v1010, %v1004
      %v1013 = vmul.f32 %v1010, %v1007
      %v1014 = vadd.f32 %v366, %v1011
      %v1015 = vadd.f32 %v367, %v1012
      %v1016 = vadd.f32 %v368, %v1013
      %v1017 = vsel %vm369, %v1014, 0.0
      %1018 = vadd.xlane.f32.xlu0 %v1017
      %v1019 = vpop.xlane.xlu0 %1018
      %v1020 = vsel %vm369, %v1015, 0.0
      %1021 = vadd.xlane.f32.xlu0 %v1020
      %v1022 = vpop.xlane.xlu0 %1021
      %v1023 = vsel %vm376, %v1016, 0.0
      %1024 = vadd.xlane.f32.xlu0 %v1023
      %v1025 = vpop.xlane.xlu0 %1024
      %v1026 = vmul.f32 %v1019, %v386
      %v1027 = vmul.f32 %v1022, %v386
      %v1028 = vmul.f32 %v1025, %v386
      %v1029 = vsub.f32 %v1014, %v1026
      %v1030 = vsub.f32 %v1015, %v1027
      %v1031 = vsub.f32 %v1016, %v1028
      %v1032 = vmul.f32 %v1029, %v1029
      %v1033 = vmul.f32 %v1030, %v1030
      %v1034 = vmul.f32 %v1031, %v1031
      %v1035 = vsel %vm369, %v1032, 0.0
      %1036 = vadd.xlane.f32.xlu0 %v1035
      %v1037 = vpop.xlane.xlu0 %1036
      %v1038 = vsel %vm369, %v1033, 0.0
      %1039 = vadd.xlane.f32.xlu0 %v1038
      %v1040 = vpop.xlane.xlu0 %1039
      %v1041 = vsel %vm376, %v1034, 0.0
      %1042 = vadd.xlane.f32.xlu0 %v1041
      %v1043 = vpop.xlane.xlu0 %1042
      %v1044 = vmul.f32 %v1037, %v386
      %v1045 = vmul.f32 %v1040, %v386
      %v1046 = vmul.f32 %v1043, %v386
      %v1047 = vadd.f32 %v1044, 1e-06
      %v1048 = vadd.f32 %v1045, 1e-06
      %v1049 = vadd.f32 %v1046, 1e-06
      %v1050 = vrsqrt.pop %v1047
      %v1051 = vmul.f32 %v1050, %v1047
      %v1052 = vmul.f32 %v1051, %v1050
      %v1053 = vmul.f32 0.5, %v1052
      %v1054 = vsub.f32 1.5, %v1053
      %v1055 = vmul.f32 %v1050, %v1054
      %vm1056 = vweird.f32 %v1047
      %vm1057 = vweird.f32 %v1050
      %vm1058 = vmor %vm1056, %vm1057
      %v1059 = vsel %vm1058, %v1050, %v1055
      %v1060 = vrsqrt.pop %v1048
      %v1061 = vmul.f32 %v1060, %v1048
      %v1062 = vmul.f32 %v1061, %v1060
      %v1063 = vmul.f32 0.5, %v1062
      %v1064 = vsub.f32 1.5, %v1063
      %v1065 = vmul.f32 %v1060, %v1064
      %vm1066 = vweird.f32 %v1048
      %vm1067 = vweird.f32 %v1060
      %vm1068 = vmor %vm1066, %vm1067
      %v1069 = vsel %vm1068, %v1060, %v1065
      %v1070 = vrsqrt.pop %v1049
      %v1071 = vmul.f32 %v1070, %v1049
      %v1072 = vmul.f32 %v1071, %v1070
      %v1073 = vmul.f32 0.5, %v1072
      %v1074 = vsub.f32 1.5, %v1073
      %v1075 = vmul.f32 %v1070, %v1074
      %vm1076 = vweird.f32 %v1049
      %vm1077 = vweird.f32 %v1070
      %vm1078 = vmor %vm1076, %vm1077
      %v1079 = vsel %vm1078, %v1070, %v1075
      %v1080 = vmul.f32 %v1029, %v1059
      %v1081 = vmul.f32 %v1030, %v1069
      %v1082 = vmul.f32 %v1031, %v1079
      %v1083 = vperm.slane %v336, 5
      %v1084 = vmul.f32 %v1080, %v1083
      %v1085 = vmul.f32 %v1081, %v1083
      %v1086 = vmul.f32 %v1082, %v1083
      %v1087 = vperm.slane %v336, 6
      %v1088 = vadd.f32 %v1084, %v1087
      %v1089 = vadd.f32 %v1085, %v1087
      %v1090 = vadd.f32 %v1086, %v1087
      %v1091 = vpack.c.bf16 %v1089, %v1088
      %v1092 = vpack.c.bf16 %v1090, %v1090
      %v1093 = vperm.slane %v336, 7
      %v1098 = vunpack.c.l.b16 %v346
      %v1099 = vunpack.c.l.b16 %v347
      %v1100 = vunpack.c.l.b16 %v348
      %v1101 = vunpack.c.l.b16 %v349
      %v1102 = vpack.c.b16 %v1099, %v1098
      %v1103 = vpack.c.b16 %v1101, %v1100
      %v1107 = vsel %vm369, %v1091, 0
      %v1110 = vsel %vm369, %v1092, 0
      %1112 = vmatpush.bf16.msra.mxu0 0
      %1113 = vmatpush.bf16.msra.mxu0 0
      %1114 = vmatpush.bf16.msra.mxu0 0
      %1115 = vmatpush.bf16.msra.mxu0 0
      %1116 = vmatpush.bf16.msra.mxu0 0
      %1117 = vmatpush.bf16.msra.mxu0 0
      %1118 = vmatpush.bf16.msra.mxu0 %v1103
      %1119 = vmatpush.bf16.msra.mxu0 %v1102
      %1120 = vmatmul.bf16.gmra.mxu0 %v1107
      %v1121 = vpop.f32.mrf.mxu0
      %v1122 = vadd.f32 %v1093, %v1121
      %v1123 = vpop.f32.mrf.mxu0
      %v1124 = vadd.f32 %v1093, %v1123
      %1125 = vmatmul.bf16.gmra.mxu0 %v1110
      %v1126 = vpop.f32.mrf.mxu0
      %v1127 = vadd.f32 %v1093, %v1126
      %v1128 = vpop.f32.mrf.mxu0
      %1129 = vdwg.mxu0
      %v1130 = vmul.f32 %v1122, %v1122
      %v1131 = vmul.f32 %v1124, %v1124
      %v1132 = vmul.f32 %v1127, %v1127
      %v1133 = vmul.f32 %v1122, %v1130
      %v1134 = vmul.f32 %v1124, %v1131
      %v1135 = vmul.f32 %v1127, %v1132
      %v1136 = vmul.f32 %v1133, 0.044715
      %v1137 = vmul.f32 %v1134, 0.044715
      %v1138 = vmul.f32 %v1135, 0.044715
      %v1139 = vadd.f32 %v1122, %v1136
      %v1140 = vadd.f32 %v1124, %v1137
      %v1141 = vadd.f32 %v1127, %v1138
      %v1142 = vmul.f32 %v1139, 0.7978846
      %v1143 = vmul.f32 %v1140, 0.7978846
      %v1144 = vmul.f32 %v1141, 0.7978846
      %v1145 = vtanh.pop %v1142
      %v1146 = vtanh.pop %v1143
      %v1147 = vtanh.pop %v1144
      %v1148 = vadd.f32 %v1145, 1.0
      %v1149 = vadd.f32 %v1146, 1.0
      %v1150 = vadd.f32 %v1147, 1.0
      %v1151 = vmul.f32 %v1148, 0.5
      %v1152 = vmul.f32 %v1149, 0.5
      %v1153 = vmul.f32 %v1150, 0.5
      %v1154 = vmul.f32 %v1122, %v1151
      %v1155 = vmul.f32 %v1124, %v1152
      %v1156 = vmul.f32 %v1127, %v1153
      %v1157 = vpack.c.bf16 %v1155, %v1154
      %v1158 = vpack.c.bf16 %v1156, %v1156
      %v1159 = vperm.slane %v337, 0
      %v1176 = vunpack.c.l.b16 %v350
      %v1177 = vunpack.c.l.b16 %v351
      %v1178 = vunpack.c.l.b16 %v352
      %v1179 = vunpack.c.l.b16 %v353
      %v1180 = vunpack.c.l.b16 %v354
      %v1181 = vunpack.c.l.b16 %v355
      %v1182 = vunpack.c.l.b16 %v356
      %v1183 = vunpack.c.l.b16 %v357
      %v1184 = vunpack.c.l.b16 %v358
      %v1185 = vunpack.c.l.b16 %v359
      %v1186 = vunpack.c.l.b16 %v360
      %v1187 = vunpack.c.l.b16 %v361
      %v1188 = vunpack.c.l.b16 %v362
      %v1189 = vunpack.c.l.b16 %v363
      %v1190 = vunpack.c.l.b16 %v364
      %v1191 = vunpack.c.l.b16 %v365
      %v1192 = vpack.c.b16 %v1177, %v1176
      %v1193 = vpack.c.b16 %v1179, %v1178
      %v1194 = vpack.c.b16 %v1181, %v1180
      %v1195 = vpack.c.b16 %v1183, %v1182
      %v1196 = vpack.c.b16 %v1185, %v1184
      %v1197 = vpack.c.b16 %v1187, %v1186
      %v1198 = vpack.c.b16 %v1189, %v1188
      %v1199 = vpack.c.b16 %v1191, %v1190
      %1208 = vmatpush.bf16.msra.mxu0 %v1199
      %1209 = vmatpush.bf16.msra.mxu0 %v1198
      %1210 = vmatpush.bf16.msra.mxu0 %v1197
      %1211 = vmatpush.bf16.msra.mxu0 %v1196
      %1212 = vmatpush.bf16.msra.mxu0 %v1195
      %1213 = vmatpush.bf16.msra.mxu0 %v1194
      %1214 = vmatpush.bf16.msra.mxu0 %v1193
      %1215 = vmatpush.bf16.msra.mxu0 %v1192
      %1216 = vmatmul.bf16.gmra.mxu0 %v1157
      %v1217 = vpop.f32.mrf.mxu0
      %v1218 = vadd.f32 %v1159, %v1217
      %v1219 = vpop.f32.mrf.mxu0
      %v1220 = vadd.f32 %v1159, %v1219
      %1221 = vmatmul.bf16.gmra.mxu0 %v1158
      %v1222 = vpop.f32.mrf.mxu0
      %v1223 = vadd.f32 %v1159, %v1222
      %v1224 = vpop.f32.mrf.mxu0
      %1225 = vdwg.mxu0
      %v1226 = vperm.slane %v337, 1
      %v1227 = vmul.f32 %v1226, %v1218
      %v1228 = vmul.f32 %v1226, %v1220
      %v1229 = vmul.f32 %v1226, %v1223
      %v1230 = vadd.f32 %v1014, %v1227
      %v1231 = vadd.f32 %v1015, %v1228
      %v1232 = vadd.f32 %v1016, %v1229
      %1233 = vst.msk [vmem:[#allocation2] sm:$0xff] %vm369, %v1230
      %1234 = vst.msk [vmem:[#allocation2 + $0x8] sm:$0xff] %vm369, %v1231
      %1235 = vst.msk [vmem:[#allocation2 + $0x10] sm:$0x1] %vm376, %v1232
      %p1236 = scmp.eq.s32.totalorder %s17, 5
      // Predicated region
      $region49: #{depth_estimator_forward.2} parent=43 // pred_check
        %p1237 = pneg %p1236
      $region50: #{depth_estimator_forward.2} parent=43 // pred_check_branch
        %1239 = sbr.rel (%p1237) target = $region52
      $region51: #{depth_estimator_forward.2} parent=43 // pred_region
        %1240 = vst.msk [vmem:[%s6] sm:$0xff] %vm369, %v1230
        %1241 = vst.msk [vmem:[%s6 + $0x8] sm:$0xff] %vm369, %v1231
        %1242 = vst.msk [vmem:[%s6 + $0x10] sm:$0x1] %vm376, %v1232
      $region52: #{depth_estimator_forward.2} parent=43 // pred_fallthru
        _
      %p1243 = scmp.eq.s32.totalorder %s17, 11
      // Predicated region
      $region53: #{depth_estimator_forward.2} parent=43 // pred_check
        %p1244 = pneg %p1243
      $region54: #{depth_estimator_forward.2} parent=43 // pred_check_branch
        %1246 = sbr.rel (%p1244) target = $region56
      $region55: #{depth_estimator_forward.2} parent=43 // pred_region
        %s1247 = scalar_lea.vmem %s6, 48
        %1248 = vst.msk [vmem:[%s1247] sm:$0xff] %vm369, %v1230
        %1249 = vst.msk [vmem:[%s1247 + $0x8] sm:$0xff] %vm369, %v1231
        %1250 = vst.msk [vmem:[%s1247 + $0x10] sm:$0x1] %vm376, %v1232
      $region56: #{depth_estimator_forward.2} parent=43 // pred_fallthru
        _
      %p1251 = scmp.eq.s32.totalorder %s17, 17
      // Predicated region
      $region57: #{depth_estimator_forward.2} parent=43 // pred_check
        %p1252 = pneg %p1251
      $region58: #{depth_estimator_forward.2} parent=43 // pred_check_branch
        %1254 = sbr.rel (%p1252) target = $region60
      $region59: #{depth_estimator_forward.2} parent=43 // pred_region
        %s1255 = scalar_lea.vmem %s6, 96
        %1256 = vst.msk [vmem:[%s1255] sm:$0xff] %vm369, %v1230
        %1257 = vst.msk [vmem:[%s1255 + $0x8] sm:$0xff] %vm369, %v1231
        %1258 = vst.msk [vmem:[%s1255 + $0x10] sm:$0x1] %vm376, %v1232
      $region60: #{depth_estimator_forward.2} parent=43 // pred_fallthru
        _
      %p1259 = scmp.eq.s32.totalorder %s17, 23
      // Predicated region
      $region61: #{depth_estimator_forward.2} parent=43 // pred_check
        %p1260 = pneg %p1259
      $region62: #{depth_estimator_forward.2} parent=43 // pred_check_branch
        %1262 = sbr.rel (%p1260) target = $region64
      $region63: #{depth_estimator_forward.2} parent=43 // pred_region
        %s1263 = scalar_lea.vmem %s6, 144
        %1264 = vst.msk [vmem:[%s1263] sm:$0xff] %vm369, %v1230
        %1265 = vst.msk [vmem:[%s1263 + $0x8] sm:$0xff] %vm369, %v1231
        %1266 = vst.msk [vmem:[%s1263 + $0x10] sm:$0x1] %vm376, %v1232
      $region64: #{depth_estimator_forward.2} parent=43 // pred_fallthru
        _
      %s1267 = scalar_lea.vmem [#allocation2], 24
      %v1268 = vld [vmem:[%s1267] sm:$0xff]
      %v1269 = vld [vmem:[%s1267 + $0x8] sm:$0xff]
      %v1270 = vld [vmem:[%s1267 + $0x10] sm:$0x1]
      %v1271 = vsel %vm369, %v1268, 0.0
      %1272 = vadd.xlane.f32.xlu0 %v1271
      %v1273 = vpop.xlane.xlu0 %1272
      %v1274 = vsel %vm369, %v1269, 0.0
      %1275 = vadd.xlane.f32.xlu0 %v1274
      %v1276 = vpop.xlane.xlu0 %1275
      %v1277 = vsel %vm376, %v1270, 0.0
      %1278 = vadd.xlane.f32.xlu0 %v1277
      %v1279 = vpop.xlane.xlu0 %1278
      %v1280 = vmul.f32 %v1273, %v386
      %v1281 = vmul.f32 %v1276, %v386
      %v1282 = vmul.f32 %v1279, %v386
      %v1283 = vsub.f32 %v1268, %v1280
      %v1284 = vsub.f32 %v1269, %v1281
      %v1285 = vsub.f32 %v1270, %v1282
      %v1286 = vmul.f32 %v1283, %v1283
      %v1287 = vmul.f32 %v1284, %v1284
      %v1288 = vmul.f32 %v1285, %v1285
      %v1289 = vsel %vm369, %v1286, 0.0
      %1290 = vadd.xlane.f32.xlu0 %v1289
      %v1291 = vpop.xlane.xlu0 %1290
      %v1292 = vsel %vm369, %v1287, 0.0
      %1293 = vadd.xlane.f32.xlu0 %v1292
      %v1294 = vpop.xlane.xlu0 %1293
      %v1295 = vsel %vm376, %v1288, 0.0
      %1296 = vadd.xlane.f32.xlu0 %v1295
      %v1297 = vpop.xlane.xlu0 %1296
      %v1298 = vmul.f32 %v1291, %v386
      %v1299 = vmul.f32 %v1294, %v386
      %v1300 = vmul.f32 %v1297, %v386
      %v1301 = vadd.f32 %v1298, 1e-06
      %v1302 = vadd.f32 %v1299, 1e-06
      %v1303 = vadd.f32 %v1300, 1e-06
      %v1304 = vrsqrt.pop %v1301
      %v1305 = vmul.f32 %v1304, %v1301
      %v1306 = vmul.f32 %v1305, %v1304
      %v1307 = vmul.f32 0.5, %v1306
      %v1308 = vsub.f32 1.5, %v1307
      %v1309 = vmul.f32 %v1304, %v1308
      %vm1310 = vweird.f32 %v1301
      %vm1311 = vweird.f32 %v1304
      %vm1312 = vmor %vm1310, %vm1311
      %v1313 = vsel %vm1312, %v1304, %v1309
      %v1314 = vrsqrt.pop %v1302
      %v1315 = vmul.f32 %v1314, %v1302
      %v1316 = vmul.f32 %v1315, %v1314
      %v1317 = vmul.f32 0.5, %v1316
      %v1318 = vsub.f32 1.5, %v1317
      %v1319 = vmul.f32 %v1314, %v1318
      %vm1320 = vweird.f32 %v1302
      %vm1321 = vweird.f32 %v1314
      %vm1322 = vmor %vm1320, %vm1321
      %v1323 = vsel %vm1322, %v1314, %v1319
      %v1324 = vrsqrt.pop %v1303
      %v1325 = vmul.f32 %v1324, %v1303
      %v1326 = vmul.f32 %v1325, %v1324
      %v1327 = vmul.f32 0.5, %v1326
      %v1328 = vsub.f32 1.5, %v1327
      %v1329 = vmul.f32 %v1324, %v1328
      %vm1330 = vweird.f32 %v1303
      %vm1331 = vweird.f32 %v1324
      %vm1332 = vmor %vm1330, %vm1331
      %v1333 = vsel %vm1332, %v1324, %v1329
      %v1334 = vmul.f32 %v1283, %v1313
      %v1335 = vmul.f32 %v1284, %v1323
      %v1336 = vmul.f32 %v1285, %v1333
      %v1337 = vmul.f32 %v1334, %v444
      %v1338 = vmul.f32 %v1335, %v444
      %v1339 = vmul.f32 %v1336, %v444
      %v1340 = vadd.f32 %v1337, %v448
      %v1341 = vadd.f32 %v1338, %v448
      %v1342 = vadd.f32 %v1339, %v448
      %v1343 = vpack.c.bf16 %v1341, %v1340
      %v1344 = vpack.c.bf16 %v1342, %v1342
      %v1346 = vsel %vm369, %v1343, 0
      %v1349 = vsel %vm369, %v1344, 0
      %1351 = vmatpush.bf16.msra.mxu0 0
      %1352 = vmatpush.bf16.msra.mxu0 0
      %1353 = vmatpush.bf16.msra.mxu0 0
      %1354 = vmatpush.bf16.msra.mxu0 0
      %1355 = vmatpush.bf16.msra.mxu0 0
      %1356 = vmatpush.bf16.msra.mxu0 0
      %1357 = vmatpush.bf16.msra.mxu0 %v464
      %1358 = vmatpush.bf16.msra.mxu0 %v463
      %1359 = vmatmul.bf16.gmra.mxu0 %v1346
      %v1360 = vpop.f32.mrf.mxu0
      %v1361 = vadd.f32 %v454, %v1360
      %v1362 = vpop.f32.mrf.mxu0
      %v1363 = vadd.f32 %v454, %v1362
      %1364 = vmatmul.bf16.gmra.mxu0 %v1349
      %v1365 = vpop.f32.mrf.mxu0
      %v1366 = vadd.f32 %v454, %v1365
      %v1367 = vpop.f32.mrf.mxu0
      %1368 = vdwg.mxu0
      %v1369 = vmul.f32 %v1361, 0.35355338
      %v1370 = vmul.f32 %v1363, 0.35355338
      %v1371 = vmul.f32 %v1366, 0.35355338
      %v1372 = vpack.c.bf16 %v1370, %v1369
      %v1373 = vpack.c.bf16 %v1371, %v1371
      %v1374 = vpack.c.bf16 %v1363, %v1361
      %v1375 = vpack.c.bf16 %v1366, %v1366
      %1378 = vrot.lane.b32.xlu0 %v1374, 96
      %v1379 = vpop.permute.xlu0 %1378
      %1380 = vrot.lane.b32.xlu0 %v1375, 96
      %v1381 = vpop.permute.xlu0 %1380
      %v1383 = vsel %vm504, %v1372, 0
      %v1386 = vsel %vm504, %v1373, 0
      %v1389 = vsel %vm504, %v1379, 0
      %v1392 = vsel %vm504, %v1381, 0
      %1394 = vmatpush.bf16.xpose.msra.mxu0 0
      %1395 = vmatpush.bf16.xpose.msra.mxu0 0
      %1396 = vmatpush.bf16.xpose.msra.mxu0 0
      %1397 = vmatpush.bf16.xpose.msra.mxu0 0
      %1398 = vmatpush.bf16.xpose.msra.mxu0 0
      %1399 = vmatpush.bf16.xpose.msra.mxu0 0
      %1400 = vmatpush.bf16.xpose.msra.mxu0 %v1392
      %1401 = vmatpush.bf16.xpose.msra.mxu0 %v1389
      %1402 = vmatmul.bf16.gmra.mxu0 %v1383
      %v1403 = vpop.f32.mrf.mxu0
      %v1404 = vadd.f32 0.0, %v1403
      %v1405 = vpop.f32.mrf.mxu0
      %v1406 = vadd.f32 0.0, %v1405
      %1407 = vmatmul.bf16.gmra.mxu0 %v1386
      %v1408 = vpop.f32.mrf.mxu0
      %v1409 = vadd.f32 0.0, %v1408
      %v1410 = vpop.f32.mrf.mxu0
      %1411 = vdwg.mxu0
      %v1412 = vsel %vm535, %v1404, -inf
      %1413 = vmax.xlane.f32.xlu0 %v1412
      %v1414 = vpop.xlane.xlu0 %1413
      %v1415 = vsel %vm535, %v1406, -inf
      %1416 = vmax.xlane.f32.xlu0 %v1415
      %v1417 = vpop.xlane.xlu0 %1416
      %v1418 = vsel %vm542, %v1409, -inf
      %1419 = vmax.xlane.f32.xlu0 %v1418
      %v1420 = vpop.xlane.xlu0 %1419
      %v1421 = vsub.f32 %v1404, %v1414
      %v1422 = vsub.f32 %v1406, %v1417
      %v1423 = vsub.f32 %v1409, %v1420
      %v1424 = vmul.f32 %v1421, 1.442695
      %v1425 = vpow.pop %v1424
      %v1426 = vmul.f32 %v1422, 1.442695
      %v1427 = vpow.pop %v1426
      %v1428 = vmul.f32 %v1423, 1.442695
      %v1429 = vpow.pop %v1428
      %v1430 = vsel %vm535, %v1425, 0.0
      %1431 = vadd.xlane.f32.xlu0 %v1430
      %v1432 = vpop.xlane.xlu0 %1431
      %v1433 = vsel %vm535, %v1427, 0.0
      %1434 = vadd.xlane.f32.xlu0 %v1433
      %v1435 = vpop.xlane.xlu0 %1434
      %v1436 = vsel %vm542, %v1429, 0.0
      %1437 = vadd.xlane.f32.xlu0 %v1436
      %v1438 = vpop.xlane.xlu0 %1437
      %v1439 = vrcp.pop %v1432
      %v1440 = vrcp.pop %v1435
      %v1441 = vrcp.pop %v1438
      %v1442 = vmul.f32 %v1425, %v1439
      %v1443 = vmul.f32 %v1427, %v1440
      %v1444 = vmul.f32 %v1429, %v1441
      %v1445 = vpack.c.bf16 %v1443, %v1442
      %v1446 = vpack.c.bf16 %v1444, %v1444
      %1447 = vrot.lane.b32.xlu0 %v1374, 64
      %v1448 = vpop.permute.xlu0 %1447
      %1449 = vrot.lane.b32.xlu0 %v1375, 64
      %v1450 = vpop.permute.xlu0 %1449
      %v1453 = vsel %vm535, %v1445, 0
      %v1456 = vsel %vm535, %v1446, 0
      %v1459 = vand.u32 %v1450, %v585
      %1461 = vmatpush.bf16.msra.mxu0 0
      %1462 = vmatpush.bf16.msra.mxu0 0
      %1463 = vmatpush.bf16.msra.mxu0 0
      %1464 = vmatpush.bf16.msra.mxu0 0
      %1465 = vmatpush.bf16.msra.mxu0 0
      %1466 = vmatpush.bf16.msra.mxu0 0
      %1467 = vmatpush.bf16.msra.mxu0 %v1459
      %1468 = vmatpush.bf16.msra.mxu0 %v1448
      %1469 = vmatmul.bf16.gmra.mxu0 %v1453
      %v1470 = vpop.f32.mrf.mxu0
      %v1471 = vadd.f32 0.0, %v1470
      %v1472 = vpop.f32.mrf.mxu0
      %v1473 = vadd.f32 0.0, %v1472
      %1474 = vmatmul.bf16.gmra.mxu0 %v1456
      %v1475 = vpop.f32.mrf.mxu0
      %v1476 = vadd.f32 0.0, %v1475
      %v1477 = vpop.f32.mrf.mxu0
      %1478 = vdwg.mxu0
      %1481 = vrot.lane.b32.xlu0 %v1372, 120
      %v1482 = vpop.permute.xlu0 %1481
      %1483 = vrot.lane.b32.xlu0 %v1373, 120
      %v1484 = vpop.permute.xlu0 %1483
      %1485 = vrot.lane.b32.xlu0 %v1374, 88
      %v1486 = vpop.permute.xlu0 %1485
      %1487 = vrot.lane.b32.xlu0 %v1375, 88
      %v1488 = vpop.permute.xlu0 %1487
      %v1490 = vsel %vm504, %v1482, 0
      %v1493 = vsel %vm504, %v1484, 0
      %v1496 = vsel %vm504, %v1486, 0
      %v1499 = vsel %vm504, %v1488, 0
      %1501 = vmatpush.bf16.xpose.msra.mxu0 0
      %1502 = vmatpush.bf16.xpose.msra.mxu0 0
      %1503 = vmatpush.bf16.xpose.msra.mxu0 0
      %1504 = vmatpush.bf16.xpose.msra.mxu0 0
      %1505 = vmatpush.bf16.xpose.msra.mxu0 0
      %1506 = vmatpush.bf16.xpose.msra.mxu0 0
      %1507 = vmatpush.bf16.xpose.msra.mxu0 %v1499
      %1508 = vmatpush.bf16.xpose.msra.mxu0 %v1496
      %1509 = vmatmul.bf16.gmra.mxu0 %v1490
      %v1510 = vpop.f32.mrf.mxu0
      %v1511 = vadd.f32 0.0, %v1510
      %v1512 = vpop.f32.mrf.mxu0
      %v1513 = vadd.f32 0.0, %v1512
      %1514 = vmatmul.bf16.gmra.mxu0 %v1493
      %v1515 = vpop.f32.mrf.mxu0
      %v1516 = vadd.f32 0.0, %v1515
      %v1517 = vpop.f32.mrf.mxu0
      %1518 = vdwg.mxu0
      %v1519 = vsel %vm535, %v1511, -inf
      %1520 = vmax.xlane.f32.xlu0 %v1519
      %v1521 = vpop.xlane.xlu0 %1520
      %v1522 = vsel %vm535, %v1513, -inf
      %1523 = vmax.xlane.f32.xlu0 %v1522
      %v1524 = vpop.xlane.xlu0 %1523
      %v1525 = vsel %vm542, %v1516, -inf
      %1526 = vmax.xlane.f32.xlu0 %v1525
      %v1527 = vpop.xlane.xlu0 %1526
      %v1528 = vsub.f32 %v1511, %v1521
      %v1529 = vsub.f32 %v1513, %v1524
      %v1530 = vsub.f32 %v1516, %v1527
      %v1531 = vmul.f32 %v1528, 1.442695
      %v1532 = vpow.pop %v1531
      %v1533 = vmul.f32 %v1529, 1.442695
      %v1534 = vpow.pop %v1533
      %v1535 = vmul.f32 %v1530, 1.442695
      %v1536 = vpow.pop %v1535
      %v1537 = vsel %vm535, %v1532, 0.0
      %1538 = vadd.xlane.f32.xlu0 %v1537
      %v1539 = vpop.xlane.xlu0 %1538
      %v1540 = vsel %vm535, %v1534, 0.0
      %1541 = vadd.xlane.f32.xlu0 %v1540
      %v1542 = vpop.xlane.xlu0 %1541
      %v1543 = vsel %vm542, %v1536, 0.0
      %1544 = vadd.xlane.f32.xlu0 %v1543
      %v1545 = vpop.xlane.xlu0 %1544
      %v1546 = vrcp.pop %v1539
      %v1547 = vrcp.pop %v1542
      %v1548 = vrcp.pop %v1545
      %v1549 = vmul.f32 %v1532, %v1546
      %v1550 = vmul.f32 %v1534, %v1547
      %v1551 = vmul.f32 %v1536, %v1548
      %v1552 = vpack.c.bf16 %v1550, %v1549
      %v1553 = vpack.c.bf16 %v1551, %v1551
      %1554 = vrot.lane.b32.xlu0 %v1374, 56
      %v1555 = vpop.permute.xlu0 %1554
      %1556 = vrot.lane.b32.xlu0 %v1375, 56
      %v1557 = vpop.permute.xlu0 %1556
      %v1560 = vsel %vm535, %v1552, 0
      %v1563 = vsel %vm535, %v1553, 0
      %v1566 = vand.u32 %v1557, %v585
      %1568 = vmatpush.bf16.msra.mxu0 0
      %1569 = vmatpush.bf16.msra.mxu0 0
      %1570 = vmatpush.bf16.msra.mxu0 0
      %1571 = vmatpush.bf16.msra.mxu0 0
      %1572 = vmatpush.bf16.msra.mxu0 0
      %1573 = vmatpush.bf16.msra.mxu0 0
      %1574 = vmatpush.bf16.msra.mxu0 %v1566
      %1575 = vmatpush.bf16.msra.mxu0 %v1555
      %1576 = vmatmul.bf16.gmra.mxu0 %v1560
      %v1577 = vpop.f32.mrf.mxu0
      %v1578 = vadd.f32 0.0, %v1577
      %v1579 = vpop.f32.mrf.mxu0
      %v1580 = vadd.f32 0.0, %v1579
      %1581 = vmatmul.bf16.gmra.mxu0 %v1563
      %v1582 = vpop.f32.mrf.mxu0
      %v1583 = vadd.f32 0.0, %v1582
      %v1584 = vpop.f32.mrf.mxu0
      %1585 = vdwg.mxu0
      %1586 = vrot.lane.b32.xlu0 %v1372, 112
      %v1587 = vpop.permute.xlu0 %1586
      %1588 = vrot.lane.b32.xlu0 %v1373, 112
      %v1589 = vpop.permute.xlu0 %1588
      %1590 = vrot.lane.b32.xlu0 %v1374, 80
      %v1591 = vpop.permute.xlu0 %1590
      %1592 = vrot.lane.b32.xlu0 %v1375, 80
      %v1593 = vpop.permute.xlu0 %1592
      %v1595 = vsel %vm504, %v1587, 0
      %v1598 = vsel %vm504, %v1589, 0
      %v1601 = vsel %vm504, %v1591, 0
      %v1604 = vsel %vm504, %v1593, 0
      %1606 = vmatpush.bf16.xpose.msra.mxu0 0
      %1607 = vmatpush.bf16.xpose.msra.mxu0 0
      %1608 = vmatpush.bf16.xpose.msra.mxu0 0
      %1609 = vmatpush.bf16.xpose.msra.mxu0 0
      %1610 = vmatpush.bf16.xpose.msra.mxu0 0
      %1611 = vmatpush.bf16.xpose.msra.mxu0 0
      %1612 = vmatpush.bf16.xpose.msra.mxu0 %v1604
      %1613 = vmatpush.bf16.xpose.msra.mxu0 %v1601
      %1614 = vmatmul.bf16.gmra.mxu0 %v1595
      %v1615 = vpop.f32.mrf.mxu0
      %v1616 = vadd.f32 0.0, %v1615
      %v1617 = vpop.f32.mrf.mxu0
      %v1618 = vadd.f32 0.0, %v1617
      %1619 = vmatmul.bf16.gmra.mxu0 %v1598
      %v1620 = vpop.f32.mrf.mxu0
      %v1621 = vadd.f32 0.0, %v1620
      %v1622 = vpop.f32.mrf.mxu0
      %1623 = vdwg.mxu0
      %v1624 = vsel %vm535, %v1616, -inf
      %1625 = vmax.xlane.f32.xlu0 %v1624
      %v1626 = vpop.xlane.xlu0 %1625
      %v1627 = vsel %vm535, %v1618, -inf
      %1628 = vmax.xlane.f32.xlu0 %v1627
      %v1629 = vpop.xlane.xlu0 %1628
      %v1630 = vsel %vm542, %v1621, -inf
      %1631 = vmax.xlane.f32.xlu0 %v1630
      %v1632 = vpop.xlane.xlu0 %1631
      %v1633 = vsub.f32 %v1616, %v1626
      %v1634 = vsub.f32 %v1618, %v1629
      %v1635 = vsub.f32 %v1621, %v1632
      %v1636 = vmul.f32 %v1633, 1.442695
      %v1637 = vpow.pop %v1636
      %v1638 = vmul.f32 %v1634, 1.442695
      %v1639 = vpow.pop %v1638
      %v1640 = vmul.f32 %v1635, 1.442695
      %v1641 = vpow.pop %v1640
      %v1642 = vsel %vm535, %v1637, 0.0
      %1643 = vadd.xlane.f32.xlu0 %v1642
      %v1644 = vpop.xlane.xlu0 %1643
      %v1645 = vsel %vm535, %v1639, 0.0
      %1646 = vadd.xlane.f32.xlu0 %v1645
      %v1647 = vpop.xlane.xlu0 %1646
      %v1648 = vsel %vm542, %v1641, 0.0
      %1649 = vadd.xlane.f32.xlu0 %v1648
      %v1650 = vpop.xlane.xlu0 %1649
      %v1651 = vrcp.pop %v1644
      %v1652 = vrcp.pop %v1647
      %v1653 = vrcp.pop %v1650
      %v1654 = vmul.f32 %v1637, %v1651
      %v1655 = vmul.f32 %v1639, %v1652
      %v1656 = vmul.f32 %v1641, %v1653
      %v1657 = vpack.c.bf16 %v1655, %v1654
      %v1658 = vpack.c.bf16 %v1656, %v1656
      %1659 = vrot.lane.b32.xlu0 %v1374, 48
      %v1660 = vpop.permute.xlu0 %1659
      %1661 = vrot.lane.b32.xlu0 %v1375, 48
      %v1662 = vpop.permute.xlu0 %1661
      %v1665 = vsel %vm535, %v1657, 0
      %v1668 = vsel %vm535, %v1658, 0
      %v1671 = vand.u32 %v1662, %v585
      %1673 = vmatpush.bf16.msra.mxu0 0
      %1674 = vmatpush.bf16.msra.mxu0 0
      %1675 = vmatpush.bf16.msra.mxu0 0
      %1676 = vmatpush.bf16.msra.mxu0 0
      %1677 = vmatpush.bf16.msra.mxu0 0
      %1678 = vmatpush.bf16.msra.mxu0 0
      %1679 = vmatpush.bf16.msra.mxu0 %v1671
      %1680 = vmatpush.bf16.msra.mxu0 %v1660
      %1681 = vmatmul.bf16.gmra.mxu0 %v1665
      %v1682 = vpop.f32.mrf.mxu0
      %v1683 = vadd.f32 0.0, %v1682
      %v1684 = vpop.f32.mrf.mxu0
      %v1685 = vadd.f32 0.0, %v1684
      %1686 = vmatmul.bf16.gmra.mxu0 %v1668
      %v1687 = vpop.f32.mrf.mxu0
      %v1688 = vadd.f32 0.0, %v1687
      %v1689 = vpop.f32.mrf.mxu0
      %1690 = vdwg.mxu0
      %1691 = vrot.lane.b32.xlu0 %v1372, 104
      %v1692 = vpop.permute.xlu0 %1691
      %1693 = vrot.lane.b32.xlu0 %v1373, 104
      %v1694 = vpop.permute.xlu0 %1693
      %1695 = vrot.lane.b32.xlu0 %v1374, 72
      %v1696 = vpop.permute.xlu0 %1695
      %1697 = vrot.lane.b32.xlu0 %v1375, 72
      %v1698 = vpop.permute.xlu0 %1697
      %v1700 = vsel %vm504, %v1692, 0
      %v1703 = vsel %vm504, %v1694, 0
      %v1706 = vsel %vm504, %v1696, 0
      %v1709 = vsel %vm504, %v1698, 0
      %1711 = vmatpush.bf16.xpose.msra.mxu0 0
      %1712 = vmatpush.bf16.xpose.msra.mxu0 0
      %1713 = vmatpush.bf16.xpose.msra.mxu0 0
      %1714 = vmatpush.bf16.xpose.msra.mxu0 0
      %1715 = vmatpush.bf16.xpose.msra.mxu0 0
      %1716 = vmatpush.bf16.xpose.msra.mxu0 0
      %1717 = vmatpush.bf16.xpose.msra.mxu0 %v1709
      %1718 = vmatpush.bf16.xpose.msra.mxu0 %v1706
      %1719 = vmatmul.bf16.gmra.mxu0 %v1700
      %v1720 = vpop.f32.mrf.mxu0
      %v1721 = vadd.f32 0.0, %v1720
      %v1722 = vpop.f32.mrf.mxu0
      %v1723 = vadd.f32 0.0, %v1722
      %1724 = vmatmul.bf16.gmra.mxu0 %v1703
      %v1725 = vpop.f32.mrf.mxu0
      %v1726 = vadd.f32 0.0, %v1725
      %v1727 = vpop.f32.mrf.mxu0
      %1728 = vdwg.mxu0
      %v1729 = vsel %vm535, %v1721, -inf
      %1730 = vmax.xlane.f32.xlu0 %v1729
      %v1731 = vpop.xlane.xlu0 %1730
      %v1732 = vsel %vm535, %v1723, -inf
      %1733 = vmax.xlane.f32.xlu0 %v1732
      %v1734 = vpop.xlane.xlu0 %1733
      %v1735 = vsel %vm542, %v1726, -inf
      %1736 = vmax.xlane.f32.xlu0 %v1735
      %v1737 = vpop.xlane.xlu0 %1736
      %v1738 = vsub.f32 %v1721, %v1731
      %v1739 = vsub.f32 %v1723, %v1734
      %v1740 = vsub.f32 %v1726, %v1737
      %v1741 = vmul.f32 %v1738, 1.442695
      %v1742 = vpow.pop %v1741
      %v1743 = vmul.f32 %v1739, 1.442695
      %v1744 = vpow.pop %v1743
      %v1745 = vmul.f32 %v1740, 1.442695
      %v1746 = vpow.pop %v1745
      %v1747 = vsel %vm535, %v1742, 0.0
      %1748 = vadd.xlane.f32.xlu0 %v1747
      %v1749 = vpop.xlane.xlu0 %1748
      %v1750 = vsel %vm535, %v1744, 0.0
      %1751 = vadd.xlane.f32.xlu0 %v1750
      %v1752 = vpop.xlane.xlu0 %1751
      %v1753 = vsel %vm542, %v1746, 0.0
      %1754 = vadd.xlane.f32.xlu0 %v1753
      %v1755 = vpop.xlane.xlu0 %1754
      %v1756 = vrcp.pop %v1749
      %v1757 = vrcp.pop %v1752
      %v1758 = vrcp.pop %v1755
      %v1759 = vmul.f32 %v1742, %v1756
      %v1760 = vmul.f32 %v1744, %v1757
      %v1761 = vmul.f32 %v1746, %v1758
      %v1762 = vpack.c.bf16 %v1760, %v1759
      %v1763 = vpack.c.bf16 %v1761, %v1761
      %1764 = vrot.lane.b32.xlu0 %v1374, 40
      %v1765 = vpop.permute.xlu0 %1764
      %1766 = vrot.lane.b32.xlu0 %v1375, 40
      %v1767 = vpop.permute.xlu0 %1766
      %v1770 = vsel %vm535, %v1762, 0
      %v1773 = vsel %vm535, %v1763, 0
      %v1776 = vand.u32 %v1767, %v585
      %1778 = vmatpush.bf16.msra.mxu0 0
      %1779 = vmatpush.bf16.msra.mxu0 0
      %1780 = vmatpush.bf16.msra.mxu0 0
      %1781 = vmatpush.bf16.msra.mxu0 0
      %1782 = vmatpush.bf16.msra.mxu0 0
      %1783 = vmatpush.bf16.msra.mxu0 0
      %1784 = vmatpush.bf16.msra.mxu0 %v1776
      %1785 = vmatpush.bf16.msra.mxu0 %v1765
      %1786 = vmatmul.bf16.gmra.mxu0 %v1770
      %v1787 = vpop.f32.mrf.mxu0
      %v1788 = vadd.f32 0.0, %v1787
      %v1789 = vpop.f32.mrf.mxu0
      %v1790 = vadd.f32 0.0, %v1789
      %1791 = vmatmul.bf16.gmra.mxu0 %v1773
      %v1792 = vpop.f32.mrf.mxu0
      %v1793 = vadd.f32 0.0, %v1792
      %v1794 = vpop.f32.mrf.mxu0
      %1795 = vdwg.mxu0
      %1799 = vrot.lane.b32.xlu0 %v1578, 8
      %v1800 = vpop.permute.xlu0 %1799
      %1801 = vrot.lane.b32.xlu0 %v1580, 8
      %v1802 = vpop.permute.xlu0 %1801
      %1803 = vrot.lane.b32.xlu0 %v1583, 8
      %v1804 = vpop.permute.xlu0 %1803
      %1811 = vrot.lane.b32.xlu0 %v1683, 16
      %v1812 = vpop.permute.xlu0 %1811
      %1813 = vrot.lane.b32.xlu0 %v1685, 16
      %v1814 = vpop.permute.xlu0 %1813
      %1815 = vrot.lane.b32.xlu0 %v1688, 16
      %v1816 = vpop.permute.xlu0 %1815
      %1823 = vrot.lane.b32.xlu0 %v1788, 24
      %v1824 = vpop.permute.xlu0 %1823
      %1825 = vrot.lane.b32.xlu0 %v1790, 24
      %v1826 = vpop.permute.xlu0 %1825
      %1827 = vrot.lane.b32.xlu0 %v1793, 24
      %v1828 = vpop.permute.xlu0 %1827
      %v1832 = vsel %vm504, %v1471, %v1800
      %v1833 = vsel %vm504, %v1473, %v1802
      %v1834 = vsel %vm504, %v1476, %v1804
      %v1835 = vsel %vm963, %v1832, %v1812
      %v1836 = vsel %vm963, %v1833, %v1814
      %v1837 = vsel %vm963, %v1834, %v1816
      %v1838 = vsel %vm967, %v1835, %v1824
      %v1839 = vsel %vm967, %v1836, %v1826
      %v1840 = vsel %vm967, %v1837, %v1828
      %v1841 = vpack.c.bf16 %v1839, %v1838
      %v1842 = vpack.c.bf16 %v1840, %v1840
      %v1844 = vsel %vm369, %v1841, 0
      %v1847 = vsel %vm369, %v1842, 0
      %1849 = vmatpush.bf16.msra.mxu0 0
      %1850 = vmatpush.bf16.msra.mxu0 0
      %1851 = vmatpush.bf16.msra.mxu0 0
      %1852 = vmatpush.bf16.msra.mxu0 0
      %1853 = vmatpush.bf16.msra.mxu0 0
      %1854 = vmatpush.bf16.msra.mxu0 0
      %1855 = vmatpush.bf16.msra.mxu0 %v983
      %1856 = vmatpush.bf16.msra.mxu0 %v982
      %1857 = vmatmul.bf16.gmra.mxu0 %v1844
      %v1858 = vpop.f32.mrf.mxu0
      %v1859 = vadd.f32 %v973, %v1858
      %v1860 = vpop.f32.mrf.mxu0
      %v1861 = vadd.f32 %v973, %v1860
      %1862 = vmatmul.bf16.gmra.mxu0 %v1847
      %v1863 = vpop.f32.mrf.mxu0
      %v1864 = vadd.f32 %v973, %v1863
      %v1865 = vpop.f32.mrf.mxu0
      %1866 = vdwg.mxu0
      %v1867 = vmul.f32 %v1010, %v1859
      %v1868 = vmul.f32 %v1010, %v1861
      %v1869 = vmul.f32 %v1010, %v1864
      %v1870 = vadd.f32 %v1268, %v1867
      %v1871 = vadd.f32 %v1269, %v1868
      %v1872 = vadd.f32 %v1270, %v1869
      %v1873 = vsel %vm369, %v1870, 0.0
      %1874 = vadd.xlane.f32.xlu0 %v1873
      %v1875 = vpop.xlane.xlu0 %1874
      %v1876 = vsel %vm369, %v1871, 0.0
      %1877 = vadd.xlane.f32.xlu0 %v1876
      %v1878 = vpop.xlane.xlu0 %1877
      %v1879 = vsel %vm376, %v1872, 0.0
      %1880 = vadd.xlane.f32.xlu0 %v1879
      %v1881 = vpop.xlane.xlu0 %1880
      %v1882 = vmul.f32 %v1875, %v386
      %v1883 = vmul.f32 %v1878, %v386
      %v1884 = vmul.f32 %v1881, %v386
      %v1885 = vsub.f32 %v1870, %v1882
      %v1886 = vsub.f32 %v1871, %v1883
      %v1887 = vsub.f32 %v1872, %v1884
      %v1888 = vmul.f32 %v1885, %v1885
      %v1889 = vmul.f32 %v1886, %v1886
      %v1890 = vmul.f32 %v1887, %v1887
      %v1891 = vsel %vm369, %v1888, 0.0
      %1892 = vadd.xlane.f32.xlu0 %v1891
      %v1893 = vpop.xlane.xlu0 %1892
      %v1894 = vsel %vm369, %v1889, 0.0
      %1895 = vadd.xlane.f32.xlu0 %v1894
      %v1896 = vpop.xlane.xlu0 %1895
      %v1897 = vsel %vm376, %v1890, 0.0
      %1898 = vadd.xlane.f32.xlu0 %v1897
      %v1899 = vpop.xlane.xlu0 %1898
      %v1900 = vmul.f32 %v1893, %v386
      %v1901 = vmul.f32 %v1896, %v386
      %v1902 = vmul.f32 %v1899, %v386
      %v1903 = vadd.f32 %v1900, 1e-06
      %v1904 = vadd.f32 %v1901, 1e-06
      %v1905 = vadd.f32 %v1902, 1e-06
      %v1906 = vrsqrt.pop %v1903
      %v1907 = vmul.f32 %v1906, %v1903
      %v1908 = vmul.f32 %v1907, %v1906
      %v1909 = vmul.f32 0.5, %v1908
      %v1910 = vsub.f32 1.5, %v1909
      %v1911 = vmul.f32 %v1906, %v1910
      %vm1912 = vweird.f32 %v1903
      %vm1913 = vweird.f32 %v1906
      %vm1914 = vmor %vm1912, %vm1913
      %v1915 = vsel %vm1914, %v1906, %v1911
      %v1916 = vrsqrt.pop %v1904
      %v1917 = vmul.f32 %v1916, %v1904
      %v1918 = vmul.f32 %v1917, %v1916
      %v1919 = vmul.f32 0.5, %v1918
      %v1920 = vsub.f32 1.5, %v1919
      %v1921 = vmul.f32 %v1916, %v1920
      %vm1922 = vweird.f32 %v1904
      %vm1923 = vweird.f32 %v1916
      %vm1924 = vmor %vm1922, %vm1923
      %v1925 = vsel %vm1924, %v1916, %v1921
      %v1926 = vrsqrt.pop %v1905
      %v1927 = vmul.f32 %v1926, %v1905
      %v1928 = vmul.f32 %v1927, %v1926
      %v1929 = vmul.f32 0.5, %v1928
      %v1930 = vsub.f32 1.5, %v1929
      %v1931 = vmul.f32 %v1926, %v1930
      %vm1932 = vweird.f32 %v1905
      %vm1933 = vweird.f32 %v1926
      %vm1934 = vmor %vm1932, %vm1933
      %v1935 = vsel %vm1934, %v1926, %v1931
      %v1936 = vmul.f32 %v1885, %v1915
      %v1937 = vmul.f32 %v1886, %v1925
      %v1938 = vmul.f32 %v1887, %v1935
      %v1939 = vmul.f32 %v1936, %v1083
      %v1940 = vmul.f32 %v1937, %v1083
      %v1941 = vmul.f32 %v1938, %v1083
      %v1942 = vadd.f32 %v1939, %v1087
      %v1943 = vadd.f32 %v1940, %v1087
      %v1944 = vadd.f32 %v1941, %v1087
      %v1945 = vpack.c.bf16 %v1943, %v1942
      %v1946 = vpack.c.bf16 %v1944, %v1944
      %v1948 = vsel %vm369, %v1945, 0
      %v1951 = vsel %vm369, %v1946, 0
      %1953 = vmatpush.bf16.msra.mxu0 0
      %1954 = vmatpush.bf16.msra.mxu0 0
      %1955 = vmatpush.bf16.msra.mxu0 0
      %1956 = vmatpush.bf16.msra.mxu0 0
      %1957 = vmatpush.bf16.msra.mxu0 0
      %1958 = vmatpush.bf16.msra.mxu0 0
      %1959 = vmatpush.bf16.msra.mxu0 %v1103
      %1960 = vmatpush.bf16.msra.mxu0 %v1102
      %1961 = vmatmul.bf16.gmra.mxu0 %v1948
      %v1962 = vpop.f32.mrf.mxu0
      %v1963 = vadd.f32 %v1093, %v1962
      %v1964 = vpop.f32.mrf.mxu0
      %v1965 = vadd.f32 %v1093, %v1964
      %1966 = vmatmul.bf16.gmra.mxu0 %v1951
      %v1967 = vpop.f32.mrf.mxu0
      %v1968 = vadd.f32 %v1093, %v1967
      %v1969 = vpop.f32.mrf.mxu0
      %1970 = vdwg.mxu0
      %v1971 = vmul.f32 %v1963, %v1963
      %v1972 = vmul.f32 %v1965, %v1965
      %v1973 = vmul.f32 %v1968, %v1968
      %v1974 = vmul.f32 %v1963, %v1971
      %v1975 = vmul.f32 %v1965, %v1972
      %v1976 = vmul.f32 %v1968, %v1973
      %v1977 = vmul.f32 %v1974, 0.044715
      %v1978 = vmul.f32 %v1975, 0.044715
      %v1979 = vmul.f32 %v1976, 0.044715
      %v1980 = vadd.f32 %v1963, %v1977
      %v1981 = vadd.f32 %v1965, %v1978
      %v1982 = vadd.f32 %v1968, %v1979
      %v1983 = vmul.f32 %v1980, 0.7978846
      %v1984 = vmul.f32 %v1981, 0.7978846
      %v1985 = vmul.f32 %v1982, 0.7978846
      %v1986 = vtanh.pop %v1983
      %v1987 = vtanh.pop %v1984
      %v1988 = vtanh.pop %v1985
      %v1989 = vadd.f32 %v1986, 1.0
      %v1990 = vadd.f32 %v1987, 1.0
      %v1991 = vadd.f32 %v1988, 1.0
      %v1992 = vmul.f32 %v1989, 0.5
      %v1993 = vmul.f32 %v1990, 0.5
      %v1994 = vmul.f32 %v1991, 0.5
      %v1995 = vmul.f32 %v1963, %v1992
      %v1996 = vmul.f32 %v1965, %v1993
      %v1997 = vmul.f32 %v1968, %v1994
      %v1998 = vpack.c.bf16 %v1996, %v1995
      %v1999 = vpack.c.bf16 %v1997, %v1997
      %2000 = vmatpush.bf16.msra.mxu0 %v1199
      %2001 = vmatpush.bf16.msra.mxu0 %v1198
      %2002 = vmatpush.bf16.msra.mxu0 %v1197
      %2003 = vmatpush.bf16.msra.mxu0 %v1196
      %2004 = vmatpush.bf16.msra.mxu0 %v1195
      %2005 = vmatpush.bf16.msra.mxu0 %v1194
      %2006 = vmatpush.bf16.msra.mxu0 %v1193
      %2007 = vmatpush.bf16.msra.mxu0 %v1192
      %2008 = vmatmul.bf16.gmra.mxu0 %v1998
      %v2009 = vpop.f32.mrf.mxu0
      %v2010 = vadd.f32 %v1159, %v2009
      %v2011 = vpop.f32.mrf.mxu0
      %v2012 = vadd.f32 %v1159, %v2011
      %2013 = vmatmul.bf16.gmra.mxu0 %v1999
      %v2014 = vpop.f32.mrf.mxu0
      %v2015 = vadd.f32 %v1159, %v2014
      %v2016 = vpop.f32.mrf.mxu0
      %2017 = vdwg.mxu0
      %v2018 = vmul.f32 %v1226, %v2010
      %v2019 = vmul.f32 %v1226, %v2012
      %v2020 = vmul.f32 %v1226, %v2015
      %v2021 = vadd.f32 %v1870, %v2018
      %v2022 = vadd.f32 %v1871, %v2019
      %v2023 = vadd.f32 %v1872, %v2020
      %2024 = vst.msk [vmem:[%s1267] sm:$0xff] %vm369, %v2021
      %2025 = vst.msk [vmem:[%s1267 + $0x8] sm:$0xff] %vm369, %v2022
      %2026 = vst.msk [vmem:[%s1267 + $0x10] sm:$0x1] %vm376, %v2023
      // Predicated region
      $region65: #{depth_estimator_forward.2} parent=43 // pred_check
        %p2027 = pneg %p1236
      $region66: #{depth_estimator_forward.2} parent=43 // pred_check_branch
        %2029 = sbr.rel (%p2027) target = $region68
      $region67: #{depth_estimator_forward.2} parent=43 // pred_region
        %s2030 = scalar_lea.vmem %s6, 24
        %2031 = vst.msk [vmem:[%s2030] sm:$0xff] %vm369, %v2021
        %2032 = vst.msk [vmem:[%s2030 + $0x8] sm:$0xff] %vm369, %v2022
        %2033 = vst.msk [vmem:[%s2030 + $0x10] sm:$0x1] %vm376, %v2023
      $region68: #{depth_estimator_forward.2} parent=43 // pred_fallthru
        _
      // Predicated region
      $region69: #{depth_estimator_forward.2} parent=43 // pred_check
        %p2034 = pneg %p1243
      $region70: #{depth_estimator_forward.2} parent=43 // pred_check_branch
        %2036 = sbr.rel (%p2034) target = $region72
      $region71: #{depth_estimator_forward.2} parent=43 // pred_region
        %s2037 = scalar_lea.vmem %s6, 72
        %2038 = vst.msk [vmem:[%s2037] sm:$0xff] %vm369, %v2021
        %2039 = vst.msk [vmem:[%s2037 + $0x8] sm:$0xff] %vm369, %v2022
        %2040 = vst.msk [vmem:[%s2037 + $0x10] sm:$0x1] %vm376, %v2023
      $region72: #{depth_estimator_forward.2} parent=43 // pred_fallthru
        _
      // Predicated region
      $region73: #{depth_estimator_forward.2} parent=43 // pred_check
        %p2041 = pneg %p1251
      $region74: #{depth_estimator_forward.2} parent=43 // pred_check_branch
        %2043 = sbr.rel (%p2041) target = $region76
      $region75: #{depth_estimator_forward.2} parent=43 // pred_region
        %s2044 = scalar_lea.vmem %s6, 120
        %2045 = vst.msk [vmem:[%s2044] sm:$0xff] %vm369, %v2021
        %2046 = vst.msk [vmem:[%s2044 + $0x8] sm:$0xff] %vm369, %v2022
        %2047 = vst.msk [vmem:[%s2044 + $0x10] sm:$0x1] %vm376, %v2023
      $region76: #{depth_estimator_forward.2} parent=43 // pred_fallthru
        _
      // Predicated region
      $region77: #{depth_estimator_forward.2} parent=43 // pred_check
        %p2048 = pneg %p1259
      $region78: #{depth_estimator_forward.2} parent=43 // pred_check_branch
        %2050 = sbr.rel (%p2048) target = $region80
      $region79: #{depth_estimator_forward.2} parent=43 // pred_region
        %s2051 = scalar_lea.vmem %s6, 168
        %2052 = vst.msk [vmem:[%s2051] sm:$0xff] %vm369, %v2021
        %2053 = vst.msk [vmem:[%s2051 + $0x8] sm:$0xff] %vm369, %v2022
        %2054 = vst.msk [vmem:[%s2051 + $0x10] sm:$0x1] %vm376, %v2023
      $region80: #{depth_estimator_forward.2} parent=43 // pred_fallthru
        _
      // Predicated region
      $region81: #{depth_estimator_forward.2} parent=43 // pred_check
        %p2055 = pneg %p181
      $region82: #{depth_estimator_forward.2} parent=43 // pred_check_branch
        %2057 = sbr.rel (%p2055) target = $region84
      $region83: #{depth_estimator_forward.2} parent=43 // pred_region
        _
      $region84: #{depth_estimator_forward.2} parent=43 // pred_fallthru
        _
      // Predicated region
      $region85: #{depth_estimator_forward.2} parent=43 // pred_check
        %p2058 = pneg %p181
      $region86: #{depth_estimator_forward.2} parent=43 // pred_check_branch
        %2060 = sbr.rel (%p2058) target = $region88
      $region87: #{depth_estimator_forward.2} parent=43 // pred_region
        _
      $region88: #{depth_estimator_forward.2} parent=43 // pred_fallthru
        _
    $region44: #{depth_estimator_forward.2} parent=5 // pred_fallthru
      _
    %p2061 = scmp.le.s32.totalorder 2, %s12
    // Predicated region
    $region89: #{depth_estimator_forward.2} parent=5 // pred_check
      %p2062 = pneg %p2061
    $region90: #{depth_estimator_forward.2} parent=5 // pred_check_branch
      %2064 = sbr.rel (%p2062) target = $region92
    $region91: #{depth_estimator_forward.2} parent=5 // pred_region
      %s2065 = ssub.s32 %s12, 2
    $region92: #{depth_estimator_forward.2} parent=5 // pred_fallthru
      _
  $region6: #{depth_estimator_forward.2} parent=0 // loop_footer
    %s16 = sadd.s32 1, %s12
  $region7: #{depth_estimator_forward.2} parent=0 // loop_footer_branch
    %11 = sbr.rel target = $region3
  $region8: #{depth_estimator_forward.2} parent=0 // loop_exit
    _

// kernel: depth_estimator_forward.3
$region0: #{depth_estimator_forward.3}
  #allocation0 [shape = 'u32[]', space=smem, size = 0x4, offset = 0x4, fixed_abs, tag = 'smem constant byte address 0x4 - core index']
  #allocation1 [shape = 'u32[72,128]{1,0:T(1,128)}', space=vmem, size = 0x9000, scoped, tag = 'internal scratch']
  #allocation2 [shape = 'f32[304,64]{1,0:T(8,128)}', space=vmem, size = 0x26000, scoped, tag = 'scratch operand']
  #allocation3 [shape = 'f32[1,1]{1,0:T(1,128)S(1)}', space=vmem, size = 0x200, scoped, tag = 'scoped memory for depth_estimator_forward.3']
  %s0 = inlined_call_operand.vmem [shape: f32[4,32,32], index: 0, kind: input, shape index: {}]
  %s1 = inlined_call_operand.vmem [shape: bf16[4,32,64], index: 1, kind: input, shape index: {}]
  %s2 = inlined_call_operand.vmem [shape: f32[4,1,64], index: 2, kind: input, shape index: {}]
  %s3 = inlined_call_operand.vmem [shape: f32[4,1,64], index: 3, kind: input, shape index: {}]
  %s4 = inlined_call_operand.vmem [shape: f32[4,1,64], index: 4, kind: input, shape index: {}]
  %s5 = inlined_call_operand.vmem [shape: f32[256,16], index: 5, kind: input, shape index: {}]
  %s6 = inlined_call_operand.vmem [shape: f32[3,256,1], index: 6, kind: input, shape index: {}]
  %s7 = inlined_call_operand.vmem [shape: bf16[3,3,64,32], index: 7, kind: input, shape index: {}]
  %s8 = inlined_call_operand.vmem [shape: f32[1,32], index: 8, kind: input, shape index: {}]
  %s9 = inlined_call_operand.vmem [shape: bf16[3,3,32,32], index: 9, kind: input, shape index: {}]
  %s10 = inlined_call_operand.vmem [shape: f32[1,32], index: 10, kind: input, shape index: {}]
  %s11 = inlined_call_operand.vmem [shape: f32[1,32], index: 11, kind: input, shape index: {}]
  %s12 = inlined_call_operand.<no memory space> [shape: f32[1,1], index: 12, kind: input, shape index: {}]
  %s13 = inlined_call_operand.vmem [shape: f32[2,1,256], index: 13, kind: output, shape index: {}]
  %s14 = sld [smem:[#allocation0]]
  $region85: #{depth_estimator_forward.3} parent=0
    _
  %s16 = ssub.s32 1, %s14
  %s17 = scalar_select 0, %s16, %s14
  %v18 = vstv %s12
  %19 = vst [vmem:[#allocation3] sm:$0x1] %v18
  loop: start=0, step=1, limit=4
  $region2: #{depth_estimator_forward.3} parent=0 // loop_pre_header
    _
  $region3: #{depth_estimator_forward.3} parent=0 // loop_header
    %s21 = sphi 0, %s25
    %p22 = scmp.ge.s32.totalorder %s21, 4
    %s29 = sphi 0, %s29
    %s31 = sphi 0, %s29
    %s32 = sphi 0, %s31
    %s46 = sphi 0, %s32
    %s50 = sphi 0, %s50
    %s52 = sphi 0, %s50
    %s53 = sphi 0, %s52
    %s67 = sphi 0, %s53
    %s71 = sphi 0, %s71
    %s73 = sphi 0, %s71
    %s74 = sphi 0, %s73
    %s88 = sphi 0, %s74
    %s92 = sphi 0, %s92
    %s94 = sphi 0, %s92
    %s95 = sphi 0, %s94
    %s109 = sphi 0, %s95
    %s113 = sphi 0, %s113
    %s115 = sphi 0, %s113
    %s116 = sphi 0, %s115
    %s130 = sphi 0, %s116
    %s134 = sphi 0, %s134
    %s136 = sphi 0, %s134
    %s137 = sphi 0, %s136
    %s151 = sphi 0, %s137
    %s155 = sphi 0, %s155
    %s157 = sphi 0, %s155
    %s158 = sphi 0, %s157
    %s172 = sphi 0, %s158
    %s176 = sphi 0, %s176
    %s178 = sphi 0, %s176
    %s179 = sphi 0, %s178
    %s193 = sphi 0, %s179
    %s197 = sphi 0, %s197
    %s199 = sphi 0, %s197
    %s200 = sphi 0, %s199
    %s214 = sphi 0, %s200
    %s218 = sphi 0, %s218
    %s220 = sphi 0, %s218
    %s221 = sphi 0, %s220
    %s235 = sphi 0, %s221
    %s239 = sphi 0, %s239
    %s241 = sphi 0, %s239
    %s242 = sphi 0, %s241
    %s256 = sphi 0, %s242
    %s260 = sphi 0, %s260
    %s262 = sphi 0, %s260
    %s263 = sphi 0, %s262
    %s277 = sphi 0, %s263
    %s281 = sphi 0, %s281
    %s283 = sphi 0, %s281
    %s284 = sphi 0, %s283
    %s298 = sphi 0, %s284
    %s304 = sphi 0, %s306
    %s307 = sphi 0, %s304
    %s308 = sphi 0, %s307
    %s324 = sphi 0, %s308
  $region4: #{depth_estimator_forward.3} parent=0 // loop_header_branch
    %24 = sbr.rel (%p22) target = $region8
  $region5: #{depth_estimator_forward.3} parent=0 // loop_body
    %s26 = ssub.s32 %s21, 1
    %s27 = ssub.s32 %s21, 2
    %s28 = sadd.s32 %s21, 1
    %s30 = sadd.s32 %s29, 1
    %p33 = scmp.eq.s32.totalorder %s21, 1
    %p34 = scmp.ne.s32.totalorder %s29, %s31
    %p35 = scmp.eq.s32.totalorder %s21, 0
    %p36 = por %p34, %p35
    %p37 = scmp.ne.s32.totalorder %s29, %s31
    %p38 = scmp.eq.s32.totalorder %s26, 1
    %p39 = por %p37, %p38
    %p40 = scmp.ne.s32.totalorder %s31, %s32
    %p41 = scmp.eq.s32.totalorder %s26, 0
    %p42 = por %p40, %p41
    %p43 = scmp.ne.s32.totalorder %s31, %s32
    %p44 = scmp.eq.s32.totalorder %s27, 1
    %p45 = por %p43, %p44
    %p47 = scmp.ne.s32.totalorder %s32, %s46
    %p48 = scmp.eq.s32.totalorder %s27, 0
    %p49 = por %p47, %p48
    %s51 = sadd.s32 %s50, 1
    %p54 = scmp.eq.s32.totalorder %s21, 1
    %p55 = scmp.ne.s32.totalorder %s50, %s52
    %p56 = scmp.eq.s32.totalorder %s21, 0
    %p57 = por %p55, %p56
    %p58 = scmp.ne.s32.totalorder %s50, %s52
    %p59 = scmp.eq.s32.totalorder %s26, 1
    %p60 = por %p58, %p59
    %p61 = scmp.ne.s32.totalorder %s52, %s53
    %p62 = scmp.eq.s32.totalorder %s26, 0
    %p63 = por %p61, %p62
    %p64 = scmp.ne.s32.totalorder %s52, %s53
    %p65 = scmp.eq.s32.totalorder %s27, 1
    %p66 = por %p64, %p65
    %p68 = scmp.ne.s32.totalorder %s53, %s67
    %p69 = scmp.eq.s32.totalorder %s27, 0
    %p70 = por %p68, %p69
    %s72 = sadd.s32 %s71, 1
    %p75 = scmp.eq.s32.totalorder %s21, 1
    %p76 = scmp.ne.s32.totalorder %s71, %s73
    %p77 = scmp.eq.s32.totalorder %s21, 0
    %p78 = por %p76, %p77
    %p79 = scmp.ne.s32.totalorder %s71, %s73
    %p80 = scmp.eq.s32.totalorder %s26, 1
    %p81 = por %p79, %p80
    %p82 = scmp.ne.s32.totalorder %s73, %s74
    %p83 = scmp.eq.s32.totalorder %s26, 0
    %p84 = por %p82, %p83
    %p85 = scmp.ne.s32.totalorder %s73, %s74
    %p86 = scmp.eq.s32.totalorder %s27, 1
    %p87 = por %p85, %p86
    %p89 = scmp.ne.s32.totalorder %s74, %s88
    %p90 = scmp.eq.s32.totalorder %s27, 0
    %p91 = por %p89, %p90
    %s93 = sadd.s32 %s92, 1
    %p96 = scmp.eq.s32.totalorder %s21, 1
    %p97 = scmp.ne.s32.totalorder %s92, %s94
    %p98 = scmp.eq.s32.totalorder %s21, 0
    %p99 = por %p97, %p98
    %p100 = scmp.ne.s32.totalorder %s92, %s94
    %p101 = scmp.eq.s32.totalorder %s26, 1
    %p102 = por %p100, %p101
    %p103 = scmp.ne.s32.totalorder %s94, %s95
    %p104 = scmp.eq.s32.totalorder %s26, 0
    %p105 = por %p103, %p104
    %p106 = scmp.ne.s32.totalorder %s94, %s95
    %p107 = scmp.eq.s32.totalorder %s27, 1
    %p108 = por %p106, %p107
    %p110 = scmp.ne.s32.totalorder %s95, %s109
    %p111 = scmp.eq.s32.totalorder %s27, 0
    %p112 = por %p110, %p111
    %s114 = sadd.s32 %s113, 1
    %p117 = scmp.eq.s32.totalorder %s21, 1
    %p118 = scmp.ne.s32.totalorder %s113, %s115
    %p119 = scmp.eq.s32.totalorder %s21, 0
    %p120 = por %p118, %p119
    %p121 = scmp.ne.s32.totalorder %s113, %s115
    %p122 = scmp.eq.s32.totalorder %s26, 1
    %p123 = por %p121, %p122
    %p124 = scmp.ne.s32.totalorder %s115, %s116
    %p125 = scmp.eq.s32.totalorder %s26, 0
    %p126 = por %p124, %p125
    %p127 = scmp.ne.s32.totalorder %s115, %s116
    %p128 = scmp.eq.s32.totalorder %s27, 1
    %p129 = por %p127, %p128
    %p131 = scmp.ne.s32.totalorder %s116, %s130
    %p132 = scmp.eq.s32.totalorder %s27, 0
    %p133 = por %p131, %p132
    %s135 = sadd.s32 %s134, 1
    %p138 = scmp.eq.s32.totalorder %s21, 1
    %p139 = scmp.ne.s32.totalorder %s134, %s136
    %p140 = scmp.eq.s32.totalorder %s21, 0
    %p141 = por %p139, %p140
    %p142 = scmp.ne.s32.totalorder %s134, %s136
    %p143 = scmp.eq.s32.totalorder %s26, 1
    %p144 = por %p142, %p143
    %p145 = scmp.ne.s32.totalorder %s136, %s137
    %p146 = scmp.eq.s32.totalorder %s26, 0
    %p147 = por %p145, %p146
    %p148 = scmp.ne.s32.totalorder %s136, %s137
    %p149 = scmp.eq.s32.totalorder %s27, 1
    %p150 = por %p148, %p149
    %p152 = scmp.ne.s32.totalorder %s137, %s151
    %p153 = scmp.eq.s32.totalorder %s27, 0
    %p154 = por %p152, %p153
    %s156 = sadd.s32 %s155, 1
    %p159 = scmp.eq.s32.totalorder %s21, 1
    %p160 = scmp.ne.s32.totalorder %s155, %s157
    %p161 = scmp.eq.s32.totalorder %s21, 0
    %p162 = por %p160, %p161
    %p163 = scmp.ne.s32.totalorder %s155, %s157
    %p164 = scmp.eq.s32.totalorder %s26, 1
    %p165 = por %p163, %p164
    %p166 = scmp.ne.s32.totalorder %s157, %s158
    %p167 = scmp.eq.s32.totalorder %s26, 0
    %p168 = por %p166, %p167
    %p169 = scmp.ne.s32.totalorder %s157, %s158
    %p170 = scmp.eq.s32.totalorder %s27, 1
    %p171 = por %p169, %p170
    %p173 = scmp.ne.s32.totalorder %s158, %s172
    %p174 = scmp.eq.s32.totalorder %s27, 0
    %p175 = por %p173, %p174
    %s177 = sadd.s32 %s176, 1
    %p180 = scmp.eq.s32.totalorder %s21, 1
    %p181 = scmp.ne.s32.totalorder %s176, %s178
    %p182 = scmp.eq.s32.totalorder %s21, 0
    %p183 = por %p181, %p182
    %p184 = scmp.ne.s32.totalorder %s176, %s178
    %p185 = scmp.eq.s32.totalorder %s26, 1
    %p186 = por %p184, %p185
    %p187 = scmp.ne.s32.totalorder %s178, %s179
    %p188 = scmp.eq.s32.totalorder %s26, 0
    %p189 = por %p187, %p188
    %p190 = scmp.ne.s32.totalorder %s178, %s179
    %p191 = scmp.eq.s32.totalorder %s27, 1
    %p192 = por %p190, %p191
    %p194 = scmp.ne.s32.totalorder %s179, %s193
    %p195 = scmp.eq.s32.totalorder %s27, 0
    %p196 = por %p194, %p195
    %s198 = sadd.s32 %s197, 1
    %p201 = scmp.eq.s32.totalorder %s21, 1
    %p202 = scmp.ne.s32.totalorder %s197, %s199
    %p203 = scmp.eq.s32.totalorder %s21, 0
    %p204 = por %p202, %p203
    %p205 = scmp.ne.s32.totalorder %s197, %s199
    %p206 = scmp.eq.s32.totalorder %s26, 1
    %p207 = por %p205, %p206
    %p208 = scmp.ne.s32.totalorder %s199, %s200
    %p209 = scmp.eq.s32.totalorder %s26, 0
    %p210 = por %p208, %p209
    %p211 = scmp.ne.s32.totalorder %s199, %s200
    %p212 = scmp.eq.s32.totalorder %s27, 1
    %p213 = por %p211, %p212
    %p215 = scmp.ne.s32.totalorder %s200, %s214
    %p216 = scmp.eq.s32.totalorder %s27, 0
    %p217 = por %p215, %p216
    %s219 = sadd.s32 %s218, 1
    %p222 = scmp.eq.s32.totalorder %s21, 1
    %p223 = scmp.ne.s32.totalorder %s218, %s220
    %p224 = scmp.eq.s32.totalorder %s21, 0
    %p225 = por %p223, %p224
    %p226 = scmp.ne.s32.totalorder %s218, %s220
    %p227 = scmp.eq.s32.totalorder %s26, 1
    %p228 = por %p226, %p227
    %p229 = scmp.ne.s32.totalorder %s220, %s221
    %p230 = scmp.eq.s32.totalorder %s26, 0
    %p231 = por %p229, %p230
    %p232 = scmp.ne.s32.totalorder %s220, %s221
    %p233 = scmp.eq.s32.totalorder %s27, 1
    %p234 = por %p232, %p233
    %p236 = scmp.ne.s32.totalorder %s221, %s235
    %p237 = scmp.eq.s32.totalorder %s27, 0
    %p238 = por %p236, %p237
    %s240 = sadd.s32 %s239, 1
    %p243 = scmp.eq.s32.totalorder %s21, 1
    %p244 = scmp.ne.s32.totalorder %s239, %s241
    %p245 = scmp.eq.s32.totalorder %s21, 0
    %p246 = por %p244, %p245
    %p247 = scmp.ne.s32.totalorder %s239, %s241
    %p248 = scmp.eq.s32.totalorder %s26, 1
    %p249 = por %p247, %p248
    %p250 = scmp.ne.s32.totalorder %s241, %s242
    %p251 = scmp.eq.s32.totalorder %s26, 0
    %p252 = por %p250, %p251
    %p253 = scmp.ne.s32.totalorder %s241, %s242
    %p254 = scmp.eq.s32.totalorder %s27, 1
    %p255 = por %p253, %p254
    %p257 = scmp.ne.s32.totalorder %s242, %s256
    %p258 = scmp.eq.s32.totalorder %s27, 0
    %p259 = por %p257, %p258
    %s261 = sadd.s32 %s260, 1
    %p264 = scmp.eq.s32.totalorder %s21, 1
    %p265 = scmp.ne.s32.totalorder %s260, %s262
    %p266 = scmp.eq.s32.totalorder %s21, 0
    %p267 = por %p265, %p266
    %p268 = scmp.ne.s32.totalorder %s260, %s262
    %p269 = scmp.eq.s32.totalorder %s26, 1
    %p270 = por %p268, %p269
    %p271 = scmp.ne.s32.totalorder %s262, %s263
    %p272 = scmp.eq.s32.totalorder %s26, 0
    %p273 = por %p271, %p272
    %p274 = scmp.ne.s32.totalorder %s262, %s263
    %p275 = scmp.eq.s32.totalorder %s27, 1
    %p276 = por %p274, %p275
    %p278 = scmp.ne.s32.totalorder %s263, %s277
    %p279 = scmp.eq.s32.totalorder %s27, 0
    %p280 = por %p278, %p279
    %s282 = sadd.s32 %s281, 1
    %p285 = scmp.eq.s32.totalorder %s21, 1
    %p286 = scmp.ne.s32.totalorder %s281, %s283
    %p287 = scmp.eq.s32.totalorder %s21, 0
    %p288 = por %p286, %p287
    %p289 = scmp.ne.s32.totalorder %s281, %s283
    %p290 = scmp.eq.s32.totalorder %s26, 1
    %p291 = por %p289, %p290
    %p292 = scmp.ne.s32.totalorder %s283, %s284
    %p293 = scmp.eq.s32.totalorder %s26, 0
    %p294 = por %p292, %p293
    %p295 = scmp.ne.s32.totalorder %s283, %s284
    %p296 = scmp.eq.s32.totalorder %s27, 1
    %p297 = por %p295, %p296
    %p299 = scmp.ne.s32.totalorder %s284, %s298
    %p300 = scmp.eq.s32.totalorder %s27, 0
    %p301 = por %p299, %p300
    %s302 = ssub.s32 %s21, %s28
    %p303 = scmp.eq.s32.totalorder %s302, 0
    %s305 = sadd.s32 %s304, 1
    %s306 = scalar_select %p303, %s304, %s305
    %p309 = pneg %p303
    %p310 = scmp.eq.s32.totalorder %s21, 1
    %p311 = por %p309, %p310
    %p312 = scmp.ne.s32.totalorder %s304, %s307
    %p313 = scmp.eq.s32.totalorder %s21, 0
    %p314 = por %p312, %p313
    %p315 = scmp.ne.s32.totalorder %s304, %s307
    %p316 = scmp.eq.s32.totalorder %s26, 1
    %p317 = por %p315, %p316
    %p318 = scmp.ne.s32.totalorder %s307, %s308
    %p319 = scmp.eq.s32.totalorder %s26, 0
    %p320 = por %p318, %p319
    %p321 = scmp.ne.s32.totalorder %s307, %s308
    %p322 = scmp.eq.s32.totalorder %s27, 1
    %p323 = por %p321, %p322
    %p325 = scmp.ne.s32.totalorder %s308, %s324
    %p326 = scmp.eq.s32.totalorder %s27, 0
    %p327 = por %p325, %p326
    %p328 = scmp.le.s32.totalorder 1, %s21
    %p329 = scmp.lt.s32.totalorder %s21, 3
    %p330 = pnand %p328, %p329
    %p331 = pneg %p330
    // Predicated region
    $region9: #{depth_estimator_forward.3} parent=5 // pred_check
      _
    $region10: #{depth_estimator_forward.3} parent=5 // pred_check_branch
      %333 = sbr.rel (%p330) target = $region12
    $region11: #{depth_estimator_forward.3} parent=5 // pred_region
      %s334 = ssub.s32 %s21, 1
      // Predicated region
      $region13: #{depth_estimator_forward.3} parent=11 // pred_check
        %p335 = pneg %p42
      $region14: #{depth_estimator_forward.3} parent=11 // pred_check_branch
        %337 = sbr.rel (%p335) target = $region16
      $region15: #{depth_estimator_forward.3} parent=11 // pred_region
        _
      $region16: #{depth_estimator_forward.3} parent=11 // pred_fallthru
        _
      // Predicated region
      $region17: #{depth_estimator_forward.3} parent=11 // pred_check
        %p338 = pneg %p63
      $region18: #{depth_estimator_forward.3} parent=11 // pred_check_branch
        %340 = sbr.rel (%p338) target = $region20
      $region19: #{depth_estimator_forward.3} parent=11 // pred_region
        _
      $region20: #{depth_estimator_forward.3} parent=11 // pred_fallthru
        _
      // Predicated region
      $region21: #{depth_estimator_forward.3} parent=11 // pred_check
        %p341 = pneg %p84
      $region22: #{depth_estimator_forward.3} parent=11 // pred_check_branch
        %343 = sbr.rel (%p341) target = $region24
      $region23: #{depth_estimator_forward.3} parent=11 // pred_region
        _
      $region24: #{depth_estimator_forward.3} parent=11 // pred_fallthru
        _
      // Predicated region
      $region25: #{depth_estimator_forward.3} parent=11 // pred_check
        %p344 = pneg %p105
      $region26: #{depth_estimator_forward.3} parent=11 // pred_check_branch
        %346 = sbr.rel (%p344) target = $region28
      $region27: #{depth_estimator_forward.3} parent=11 // pred_region
        _
      $region28: #{depth_estimator_forward.3} parent=11 // pred_fallthru
        _
      // Predicated region
      $region29: #{depth_estimator_forward.3} parent=11 // pred_check
        %p347 = pneg %p126
      $region30: #{depth_estimator_forward.3} parent=11 // pred_check_branch
        %349 = sbr.rel (%p347) target = $region32
      $region31: #{depth_estimator_forward.3} parent=11 // pred_region
        _
      $region32: #{depth_estimator_forward.3} parent=11 // pred_fallthru
        _
      // Predicated region
      $region33: #{depth_estimator_forward.3} parent=11 // pred_check
        %p350 = pneg %p147
      $region34: #{depth_estimator_forward.3} parent=11 // pred_check_branch
        %352 = sbr.rel (%p350) target = $region36
      $region35: #{depth_estimator_forward.3} parent=11 // pred_region
        _
      $region36: #{depth_estimator_forward.3} parent=11 // pred_fallthru
        _
      // Predicated region
      $region37: #{depth_estimator_forward.3} parent=11 // pred_check
        %p353 = pneg %p168
      $region38: #{depth_estimator_forward.3} parent=11 // pred_check_branch
        %355 = sbr.rel (%p353) target = $region40
      $region39: #{depth_estimator_forward.3} parent=11 // pred_region
        _
      $region40: #{depth_estimator_forward.3} parent=11 // pred_fallthru
        _
      // Predicated region
      $region41: #{depth_estimator_forward.3} parent=11 // pred_check
        %p356 = pneg %p189
      $region42: #{depth_estimator_forward.3} parent=11 // pred_check_branch
        %358 = sbr.rel (%p356) target = $region44
      $region43: #{depth_estimator_forward.3} parent=11 // pred_region
        _
      $region44: #{depth_estimator_forward.3} parent=11 // pred_fallthru
        _
      // Predicated region
      $region45: #{depth_estimator_forward.3} parent=11 // pred_check
        %p359 = pneg %p210
      $region46: #{depth_estimator_forward.3} parent=11 // pred_check_branch
        %361 = sbr.rel (%p359) target = $region48
      $region47: #{depth_estimator_forward.3} parent=11 // pred_region
        _
      $region48: #{depth_estimator_forward.3} parent=11 // pred_fallthru
        _
      // Predicated region
      $region49: #{depth_estimator_forward.3} parent=11 // pred_check
        %p362 = pneg %p231
      $region50: #{depth_estimator_forward.3} parent=11 // pred_check_branch
        %364 = sbr.rel (%p362) target = $region52
      $region51: #{depth_estimator_forward.3} parent=11 // pred_region
        _
      $region52: #{depth_estimator_forward.3} parent=11 // pred_fallthru
        _
      // Predicated region
      $region53: #{depth_estimator_forward.3} parent=11 // pred_check
        %p365 = pneg %p252
      $region54: #{depth_estimator_forward.3} parent=11 // pred_check_branch
        %367 = sbr.rel (%p365) target = $region56
      $region55: #{depth_estimator_forward.3} parent=11 // pred_region
        _
      $region56: #{depth_estimator_forward.3} parent=11 // pred_fallthru
        _
      // Predicated region
      $region57: #{depth_estimator_forward.3} parent=11 // pred_check
        %p368 = pneg %p273
      $region58: #{depth_estimator_forward.3} parent=11 // pred_check_branch
        %370 = sbr.rel (%p368) target = $region60
      $region59: #{depth_estimator_forward.3} parent=11 // pred_region
        _
      $region60: #{depth_estimator_forward.3} parent=11 // pred_fallthru
        _
      // Predicated region
      $region61: #{depth_estimator_forward.3} parent=11 // pred_check
        %p371 = pneg %p294
      $region62: #{depth_estimator_forward.3} parent=11 // pred_check_branch
        %373 = sbr.rel (%p371) target = $region64
      $region63: #{depth_estimator_forward.3} parent=11 // pred_region
        _
      $region64: #{depth_estimator_forward.3} parent=11 // pred_fallthru
        _
    $region12: #{depth_estimator_forward.3} parent=5 // pred_fallthru
      _
    %p374 = scmp.lt.s32.totalorder %s21, 2
    // Predicated region
    $region65: #{depth_estimator_forward.3} parent=5 // pred_check
      %p375 = pneg %p374
    $region66: #{depth_estimator_forward.3} parent=5 // pred_check_branch
      %377 = sbr.rel (%p375) target = $region68
    $region67: #{depth_estimator_forward.3} parent=5 // pred_region
      _
    $region68: #{depth_estimator_forward.3} parent=5 // pred_fallthru
      _
    %p378 = scmp.le.s32.totalorder 1, %s21
    %p379 = scmp.lt.s32.totalorder %s21, 3
    %p380 = pnand %p378, %p379
    %p381 = pneg %p380
    // Predicated region
    $region69: #{depth_estimator_forward.3} parent=5 // pred_check
      _
    $region70: #{depth_estimator_forward.3} parent=5 // pred_check_branch
      %383 = sbr.rel (%p380) target = $region72
    $region71: #{depth_estimator_forward.3} parent=5 // pred_region
      %s384 = ssub.s32 %s21, 1
      %p385 = pneg %p42
      %p386 = pneg %p39
      %p387 = pneg %p63
      %p388 = pneg %p60
      %p389 = pneg %p84
      %p390 = pneg %p81
      %p391 = pneg %p105
      %p392 = pneg %p102
      %p393 = pneg %p126
      %p394 = pneg %p123
      %p395 = pneg %p147
      %p396 = pneg %p144
      %p397 = pneg %p168
      %p398 = pneg %p165
      %p399 = pneg %p189
      %p400 = pneg %p186
      %p401 = pneg %p210
      %p402 = pneg %p207
      %p403 = pneg %p231
      %p404 = pneg %p228
      %p405 = pneg %p252
      %p406 = pneg %p249
      %p407 = pneg %p273
      %p408 = pneg %p270
      %p409 = pneg %p294
      %p410 = pneg %p291
      %p411 = pneg %p320
      %p412 = pneg %p317
      %p413 = scmp.lt.s32.totalorder %s26, 1
      %s414 = scalar_select %p413, %s26, 1
      %s415 = smul.addr %s414, 2
      %s416 = scalar_lea.vmem %s13, %s415
      %p417 = scmp.lt.s32.totalorder %s26, 1
      %s418 = scalar_select %p417, %s26, 1
      %s419 = smul.addr %s418, 2
      %s420 = scalar_lea.vmem %s13, %s419
      %vm422 = vcmask 523264
      %423 = vst.msk [vmem:[#allocation2] sm:$0xff] %vm422, 0.0
      %424 = vst.msk [vmem:[#allocation2 + $0x8] sm:$0xff] %vm422, 0.0
      %425 = vst.msk [vmem:[#allocation2 + $0x10] sm:$0xff] %vm422, 0.0
      %426 = vst.msk [vmem:[#allocation2 + $0x18] sm:$0xff] %vm422, 0.0
      %427 = vst.msk [vmem:[#allocation2 + $0x20] sm:$0xff] %vm422, 0.0
      %428 = vst.msk [vmem:[#allocation2 + $0x28] sm:$0xff] %vm422, 0.0
      %429 = vst.msk [vmem:[#allocation2 + $0x30] sm:$0xff] %vm422, 0.0
      %430 = vst.msk [vmem:[#allocation2 + $0x38] sm:$0xff] %vm422, 0.0
      %431 = vst.msk [vmem:[#allocation2 + $0x40] sm:$0xff] %vm422, 0.0
      %432 = vst.msk [vmem:[#allocation2 + $0x48] sm:$0xff] %vm422, 0.0
      %433 = vst.msk [vmem:[#allocation2 + $0x50] sm:$0xff] %vm422, 0.0
      %434 = vst.msk [vmem:[#allocation2 + $0x58] sm:$0xff] %vm422, 0.0
      %435 = vst.msk [vmem:[#allocation2 + $0x60] sm:$0xff] %vm422, 0.0
      %436 = vst.msk [vmem:[#allocation2 + $0x68] sm:$0xff] %vm422, 0.0
      %437 = vst.msk [vmem:[#allocation2 + $0x70] sm:$0xff] %vm422, 0.0
      %438 = vst.msk [vmem:[#allocation2 + $0x78] sm:$0xff] %vm422, 0.0
      %439 = vst.msk [vmem:[#allocation2 + $0x80] sm:$0xff] %vm422, 0.0
      %440 = vst.msk [vmem:[#allocation2 + $0x88] sm:$0xff] %vm422, 0.0
      %441 = vst.msk [vmem:[#allocation2 + $0x90] sm:$0xff] %vm422, 0.0
      %442 = vst.msk [vmem:[#allocation2 + $0x98] sm:$0xff] %vm422, 0.0
      %443 = vst.msk [vmem:[#allocation2 + $0xa0] sm:$0xff] %vm422, 0.0
      %444 = vst.msk [vmem:[#allocation2 + $0xa8] sm:$0xff] %vm422, 0.0
      %445 = vst.msk [vmem:[#allocation2 + $0xb0] sm:$0xff] %vm422, 0.0
      %446 = vst.msk [vmem:[#allocation2 + $0xb8] sm:$0xff] %vm422, 0.0
      %447 = vst.msk [vmem:[#allocation2 + $0xc0] sm:$0xff] %vm422, 0.0
      %448 = vst.msk [vmem:[#allocation2 + $0xc8] sm:$0xff] %vm422, 0.0
      %449 = vst.msk [vmem:[#allocation2 + $0xd0] sm:$0xff] %vm422, 0.0
      %450 = vst.msk [vmem:[#allocation2 + $0xd8] sm:$0xff] %vm422, 0.0
      %451 = vst.msk [vmem:[#allocation2 + $0xe0] sm:$0xff] %vm422, 0.0
      %452 = vst.msk [vmem:[#allocation2 + $0xe8] sm:$0xff] %vm422, 0.0
      %453 = vst.msk [vmem:[#allocation2 + $0xf0] sm:$0xff] %vm422, 0.0
      %454 = vst.msk [vmem:[#allocation2 + $0xf8] sm:$0xff] %vm422, 0.0
      %455 = vst.msk [vmem:[#allocation2 + $0x100] sm:$0xff] %vm422, 0.0
      %456 = vst.msk [vmem:[#allocation2 + $0x108] sm:$0xff] %vm422, 0.0
      %457 = vst.msk [vmem:[#allocation2 + $0x110] sm:$0xff] %vm422, 0.0
      %458 = vst.msk [vmem:[#allocation2 + $0x118] sm:$0xff] %vm422, 0.0
      %459 = vst.msk [vmem:[#allocation2 + $0x120] sm:$0xff] %vm422, 0.0
      %460 = vst.msk [vmem:[#allocation2 + $0x128] sm:$0xff] %vm422, 0.0
      %v461 = vld [vmem:[%s5] sm:$0xff]
      %v462 = vld [vmem:[%s5 + $0x8] sm:$0xff]
      %v463 = vld [vmem:[%s5 + $0x10] sm:$0xff]
      %v464 = vld [vmem:[%s5 + $0x18] sm:$0xff]
      %v465 = vld [vmem:[%s5 + $0x20] sm:$0xff]
      %v466 = vld [vmem:[%s5 + $0x28] sm:$0xff]
      %v467 = vld [vmem:[%s5 + $0x30] sm:$0xff]
      %v468 = vld [vmem:[%s5 + $0x38] sm:$0xff]
      %v469 = vld [vmem:[%s5 + $0x40] sm:$0xff]
      %v470 = vld [vmem:[%s5 + $0x48] sm:$0xff]
      %v471 = vld [vmem:[%s5 + $0x50] sm:$0xff]
      %v472 = vld [vmem:[%s5 + $0x58] sm:$0xff]
      %v473 = vld [vmem:[%s5 + $0x60] sm:$0xff]
      %v474 = vld [vmem:[%s5 + $0x68] sm:$0xff]
      %v475 = vld [vmem:[%s5 + $0x70] sm:$0xff]
      %v476 = vld [vmem:[%s5 + $0x78] sm:$0xff]
      %v477 = vld [vmem:[%s5 + $0x80] sm:$0xff]
      %v478 = vld [vmem:[%s5 + $0x88] sm:$0xff]
      %v479 = vld [vmem:[%s5 + $0x90] sm:$0xff]
      %v480 = vld [vmem:[%s5 + $0x98] sm:$0xff]
      %v481 = vld [vmem:[%s5 + $0xa0] sm:$0xff]
      %v482 = vld [vmem:[%s5 + $0xa8] sm:$0xff]
      %v483 = vld [vmem:[%s5 + $0xb0] sm:$0xff]
      %v484 = vld [vmem:[%s5 + $0xb8] sm:$0xff]
      %v485 = vld [vmem:[%s5 + $0xc0] sm:$0xff]
      %v486 = vld [vmem:[%s5 + $0xc8] sm:$0xff]
      %v487 = vld [vmem:[%s5 + $0xd0] sm:$0xff]
      %v488 = vld [vmem:[%s5 + $0xd8] sm:$0xff]
      %v489 = vld [vmem:[%s5 + $0xe0] sm:$0xff]
      %v490 = vld [vmem:[%s5 + $0xe8] sm:$0xff]
      %v491 = vld [vmem:[%s5 + $0xf0] sm:$0xff]
      %v492 = vld [vmem:[%s5 + $0xf8] sm:$0xff]
      %s493 = scalar_lea.vmem %s0, 96
      %v494 = vld [vmem:[%s493] sm:$0xff]
      %v495 = vld [vmem:[%s493 + $0x8] sm:$0xff]
      %v496 = vld [vmem:[%s493 + $0x10] sm:$0xff]
      %v497 = vld [vmem:[%s493 + $0x18] sm:$0xff]
      %v498 = vpack.c.bf16 %v495, %v494
      %v499 = vpack.c.bf16 %v497, %v496
      %s500 = scalar_lea.vmem %s1, 48
      %v501 = vld [vmem:[%s500] sm:$0xf]
      %v502 = vld [vmem:[%s500 + $0x4] sm:$0xf]
      %v503 = vld [vmem:[%s500 + $0x8] sm:$0xf]
      %v504 = vld [vmem:[%s500 + $0xc] sm:$0xf]
      %s505 = scalar_lea.vmem %s2, 3
      %v506 = vld [vmem:[%s505] sm:$0x1]
      %v508 = vperm.slane %v506, 0
      %v514 = vunpack.c.l.b16 %v501
      %v515 = vunpack.c.l.b16 %v502
      %v516 = vunpack.c.l.b16 %v503
      %v517 = vunpack.c.l.b16 %v504
      %v518 = vpack.c.b16 %v515, %v514
      %v519 = vpack.c.b16 %v517, %v516
      %vm522 = vcmask 261120
      %v524 = vsel %vm522, %v498, 0
      %v527 = vsel %vm522, %v499, 0
      %529 = vmatpush.bf16.msra.mxu0 0
      %530 = vmatpush.bf16.msra.mxu0 0
      %531 = vmatpush.bf16.msra.mxu0 0
      %532 = vmatpush.bf16.msra.mxu0 0
      %533 = vmatpush.bf16.msra.mxu0 0
      %534 = vmatpush.bf16.msra.mxu0 0
      %535 = vmatpush.bf16.msra.mxu0 %v519
      %536 = vmatpush.bf16.msra.mxu0 %v518
      %537 = vmatmul.bf16.gmra.mxu0 %v524
      %v538 = vpop.f32.mrf.mxu0
      %v539 = vadd.f32 %v508, %v538
      %v540 = vpop.f32.mrf.mxu0
      %v541 = vadd.f32 %v508, %v540
      %542 = vmatmul.bf16.gmra.mxu0 %v527
      %v543 = vpop.f32.mrf.mxu0
      %v544 = vadd.f32 %v508, %v543
      %v545 = vpop.f32.mrf.mxu0
      %v546 = vadd.f32 %v508, %v545
      %547 = vdwg.mxu0
      %v548 = vsel %vm422, %v539, 0.0
      %v549 = vsel %vm422, %v541, 0.0
      %v550 = vadd.f32 %v548, %v549
      %v551 = vsel %vm422, %v544, 0.0
      %v552 = vadd.f32 %v550, %v551
      %v553 = vsel %vm422, %v546, 0.0
      %v554 = vadd.f32 %v552, %v553
      %v555 = vrot.slane %v554, 4
      %v556 = vadd.f32 %v554, %v555
      %v557 = vrot.slane %v556, 2
      %v558 = vadd.f32 %v556, %v557
      %v559 = vrot.slane %v558, 1
      %v560 = vadd.f32 %v558, %v559
      %v561 = vrcp.pop 32.0
      %v562 = vmul.f32 32.0, %v561
      %v563 = vsub.f32 1.0, %v562
      %v564 = vmul.f32 %v561, %v563
      %v565 = vadd.f32 %v561, %v564
      %vm566 = vweird.f32 %v561
      %v567 = vsel %vm566, %v561, %v565
      %v568 = vmul.f32 %v560, %v567
      %v569 = vsub.f32 %v539, %v568
      %v570 = vsub.f32 %v541, %v568
      %v571 = vsub.f32 %v544, %v568
      %v572 = vsub.f32 %v546, %v568
      %v573 = vmul.f32 %v569, %v569
      %v574 = vmul.f32 %v570, %v570
      %v575 = vmul.f32 %v571, %v571
      %v576 = vmul.f32 %v572, %v572
      %v577 = vsel %vm422, %v573, 0.0
      %v578 = vsel %vm422, %v574, 0.0
      %v579 = vadd.f32 %v577, %v578
      %v580 = vsel %vm422, %v575, 0.0
      %v581 = vadd.f32 %v579, %v580
      %v582 = vsel %vm422, %v576, 0.0
      %v583 = vadd.f32 %v581, %v582
      %v584 = vrot.slane %v583, 4
      %v585 = vadd.f32 %v583, %v584
      %v586 = vrot.slane %v585, 2
      %v587 = vadd.f32 %v585, %v586
      %v588 = vrot.slane %v587, 1
      %v589 = vadd.f32 %v587, %v588
      %v590 = vmul.f32 %v589, %v567
      %v591 = vadd.f32 %v590, 1e-05
      %v592 = vrsqrt.pop %v591
      %v593 = vmul.f32 %v592, %v591
      %v594 = vmul.f32 %v593, %v592
      %v595 = vmul.f32 0.5, %v594
      %v596 = vsub.f32 1.5, %v595
      %v597 = vmul.f32 %v592, %v596
      %vm598 = vweird.f32 %v591
      %vm599 = vweird.f32 %v592
      %vm600 = vmor %vm598, %vm599
      %v601 = vsel %vm600, %v592, %v597
      %v602 = vmul.f32 %v569, %v601
      %v603 = vmul.f32 %v570, %v601
      %v604 = vmul.f32 %v571, %v601
      %v605 = vmul.f32 %v572, %v601
      %s606 = scalar_lea.vmem %s3, 3
      %v607 = vld [vmem:[%s606] sm:$0x1]
      %v609 = vperm.slane %v607, 0
      %v611 = vmul.f32 %v602, %v609
      %v612 = vmul.f32 %v603, %v609
      %v613 = vmul.f32 %v604, %v609
      %v614 = vmul.f32 %v605, %v609
      %s615 = scalar_lea.vmem %s4, 3
      %v616 = vld [vmem:[%s615] sm:$0x1]
      %v618 = vperm.slane %v616, 0
      %v620 = vadd.f32 %v611, %v618
      %v621 = vadd.f32 %v612, %v618
      %v622 = vadd.f32 %v613, %v618
      %v623 = vadd.f32 %v614, %v618
      %v624 = vmax.f32 %v620, 0.0
      %v625 = vmax.f32 %v621, 0.0
      %v626 = vmax.f32 %v622, 0.0
      %v627 = vmax.f32 %v623, 0.0
      %p628 = scmp.eq.s32.totalorder %s26, 1
      %s629 = scalar_select %p628, 1, 0
      %v630 = vstv %s629
      %vm631 = vcmp.eq.s32.totalorder %v630, 1
      %v632 = vsel %vm631, %v626, %v624
      %v633 = vsel %vm631, %v627, %v625
      %s634 = scalar_lea.vmem %s0, 64
      %v635 = vld [vmem:[%s634] sm:$0xff]
      %v636 = vld [vmem:[%s634 + $0x8] sm:$0xff]
      %v637 = vld [vmem:[%s634 + $0x10] sm:$0xff]
      %v638 = vld [vmem:[%s634 + $0x18] sm:$0xff]
      %v639 = vpack.c.bf16 %v636, %v635
      %v640 = vpack.c.bf16 %v638, %v637
      %s641 = scalar_lea.vmem %s1, 32
      %v642 = vld [vmem:[%s641] sm:$0xf]
      %v643 = vld [vmem:[%s641 + $0x4] sm:$0xf]
      %v644 = vld [vmem:[%s641 + $0x8] sm:$0xf]
      %v645 = vld [vmem:[%s641 + $0xc] sm:$0xf]
      %s646 = scalar_lea.vmem %s2, 2
      %v647 = vld [vmem:[%s646] sm:$0x1]
      %v649 = vperm.slane %v647, 0
      %v655 = vunpack.c.l.b16 %v642
      %v656 = vunpack.c.l.b16 %v643
      %v657 = vunpack.c.l.b16 %v644
      %v658 = vunpack.c.l.b16 %v645
      %v659 = vpack.c.b16 %v656, %v655
      %v660 = vpack.c.b16 %v658, %v657
      %v664 = vsel %vm522, %v639, 0
      %v667 = vsel %vm522, %v640, 0
      %669 = vmatpush.bf16.msra.mxu0 0
      %670 = vmatpush.bf16.msra.mxu0 0
      %671 = vmatpush.bf16.msra.mxu0 0
      %672 = vmatpush.bf16.msra.mxu0 0
      %673 = vmatpush.bf16.msra.mxu0 0
      %674 = vmatpush.bf16.msra.mxu0 0
      %675 = vmatpush.bf16.msra.mxu0 %v660
      %676 = vmatpush.bf16.msra.mxu0 %v659
      %677 = vmatmul.bf16.gmra.mxu0 %v664
      %v678 = vpop.f32.mrf.mxu0
      %v679 = vadd.f32 %v649, %v678
      %v680 = vpop.f32.mrf.mxu0
      %v681 = vadd.f32 %v649, %v680
      %682 = vmatmul.bf16.gmra.mxu0 %v667
      %v683 = vpop.f32.mrf.mxu0
      %v684 = vadd.f32 %v649, %v683
      %v685 = vpop.f32.mrf.mxu0
      %v686 = vadd.f32 %v649, %v685
      %687 = vdwg.mxu0
      %v688 = vsel %vm422, %v679, 0.0
      %v689 = vsel %vm422, %v681, 0.0
      %v690 = vadd.f32 %v688, %v689
      %v691 = vsel %vm422, %v684, 0.0
      %v692 = vadd.f32 %v690, %v691
      %v693 = vsel %vm422, %v686, 0.0
      %v694 = vadd.f32 %v692, %v693
      %v695 = vrot.slane %v694, 4
      %v696 = vadd.f32 %v694, %v695
      %v697 = vrot.slane %v696, 2
      %v698 = vadd.f32 %v696, %v697
      %v699 = vrot.slane %v698, 1
      %v700 = vadd.f32 %v698, %v699
      %v701 = vmul.f32 %v700, %v567
      %v702 = vsub.f32 %v679, %v701
      %v703 = vsub.f32 %v681, %v701
      %v704 = vsub.f32 %v684, %v701
      %v705 = vsub.f32 %v686, %v701
      %v706 = vmul.f32 %v702, %v702
      %v707 = vmul.f32 %v703, %v703
      %v708 = vmul.f32 %v704, %v704
      %v709 = vmul.f32 %v705, %v705
      %v710 = vsel %vm422, %v706, 0.0
      %v711 = vsel %vm422, %v707, 0.0
      %v712 = vadd.f32 %v710, %v711
      %v713 = vsel %vm422, %v708, 0.0
      %v714 = vadd.f32 %v712, %v713
      %v715 = vsel %vm422, %v709, 0.0
      %v716 = vadd.f32 %v714, %v715
      %v717 = vrot.slane %v716, 4
      %v718 = vadd.f32 %v716, %v717
      %v719 = vrot.slane %v718, 2
      %v720 = vadd.f32 %v718, %v719
      %v721 = vrot.slane %v720, 1
      %v722 = vadd.f32 %v720, %v721
      %v723 = vmul.f32 %v722, %v567
      %v724 = vadd.f32 %v723, 1e-05
      %v725 = vrsqrt.pop %v724
      %v726 = vmul.f32 %v725, %v724
      %v727 = vmul.f32 %v726, %v725
      %v728 = vmul.f32 0.5, %v727
      %v729 = vsub.f32 1.5, %v728
      %v730 = vmul.f32 %v725, %v729
      %vm731 = vweird.f32 %v724
      %vm732 = vweird.f32 %v725
      %vm733 = vmor %vm731, %vm732
      %v734 = vsel %vm733, %v725, %v730
      %v735 = vmul.f32 %v702, %v734
      %v736 = vmul.f32 %v703, %v734
      %v737 = vmul.f32 %v704, %v734
      %v738 = vmul.f32 %v705, %v734
      %s739 = scalar_lea.vmem %s3, 2
      %v740 = vld [vmem:[%s739] sm:$0x1]
      %v742 = vperm.slane %v740, 0
      %v744 = vmul.f32 %v735, %v742
      %v745 = vmul.f32 %v736, %v742
      %v746 = vmul.f32 %v737, %v742
      %v747 = vmul.f32 %v738, %v742
      %s748 = scalar_lea.vmem %s4, 2
      %v749 = vld [vmem:[%s748] sm:$0x1]
      %v751 = vperm.slane %v749, 0
      %v753 = vadd.f32 %v744, %v751
      %v754 = vadd.f32 %v745, %v751
      %v755 = vadd.f32 %v746, %v751
      %v756 = vadd.f32 %v747, %v751
      %v757 = vmax.f32 %v753, 0.0
      %v758 = vmax.f32 %v754, 0.0
      %v759 = vmax.f32 %v755, 0.0
      %v760 = vmax.f32 %v756, 0.0
      %v761 = vsel %vm631, %v759, %v757
      %v762 = vsel %vm631, %v760, %v758
      %vm763 = vcmask 130048
      %v765 = vsel %vm763, %v461, 0
      %v768 = vsel %vm763, %v462, 0
      %v771 = vsel %vm763, %v463, 0
      %v774 = vsel %vm763, %v464, 0
      %v777 = vsel %vm763, %v465, 0
      %v780 = vsel %vm763, %v466, 0
      %v783 = vsel %vm763, %v467, 0
      %v786 = vsel %vm763, %v468, 0
      %v789 = vsel %vm763, %v469, 0
      %v792 = vsel %vm763, %v470, 0
      %v795 = vsel %vm763, %v471, 0
      %v798 = vsel %vm763, %v472, 0
      %v801 = vsel %vm763, %v473, 0
      %v804 = vsel %vm763, %v474, 0
      %v807 = vsel %vm763, %v475, 0
      %v810 = vsel %vm763, %v476, 0
      %v813 = vsel %vm763, %v477, 0
      %v816 = vsel %vm763, %v478, 0
      %v819 = vsel %vm763, %v479, 0
      %v822 = vsel %vm763, %v480, 0
      %v825 = vsel %vm763, %v481, 0
      %v828 = vsel %vm763, %v482, 0
      %v831 = vsel %vm763, %v483, 0
      %v834 = vsel %vm763, %v484, 0
      %v837 = vsel %vm763, %v485, 0
      %v840 = vsel %vm763, %v486, 0
      %v843 = vsel %vm763, %v487, 0
      %v846 = vsel %vm763, %v488, 0
      %v849 = vsel %vm763, %v489, 0
      %v852 = vsel %vm763, %v490, 0
      %v855 = vsel %vm763, %v491, 0
      %v858 = vsel %vm763, %v492, 0
      %860 = vmatpush.msra.mxu0 0.0
      %861 = vmatpush.msra.mxu0 0.0
      %862 = vmatpush.msra.mxu0 0.0
      %863 = vmatpush.msra.mxu0 0.0
      %864 = vmatpush.msra.mxu0 0.0
      %865 = vmatpush.msra.mxu0 0.0
      %866 = vmatpush.msra.mxu0 0.0
      %867 = vmatpush.msra.mxu0 0.0
      %868 = vmatpush.msra.mxu0 0.0
      %869 = vmatpush.msra.mxu0 0.0
      %870 = vmatpush.msra.mxu0 0.0
      %871 = vmatpush.msra.mxu0 0.0
      %872 = vmatpush.msra.mxu0 0.0
      %873 = vmatpush.msra.mxu0 0.0
      %874 = vmatpush.msra.mxu0 %v762
      %875 = vmatpush.msra.mxu0 %v761
      %876 = vmatmul.f32.gmra.mxu0 %v765
      %v877 = vpop.f32.mrf.mxu0
      %v878 = vadd.f32 0.0, %v877
      %879 = vmatmul.f32.gmra.mxu0 %v768
      %v880 = vpop.f32.mrf.mxu0
      %v881 = vadd.f32 0.0, %v880
      %882 = vmatmul.f32.gmra.mxu0 %v771
      %v883 = vpop.f32.mrf.mxu0
      %v884 = vadd.f32 0.0, %v883
      %885 = vmatmul.f32.gmra.mxu0 %v774
      %v886 = vpop.f32.mrf.mxu0
      %v887 = vadd.f32 0.0, %v886
      %888 = vmatmul.f32.gmra.mxu0 %v777
      %v889 = vpop.f32.mrf.mxu0
      %v890 = vadd.f32 0.0, %v889
      %891 = vmatmul.f32.gmra.mxu0 %v780
      %v892 = vpop.f32.mrf.mxu0
      %v893 = vadd.f32 0.0, %v892
      %894 = vmatmul.f32.gmra.mxu0 %v783
      %v895 = vpop.f32.mrf.mxu0
      %v896 = vadd.f32 0.0, %v895
      %897 = vmatmul.f32.gmra.mxu0 %v786
      %v898 = vpop.f32.mrf.mxu0
      %v899 = vadd.f32 0.0, %v898
      %900 = vmatmul.f32.gmra.mxu0 %v789
      %v901 = vpop.f32.mrf.mxu0
      %v902 = vadd.f32 0.0, %v901
      %903 = vmatmul.f32.gmra.mxu0 %v792
      %v904 = vpop.f32.mrf.mxu0
      %v905 = vadd.f32 0.0, %v904
      %906 = vmatmul.f32.gmra.mxu0 %v795
      %v907 = vpop.f32.mrf.mxu0
      %v908 = vadd.f32 0.0, %v907
      %909 = vmatmul.f32.gmra.mxu0 %v798
      %v910 = vpop.f32.mrf.mxu0
      %v911 = vadd.f32 0.0, %v910
      %912 = vmatmul.f32.gmra.mxu0 %v801
      %v913 = vpop.f32.mrf.mxu0
      %v914 = vadd.f32 0.0, %v913
      %915 = vmatmul.f32.gmra.mxu0 %v804
      %v916 = vpop.f32.mrf.mxu0
      %v917 = vadd.f32 0.0, %v916
      %918 = vmatmul.f32.gmra.mxu0 %v807
      %v919 = vpop.f32.mrf.mxu0
      %v920 = vadd.f32 0.0, %v919
      %921 = vmatmul.f32.gmra.mxu0 %v810
      %v922 = vpop.f32.mrf.mxu0
      %v923 = vadd.f32 0.0, %v922
      %924 = vmatmul.f32.gmra.mxu0 %v813
      %v925 = vpop.f32.mrf.mxu0
      %v926 = vadd.f32 0.0, %v925
      %927 = vmatmul.f32.gmra.mxu0 %v816
      %v928 = vpop.f32.mrf.mxu0
      %v929 = vadd.f32 0.0, %v928
      %930 = vmatmul.f32.gmra.mxu0 %v819
      %v931 = vpop.f32.mrf.mxu0
      %v932 = vadd.f32 0.0, %v931
      %933 = vmatmul.f32.gmra.mxu0 %v822
      %v934 = vpop.f32.mrf.mxu0
      %v935 = vadd.f32 0.0, %v934
      %936 = vmatmul.f32.gmra.mxu0 %v825
      %v937 = vpop.f32.mrf.mxu0
      %v938 = vadd.f32 0.0, %v937
      %939 = vmatmul.f32.gmra.mxu0 %v828
      %v940 = vpop.f32.mrf.mxu0
      %v941 = vadd.f32 0.0, %v940
      %942 = vmatmul.f32.gmra.mxu0 %v831
      %v943 = vpop.f32.mrf.mxu0
      %v944 = vadd.f32 0.0, %v943
      %945 = vmatmul.f32.gmra.mxu0 %v834
      %v946 = vpop.f32.mrf.mxu0
      %v947 = vadd.f32 0.0, %v946
      %948 = vmatmul.f32.gmra.mxu0 %v837
      %v949 = vpop.f32.mrf.mxu0
      %v950 = vadd.f32 0.0, %v949
      %951 = vmatmul.f32.gmra.mxu0 %v840
      %v952 = vpop.f32.mrf.mxu0
      %v953 = vadd.f32 0.0, %v952
      %954 = vmatmul.f32.gmra.mxu0 %v843
      %v955 = vpop.f32.mrf.mxu0
      %v956 = vadd.f32 0.0, %v955
      %957 = vmatmul.f32.gmra.mxu0 %v846
      %v958 = vpop.f32.mrf.mxu0
      %v959 = vadd.f32 0.0, %v958
      %960 = vmatmul.f32.gmra.mxu0 %v849
      %v961 = vpop.f32.mrf.mxu0
      %v962 = vadd.f32 0.0, %v961
      %963 = vmatmul.f32.gmra.mxu0 %v852
      %v964 = vpop.f32.mrf.mxu0
      %v965 = vadd.f32 0.0, %v964
      %966 = vmatmul.f32.gmra.mxu0 %v855
      %v967 = vpop.f32.mrf.mxu0
      %v968 = vadd.f32 0.0, %v967
      %969 = vmatmul.f32.gmra.mxu0 %v858
      %v970 = vpop.f32.mrf.mxu0
      %v971 = vadd.f32 0.0, %v970
      %972 = vdwg.mxu0
      %973 = vmatpush.msra.mxu0 0.0
      %974 = vmatpush.msra.mxu0 0.0
      %975 = vmatpush.msra.mxu0 0.0
      %976 = vmatpush.msra.mxu0 0.0
      %977 = vmatpush.msra.mxu0 0.0
      %978 = vmatpush.msra.mxu0 0.0
      %979 = vmatpush.msra.mxu0 0.0
      %980 = vmatpush.msra.mxu0 0.0
      %981 = vmatpush.msra.mxu0 0.0
      %982 = vmatpush.msra.mxu0 0.0
      %983 = vmatpush.msra.mxu0 0.0
      %984 = vmatpush.msra.mxu0 0.0
      %985 = vmatpush.msra.mxu0 0.0
      %986 = vmatpush.msra.mxu0 0.0
      %987 = vmatpush.msra.mxu0 %v633
      %988 = vmatpush.msra.mxu0 %v632
      %989 = vmatmul.f32.gmra.mxu0 %v765
      %v990 = vpop.f32.mrf.mxu0
      %v991 = vadd.f32 %v878, %v990
      %992 = vmatmul.f32.gmra.mxu0 %v768
      %v993 = vpop.f32.mrf.mxu0
      %v994 = vadd.f32 %v881, %v993
      %995 = vmatmul.f32.gmra.mxu0 %v771
      %v996 = vpop.f32.mrf.mxu0
      %v997 = vadd.f32 %v884, %v996
      %998 = vmatmul.f32.gmra.mxu0 %v774
      %v999 = vpop.f32.mrf.mxu0
      %v1000 = vadd.f32 %v887, %v999
      %1001 = vmatmul.f32.gmra.mxu0 %v777
      %v1002 = vpop.f32.mrf.mxu0
      %v1003 = vadd.f32 %v890, %v1002
      %1004 = vmatmul.f32.gmra.mxu0 %v780
      %v1005 = vpop.f32.mrf.mxu0
      %v1006 = vadd.f32 %v893, %v1005
      %1007 = vmatmul.f32.gmra.mxu0 %v783
      %v1008 = vpop.f32.mrf.mxu0
      %v1009 = vadd.f32 %v896, %v1008
      %1010 = vmatmul.f32.gmra.mxu0 %v786
      %v1011 = vpop.f32.mrf.mxu0
      %v1012 = vadd.f32 %v899, %v1011
      %1013 = vmatmul.f32.gmra.mxu0 %v789
      %v1014 = vpop.f32.mrf.mxu0
      %v1015 = vadd.f32 %v902, %v1014
      %1016 = vmatmul.f32.gmra.mxu0 %v792
      %v1017 = vpop.f32.mrf.mxu0
      %v1018 = vadd.f32 %v905, %v1017
      %1019 = vmatmul.f32.gmra.mxu0 %v795
      %v1020 = vpop.f32.mrf.mxu0
      %v1021 = vadd.f32 %v908, %v1020
      %1022 = vmatmul.f32.gmra.mxu0 %v798
      %v1023 = vpop.f32.mrf.mxu0
      %v1024 = vadd.f32 %v911, %v1023
      %1025 = vmatmul.f32.gmra.mxu0 %v801
      %v1026 = vpop.f32.mrf.mxu0
      %v1027 = vadd.f32 %v914, %v1026
      %1028 = vmatmul.f32.gmra.mxu0 %v804
      %v1029 = vpop.f32.mrf.mxu0
      %v1030 = vadd.f32 %v917, %v1029
      %1031 = vmatmul.f32.gmra.mxu0 %v807
      %v1032 = vpop.f32.mrf.mxu0
      %v1033 = vadd.f32 %v920, %v1032
      %1034 = vmatmul.f32.gmra.mxu0 %v810
      %v1035 = vpop.f32.mrf.mxu0
      %v1036 = vadd.f32 %v923, %v1035
      %1037 = vmatmul.f32.gmra.mxu0 %v813
      %v1038 = vpop.f32.mrf.mxu0
      %v1039 = vadd.f32 %v926, %v1038
      %1040 = vmatmul.f32.gmra.mxu0 %v816
      %v1041 = vpop.f32.mrf.mxu0
      %v1042 = vadd.f32 %v929, %v1041
      %1043 = vmatmul.f32.gmra.mxu0 %v819
      %v1044 = vpop.f32.mrf.mxu0
      %v1045 = vadd.f32 %v932, %v1044
      %1046 = vmatmul.f32.gmra.mxu0 %v822
      %v1047 = vpop.f32.mrf.mxu0
      %v1048 = vadd.f32 %v935, %v1047
      %1049 = vmatmul.f32.gmra.mxu0 %v825
      %v1050 = vpop.f32.mrf.mxu0
      %v1051 = vadd.f32 %v938, %v1050
      %1052 = vmatmul.f32.gmra.mxu0 %v828
      %v1053 = vpop.f32.mrf.mxu0
      %v1054 = vadd.f32 %v941, %v1053
      %1055 = vmatmul.f32.gmra.mxu0 %v831
      %v1056 = vpop.f32.mrf.mxu0
      %v1057 = vadd.f32 %v944, %v1056
      %1058 = vmatmul.f32.gmra.mxu0 %v834
      %v1059 = vpop.f32.mrf.mxu0
      %v1060 = vadd.f32 %v947, %v1059
      %1061 = vmatmul.f32.gmra.mxu0 %v837
      %v1062 = vpop.f32.mrf.mxu0
      %v1063 = vadd.f32 %v950, %v1062
      %1064 = vmatmul.f32.gmra.mxu0 %v840
      %v1065 = vpop.f32.mrf.mxu0
      %v1066 = vadd.f32 %v953, %v1065
      %1067 = vmatmul.f32.gmra.mxu0 %v843
      %v1068 = vpop.f32.mrf.mxu0
      %v1069 = vadd.f32 %v956, %v1068
      %1070 = vmatmul.f32.gmra.mxu0 %v846
      %v1071 = vpop.f32.mrf.mxu0
      %v1072 = vadd.f32 %v959, %v1071
      %1073 = vmatmul.f32.gmra.mxu0 %v849
      %v1074 = vpop.f32.mrf.mxu0
      %v1075 = vadd.f32 %v962, %v1074
      %1076 = vmatmul.f32.gmra.mxu0 %v852
      %v1077 = vpop.f32.mrf.mxu0
      %v1078 = vadd.f32 %v965, %v1077
      %1079 = vmatmul.f32.gmra.mxu0 %v855
      %v1080 = vpop.f32.mrf.mxu0
      %v1081 = vadd.f32 %v968, %v1080
      %1082 = vmatmul.f32.gmra.mxu0 %v858
      %v1083 = vpop.f32.mrf.mxu0
      %v1084 = vadd.f32 %v971, %v1083
      %1085 = vdwg.mxu0
      %s1086 = scalar_lea.vmem %s0, 32
      %v1087 = vld [vmem:[%s1086] sm:$0xff]
      %v1088 = vld [vmem:[%s1086 + $0x8] sm:$0xff]
      %v1089 = vld [vmem:[%s1086 + $0x10] sm:$0xff]
      %v1090 = vld [vmem:[%s1086 + $0x18] sm:$0xff]
      %v1091 = vpack.c.bf16 %v1088, %v1087
      %v1092 = vpack.c.bf16 %v1090, %v1089
      %s1093 = scalar_lea.vmem %s1, 16
      %v1094 = vld [vmem:[%s1093] sm:$0xf]
      %v1095 = vld [vmem:[%s1093 + $0x4] sm:$0xf]
      %v1096 = vld [vmem:[%s1093 + $0x8] sm:$0xf]
      %v1097 = vld [vmem:[%s1093 + $0xc] sm:$0xf]
      %s1098 = scalar_lea.vmem %s2, 1
      %v1099 = vld [vmem:[%s1098] sm:$0x1]
      %v1101 = vperm.slane %v1099, 0
      %v1107 = vunpack.c.l.b16 %v1094
      %v1108 = vunpack.c.l.b16 %v1095
      %v1109 = vunpack.c.l.b16 %v1096
      %v1110 = vunpack.c.l.b16 %v1097
      %v1111 = vpack.c.b16 %v1108, %v1107
      %v1112 = vpack.c.b16 %v1110, %v1109
      %v1116 = vsel %vm522, %v1091, 0
      %v1119 = vsel %vm522, %v1092, 0
      %1121 = vmatpush.bf16.msra.mxu0 0
      %1122 = vmatpush.bf16.msra.mxu0 0
      %1123 = vmatpush.bf16.msra.mxu0 0
      %1124 = vmatpush.bf16.msra.mxu0 0
      %1125 = vmatpush.bf16.msra.mxu0 0
      %1126 = vmatpush.bf16.msra.mxu0 0
      %1127 = vmatpush.bf16.msra.mxu0 %v1112
      %1128 = vmatpush.bf16.msra.mxu0 %v1111
      %1129 = vmatmul.bf16.gmra.mxu0 %v1116
      %v1130 = vpop.f32.mrf.mxu0
      %v1131 = vadd.f32 %v1101, %v1130
      %v1132 = vpop.f32.mrf.mxu0
      %v1133 = vadd.f32 %v1101, %v1132
      %1134 = vmatmul.bf16.gmra.mxu0 %v1119
      %v1135 = vpop.f32.mrf.mxu0
      %v1136 = vadd.f32 %v1101, %v1135
      %v1137 = vpop.f32.mrf.mxu0
      %v1138 = vadd.f32 %v1101, %v1137
      %1139 = vdwg.mxu0
      %v1140 = vsel %vm422, %v1131, 0.0
      %v1141 = vsel %vm422, %v1133, 0.0
      %v1142 = vadd.f32 %v1140, %v1141
      %v1143 = vsel %vm422, %v1136, 0.0
      %v1144 = vadd.f32 %v1142, %v1143
      %v1145 = vsel %vm422, %v1138, 0.0
      %v1146 = vadd.f32 %v1144, %v1145
      %v1147 = vrot.slane %v1146, 4
      %v1148 = vadd.f32 %v1146, %v1147
      %v1149 = vrot.slane %v1148, 2
      %v1150 = vadd.f32 %v1148, %v1149
      %v1151 = vrot.slane %v1150, 1
      %v1152 = vadd.f32 %v1150, %v1151
      %v1153 = vmul.f32 %v1152, %v567
      %v1154 = vsub.f32 %v1131, %v1153
      %v1155 = vsub.f32 %v1133, %v1153
      %v1156 = vsub.f32 %v1136, %v1153
      %v1157 = vsub.f32 %v1138, %v1153
      %v1158 = vmul.f32 %v1154, %v1154
      %v1159 = vmul.f32 %v1155, %v1155
      %v1160 = vmul.f32 %v1156, %v1156
      %v1161 = vmul.f32 %v1157, %v1157
      %v1162 = vsel %vm422, %v1158, 0.0
      %v1163 = vsel %vm422, %v1159, 0.0
      %v1164 = vadd.f32 %v1162, %v1163
      %v1165 = vsel %vm422, %v1160, 0.0
      %v1166 = vadd.f32 %v1164, %v1165
      %v1167 = vsel %vm422, %v1161, 0.0
      %v1168 = vadd.f32 %v1166, %v1167
      %v1169 = vrot.slane %v1168, 4
      %v1170 = vadd.f32 %v1168, %v1169
      %v1171 = vrot.slane %v1170, 2
      %v1172 = vadd.f32 %v1170, %v1171
      %v1173 = vrot.slane %v1172, 1
      %v1174 = vadd.f32 %v1172, %v1173
      %v1175 = vmul.f32 %v1174, %v567
      %v1176 = vadd.f32 %v1175, 1e-05
      %v1177 = vrsqrt.pop %v1176
      %v1178 = vmul.f32 %v1177, %v1176
      %v1179 = vmul.f32 %v1178, %v1177
      %v1180 = vmul.f32 0.5, %v1179
      %v1181 = vsub.f32 1.5, %v1180
      %v1182 = vmul.f32 %v1177, %v1181
      %vm1183 = vweird.f32 %v1176
      %vm1184 = vweird.f32 %v1177
      %vm1185 = vmor %vm1183, %vm1184
      %v1186 = vsel %vm1185, %v1177, %v1182
      %v1187 = vmul.f32 %v1154, %v1186
      %v1188 = vmul.f32 %v1155, %v1186
      %v1189 = vmul.f32 %v1156, %v1186
      %v1190 = vmul.f32 %v1157, %v1186
      %s1191 = scalar_lea.vmem %s3, 1
      %v1192 = vld [vmem:[%s1191] sm:$0x1]
      %v1194 = vperm.slane %v1192, 0
      %v1196 = vmul.f32 %v1187, %v1194
      %v1197 = vmul.f32 %v1188, %v1194
      %v1198 = vmul.f32 %v1189, %v1194
      %v1199 = vmul.f32 %v1190, %v1194
      %s1200 = scalar_lea.vmem %s4, 1
      %v1201 = vld [vmem:[%s1200] sm:$0x1]
      %v1203 = vperm.slane %v1201, 0
      %v1205 = vadd.f32 %v1196, %v1203
      %v1206 = vadd.f32 %v1197, %v1203
      %v1207 = vadd.f32 %v1198, %v1203
      %v1208 = vadd.f32 %v1199, %v1203
      %v1209 = vmax.f32 %v1205, 0.0
      %v1210 = vmax.f32 %v1206, 0.0
      %v1211 = vmax.f32 %v1207, 0.0
      %v1212 = vmax.f32 %v1208, 0.0
      %v1213 = vsel %vm631, %v1211, %v1209
      %v1214 = vsel %vm631, %v1212, %v1210
      %1215 = vmatpush.msra.mxu0 0.0
      %1216 = vmatpush.msra.mxu0 0.0
      %1217 = vmatpush.msra.mxu0 0.0
      %1218 = vmatpush.msra.mxu0 0.0
      %1219 = vmatpush.msra.mxu0 0.0
      %1220 = vmatpush.msra.mxu0 0.0
      %1221 = vmatpush.msra.mxu0 0.0
      %1222 = vmatpush.msra.mxu0 0.0
      %1223 = vmatpush.msra.mxu0 0.0
      %1224 = vmatpush.msra.mxu0 0.0
      %1225 = vmatpush.msra.mxu0 0.0
      %1226 = vmatpush.msra.mxu0 0.0
      %1227 = vmatpush.msra.mxu0 0.0
      %1228 = vmatpush.msra.mxu0 0.0
      %1229 = vmatpush.msra.mxu0 %v1214
      %1230 = vmatpush.msra.mxu0 %v1213
      %1231 = vmatmul.f32.gmra.mxu0 %v765
      %v1232 = vpop.f32.mrf.mxu0
      %v1233 = vadd.f32 0.0, %v1232
      %1234 = vmatmul.f32.gmra.mxu0 %v768
      %v1235 = vpop.f32.mrf.mxu0
      %v1236 = vadd.f32 0.0, %v1235
      %1237 = vmatmul.f32.gmra.mxu0 %v771
      %v1238 = vpop.f32.mrf.mxu0
      %v1239 = vadd.f32 0.0, %v1238
      %1240 = vmatmul.f32.gmra.mxu0 %v774
      %v1241 = vpop.f32.mrf.mxu0
      %v1242 = vadd.f32 0.0, %v1241
      %1243 = vmatmul.f32.gmra.mxu0 %v777
      %v1244 = vpop.f32.mrf.mxu0
      %v1245 = vadd.f32 0.0, %v1244
      %1246 = vmatmul.f32.gmra.mxu0 %v780
      %v1247 = vpop.f32.mrf.mxu0
      %v1248 = vadd.f32 0.0, %v1247
      %1249 = vmatmul.f32.gmra.mxu0 %v783
      %v1250 = vpop.f32.mrf.mxu0
      %v1251 = vadd.f32 0.0, %v1250
      %1252 = vmatmul.f32.gmra.mxu0 %v786
      %v1253 = vpop.f32.mrf.mxu0
      %v1254 = vadd.f32 0.0, %v1253
      %1255 = vmatmul.f32.gmra.mxu0 %v789
      %v1256 = vpop.f32.mrf.mxu0
      %v1257 = vadd.f32 0.0, %v1256
      %1258 = vmatmul.f32.gmra.mxu0 %v792
      %v1259 = vpop.f32.mrf.mxu0
      %v1260 = vadd.f32 0.0, %v1259
      %1261 = vmatmul.f32.gmra.mxu0 %v795
      %v1262 = vpop.f32.mrf.mxu0
      %v1263 = vadd.f32 0.0, %v1262
      %1264 = vmatmul.f32.gmra.mxu0 %v798
      %v1265 = vpop.f32.mrf.mxu0
      %v1266 = vadd.f32 0.0, %v1265
      %1267 = vmatmul.f32.gmra.mxu0 %v801
      %v1268 = vpop.f32.mrf.mxu0
      %v1269 = vadd.f32 0.0, %v1268
      %1270 = vmatmul.f32.gmra.mxu0 %v804
      %v1271 = vpop.f32.mrf.mxu0
      %v1272 = vadd.f32 0.0, %v1271
      %1273 = vmatmul.f32.gmra.mxu0 %v807
      %v1274 = vpop.f32.mrf.mxu0
      %v1275 = vadd.f32 0.0, %v1274
      %1276 = vmatmul.f32.gmra.mxu0 %v810
      %v1277 = vpop.f32.mrf.mxu0
      %v1278 = vadd.f32 0.0, %v1277
      %1279 = vmatmul.f32.gmra.mxu0 %v813
      %v1280 = vpop.f32.mrf.mxu0
      %v1281 = vadd.f32 0.0, %v1280
      %1282 = vmatmul.f32.gmra.mxu0 %v816
      %v1283 = vpop.f32.mrf.mxu0
      %v1284 = vadd.f32 0.0, %v1283
      %1285 = vmatmul.f32.gmra.mxu0 %v819
      %v1286 = vpop.f32.mrf.mxu0
      %v1287 = vadd.f32 0.0, %v1286
      %1288 = vmatmul.f32.gmra.mxu0 %v822
      %v1289 = vpop.f32.mrf.mxu0
      %v1290 = vadd.f32 0.0, %v1289
      %1291 = vmatmul.f32.gmra.mxu0 %v825
      %v1292 = vpop.f32.mrf.mxu0
      %v1293 = vadd.f32 0.0, %v1292
      %1294 = vmatmul.f32.gmra.mxu0 %v828
      %v1295 = vpop.f32.mrf.mxu0
      %v1296 = vadd.f32 0.0, %v1295
      %1297 = vmatmul.f32.gmra.mxu0 %v831
      %v1298 = vpop.f32.mrf.mxu0
      %v1299 = vadd.f32 0.0, %v1298
      %1300 = vmatmul.f32.gmra.mxu0 %v834
      %v1301 = vpop.f32.mrf.mxu0
      %v1302 = vadd.f32 0.0, %v1301
      %1303 = vmatmul.f32.gmra.mxu0 %v837
      %v1304 = vpop.f32.mrf.mxu0
      %v1305 = vadd.f32 0.0, %v1304
      %1306 = vmatmul.f32.gmra.mxu0 %v840
      %v1307 = vpop.f32.mrf.mxu0
      %v1308 = vadd.f32 0.0, %v1307
      %1309 = vmatmul.f32.gmra.mxu0 %v843
      %v1310 = vpop.f32.mrf.mxu0
      %v1311 = vadd.f32 0.0, %v1310
      %1312 = vmatmul.f32.gmra.mxu0 %v846
      %v1313 = vpop.f32.mrf.mxu0
      %v1314 = vadd.f32 0.0, %v1313
      %1315 = vmatmul.f32.gmra.mxu0 %v849
      %v1316 = vpop.f32.mrf.mxu0
      %v1317 = vadd.f32 0.0, %v1316
      %1318 = vmatmul.f32.gmra.mxu0 %v852
      %v1319 = vpop.f32.mrf.mxu0
      %v1320 = vadd.f32 0.0, %v1319
      %1321 = vmatmul.f32.gmra.mxu0 %v855
      %v1322 = vpop.f32.mrf.mxu0
      %v1323 = vadd.f32 0.0, %v1322
      %1324 = vmatmul.f32.gmra.mxu0 %v858
      %v1325 = vpop.f32.mrf.mxu0
      %v1326 = vadd.f32 0.0, %v1325
      %1327 = vdwg.mxu0
      %v1328 = vadd.f32 %v991, %v1233
      %v1329 = vadd.f32 %v994, %v1236
      %v1330 = vadd.f32 %v997, %v1239
      %v1331 = vadd.f32 %v1000, %v1242
      %v1332 = vadd.f32 %v1003, %v1245
      %v1333 = vadd.f32 %v1006, %v1248
      %v1334 = vadd.f32 %v1009, %v1251
      %v1335 = vadd.f32 %v1012, %v1254
      %v1336 = vadd.f32 %v1015, %v1257
      %v1337 = vadd.f32 %v1018, %v1260
      %v1338 = vadd.f32 %v1021, %v1263
      %v1339 = vadd.f32 %v1024, %v1266
      %v1340 = vadd.f32 %v1027, %v1269
      %v1341 = vadd.f32 %v1030, %v1272
      %v1342 = vadd.f32 %v1033, %v1275
      %v1343 = vadd.f32 %v1036, %v1278
      %v1344 = vadd.f32 %v1039, %v1281
      %v1345 = vadd.f32 %v1042, %v1284
      %v1346 = vadd.f32 %v1045, %v1287
      %v1347 = vadd.f32 %v1048, %v1290
      %v1348 = vadd.f32 %v1051, %v1293
      %v1349 = vadd.f32 %v1054, %v1296
      %v1350 = vadd.f32 %v1057, %v1299
      %v1351 = vadd.f32 %v1060, %v1302
      %v1352 = vadd.f32 %v1063, %v1305
      %v1353 = vadd.f32 %v1066, %v1308
      %v1354 = vadd.f32 %v1069, %v1311
      %v1355 = vadd.f32 %v1072, %v1314
      %v1356 = vadd.f32 %v1075, %v1317
      %v1357 = vadd.f32 %v1078, %v1320
      %v1358 = vadd.f32 %v1081, %v1323
      %v1359 = vadd.f32 %v1084, %v1326
      %v1360 = vld [vmem:[%s0] sm:$0xff]
      %v1361 = vld [vmem:[%s0 + $0x8] sm:$0xff]
      %v1362 = vld [vmem:[%s0 + $0x10] sm:$0xff]
      %v1363 = vld [vmem:[%s0 + $0x18] sm:$0xff]
      %v1364 = vpack.c.bf16 %v1361, %v1360
      %v1365 = vpack.c.bf16 %v1363, %v1362
      %v1366 = vld [vmem:[%s1] sm:$0xf]
      %v1367 = vld [vmem:[%s1 + $0x4] sm:$0xf]
      %v1368 = vld [vmem:[%s1 + $0x8] sm:$0xf]
      %v1369 = vld [vmem:[%s1 + $0xc] sm:$0xf]
      %v1370 = vld [vmem:[%s2] sm:$0x1]
      %v1372 = vperm.slane %v1370, 0
      %v1378 = vunpack.c.l.b16 %v1366
      %v1379 = vunpack.c.l.b16 %v1367
      %v1380 = vunpack.c.l.b16 %v1368
      %v1381 = vunpack.c.l.b16 %v1369
      %v1382 = vpack.c.b16 %v1379, %v1378
      %v1383 = vpack.c.b16 %v1381, %v1380
      %v1387 = vsel %vm522, %v1364, 0
      %v1390 = vsel %vm522, %v1365, 0
      %1392 = vmatpush.bf16.msra.mxu0 0
      %1393 = vmatpush.bf16.msra.mxu0 0
      %1394 = vmatpush.bf16.msra.mxu0 0
      %1395 = vmatpush.bf16.msra.mxu0 0
      %1396 = vmatpush.bf16.msra.mxu0 0
      %1397 = vmatpush.bf16.msra.mxu0 0
      %1398 = vmatpush.bf16.msra.mxu0 %v1383
      %1399 = vmatpush.bf16.msra.mxu0 %v1382
      %1400 = vmatmul.bf16.gmra.mxu0 %v1387
      %v1401 = vpop.f32.mrf.mxu0
      %v1402 = vadd.f32 %v1372, %v1401
      %v1403 = vpop.f32.mrf.mxu0
      %v1404 = vadd.f32 %v1372, %v1403
      %1405 = vmatmul.bf16.gmra.mxu0 %v1390
      %v1406 = vpop.f32.mrf.mxu0
      %v1407 = vadd.f32 %v1372, %v1406
      %v1408 = vpop.f32.mrf.mxu0
      %v1409 = vadd.f32 %v1372, %v1408
      %1410 = vdwg.mxu0
      %v1411 = vsel %vm422, %v1402, 0.0
      %v1412 = vsel %vm422, %v1404, 0.0
      %v1413 = vadd.f32 %v1411, %v1412
      %v1414 = vsel %vm422, %v1407, 0.0
      %v1415 = vadd.f32 %v1413, %v1414
      %v1416 = vsel %vm422, %v1409, 0.0
      %v1417 = vadd.f32 %v1415, %v1416
      %v1418 = vrot.slane %v1417, 4
      %v1419 = vadd.f32 %v1417, %v1418
      %v1420 = vrot.slane %v1419, 2
      %v1421 = vadd.f32 %v1419, %v1420
      %v1422 = vrot.slane %v1421, 1
      %v1423 = vadd.f32 %v1421, %v1422
      %v1424 = vmul.f32 %v1423, %v567
      %v1425 = vsub.f32 %v1402, %v1424
      %v1426 = vsub.f32 %v1404, %v1424
      %v1427 = vsub.f32 %v1407, %v1424
      %v1428 = vsub.f32 %v1409, %v1424
      %v1429 = vmul.f32 %v1425, %v1425
      %v1430 = vmul.f32 %v1426, %v1426
      %v1431 = vmul.f32 %v1427, %v1427
      %v1432 = vmul.f32 %v1428, %v1428
      %v1433 = vsel %vm422, %v1429, 0.0
      %v1434 = vsel %vm422, %v1430, 0.0
      %v1435 = vadd.f32 %v1433, %v1434
      %v1436 = vsel %vm422, %v1431, 0.0
      %v1437 = vadd.f32 %v1435, %v1436
      %v1438 = vsel %vm422, %v1432, 0.0
      %v1439 = vadd.f32 %v1437, %v1438
      %v1440 = vrot.slane %v1439, 4
      %v1441 = vadd.f32 %v1439, %v1440
      %v1442 = vrot.slane %v1441, 2
      %v1443 = vadd.f32 %v1441, %v1442
      %v1444 = vrot.slane %v1443, 1
      %v1445 = vadd.f32 %v1443, %v1444
      %v1446 = vmul.f32 %v1445, %v567
      %v1447 = vadd.f32 %v1446, 1e-05
      %v1448 = vrsqrt.pop %v1447
      %v1449 = vmul.f32 %v1448, %v1447
      %v1450 = vmul.f32 %v1449, %v1448
      %v1451 = vmul.f32 0.5, %v1450
      %v1452 = vsub.f32 1.5, %v1451
      %v1453 = vmul.f32 %v1448, %v1452
      %vm1454 = vweird.f32 %v1447
      %vm1455 = vweird.f32 %v1448
      %vm1456 = vmor %vm1454, %vm1455
      %v1457 = vsel %vm1456, %v1448, %v1453
      %v1458 = vmul.f32 %v1425, %v1457
      %v1459 = vmul.f32 %v1426, %v1457
      %v1460 = vmul.f32 %v1427, %v1457
      %v1461 = vmul.f32 %v1428, %v1457
      %v1462 = vld [vmem:[%s3] sm:$0x1]
      %v1464 = vperm.slane %v1462, 0
      %v1466 = vmul.f32 %v1458, %v1464
      %v1467 = vmul.f32 %v1459, %v1464
      %v1468 = vmul.f32 %v1460, %v1464
      %v1469 = vmul.f32 %v1461, %v1464
      %v1470 = vld [vmem:[%s4] sm:$0x1]
      %v1472 = vperm.slane %v1470, 0
      %v1474 = vadd.f32 %v1466, %v1472
      %v1475 = vadd.f32 %v1467, %v1472
      %v1476 = vadd.f32 %v1468, %v1472
      %v1477 = vadd.f32 %v1469, %v1472
      %v1478 = vmax.f32 %v1474, 0.0
      %v1479 = vmax.f32 %v1475, 0.0
      %v1480 = vmax.f32 %v1476, 0.0
      %v1481 = vmax.f32 %v1477, 0.0
      %v1482 = vsel %vm631, %v1480, %v1478
      %v1483 = vsel %vm631, %v1481, %v1479
      %1484 = vmatpush.msra.mxu0 0.0
      %1485 = vmatpush.msra.mxu0 0.0
      %1486 = vmatpush.msra.mxu0 0.0
      %1487 = vmatpush.msra.mxu0 0.0
      %1488 = vmatpush.msra.mxu0 0.0
      %1489 = vmatpush.msra.mxu0 0.0
      %1490 = vmatpush.msra.mxu0 0.0
      %1491 = vmatpush.msra.mxu0 0.0
      %1492 = vmatpush.msra.mxu0 0.0
      %1493 = vmatpush.msra.mxu0 0.0
      %1494 = vmatpush.msra.mxu0 0.0
      %1495 = vmatpush.msra.mxu0 0.0
      %1496 = vmatpush.msra.mxu0 0.0
      %1497 = vmatpush.msra.mxu0 0.0
      %1498 = vmatpush.msra.mxu0 %v1483
      %1499 = vmatpush.msra.mxu0 %v1482
      %1500 = vmatmul.f32.gmra.mxu0 %v765
      %v1501 = vpop.f32.mrf.mxu0
      %v1502 = vadd.f32 0.0, %v1501
      %1503 = vmatmul.f32.gmra.mxu0 %v768
      %v1504 = vpop.f32.mrf.mxu0
      %v1505 = vadd.f32 0.0, %v1504
      %1506 = vmatmul.f32.gmra.mxu0 %v771
      %v1507 = vpop.f32.mrf.mxu0
      %v1508 = vadd.f32 0.0, %v1507
      %1509 = vmatmul.f32.gmra.mxu0 %v774
      %v1510 = vpop.f32.mrf.mxu0
      %v1511 = vadd.f32 0.0, %v1510
      %1512 = vmatmul.f32.gmra.mxu0 %v777
      %v1513 = vpop.f32.mrf.mxu0
      %v1514 = vadd.f32 0.0, %v1513
      %1515 = vmatmul.f32.gmra.mxu0 %v780
      %v1516 = vpop.f32.mrf.mxu0
      %v1517 = vadd.f32 0.0, %v1516
      %1518 = vmatmul.f32.gmra.mxu0 %v783
      %v1519 = vpop.f32.mrf.mxu0
      %v1520 = vadd.f32 0.0, %v1519
      %1521 = vmatmul.f32.gmra.mxu0 %v786
      %v1522 = vpop.f32.mrf.mxu0
      %v1523 = vadd.f32 0.0, %v1522
      %1524 = vmatmul.f32.gmra.mxu0 %v789
      %v1525 = vpop.f32.mrf.mxu0
      %v1526 = vadd.f32 0.0, %v1525
      %1527 = vmatmul.f32.gmra.mxu0 %v792
      %v1528 = vpop.f32.mrf.mxu0
      %v1529 = vadd.f32 0.0, %v1528
      %1530 = vmatmul.f32.gmra.mxu0 %v795
      %v1531 = vpop.f32.mrf.mxu0
      %v1532 = vadd.f32 0.0, %v1531
      %1533 = vmatmul.f32.gmra.mxu0 %v798
      %v1534 = vpop.f32.mrf.mxu0
      %v1535 = vadd.f32 0.0, %v1534
      %1536 = vmatmul.f32.gmra.mxu0 %v801
      %v1537 = vpop.f32.mrf.mxu0
      %v1538 = vadd.f32 0.0, %v1537
      %1539 = vmatmul.f32.gmra.mxu0 %v804
      %v1540 = vpop.f32.mrf.mxu0
      %v1541 = vadd.f32 0.0, %v1540
      %1542 = vmatmul.f32.gmra.mxu0 %v807
      %v1543 = vpop.f32.mrf.mxu0
      %v1544 = vadd.f32 0.0, %v1543
      %1545 = vmatmul.f32.gmra.mxu0 %v810
      %v1546 = vpop.f32.mrf.mxu0
      %v1547 = vadd.f32 0.0, %v1546
      %1548 = vmatmul.f32.gmra.mxu0 %v813
      %v1549 = vpop.f32.mrf.mxu0
      %v1550 = vadd.f32 0.0, %v1549
      %1551 = vmatmul.f32.gmra.mxu0 %v816
      %v1552 = vpop.f32.mrf.mxu0
      %v1553 = vadd.f32 0.0, %v1552
      %1554 = vmatmul.f32.gmra.mxu0 %v819
      %v1555 = vpop.f32.mrf.mxu0
      %v1556 = vadd.f32 0.0, %v1555
      %1557 = vmatmul.f32.gmra.mxu0 %v822
      %v1558 = vpop.f32.mrf.mxu0
      %v1559 = vadd.f32 0.0, %v1558
      %1560 = vmatmul.f32.gmra.mxu0 %v825
      %v1561 = vpop.f32.mrf.mxu0
      %v1562 = vadd.f32 0.0, %v1561
      %1563 = vmatmul.f32.gmra.mxu0 %v828
      %v1564 = vpop.f32.mrf.mxu0
      %v1565 = vadd.f32 0.0, %v1564
      %1566 = vmatmul.f32.gmra.mxu0 %v831
      %v1567 = vpop.f32.mrf.mxu0
      %v1568 = vadd.f32 0.0, %v1567
      %1569 = vmatmul.f32.gmra.mxu0 %v834
      %v1570 = vpop.f32.mrf.mxu0
      %v1571 = vadd.f32 0.0, %v1570
      %1572 = vmatmul.f32.gmra.mxu0 %v837
      %v1573 = vpop.f32.mrf.mxu0
      %v1574 = vadd.f32 0.0, %v1573
      %1575 = vmatmul.f32.gmra.mxu0 %v840
      %v1576 = vpop.f32.mrf.mxu0
      %v1577 = vadd.f32 0.0, %v1576
      %1578 = vmatmul.f32.gmra.mxu0 %v843
      %v1579 = vpop.f32.mrf.mxu0
      %v1580 = vadd.f32 0.0, %v1579
      %1581 = vmatmul.f32.gmra.mxu0 %v846
      %v1582 = vpop.f32.mrf.mxu0
      %v1583 = vadd.f32 0.0, %v1582
      %1584 = vmatmul.f32.gmra.mxu0 %v849
      %v1585 = vpop.f32.mrf.mxu0
      %v1586 = vadd.f32 0.0, %v1585
      %1587 = vmatmul.f32.gmra.mxu0 %v852
      %v1588 = vpop.f32.mrf.mxu0
      %v1589 = vadd.f32 0.0, %v1588
      %1590 = vmatmul.f32.gmra.mxu0 %v855
      %v1591 = vpop.f32.mrf.mxu0
      %v1592 = vadd.f32 0.0, %v1591
      %1593 = vmatmul.f32.gmra.mxu0 %v858
      %v1594 = vpop.f32.mrf.mxu0
      %v1595 = vadd.f32 0.0, %v1594
      %1596 = vdwg.mxu0
      %v1597 = vadd.f32 %v1328, %v1502
      %v1598 = vadd.f32 %v1329, %v1505
      %v1599 = vadd.f32 %v1330, %v1508
      %v1600 = vadd.f32 %v1331, %v1511
      %v1601 = vadd.f32 %v1332, %v1514
      %v1602 = vadd.f32 %v1333, %v1517
      %v1603 = vadd.f32 %v1334, %v1520
      %v1604 = vadd.f32 %v1335, %v1523
      %v1605 = vadd.f32 %v1336, %v1526
      %v1606 = vadd.f32 %v1337, %v1529
      %v1607 = vadd.f32 %v1338, %v1532
      %v1608 = vadd.f32 %v1339, %v1535
      %v1609 = vadd.f32 %v1340, %v1538
      %v1610 = vadd.f32 %v1341, %v1541
      %v1611 = vadd.f32 %v1342, %v1544
      %v1612 = vadd.f32 %v1343, %v1547
      %v1613 = vadd.f32 %v1344, %v1550
      %v1614 = vadd.f32 %v1345, %v1553
      %v1615 = vadd.f32 %v1346, %v1556
      %v1616 = vadd.f32 %v1347, %v1559
      %v1617 = vadd.f32 %v1348, %v1562
      %v1618 = vadd.f32 %v1349, %v1565
      %v1619 = vadd.f32 %v1350, %v1568
      %v1620 = vadd.f32 %v1351, %v1571
      %v1621 = vadd.f32 %v1352, %v1574
      %v1622 = vadd.f32 %v1353, %v1577
      %v1623 = vadd.f32 %v1354, %v1580
      %v1624 = vadd.f32 %v1355, %v1583
      %v1625 = vadd.f32 %v1356, %v1586
      %v1626 = vadd.f32 %v1357, %v1589
      %v1627 = vadd.f32 %v1358, %v1592
      %v1628 = vadd.f32 %v1359, %v1595
      %v1629 = vld [vmem:[%s8] sm:$0x1]
      %1630 = vst.msk [vmem:[#allocation2 + $0x18] sm:$0xff] %vm422, %v1597
      %1631 = vst.msk [vmem:[#allocation2 + $0x20] sm:$0xff] %vm422, %v1598
      %1632 = vst.msk [vmem:[#allocation2 + $0x28] sm:$0xff] %vm422, %v1599
      %1633 = vst.msk [vmem:[#allocation2 + $0x30] sm:$0xff] %vm422, %v1600
      %1634 = vst.msk [vmem:[#allocation2 + $0x38] sm:$0xff] %vm422, %v1601
      %1635 = vst.msk [vmem:[#allocation2 + $0x40] sm:$0xff] %vm422, %v1602
      %1636 = vst.msk [vmem:[#allocation2 + $0x48] sm:$0xff] %vm422, %v1603
      %1637 = vst.msk [vmem:[#allocation2 + $0x50] sm:$0xff] %vm422, %v1604
      %1638 = vst.msk [vmem:[#allocation2 + $0x58] sm:$0xff] %vm422, %v1605
      %1639 = vst.msk [vmem:[#allocation2 + $0x60] sm:$0xff] %vm422, %v1606
      %1640 = vst.msk [vmem:[#allocation2 + $0x68] sm:$0xff] %vm422, %v1607
      %1641 = vst.msk [vmem:[#allocation2 + $0x70] sm:$0xff] %vm422, %v1608
      %1642 = vst.msk [vmem:[#allocation2 + $0x78] sm:$0xff] %vm422, %v1609
      %1643 = vst.msk [vmem:[#allocation2 + $0x80] sm:$0xff] %vm422, %v1610
      %1644 = vst.msk [vmem:[#allocation2 + $0x88] sm:$0xff] %vm422, %v1611
      %1645 = vst.msk [vmem:[#allocation2 + $0x90] sm:$0xff] %vm422, %v1612
      %1646 = vst.msk [vmem:[#allocation2 + $0x98] sm:$0xff] %vm422, %v1613
      %1647 = vst.msk [vmem:[#allocation2 + $0xa0] sm:$0xff] %vm422, %v1614
      %1648 = vst.msk [vmem:[#allocation2 + $0xa8] sm:$0xff] %vm422, %v1615
      %1649 = vst.msk [vmem:[#allocation2 + $0xb0] sm:$0xff] %vm422, %v1616
      %1650 = vst.msk [vmem:[#allocation2 + $0xb8] sm:$0xff] %vm422, %v1617
      %1651 = vst.msk [vmem:[#allocation2 + $0xc0] sm:$0xff] %vm422, %v1618
      %1652 = vst.msk [vmem:[#allocation2 + $0xc8] sm:$0xff] %vm422, %v1619
      %1653 = vst.msk [vmem:[#allocation2 + $0xd0] sm:$0xff] %vm422, %v1620
      %1654 = vst.msk [vmem:[#allocation2 + $0xd8] sm:$0xff] %vm422, %v1621
      %1655 = vst.msk [vmem:[#allocation2 + $0xe0] sm:$0xff] %vm422, %v1622
      %1656 = vst.msk [vmem:[#allocation2 + $0xe8] sm:$0xff] %vm422, %v1623
      %1657 = vst.msk [vmem:[#allocation2 + $0xf0] sm:$0xff] %vm422, %v1624
      %1658 = vst.msk [vmem:[#allocation2 + $0xf8] sm:$0xff] %vm422, %v1625
      %1659 = vst.msk [vmem:[#allocation2 + $0x100] sm:$0xff] %vm422, %v1626
      %1660 = vst.msk [vmem:[#allocation2 + $0x108] sm:$0xff] %vm422, %v1627
      %1661 = vst.msk [vmem:[#allocation2 + $0x110] sm:$0xff] %vm422, %v1628
      %v1662 = vld [vmem:[#allocation2 + $0x7] sm:$0xff]
      %v1663 = vld [vmem:[#allocation2 + $0xf] sm:$0xff]
      %v1664 = vld [vmem:[#allocation2 + $0x17] sm:$0xff]
      %v1665 = vld [vmem:[#allocation2 + $0x1f] sm:$0xff]
      %v1666 = vld [vmem:[#allocation2 + $0x27] sm:$0xff]
      %v1667 = vld [vmem:[#allocation2 + $0x2f] sm:$0xff]
      %v1668 = vld [vmem:[#allocation2 + $0x37] sm:$0xff]
      %v1669 = vld [vmem:[#allocation2 + $0x3f] sm:$0xff]
      %v1670 = vld [vmem:[#allocation2 + $0x47] sm:$0xff]
      %v1671 = vld [vmem:[#allocation2 + $0x4f] sm:$0xff]
      %v1672 = vld [vmem:[#allocation2 + $0x57] sm:$0xff]
      %v1673 = vld [vmem:[#allocation2 + $0x5f] sm:$0xff]
      %v1674 = vld [vmem:[#allocation2 + $0x67] sm:$0xff]
      %v1675 = vld [vmem:[#allocation2 + $0x6f] sm:$0xff]
      %v1676 = vld [vmem:[#allocation2 + $0x77] sm:$0xff]
      %v1677 = vld [vmem:[#allocation2 + $0x7f] sm:$0xff]
      %v1678 = vld [vmem:[#allocation2 + $0x87] sm:$0xff]
      %v1679 = vld [vmem:[#allocation2 + $0x8f] sm:$0xff]
      %v1680 = vld [vmem:[#allocation2 + $0x97] sm:$0xff]
      %v1681 = vld [vmem:[#allocation2 + $0x9f] sm:$0xff]
      %v1682 = vld [vmem:[#allocation2 + $0xa7] sm:$0xff]
      %v1683 = vld [vmem:[#allocation2 + $0xaf] sm:$0xff]
      %v1684 = vld [vmem:[#allocation2 + $0xb7] sm:$0xff]
      %v1685 = vld [vmem:[#allocation2 + $0xbf] sm:$0xff]
      %v1686 = vld [vmem:[#allocation2 + $0xc7] sm:$0xff]
      %v1687 = vld [vmem:[#allocation2 + $0xcf] sm:$0xff]
      %v1688 = vld [vmem:[#allocation2 + $0xd7] sm:$0xff]
      %v1689 = vld [vmem:[#allocation2 + $0xdf] sm:$0xff]
      %v1690 = vld [vmem:[#allocation2 + $0xe7] sm:$0xff]
      %v1691 = vld [vmem:[#allocation2 + $0xef] sm:$0xff]
      %v1692 = vld [vmem:[#allocation2 + $0xf7] sm:$0xff]
      %v1693 = vld [vmem:[#allocation2 + $0xff] sm:$0xff]
      %v1694 = vld [vmem:[%s6] sm:$0xff]
      %v1695 = vld [vmem:[%s6 + $0x8] sm:$0xff]
      %v1696 = vld [vmem:[%s6 + $0x10] sm:$0xff]
      %v1697 = vld [vmem:[%s6 + $0x18] sm:$0xff]
      %v1698 = vld [vmem:[%s6 + $0x20] sm:$0xff]
      %v1699 = vld [vmem:[%s6 + $0x28] sm:$0xff]
      %v1700 = vld [vmem:[%s6 + $0x30] sm:$0xff]
      %v1701 = vld [vmem:[%s6 + $0x38] sm:$0xff]
      %v1702 = vld [vmem:[%s6 + $0x40] sm:$0xff]
      %v1703 = vld [vmem:[%s6 + $0x48] sm:$0xff]
      %v1704 = vld [vmem:[%s6 + $0x50] sm:$0xff]
      %v1705 = vld [vmem:[%s6 + $0x58] sm:$0xff]
      %v1706 = vld [vmem:[%s6 + $0x60] sm:$0xff]
      %v1707 = vld [vmem:[%s6 + $0x68] sm:$0xff]
      %v1708 = vld [vmem:[%s6 + $0x70] sm:$0xff]
      %v1709 = vld [vmem:[%s6 + $0x78] sm:$0xff]
      %v1710 = vld [vmem:[%s6 + $0x80] sm:$0xff]
      %v1711 = vld [vmem:[%s6 + $0x88] sm:$0xff]
      %v1712 = vld [vmem:[%s6 + $0x90] sm:$0xff]
      %v1713 = vld [vmem:[%s6 + $0x98] sm:$0xff]
      %v1714 = vld [vmem:[%s6 + $0xa0] sm:$0xff]
      %v1715 = vld [vmem:[%s6 + $0xa8] sm:$0xff]
      %v1716 = vld [vmem:[%s6 + $0xb0] sm:$0xff]
      %v1717 = vld [vmem:[%s6 + $0xb8] sm:$0xff]
      %v1718 = vld [vmem:[%s6 + $0xc0] sm:$0xff]
      %v1719 = vld [vmem:[%s6 + $0xc8] sm:$0xff]
      %v1720 = vld [vmem:[%s6 + $0xd0] sm:$0xff]
      %v1721 = vld [vmem:[%s6 + $0xd8] sm:$0xff]
      %v1722 = vld [vmem:[%s6 + $0xe0] sm:$0xff]
      %v1723 = vld [vmem:[%s6 + $0xe8] sm:$0xff]
      %v1724 = vld [vmem:[%s6 + $0xf0] sm:$0xff]
      %v1725 = vld [vmem:[%s6 + $0xf8] sm:$0xff]
      %1727 = vset.pattern.permute.xlu0 0
      %1728 = vperm.xlu0 %1727, %v1694
      %v1729 = vpop.permute.xlu0 %1728
      %1732 = vset.pattern.permute.xlu0 0
      %1733 = vperm.xlu0 %1732, %v1695
      %v1734 = vpop.permute.xlu0 %1733
      %1737 = vset.pattern.permute.xlu0 0
      %1738 = vperm.xlu0 %1737, %v1696
      %v1739 = vpop.permute.xlu0 %1738
      %1742 = vset.pattern.permute.xlu0 0
      %1743 = vperm.xlu0 %1742, %v1697
      %v1744 = vpop.permute.xlu0 %1743
      %1747 = vset.pattern.permute.xlu0 0
      %1748 = vperm.xlu0 %1747, %v1698
      %v1749 = vpop.permute.xlu0 %1748
      %1752 = vset.pattern.permute.xlu0 0
      %1753 = vperm.xlu0 %1752, %v1699
      %v1754 = vpop.permute.xlu0 %1753
      %1757 = vset.pattern.permute.xlu0 0
      %1758 = vperm.xlu0 %1757, %v1700
      %v1759 = vpop.permute.xlu0 %1758
      %1762 = vset.pattern.permute.xlu0 0
      %1763 = vperm.xlu0 %1762, %v1701
      %v1764 = vpop.permute.xlu0 %1763
      %1767 = vset.pattern.permute.xlu0 0
      %1768 = vperm.xlu0 %1767, %v1702
      %v1769 = vpop.permute.xlu0 %1768
      %1772 = vset.pattern.permute.xlu0 0
      %1773 = vperm.xlu0 %1772, %v1703
      %v1774 = vpop.permute.xlu0 %1773
      %1777 = vset.pattern.permute.xlu0 0
      %1778 = vperm.xlu0 %1777, %v1704
      %v1779 = vpop.permute.xlu0 %1778
      %1782 = vset.pattern.permute.xlu0 0
      %1783 = vperm.xlu0 %1782, %v1705
      %v1784 = vpop.permute.xlu0 %1783
      %1787 = vset.pattern.permute.xlu0 0
      %1788 = vperm.xlu0 %1787, %v1706
      %v1789 = vpop.permute.xlu0 %1788
      %1792 = vset.pattern.permute.xlu0 0
      %1793 = vperm.xlu0 %1792, %v1707
      %v1794 = vpop.permute.xlu0 %1793
      %1797 = vset.pattern.permute.xlu0 0
      %1798 = vperm.xlu0 %1797, %v1708
      %v1799 = vpop.permute.xlu0 %1798
      %1802 = vset.pattern.permute.xlu0 0
      %1803 = vperm.xlu0 %1802, %v1709
      %v1804 = vpop.permute.xlu0 %1803
      %1807 = vset.pattern.permute.xlu0 0
      %1808 = vperm.xlu0 %1807, %v1710
      %v1809 = vpop.permute.xlu0 %1808
      %1812 = vset.pattern.permute.xlu0 0
      %1813 = vperm.xlu0 %1812, %v1711
      %v1814 = vpop.permute.xlu0 %1813
      %1817 = vset.pattern.permute.xlu0 0
      %1818 = vperm.xlu0 %1817, %v1712
      %v1819 = vpop.permute.xlu0 %1818
      %1822 = vset.pattern.permute.xlu0 0
      %1823 = vperm.xlu0 %1822, %v1713
      %v1824 = vpop.permute.xlu0 %1823
      %1827 = vset.pattern.permute.xlu0 0
      %1828 = vperm.xlu0 %1827, %v1714
      %v1829 = vpop.permute.xlu0 %1828
      %1832 = vset.pattern.permute.xlu0 0
      %1833 = vperm.xlu0 %1832, %v1715
      %v1834 = vpop.permute.xlu0 %1833
      %1837 = vset.pattern.permute.xlu0 0
      %1838 = vperm.xlu0 %1837, %v1716
      %v1839 = vpop.permute.xlu0 %1838
      %1842 = vset.pattern.permute.xlu0 0
      %1843 = vperm.xlu0 %1842, %v1717
      %v1844 = vpop.permute.xlu0 %1843
      %1847 = vset.pattern.permute.xlu0 0
      %1848 = vperm.xlu0 %1847, %v1718
      %v1849 = vpop.permute.xlu0 %1848
      %1852 = vset.pattern.permute.xlu0 0
      %1853 = vperm.xlu0 %1852, %v1719
      %v1854 = vpop.permute.xlu0 %1853
      %1857 = vset.pattern.permute.xlu0 0
      %1858 = vperm.xlu0 %1857, %v1720
      %v1859 = vpop.permute.xlu0 %1858
      %1862 = vset.pattern.permute.xlu0 0
      %1863 = vperm.xlu0 %1862, %v1721
      %v1864 = vpop.permute.xlu0 %1863
      %1867 = vset.pattern.permute.xlu0 0
      %1868 = vperm.xlu0 %1867, %v1722
      %v1869 = vpop.permute.xlu0 %1868
      %1872 = vset.pattern.permute.xlu0 0
      %1873 = vperm.xlu0 %1872, %v1723
      %v1874 = vpop.permute.xlu0 %1873
      %1877 = vset.pattern.permute.xlu0 0
      %1878 = vperm.xlu0 %1877, %v1724
      %v1879 = vpop.permute.xlu0 %1878
      %1882 = vset.pattern.permute.xlu0 0
      %1883 = vperm.xlu0 %1882, %v1725
      %v1884 = vpop.permute.xlu0 %1883
      %v1886 = vmul.f32 %v1662, %v1729
      %v1887 = vmul.f32 %v1663, %v1734
      %v1888 = vmul.f32 %v1664, %v1739
      %v1889 = vmul.f32 %v1665, %v1744
      %v1890 = vmul.f32 %v1666, %v1749
      %v1891 = vmul.f32 %v1667, %v1754
      %v1892 = vmul.f32 %v1668, %v1759
      %v1893 = vmul.f32 %v1669, %v1764
      %v1894 = vmul.f32 %v1670, %v1769
      %v1895 = vmul.f32 %v1671, %v1774
      %v1896 = vmul.f32 %v1672, %v1779
      %v1897 = vmul.f32 %v1673, %v1784
      %v1898 = vmul.f32 %v1674, %v1789
      %v1899 = vmul.f32 %v1675, %v1794
      %v1900 = vmul.f32 %v1676, %v1799
      %v1901 = vmul.f32 %v1677, %v1804
      %v1902 = vmul.f32 %v1678, %v1809
      %v1903 = vmul.f32 %v1679, %v1814
      %v1904 = vmul.f32 %v1680, %v1819
      %v1905 = vmul.f32 %v1681, %v1824
      %v1906 = vmul.f32 %v1682, %v1829
      %v1907 = vmul.f32 %v1683, %v1834
      %v1908 = vmul.f32 %v1684, %v1839
      %v1909 = vmul.f32 %v1685, %v1844
      %v1910 = vmul.f32 %v1686, %v1849
      %v1911 = vmul.f32 %v1687, %v1854
      %v1912 = vmul.f32 %v1688, %v1859
      %v1913 = vmul.f32 %v1689, %v1864
      %v1914 = vmul.f32 %v1690, %v1869
      %v1915 = vmul.f32 %v1691, %v1874
      %v1916 = vmul.f32 %v1692, %v1879
      %v1917 = vmul.f32 %v1693, %v1884
      %v1918 = vpack.c.bf16 %v1887, %v1886
      %v1919 = vpack.c.bf16 %v1889, %v1888
      %v1920 = vpack.c.bf16 %v1891, %v1890
      %v1921 = vpack.c.bf16 %v1893, %v1892
      %v1922 = vpack.c.bf16 %v1895, %v1894
      %v1923 = vpack.c.bf16 %v1897, %v1896
      %v1924 = vpack.c.bf16 %v1899, %v1898
      %v1925 = vpack.c.bf16 %v1901, %v1900
      %v1926 = vpack.c.bf16 %v1903, %v1902
      %v1927 = vpack.c.bf16 %v1905, %v1904
      %v1928 = vpack.c.bf16 %v1907, %v1906
      %v1929 = vpack.c.bf16 %v1909, %v1908
      %v1930 = vpack.c.bf16 %v1911, %v1910
      %v1931 = vpack.c.bf16 %v1913, %v1912
      %v1932 = vpack.c.bf16 %v1915, %v1914
      %v1933 = vpack.c.bf16 %v1917, %v1916
      %v1934 = vld [vmem:[%s7] sm:$0xf]
      %v1935 = vld [vmem:[%s7 + $0x4] sm:$0xf]
      %v1936 = vld [vmem:[%s7 + $0x8] sm:$0xf]
      %v1937 = vld [vmem:[%s7 + $0xc] sm:$0xf]
      %v1938 = vld [vmem:[%s7 + $0x10] sm:$0xf]
      %v1939 = vld [vmem:[%s7 + $0x14] sm:$0xf]
      %v1940 = vld [vmem:[%s7 + $0x18] sm:$0xf]
      %v1941 = vld [vmem:[%s7 + $0x1c] sm:$0xf]
      %v1942 = vld [vmem:[#allocation2 + $0x8] sm:$0xff]
      %v1943 = vld [vmem:[#allocation2 + $0x10] sm:$0xff]
      %v1944 = vld [vmem:[#allocation2 + $0x18] sm:$0xff]
      %v1945 = vld [vmem:[#allocation2 + $0x20] sm:$0xff]
      %v1946 = vld [vmem:[#allocation2 + $0x28] sm:$0xff]
      %v1947 = vld [vmem:[#allocation2 + $0x30] sm:$0xff]
      %v1948 = vld [vmem:[#allocation2 + $0x38] sm:$0xff]
      %v1949 = vld [vmem:[#allocation2 + $0x40] sm:$0xff]
      %v1950 = vld [vmem:[#allocation2 + $0x48] sm:$0xff]
      %v1951 = vld [vmem:[#allocation2 + $0x50] sm:$0xff]
      %v1952 = vld [vmem:[#allocation2 + $0x58] sm:$0xff]
      %v1953 = vld [vmem:[#allocation2 + $0x60] sm:$0xff]
      %v1954 = vld [vmem:[#allocation2 + $0x68] sm:$0xff]
      %v1955 = vld [vmem:[#allocation2 + $0x70] sm:$0xff]
      %v1956 = vld [vmem:[#allocation2 + $0x78] sm:$0xff]
      %v1957 = vld [vmem:[#allocation2 + $0x80] sm:$0xff]
      %v1958 = vld [vmem:[#allocation2 + $0x88] sm:$0xff]
      %v1959 = vld [vmem:[#allocation2 + $0x90] sm:$0xff]
      %v1960 = vld [vmem:[#allocation2 + $0x98] sm:$0xff]
      %v1961 = vld [vmem:[#allocation2 + $0xa0] sm:$0xff]
      %v1962 = vld [vmem:[#allocation2 + $0xa8] sm:$0xff]
      %v1963 = vld [vmem:[#allocation2 + $0xb0] sm:$0xff]
      %v1964 = vld [vmem:[#allocation2 + $0xb8] sm:$0xff]
      %v1965 = vld [vmem:[#allocation2 + $0xc0] sm:$0xff]
      %v1966 = vld [vmem:[#allocation2 + $0xc8] sm:$0xff]
      %v1967 = vld [vmem:[#allocation2 + $0xd0] sm:$0xff]
      %v1968 = vld [vmem:[#allocation2 + $0xd8] sm:$0xff]
      %v1969 = vld [vmem:[#allocation2 + $0xe0] sm:$0xff]
      %v1970 = vld [vmem:[#allocation2 + $0xe8] sm:$0xff]
      %v1971 = vld [vmem:[#allocation2 + $0xf0] sm:$0xff]
      %v1972 = vld [vmem:[#allocation2 + $0xf8] sm:$0xff]
      %v1973 = vld [vmem:[#allocation2 + $0x100] sm:$0xff]
      %s1974 = scalar_lea.vmem %s6, 256
      %v1975 = vld [vmem:[%s1974] sm:$0xff]
      %v1976 = vld [vmem:[%s1974 + $0x8] sm:$0xff]
      %v1977 = vld [vmem:[%s1974 + $0x10] sm:$0xff]
      %v1978 = vld [vmem:[%s1974 + $0x18] sm:$0xff]
      %v1979 = vld [vmem:[%s1974 + $0x20] sm:$0xff]
      %v1980 = vld [vmem:[%s1974 + $0x28] sm:$0xff]
      %v1981 = vld [vmem:[%s1974 + $0x30] sm:$0xff]
      %v1982 = vld [vmem:[%s1974 + $0x38] sm:$0xff]
      %v1983 = vld [vmem:[%s1974 + $0x40] sm:$0xff]
      %v1984 = vld [vmem:[%s1974 + $0x48] sm:$0xff]
      %v1985 = vld [vmem:[%s1974 + $0x50] sm:$0xff]
      %v1986 = vld [vmem:[%s1974 + $0x58] sm:$0xff]
      %v1987 = vld [vmem:[%s1974 + $0x60] sm:$0xff]
      %v1988 = vld [vmem:[%s1974 + $0x68] sm:$0xff]
      %v1989 = vld [vmem:[%s1974 + $0x70] sm:$0xff]
      %v1990 = vld [vmem:[%s1974 + $0x78] sm:$0xff]
      %v1991 = vld [vmem:[%s1974 + $0x80] sm:$0xff]
      %v1992 = vld [vmem:[%s1974 + $0x88] sm:$0xff]
      %v1993 = vld [vmem:[%s1974 + $0x90] sm:$0xff]
      %v1994 = vld [vmem:[%s1974 + $0x98] sm:$0xff]
      %v1995 = vld [vmem:[%s1974 + $0xa0] sm:$0xff]
      %v1996 = vld [vmem:[%s1974 + $0xa8] sm:$0xff]
      %v1997 = vld [vmem:[%s1974 + $0xb0] sm:$0xff]
      %v1998 = vld [vmem:[%s1974 + $0xb8] sm:$0xff]
      %v1999 = vld [vmem:[%s1974 + $0xc0] sm:$0xff]
      %v2000 = vld [vmem:[%s1974 + $0xc8] sm:$0xff]
      %v2001 = vld [vmem:[%s1974 + $0xd0] sm:$0xff]
      %v2002 = vld [vmem:[%s1974 + $0xd8] sm:$0xff]
      %v2003 = vld [vmem:[%s1974 + $0xe0] sm:$0xff]
      %v2004 = vld [vmem:[%s1974 + $0xe8] sm:$0xff]
      %v2005 = vld [vmem:[%s1974 + $0xf0] sm:$0xff]
      %v2006 = vld [vmem:[%s1974 + $0xf8] sm:$0xff]
      %2008 = vset.pattern.permute.xlu0 0
      %2009 = vperm.xlu0 %2008, %v1975
      %v2010 = vpop.permute.xlu0 %2009
      %2013 = vset.pattern.permute.xlu0 0
      %2014 = vperm.xlu0 %2013, %v1976
      %v2015 = vpop.permute.xlu0 %2014
      %2018 = vset.pattern.permute.xlu0 0
      %2019 = vperm.xlu0 %2018, %v1977
      %v2020 = vpop.permute.xlu0 %2019
      %2023 = vset.pattern.permute.xlu0 0
      %2024 = vperm.xlu0 %2023, %v1978
      %v2025 = vpop.permute.xlu0 %2024
      %2028 = vset.pattern.permute.xlu0 0
      %2029 = vperm.xlu0 %2028, %v1979
      %v2030 = vpop.permute.xlu0 %2029
      %2033 = vset.pattern.permute.xlu0 0
      %2034 = vperm.xlu0 %2033, %v1980
      %v2035 = vpop.permute.xlu0 %2034
      %2038 = vset.pattern.permute.xlu0 0
      %2039 = vperm.xlu0 %2038, %v1981
      %v2040 = vpop.permute.xlu0 %2039
      %2043 = vset.pattern.permute.xlu0 0
      %2044 = vperm.xlu0 %2043, %v1982
      %v2045 = vpop.permute.xlu0 %2044
      %2048 = vset.pattern.permute.xlu0 0
      %2049 = vperm.xlu0 %2048, %v1983
      %v2050 = vpop.permute.xlu0 %2049
      %2053 = vset.pattern.permute.xlu0 0
      %2054 = vperm.xlu0 %2053, %v1984
      %v2055 = vpop.permute.xlu0 %2054
      %2058 = vset.pattern.permute.xlu0 0
      %2059 = vperm.xlu0 %2058, %v1985
      %v2060 = vpop.permute.xlu0 %2059
      %2063 = vset.pattern.permute.xlu0 0
      %2064 = vperm.xlu0 %2063, %v1986
      %v2065 = vpop.permute.xlu0 %2064
      %2068 = vset.pattern.permute.xlu0 0
      %2069 = vperm.xlu0 %2068, %v1987
      %v2070 = vpop.permute.xlu0 %2069
      %2073 = vset.pattern.permute.xlu0 0
      %2074 = vperm.xlu0 %2073, %v1988
      %v2075 = vpop.permute.xlu0 %2074
      %2078 = vset.pattern.permute.xlu0 0
      %2079 = vperm.xlu0 %2078, %v1989
      %v2080 = vpop.permute.xlu0 %2079
      %2083 = vset.pattern.permute.xlu0 0
      %2084 = vperm.xlu0 %2083, %v1990
      %v2085 = vpop.permute.xlu0 %2084
      %2088 = vset.pattern.permute.xlu0 0
      %2089 = vperm.xlu0 %2088, %v1991
      %v2090 = vpop.permute.xlu0 %2089
      %2093 = vset.pattern.permute.xlu0 0
      %2094 = vperm.xlu0 %2093, %v1992
      %v2095 = vpop.permute.xlu0 %2094
      %2098 = vset.pattern.permute.xlu0 0
      %2099 = vperm.xlu0 %2098, %v1993
      %v2100 = vpop.permute.xlu0 %2099
      %2103 = vset.pattern.permute.xlu0 0
      %2104 = vperm.xlu0 %2103, %v1994
      %v2105 = vpop.permute.xlu0 %2104
      %2108 = vset.pattern.permute.xlu0 0
      %2109 = vperm.xlu0 %2108, %v1995
      %v2110 = vpop.permute.xlu0 %2109
      %2113 = vset.pattern.permute.xlu0 0
      %2114 = vperm.xlu0 %2113, %v1996
      %v2115 = vpop.permute.xlu0 %2114
      %2118 = vset.pattern.permute.xlu0 0
      %2119 = vperm.xlu0 %2118, %v1997
      %v2120 = vpop.permute.xlu0 %2119
      %2123 = vset.pattern.permute.xlu0 0
      %2124 = vperm.xlu0 %2123, %v1998
      %v2125 = vpop.permute.xlu0 %2124
      %2128 = vset.pattern.permute.xlu0 0
      %2129 = vperm.xlu0 %2128, %v1999
      %v2130 = vpop.permute.xlu0 %2129
      %2133 = vset.pattern.permute.xlu0 0
      %2134 = vperm.xlu0 %2133, %v2000
      %v2135 = vpop.permute.xlu0 %2134
      %2138 = vset.pattern.permute.xlu0 0
      %2139 = vperm.xlu0 %2138, %v2001
      %v2140 = vpop.permute.xlu0 %2139
      %2143 = vset.pattern.permute.xlu0 0
      %2144 = vperm.xlu0 %2143, %v2002
      %v2145 = vpop.permute.xlu0 %2144
      %2148 = vset.pattern.permute.xlu0 0
      %2149 = vperm.xlu0 %2148, %v2003
      %v2150 = vpop.permute.xlu0 %2149
      %2153 = vset.pattern.permute.xlu0 0
      %2154 = vperm.xlu0 %2153, %v2004
      %v2155 = vpop.permute.xlu0 %2154
      %2158 = vset.pattern.permute.xlu0 0
      %2159 = vperm.xlu0 %2158, %v2005
      %v2160 = vpop.permute.xlu0 %2159
      %2163 = vset.pattern.permute.xlu0 0
      %2164 = vperm.xlu0 %2163, %v2006
      %v2165 = vpop.permute.xlu0 %2164
      %v2167 = vmul.f32 %v1942, %v2010
      %v2168 = vmul.f32 %v1943, %v2015
      %v2169 = vmul.f32 %v1944, %v2020
      %v2170 = vmul.f32 %v1945, %v2025
      %v2171 = vmul.f32 %v1946, %v2030
      %v2172 = vmul.f32 %v1947, %v2035
      %v2173 = vmul.f32 %v1948, %v2040
      %v2174 = vmul.f32 %v1949, %v2045
      %v2175 = vmul.f32 %v1950, %v2050
      %v2176 = vmul.f32 %v1951, %v2055
      %v2177 = vmul.f32 %v1952, %v2060
      %v2178 = vmul.f32 %v1953, %v2065
      %v2179 = vmul.f32 %v1954, %v2070
      %v2180 = vmul.f32 %v1955, %v2075
      %v2181 = vmul.f32 %v1956, %v2080
      %v2182 = vmul.f32 %v1957, %v2085
      %v2183 = vmul.f32 %v1958, %v2090
      %v2184 = vmul.f32 %v1959, %v2095
      %v2185 = vmul.f32 %v1960, %v2100
      %v2186 = vmul.f32 %v1961, %v2105
      %v2187 = vmul.f32 %v1962, %v2110
      %v2188 = vmul.f32 %v1963, %v2115
      %v2189 = vmul.f32 %v1964, %v2120
      %v2190 = vmul.f32 %v1965, %v2125
      %v2191 = vmul.f32 %v1966, %v2130
      %v2192 = vmul.f32 %v1967, %v2135
      %v2193 = vmul.f32 %v1968, %v2140
      %v2194 = vmul.f32 %v1969, %v2145
      %v2195 = vmul.f32 %v1970, %v2150
      %v2196 = vmul.f32 %v1971, %v2155
      %v2197 = vmul.f32 %v1972, %v2160
      %v2198 = vmul.f32 %v1973, %v2165
      %v2199 = vpack.c.bf16 %v2168, %v2167
      %v2200 = vpack.c.bf16 %v2170, %v2169
      %v2201 = vpack.c.bf16 %v2172, %v2171
      %v2202 = vpack.c.bf16 %v2174, %v2173
      %v2203 = vpack.c.bf16 %v2176, %v2175
      %v2204 = vpack.c.bf16 %v2178, %v2177
      %v2205 = vpack.c.bf16 %v2180, %v2179
      %v2206 = vpack.c.bf16 %v2182, %v2181
      %v2207 = vpack.c.bf16 %v2184, %v2183
      %v2208 = vpack.c.bf16 %v2186, %v2185
      %v2209 = vpack.c.bf16 %v2188, %v2187
      %v2210 = vpack.c.bf16 %v2190, %v2189
      %v2211 = vpack.c.bf16 %v2192, %v2191
      %v2212 = vpack.c.bf16 %v2194, %v2193
      %v2213 = vpack.c.bf16 %v2196, %v2195
      %v2214 = vpack.c.bf16 %v2198, %v2197
      %s2215 = scalar_lea.vmem %s7, 32
      %v2216 = vld [vmem:[%s2215] sm:$0xf]
      %v2217 = vld [vmem:[%s2215 + $0x4] sm:$0xf]
      %v2218 = vld [vmem:[%s2215 + $0x8] sm:$0xf]
      %v2219 = vld [vmem:[%s2215 + $0xc] sm:$0xf]
      %v2220 = vld [vmem:[%s2215 + $0x10] sm:$0xf]
      %v2221 = vld [vmem:[%s2215 + $0x14] sm:$0xf]
      %v2222 = vld [vmem:[%s2215 + $0x18] sm:$0xf]
      %v2223 = vld [vmem:[%s2215 + $0x1c] sm:$0xf]
      %v2232 = vunpack.c.l.b16 %v2216
      %v2233 = vunpack.c.l.b16 %v2217
      %v2234 = vunpack.c.l.b16 %v2218
      %v2235 = vunpack.c.l.b16 %v2219
      %v2236 = vunpack.c.l.b16 %v2220
      %v2237 = vunpack.c.l.b16 %v2221
      %v2238 = vunpack.c.l.b16 %v2222
      %v2239 = vunpack.c.l.b16 %v2223
      %v2240 = vpack.c.b16 %v2233, %v2232
      %v2241 = vpack.c.b16 %v2235, %v2234
      %v2242 = vpack.c.b16 %v2237, %v2236
      %v2243 = vpack.c.b16 %v2239, %v2238
      %v2249 = vsel %vm422, %v2199, 0
      %v2252 = vsel %vm422, %v2200, 0
      %v2255 = vsel %vm422, %v2201, 0
      %v2258 = vsel %vm422, %v2202, 0
      %v2261 = vsel %vm422, %v2203, 0
      %v2264 = vsel %vm422, %v2204, 0
      %v2267 = vsel %vm422, %v2205, 0
      %v2270 = vsel %vm422, %v2206, 0
      %v2273 = vsel %vm422, %v2207, 0
      %v2276 = vsel %vm422, %v2208, 0
      %v2279 = vsel %vm422, %v2209, 0
      %v2282 = vsel %vm422, %v2210, 0
      %v2285 = vsel %vm422, %v2211, 0
      %v2288 = vsel %vm422, %v2212, 0
      %v2291 = vsel %vm422, %v2213, 0
      %v2294 = vsel %vm422, %v2214, 0
      %2296 = vmatpush.bf16.msra.mxu0 0
      %2297 = vmatpush.bf16.msra.mxu0 0
      %2298 = vmatpush.bf16.msra.mxu0 0
      %2299 = vmatpush.bf16.msra.mxu0 0
      %2300 = vmatpush.bf16.msra.mxu0 %v2243
      %2301 = vmatpush.bf16.msra.mxu0 %v2242
      %2302 = vmatpush.bf16.msra.mxu0 %v2241
      %2303 = vmatpush.bf16.msra.mxu0 %v2240
      %2304 = vmatmul.bf16.gmra.mxu0 %v2249
      %v2305 = vpop.f32.mrf.mxu0
      %v2306 = vadd.f32 0.0, %v2305
      %v2307 = vpop.f32.mrf.mxu0
      %v2308 = vadd.f32 0.0, %v2307
      %2309 = vmatmul.bf16.gmra.mxu0 %v2252
      %v2310 = vpop.f32.mrf.mxu0
      %v2311 = vadd.f32 0.0, %v2310
      %v2312 = vpop.f32.mrf.mxu0
      %v2313 = vadd.f32 0.0, %v2312
      %2314 = vmatmul.bf16.gmra.mxu0 %v2255
      %v2315 = vpop.f32.mrf.mxu0
      %v2316 = vadd.f32 0.0, %v2315
      %v2317 = vpop.f32.mrf.mxu0
      %v2318 = vadd.f32 0.0, %v2317
      %2319 = vmatmul.bf16.gmra.mxu0 %v2258
      %v2320 = vpop.f32.mrf.mxu0
      %v2321 = vadd.f32 0.0, %v2320
      %v2322 = vpop.f32.mrf.mxu0
      %v2323 = vadd.f32 0.0, %v2322
      %2324 = vmatmul.bf16.gmra.mxu0 %v2261
      %v2325 = vpop.f32.mrf.mxu0
      %v2326 = vadd.f32 0.0, %v2325
      %v2327 = vpop.f32.mrf.mxu0
      %v2328 = vadd.f32 0.0, %v2327
      %2329 = vmatmul.bf16.gmra.mxu0 %v2264
      %v2330 = vpop.f32.mrf.mxu0
      %v2331 = vadd.f32 0.0, %v2330
      %v2332 = vpop.f32.mrf.mxu0
      %v2333 = vadd.f32 0.0, %v2332
      %2334 = vmatmul.bf16.gmra.mxu0 %v2267
      %v2335 = vpop.f32.mrf.mxu0
      %v2336 = vadd.f32 0.0, %v2335
      %v2337 = vpop.f32.mrf.mxu0
      %v2338 = vadd.f32 0.0, %v2337
      %2339 = vmatmul.bf16.gmra.mxu0 %v2270
      %v2340 = vpop.f32.mrf.mxu0
      %v2341 = vadd.f32 0.0, %v2340
      %v2342 = vpop.f32.mrf.mxu0
      %v2343 = vadd.f32 0.0, %v2342
      %2344 = vmatmul.bf16.gmra.mxu0 %v2273
      %v2345 = vpop.f32.mrf.mxu0
      %v2346 = vadd.f32 0.0, %v2345
      %v2347 = vpop.f32.mrf.mxu0
      %v2348 = vadd.f32 0.0, %v2347
      %2349 = vmatmul.bf16.gmra.mxu0 %v2276
      %v2350 = vpop.f32.mrf.mxu0
      %v2351 = vadd.f32 0.0, %v2350
      %v2352 = vpop.f32.mrf.mxu0
      %v2353 = vadd.f32 0.0, %v2352
      %2354 = vmatmul.bf16.gmra.mxu0 %v2279
      %v2355 = vpop.f32.mrf.mxu0
      %v2356 = vadd.f32 0.0, %v2355
      %v2357 = vpop.f32.mrf.mxu0
      %v2358 = vadd.f32 0.0, %v2357
      %2359 = vmatmul.bf16.gmra.mxu0 %v2282
      %v2360 = vpop.f32.mrf.mxu0
      %v2361 = vadd.f32 0.0, %v2360
      %v2362 = vpop.f32.mrf.mxu0
      %v2363 = vadd.f32 0.0, %v2362
      %2364 = vmatmul.bf16.gmra.mxu0 %v2285
      %v2365 = vpop.f32.mrf.mxu0
      %v2366 = vadd.f32 0.0, %v2365
      %v2367 = vpop.f32.mrf.mxu0
      %v2368 = vadd.f32 0.0, %v2367
      %2369 = vmatmul.bf16.gmra.mxu0 %v2288
      %v2370 = vpop.f32.mrf.mxu0
      %v2371 = vadd.f32 0.0, %v2370
      %v2372 = vpop.f32.mrf.mxu0
      %v2373 = vadd.f32 0.0, %v2372
      %2374 = vmatmul.bf16.gmra.mxu0 %v2291
      %v2375 = vpop.f32.mrf.mxu0
      %v2376 = vadd.f32 0.0, %v2375
      %v2377 = vpop.f32.mrf.mxu0
      %v2378 = vadd.f32 0.0, %v2377
      %2379 = vmatmul.bf16.gmra.mxu0 %v2294
      %v2380 = vpop.f32.mrf.mxu0
      %v2381 = vadd.f32 0.0, %v2380
      %v2382 = vpop.f32.mrf.mxu0
      %v2383 = vadd.f32 0.0, %v2382
      %2384 = vdwg.mxu0
      %v2393 = vunpack.c.l.b16 %v1934
      %v2394 = vunpack.c.l.b16 %v1935
      %v2395 = vunpack.c.l.b16 %v1936
      %v2396 = vunpack.c.l.b16 %v1937
      %v2397 = vunpack.c.l.b16 %v1938
      %v2398 = vunpack.c.l.b16 %v1939
      %v2399 = vunpack.c.l.b16 %v1940
      %v2400 = vunpack.c.l.b16 %v1941
      %v2401 = vpack.c.b16 %v2394, %v2393
      %v2402 = vpack.c.b16 %v2396, %v2395
      %v2403 = vpack.c.b16 %v2398, %v2397
      %v2404 = vpack.c.b16 %v2400, %v2399
      %v2410 = vsel %vm422, %v1918, 0
      %v2413 = vsel %vm422, %v1919, 0
      %v2416 = vsel %vm422, %v1920, 0
      %v2419 = vsel %vm422, %v1921, 0
      %v2422 = vsel %vm422, %v1922, 0
      %v2425 = vsel %vm422, %v1923, 0
      %v2428 = vsel %vm422, %v1924, 0
      %v2431 = vsel %vm422, %v1925, 0
      %v2434 = vsel %vm422, %v1926, 0
      %v2437 = vsel %vm422, %v1927, 0
      %v2440 = vsel %vm422, %v1928, 0
      %v2443 = vsel %vm422, %v1929, 0
      %v2446 = vsel %vm422, %v1930, 0
      %v2449 = vsel %vm422, %v1931, 0
      %v2452 = vsel %vm422, %v1932, 0
      %v2455 = vsel %vm422, %v1933, 0
      %2457 = vmatpush.bf16.msra.mxu0 0
      %2458 = vmatpush.bf16.msra.mxu0 0
      %2459 = vmatpush.bf16.msra.mxu0 0
      %2460 = vmatpush.bf16.msra.mxu0 0
      %2461 = vmatpush.bf16.msra.mxu0 %v2404
      %2462 = vmatpush.bf16.msra.mxu0 %v2403
      %2463 = vmatpush.bf16.msra.mxu0 %v2402
      %2464 = vmatpush.bf16.msra.mxu0 %v2401
      %2465 = vmatmul.bf16.gmra.mxu0 %v2410
      %v2466 = vpop.f32.mrf.mxu0
      %v2467 = vadd.f32 %v2306, %v2466
      %v2468 = vpop.f32.mrf.mxu0
      %v2469 = vadd.f32 %v2308, %v2468
      %2470 = vmatmul.bf16.gmra.mxu0 %v2413
      %v2471 = vpop.f32.mrf.mxu0
      %v2472 = vadd.f32 %v2311, %v2471
      %v2473 = vpop.f32.mrf.mxu0
      %v2474 = vadd.f32 %v2313, %v2473
      %2475 = vmatmul.bf16.gmra.mxu0 %v2416
      %v2476 = vpop.f32.mrf.mxu0
      %v2477 = vadd.f32 %v2316, %v2476
      %v2478 = vpop.f32.mrf.mxu0
      %v2479 = vadd.f32 %v2318, %v2478
      %2480 = vmatmul.bf16.gmra.mxu0 %v2419
      %v2481 = vpop.f32.mrf.mxu0
      %v2482 = vadd.f32 %v2321, %v2481
      %v2483 = vpop.f32.mrf.mxu0
      %v2484 = vadd.f32 %v2323, %v2483
      %2485 = vmatmul.bf16.gmra.mxu0 %v2422
      %v2486 = vpop.f32.mrf.mxu0
      %v2487 = vadd.f32 %v2326, %v2486
      %v2488 = vpop.f32.mrf.mxu0
      %v2489 = vadd.f32 %v2328, %v2488
      %2490 = vmatmul.bf16.gmra.mxu0 %v2425
      %v2491 = vpop.f32.mrf.mxu0
      %v2492 = vadd.f32 %v2331, %v2491
      %v2493 = vpop.f32.mrf.mxu0
      %v2494 = vadd.f32 %v2333, %v2493
      %2495 = vmatmul.bf16.gmra.mxu0 %v2428
      %v2496 = vpop.f32.mrf.mxu0
      %v2497 = vadd.f32 %v2336, %v2496
      %v2498 = vpop.f32.mrf.mxu0
      %v2499 = vadd.f32 %v2338, %v2498
      %2500 = vmatmul.bf16.gmra.mxu0 %v2431
      %v2501 = vpop.f32.mrf.mxu0
      %v2502 = vadd.f32 %v2341, %v2501
      %v2503 = vpop.f32.mrf.mxu0
      %v2504 = vadd.f32 %v2343, %v2503
      %2505 = vmatmul.bf16.gmra.mxu0 %v2434
      %v2506 = vpop.f32.mrf.mxu0
      %v2507 = vadd.f32 %v2346, %v2506
      %v2508 = vpop.f32.mrf.mxu0
      %v2509 = vadd.f32 %v2348, %v2508
      %2510 = vmatmul.bf16.gmra.mxu0 %v2437
      %v2511 = vpop.f32.mrf.mxu0
      %v2512 = vadd.f32 %v2351, %v2511
      %v2513 = vpop.f32.mrf.mxu0
      %v2514 = vadd.f32 %v2353, %v2513
      %2515 = vmatmul.bf16.gmra.mxu0 %v2440
      %v2516 = vpop.f32.mrf.mxu0
      %v2517 = vadd.f32 %v2356, %v2516
      %v2518 = vpop.f32.mrf.mxu0
      %v2519 = vadd.f32 %v2358, %v2518
      %2520 = vmatmul.bf16.gmra.mxu0 %v2443
      %v2521 = vpop.f32.mrf.mxu0
      %v2522 = vadd.f32 %v2361, %v2521
      %v2523 = vpop.f32.mrf.mxu0
      %v2524 = vadd.f32 %v2363, %v2523
      %2525 = vmatmul.bf16.gmra.mxu0 %v2446
      %v2526 = vpop.f32.mrf.mxu0
      %v2527 = vadd.f32 %v2366, %v2526
      %v2528 = vpop.f32.mrf.mxu0
      %v2529 = vadd.f32 %v2368, %v2528
      %2530 = vmatmul.bf16.gmra.mxu0 %v2449
      %v2531 = vpop.f32.mrf.mxu0
      %v2532 = vadd.f32 %v2371, %v2531
      %v2533 = vpop.f32.mrf.mxu0
      %v2534 = vadd.f32 %v2373, %v2533
      %2535 = vmatmul.bf16.gmra.mxu0 %v2452
      %v2536 = vpop.f32.mrf.mxu0
      %v2537 = vadd.f32 %v2376, %v2536
      %v2538 = vpop.f32.mrf.mxu0
      %v2539 = vadd.f32 %v2378, %v2538
      %2540 = vmatmul.bf16.gmra.mxu0 %v2455
      %v2541 = vpop.f32.mrf.mxu0
      %v2542 = vadd.f32 %v2381, %v2541
      %v2543 = vpop.f32.mrf.mxu0
      %v2544 = vadd.f32 %v2383, %v2543
      %2545 = vdwg.mxu0
      %v2546 = vld [vmem:[#allocation2 + $0x9] sm:$0xff]
      %v2547 = vld [vmem:[#allocation2 + $0x11] sm:$0xff]
      %v2548 = vld [vmem:[#allocation2 + $0x19] sm:$0xff]
      %v2549 = vld [vmem:[#allocation2 + $0x21] sm:$0xff]
      %v2550 = vld [vmem:[#allocation2 + $0x29] sm:$0xff]
      %v2551 = vld [vmem:[#allocation2 + $0x31] sm:$0xff]
      %v2552 = vld [vmem:[#allocation2 + $0x39] sm:$0xff]
      %v2553 = vld [vmem:[#allocation2 + $0x41] sm:$0xff]
      %v2554 = vld [vmem:[#allocation2 + $0x49] sm:$0xff]
      %v2555 = vld [vmem:[#allocation2 + $0x51] sm:$0xff]
      %v2556 = vld [vmem:[#allocation2 + $0x59] sm:$0xff]
      %v2557 = vld [vmem:[#allocation2 + $0x61] sm:$0xff]
      %v2558 = vld [vmem:[#allocation2 + $0x69] sm:$0xff]
      %v2559 = vld [vmem:[#allocation2 + $0x71] sm:$0xff]
      %v2560 = vld [vmem:[#allocation2 + $0x79] sm:$0xff]
      %v2561 = vld [vmem:[#allocation2 + $0x81] sm:$0xff]
      %v2562 = vld [vmem:[#allocation2 + $0x89] sm:$0xff]
      %v2563 = vld [vmem:[#allocation2 + $0x91] sm:$0xff]
      %v2564 = vld [vmem:[#allocation2 + $0x99] sm:$0xff]
      %v2565 = vld [vmem:[#allocation2 + $0xa1] sm:$0xff]
      %v2566 = vld [vmem:[#allocation2 + $0xa9] sm:$0xff]
      %v2567 = vld [vmem:[#allocation2 + $0xb1] sm:$0xff]
      %v2568 = vld [vmem:[#allocation2 + $0xb9] sm:$0xff]
      %v2569 = vld [vmem:[#allocation2 + $0xc1] sm:$0xff]
      %v2570 = vld [vmem:[#allocation2 + $0xc9] sm:$0xff]
      %v2571 = vld [vmem:[#allocation2 + $0xd1] sm:$0xff]
      %v2572 = vld [vmem:[#allocation2 + $0xd9] sm:$0xff]
      %v2573 = vld [vmem:[#allocation2 + $0xe1] sm:$0xff]
      %v2574 = vld [vmem:[#allocation2 + $0xe9] sm:$0xff]
      %v2575 = vld [vmem:[#allocation2 + $0xf1] sm:$0xff]
      %v2576 = vld [vmem:[#allocation2 + $0xf9] sm:$0xff]
      %v2577 = vld [vmem:[#allocation2 + $0x101] sm:$0xff]
      %s2578 = scalar_lea.vmem %s6, 512
      %v2579 = vld [vmem:[%s2578] sm:$0xff]
      %v2580 = vld [vmem:[%s2578 + $0x8] sm:$0xff]
      %v2581 = vld [vmem:[%s2578 + $0x10] sm:$0xff]
      %v2582 = vld [vmem:[%s2578 + $0x18] sm:$0xff]
      %v2583 = vld [vmem:[%s2578 + $0x20] sm:$0xff]
      %v2584 = vld [vmem:[%s2578 + $0x28] sm:$0xff]
      %v2585 = vld [vmem:[%s2578 + $0x30] sm:$0xff]
      %v2586 = vld [vmem:[%s2578 + $0x38] sm:$0xff]
      %v2587 = vld [vmem:[%s2578 + $0x40] sm:$0xff]
      %v2588 = vld [vmem:[%s2578 + $0x48] sm:$0xff]
      %v2589 = vld [vmem:[%s2578 + $0x50] sm:$0xff]
      %v2590 = vld [vmem:[%s2578 + $0x58] sm:$0xff]
      %v2591 = vld [vmem:[%s2578 + $0x60] sm:$0xff]
      %v2592 = vld [vmem:[%s2578 + $0x68] sm:$0xff]
      %v2593 = vld [vmem:[%s2578 + $0x70] sm:$0xff]
      %v2594 = vld [vmem:[%s2578 + $0x78] sm:$0xff]
      %v2595 = vld [vmem:[%s2578 + $0x80] sm:$0xff]
      %v2596 = vld [vmem:[%s2578 + $0x88] sm:$0xff]
      %v2597 = vld [vmem:[%s2578 + $0x90] sm:$0xff]
      %v2598 = vld [vmem:[%s2578 + $0x98] sm:$0xff]
      %v2599 = vld [vmem:[%s2578 + $0xa0] sm:$0xff]
      %v2600 = vld [vmem:[%s2578 + $0xa8] sm:$0xff]
      %v2601 = vld [vmem:[%s2578 + $0xb0] sm:$0xff]
      %v2602 = vld [vmem:[%s2578 + $0xb8] sm:$0xff]
      %v2603 = vld [vmem:[%s2578 + $0xc0] sm:$0xff]
      %v2604 = vld [vmem:[%s2578 + $0xc8] sm:$0xff]
      %v2605 = vld [vmem:[%s2578 + $0xd0] sm:$0xff]
      %v2606 = vld [vmem:[%s2578 + $0xd8] sm:$0xff]
      %v2607 = vld [vmem:[%s2578 + $0xe0] sm:$0xff]
      %v2608 = vld [vmem:[%s2578 + $0xe8] sm:$0xff]
      %v2609 = vld [vmem:[%s2578 + $0xf0] sm:$0xff]
      %v2610 = vld [vmem:[%s2578 + $0xf8] sm:$0xff]
      %2612 = vset.pattern.permute.xlu0 0
      %2613 = vperm.xlu0 %2612, %v2579
      %v2614 = vpop.permute.xlu0 %2613
      %2617 = vset.pattern.permute.xlu0 0
      %2618 = vperm.xlu0 %2617, %v2580
      %v2619 = vpop.permute.xlu0 %2618
      %2622 = vset.pattern.permute.xlu0 0
      %2623 = vperm.xlu0 %2622, %v2581
      %v2624 = vpop.permute.xlu0 %2623
      %2627 = vset.pattern.permute.xlu0 0
      %2628 = vperm.xlu0 %2627, %v2582
      %v2629 = vpop.permute.xlu0 %2628
      %2632 = vset.pattern.permute.xlu0 0
      %2633 = vperm.xlu0 %2632, %v2583
      %v2634 = vpop.permute.xlu0 %2633
      %2637 = vset.pattern.permute.xlu0 0
      %2638 = vperm.xlu0 %2637, %v2584
      %v2639 = vpop.permute.xlu0 %2638
      %2642 = vset.pattern.permute.xlu0 0
      %2643 = vperm.xlu0 %2642, %v2585
      %v2644 = vpop.permute.xlu0 %2643
      %2647 = vset.pattern.permute.xlu0 0
      %2648 = vperm.xlu0 %2647, %v2586
      %v2649 = vpop.permute.xlu0 %2648
      %2652 = vset.pattern.permute.xlu0 0
      %2653 = vperm.xlu0 %2652, %v2587
      %v2654 = vpop.permute.xlu0 %2653
      %2657 = vset.pattern.permute.xlu0 0
      %2658 = vperm.xlu0 %2657, %v2588
      %v2659 = vpop.permute.xlu0 %2658
      %2662 = vset.pattern.permute.xlu0 0
      %2663 = vperm.xlu0 %2662, %v2589
      %v2664 = vpop.permute.xlu0 %2663
      %2667 = vset.pattern.permute.xlu0 0
      %2668 = vperm.xlu0 %2667, %v2590
      %v2669 = vpop.permute.xlu0 %2668
      %2672 = vset.pattern.permute.xlu0 0
      %2673 = vperm.xlu0 %2672, %v2591
      %v2674 = vpop.permute.xlu0 %2673
      %2677 = vset.pattern.permute.xlu0 0
      %2678 = vperm.xlu0 %2677, %v2592
      %v2679 = vpop.permute.xlu0 %2678
      %2682 = vset.pattern.permute.xlu0 0
      %2683 = vperm.xlu0 %2682, %v2593
      %v2684 = vpop.permute.xlu0 %2683
      %2687 = vset.pattern.permute.xlu0 0
      %2688 = vperm.xlu0 %2687, %v2594
      %v2689 = vpop.permute.xlu0 %2688
      %2692 = vset.pattern.permute.xlu0 0
      %2693 = vperm.xlu0 %2692, %v2595
      %v2694 = vpop.permute.xlu0 %2693
      %2697 = vset.pattern.permute.xlu0 0
      %2698 = vperm.xlu0 %2697, %v2596
      %v2699 = vpop.permute.xlu0 %2698
      %2702 = vset.pattern.permute.xlu0 0
      %2703 = vperm.xlu0 %2702, %v2597
      %v2704 = vpop.permute.xlu0 %2703
      %2707 = vset.pattern.permute.xlu0 0
      %2708 = vperm.xlu0 %2707, %v2598
      %v2709 = vpop.permute.xlu0 %2708
      %2712 = vset.pattern.permute.xlu0 0
      %2713 = vperm.xlu0 %2712, %v2599
      %v2714 = vpop.permute.xlu0 %2713
      %2717 = vset.pattern.permute.xlu0 0
      %2718 = vperm.xlu0 %2717, %v2600
      %v2719 = vpop.permute.xlu0 %2718
      %2722 = vset.pattern.permute.xlu0 0
      %2723 = vperm.xlu0 %2722, %v2601
      %v2724 = vpop.permute.xlu0 %2723
      %2727 = vset.pattern.permute.xlu0 0
      %2728 = vperm.xlu0 %2727, %v2602
      %v2729 = vpop.permute.xlu0 %2728
      %2732 = vset.pattern.permute.xlu0 0
      %2733 = vperm.xlu0 %2732, %v2603
      %v2734 = vpop.permute.xlu0 %2733
      %2737 = vset.pattern.permute.xlu0 0
      %2738 = vperm.xlu0 %2737, %v2604
      %v2739 = vpop.permute.xlu0 %2738
      %2742 = vset.pattern.permute.xlu0 0
      %2743 = vperm.xlu0 %2742, %v2605
      %v2744 = vpop.permute.xlu0 %2743
      %2747 = vset.pattern.permute.xlu0 0
      %2748 = vperm.xlu0 %2747, %v2606
      %v2749 = vpop.permute.xlu0 %2748
      %2752 = vset.pattern.permute.xlu0 0
      %2753 = vperm.xlu0 %2752, %v2607
      %v2754 = vpop.permute.xlu0 %2753
      %2757 = vset.pattern.permute.xlu0 0
      %2758 = vperm.xlu0 %2757, %v2608
      %v2759 = vpop.permute.xlu0 %2758
      %2762 = vset.pattern.permute.xlu0 0
      %2763 = vperm.xlu0 %2762, %v2609
      %v2764 = vpop.permute.xlu0 %2763
      %2767 = vset.pattern.permute.xlu0 0
      %2768 = vperm.xlu0 %2767, %v2610
      %v2769 = vpop.permute.xlu0 %2768
      %v2771 = vmul.f32 %v2546, %v2614
      %v2772 = vmul.f32 %v2547, %v2619
      %v2773 = vmul.f32 %v2548, %v2624
      %v2774 = vmul.f32 %v2549, %v2629
      %v2775 = vmul.f32 %v2550, %v2634
      %v2776 = vmul.f32 %v2551, %v2639
      %v2777 = vmul.f32 %v2552, %v2644
      %v2778 = vmul.f32 %v2553, %v2649
      %v2779 = vmul.f32 %v2554, %v2654
      %v2780 = vmul.f32 %v2555, %v2659
      %v2781 = vmul.f32 %v2556, %v2664
      %v2782 = vmul.f32 %v2557, %v2669
      %v2783 = vmul.f32 %v2558, %v2674
      %v2784 = vmul.f32 %v2559, %v2679
      %v2785 = vmul.f32 %v2560, %v2684
      %v2786 = vmul.f32 %v2561, %v2689
      %v2787 = vmul.f32 %v2562, %v2694
      %v2788 = vmul.f32 %v2563, %v2699
      %v2789 = vmul.f32 %v2564, %v2704
      %v2790 = vmul.f32 %v2565, %v2709
      %v2791 = vmul.f32 %v2566, %v2714
      %v2792 = vmul.f32 %v2567, %v2719
      %v2793 = vmul.f32 %v2568, %v2724
      %v2794 = vmul.f32 %v2569, %v2729
      %v2795 = vmul.f32 %v2570, %v2734
      %v2796 = vmul.f32 %v2571, %v2739
      %v2797 = vmul.f32 %v2572, %v2744
      %v2798 = vmul.f32 %v2573, %v2749
      %v2799 = vmul.f32 %v2574, %v2754
      %v2800 = vmul.f32 %v2575, %v2759
      %v2801 = vmul.f32 %v2576, %v2764
      %v2802 = vmul.f32 %v2577, %v2769
      %v2803 = vpack.c.bf16 %v2772, %v2771
      %v2804 = vpack.c.bf16 %v2774, %v2773
      %v2805 = vpack.c.bf16 %v2776, %v2775
      %v2806 = vpack.c.bf16 %v2778, %v2777
      %v2807 = vpack.c.bf16 %v2780, %v2779
      %v2808 = vpack.c.bf16 %v2782, %v2781
      %v2809 = vpack.c.bf16 %v2784, %v2783
      %v2810 = vpack.c.bf16 %v2786, %v2785
      %v2811 = vpack.c.bf16 %v2788, %v2787
      %v2812 = vpack.c.bf16 %v2790, %v2789
      %v2813 = vpack.c.bf16 %v2792, %v2791
      %v2814 = vpack.c.bf16 %v2794, %v2793
      %v2815 = vpack.c.bf16 %v2796, %v2795
      %v2816 = vpack.c.bf16 %v2798, %v2797
      %v2817 = vpack.c.bf16 %v2800, %v2799
      %v2818 = vpack.c.bf16 %v2802, %v2801
      %s2819 = scalar_lea.vmem %s7, 64
      %v2820 = vld [vmem:[%s2819] sm:$0xf]
      %v2821 = vld [vmem:[%s2819 + $0x4] sm:$0xf]
      %v2822 = vld [vmem:[%s2819 + $0x8] sm:$0xf]
      %v2823 = vld [vmem:[%s2819 + $0xc] sm:$0xf]
      %v2824 = vld [vmem:[%s2819 + $0x10] sm:$0xf]
      %v2825 = vld [vmem:[%s2819 + $0x14] sm:$0xf]
      %v2826 = vld [vmem:[%s2819 + $0x18] sm:$0xf]
      %v2827 = vld [vmem:[%s2819 + $0x1c] sm:$0xf]
      %v2836 = vunpack.c.l.b16 %v2820
      %v2837 = vunpack.c.l.b16 %v2821
      %v2838 = vunpack.c.l.b16 %v2822
      %v2839 = vunpack.c.l.b16 %v2823
      %v2840 = vunpack.c.l.b16 %v2824
      %v2841 = vunpack.c.l.b16 %v2825
      %v2842 = vunpack.c.l.b16 %v2826
      %v2843 = vunpack.c.l.b16 %v2827
      %v2844 = vpack.c.b16 %v2837, %v2836
      %v2845 = vpack.c.b16 %v2839, %v2838
      %v2846 = vpack.c.b16 %v2841, %v2840
      %v2847 = vpack.c.b16 %v2843, %v2842
      %v2853 = vsel %vm422, %v2803, 0
      %v2856 = vsel %vm422, %v2804, 0
      %v2859 = vsel %vm422, %v2805, 0
      %v2862 = vsel %vm422, %v2806, 0
      %v2865 = vsel %vm422, %v2807, 0
      %v2868 = vsel %vm422, %v2808, 0
      %v2871 = vsel %vm422, %v2809, 0
      %v2874 = vsel %vm422, %v2810, 0
      %v2877 = vsel %vm422, %v2811, 0
      %v2880 = vsel %vm422, %v2812, 0
      %v2883 = vsel %vm422, %v2813, 0
      %v2886 = vsel %vm422, %v2814, 0
      %v2889 = vsel %vm422, %v2815, 0
      %v2892 = vsel %vm422, %v2816, 0
      %v2895 = vsel %vm422, %v2817, 0
      %v2898 = vsel %vm422, %v2818, 0
      %2900 = vmatpush.bf16.msra.mxu0 0
      %2901 = vmatpush.bf16.msra.mxu0 0
      %2902 = vmatpush.bf16.msra.mxu0 0
      %2903 = vmatpush.bf16.msra.mxu0 0
      %2904 = vmatpush.bf16.msra.mxu0 %v2847
      %2905 = vmatpush.bf16.msra.mxu0 %v2846
      %2906 = vmatpush.bf16.msra.mxu0 %v2845
      %2907 = vmatpush.bf16.msra.mxu0 %v2844
      %2908 = vmatmul.bf16.gmra.mxu0 %v2853
      %v2909 = vpop.f32.mrf.mxu0
      %v2910 = vadd.f32 0.0, %v2909
      %v2911 = vpop.f32.mrf.mxu0
      %v2912 = vadd.f32 0.0, %v2911
      %2913 = vmatmul.bf16.gmra.mxu0 %v2856
      %v2914 = vpop.f32.mrf.mxu0
      %v2915 = vadd.f32 0.0, %v2914
      %v2916 = vpop.f32.mrf.mxu0
      %v2917 = vadd.f32 0.0, %v2916
      %2918 = vmatmul.bf16.gmra.mxu0 %v2859
      %v2919 = vpop.f32.mrf.mxu0
      %v2920 = vadd.f32 0.0, %v2919
      %v2921 = vpop.f32.mrf.mxu0
      %v2922 = vadd.f32 0.0, %v2921
      %2923 = vmatmul.bf16.gmra.mxu0 %v2862
      %v2924 = vpop.f32.mrf.mxu0
      %v2925 = vadd.f32 0.0, %v2924
      %v2926 = vpop.f32.mrf.mxu0
      %v2927 = vadd.f32 0.0, %v2926
      %2928 = vmatmul.bf16.gmra.mxu0 %v2865
      %v2929 = vpop.f32.mrf.mxu0
      %v2930 = vadd.f32 0.0, %v2929
      %v2931 = vpop.f32.mrf.mxu0
      %v2932 = vadd.f32 0.0, %v2931
      %2933 = vmatmul.bf16.gmra.mxu0 %v2868
      %v2934 = vpop.f32.mrf.mxu0
      %v2935 = vadd.f32 0.0, %v2934
      %v2936 = vpop.f32.mrf.mxu0
      %v2937 = vadd.f32 0.0, %v2936
      %2938 = vmatmul.bf16.gmra.mxu0 %v2871
      %v2939 = vpop.f32.mrf.mxu0
      %v2940 = vadd.f32 0.0, %v2939
      %v2941 = vpop.f32.mrf.mxu0
      %v2942 = vadd.f32 0.0, %v2941
      %2943 = vmatmul.bf16.gmra.mxu0 %v2874
      %v2944 = vpop.f32.mrf.mxu0
      %v2945 = vadd.f32 0.0, %v2944
      %v2946 = vpop.f32.mrf.mxu0
      %v2947 = vadd.f32 0.0, %v2946
      %2948 = vmatmul.bf16.gmra.mxu0 %v2877
      %v2949 = vpop.f32.mrf.mxu0
      %v2950 = vadd.f32 0.0, %v2949
      %v2951 = vpop.f32.mrf.mxu0
      %v2952 = vadd.f32 0.0, %v2951
      %2953 = vmatmul.bf16.gmra.mxu0 %v2880
      %v2954 = vpop.f32.mrf.mxu0
      %v2955 = vadd.f32 0.0, %v2954
      %v2956 = vpop.f32.mrf.mxu0
      %v2957 = vadd.f32 0.0, %v2956
      %2958 = vmatmul.bf16.gmra.mxu0 %v2883
      %v2959 = vpop.f32.mrf.mxu0
      %v2960 = vadd.f32 0.0, %v2959
      %v2961 = vpop.f32.mrf.mxu0
      %v2962 = vadd.f32 0.0, %v2961
      %2963 = vmatmul.bf16.gmra.mxu0 %v2886
      %v2964 = vpop.f32.mrf.mxu0
      %v2965 = vadd.f32 0.0, %v2964
      %v2966 = vpop.f32.mrf.mxu0
      %v2967 = vadd.f32 0.0, %v2966
      %2968 = vmatmul.bf16.gmra.mxu0 %v2889
      %v2969 = vpop.f32.mrf.mxu0
      %v2970 = vadd.f32 0.0, %v2969
      %v2971 = vpop.f32.mrf.mxu0
      %v2972 = vadd.f32 0.0, %v2971
      %2973 = vmatmul.bf16.gmra.mxu0 %v2892
      %v2974 = vpop.f32.mrf.mxu0
      %v2975 = vadd.f32 0.0, %v2974
      %v2976 = vpop.f32.mrf.mxu0
      %v2977 = vadd.f32 0.0, %v2976
      %2978 = vmatmul.bf16.gmra.mxu0 %v2895
      %v2979 = vpop.f32.mrf.mxu0
      %v2980 = vadd.f32 0.0, %v2979
      %v2981 = vpop.f32.mrf.mxu0
      %v2982 = vadd.f32 0.0, %v2981
      %2983 = vmatmul.bf16.gmra.mxu0 %v2898
      %v2984 = vpop.f32.mrf.mxu0
      %v2985 = vadd.f32 0.0, %v2984
      %v2986 = vpop.f32.mrf.mxu0
      %v2987 = vadd.f32 0.0, %v2986
      %2988 = vdwg.mxu0
      %v2989 = vadd.f32 %v2467, %v2910
      %v2990 = vadd.f32 %v2469, %v2912
      %v2991 = vadd.f32 %v2472, %v2915
      %v2992 = vadd.f32 %v2474, %v2917
      %v2993 = vadd.f32 %v2477, %v2920
      %v2994 = vadd.f32 %v2479, %v2922
      %v2995 = vadd.f32 %v2482, %v2925
      %v2996 = vadd.f32 %v2484, %v2927
      %v2997 = vadd.f32 %v2487, %v2930
      %v2998 = vadd.f32 %v2489, %v2932
      %v2999 = vadd.f32 %v2492, %v2935
      %v3000 = vadd.f32 %v2494, %v2937
      %v3001 = vadd.f32 %v2497, %v2940
      %v3002 = vadd.f32 %v2499, %v2942
      %v3003 = vadd.f32 %v2502, %v2945
      %v3004 = vadd.f32 %v2504, %v2947
      %v3005 = vadd.f32 %v2507, %v2950
      %v3006 = vadd.f32 %v2509, %v2952
      %v3007 = vadd.f32 %v2512, %v2955
      %v3008 = vadd.f32 %v2514, %v2957
      %v3009 = vadd.f32 %v2517, %v2960
      %v3010 = vadd.f32 %v2519, %v2962
      %v3011 = vadd.f32 %v2522, %v2965
      %v3012 = vadd.f32 %v2524, %v2967
      %v3013 = vadd.f32 %v2527, %v2970
      %v3014 = vadd.f32 %v2529, %v2972
      %v3015 = vadd.f32 %v2532, %v2975
      %v3016 = vadd.f32 %v2534, %v2977
      %v3017 = vadd.f32 %v2537, %v2980
      %v3018 = vadd.f32 %v2539, %v2982
      %v3019 = vadd.f32 %v2542, %v2985
      %v3020 = vadd.f32 %v2544, %v2987
      %v3021 = vld [vmem:[#allocation2 + $0x17] sm:$0xff]
      %v3022 = vld [vmem:[#allocation2 + $0x1f] sm:$0xff]
      %v3023 = vld [vmem:[#allocation2 + $0x27] sm:$0xff]
      %v3024 = vld [vmem:[#allocation2 + $0x2f] sm:$0xff]
      %v3025 = vld [vmem:[#allocation2 + $0x37] sm:$0xff]
      %v3026 = vld [vmem:[#allocation2 + $0x3f] sm:$0xff]
      %v3027 = vld [vmem:[#allocation2 + $0x47] sm:$0xff]
      %v3028 = vld [vmem:[#allocation2 + $0x4f] sm:$0xff]
      %v3029 = vld [vmem:[#allocation2 + $0x57] sm:$0xff]
      %v3030 = vld [vmem:[#allocation2 + $0x5f] sm:$0xff]
      %v3031 = vld [vmem:[#allocation2 + $0x67] sm:$0xff]
      %v3032 = vld [vmem:[#allocation2 + $0x6f] sm:$0xff]
      %v3033 = vld [vmem:[#allocation2 + $0x77] sm:$0xff]
      %v3034 = vld [vmem:[#allocation2 + $0x7f] sm:$0xff]
      %v3035 = vld [vmem:[#allocation2 + $0x87] sm:$0xff]
      %v3036 = vld [vmem:[#allocation2 + $0x8f] sm:$0xff]
      %v3037 = vld [vmem:[#allocation2 + $0x97] sm:$0xff]
      %v3038 = vld [vmem:[#allocation2 + $0x9f] sm:$0xff]
      %v3039 = vld [vmem:[#allocation2 + $0xa7] sm:$0xff]
      %v3040 = vld [vmem:[#allocation2 + $0xaf] sm:$0xff]
      %v3041 = vld [vmem:[#allocation2 + $0xb7] sm:$0xff]
      %v3042 = vld [vmem:[#allocation2 + $0xbf] sm:$0xff]
      %v3043 = vld [vmem:[#allocation2 + $0xc7] sm:$0xff]
      %v3044 = vld [vmem:[#allocation2 + $0xcf] sm:$0xff]
      %v3045 = vld [vmem:[#allocation2 + $0xd7] sm:$0xff]
      %v3046 = vld [vmem:[#allocation2 + $0xdf] sm:$0xff]
      %v3047 = vld [vmem:[#allocation2 + $0xe7] sm:$0xff]
      %v3048 = vld [vmem:[#allocation2 + $0xef] sm:$0xff]
      %v3049 = vld [vmem:[#allocation2 + $0xf7] sm:$0xff]
      %v3050 = vld [vmem:[#allocation2 + $0xff] sm:$0xff]
      %v3051 = vld [vmem:[#allocation2 + $0x107] sm:$0xff]
      %v3052 = vld [vmem:[#allocation2 + $0x10f] sm:$0xff]
      %v3053 = vmul.f32 %v3021, %v1729
      %v3054 = vmul.f32 %v3022, %v1734
      %v3055 = vmul.f32 %v3023, %v1739
      %v3056 = vmul.f32 %v3024, %v1744
      %v3057 = vmul.f32 %v3025, %v1749
      %v3058 = vmul.f32 %v3026, %v1754
      %v3059 = vmul.f32 %v3027, %v1759
      %v3060 = vmul.f32 %v3028, %v1764
      %v3061 = vmul.f32 %v3029, %v1769
      %v3062 = vmul.f32 %v3030, %v1774
      %v3063 = vmul.f32 %v3031, %v1779
      %v3064 = vmul.f32 %v3032, %v1784
      %v3065 = vmul.f32 %v3033, %v1789
      %v3066 = vmul.f32 %v3034, %v1794
      %v3067 = vmul.f32 %v3035, %v1799
      %v3068 = vmul.f32 %v3036, %v1804
      %v3069 = vmul.f32 %v3037, %v1809
      %v3070 = vmul.f32 %v3038, %v1814
      %v3071 = vmul.f32 %v3039, %v1819
      %v3072 = vmul.f32 %v3040, %v1824
      %v3073 = vmul.f32 %v3041, %v1829
      %v3074 = vmul.f32 %v3042, %v1834
      %v3075 = vmul.f32 %v3043, %v1839
      %v3076 = vmul.f32 %v3044, %v1844
      %v3077 = vmul.f32 %v3045, %v1849
      %v3078 = vmul.f32 %v3046, %v1854
      %v3079 = vmul.f32 %v3047, %v1859
      %v3080 = vmul.f32 %v3048, %v1864
      %v3081 = vmul.f32 %v3049, %v1869
      %v3082 = vmul.f32 %v3050, %v1874
      %v3083 = vmul.f32 %v3051, %v1879
      %v3084 = vmul.f32 %v3052, %v1884
      %v3085 = vpack.c.bf16 %v3054, %v3053
      %v3086 = vpack.c.bf16 %v3056, %v3055
      %v3087 = vpack.c.bf16 %v3058, %v3057
      %v3088 = vpack.c.bf16 %v3060, %v3059
      %v3089 = vpack.c.bf16 %v3062, %v3061
      %v3090 = vpack.c.bf16 %v3064, %v3063
      %v3091 = vpack.c.bf16 %v3066, %v3065
      %v3092 = vpack.c.bf16 %v3068, %v3067
      %v3093 = vpack.c.bf16 %v3070, %v3069
      %v3094 = vpack.c.bf16 %v3072, %v3071
      %v3095 = vpack.c.bf16 %v3074, %v3073
      %v3096 = vpack.c.bf16 %v3076, %v3075
      %v3097 = vpack.c.bf16 %v3078, %v3077
      %v3098 = vpack.c.bf16 %v3080, %v3079
      %v3099 = vpack.c.bf16 %v3082, %v3081
      %v3100 = vpack.c.bf16 %v3084, %v3083
      %s3101 = scalar_lea.vmem %s7, 96
      %v3102 = vld [vmem:[%s3101] sm:$0xf]
      %v3103 = vld [vmem:[%s3101 + $0x4] sm:$0xf]
      %v3104 = vld [vmem:[%s3101 + $0x8] sm:$0xf]
      %v3105 = vld [vmem:[%s3101 + $0xc] sm:$0xf]
      %v3106 = vld [vmem:[%s3101 + $0x10] sm:$0xf]
      %v3107 = vld [vmem:[%s3101 + $0x14] sm:$0xf]
      %v3108 = vld [vmem:[%s3101 + $0x18] sm:$0xf]
      %v3109 = vld [vmem:[%s3101 + $0x1c] sm:$0xf]
      %v3118 = vunpack.c.l.b16 %v3102
      %v3119 = vunpack.c.l.b16 %v3103
      %v3120 = vunpack.c.l.b16 %v3104
      %v3121 = vunpack.c.l.b16 %v3105
      %v3122 = vunpack.c.l.b16 %v3106
      %v3123 = vunpack.c.l.b16 %v3107
      %v3124 = vunpack.c.l.b16 %v3108
      %v3125 = vunpack.c.l.b16 %v3109
      %v3126 = vpack.c.b16 %v3119, %v3118
      %v3127 = vpack.c.b16 %v3121, %v3120
      %v3128 = vpack.c.b16 %v3123, %v3122
      %v3129 = vpack.c.b16 %v3125, %v3124
      %v3135 = vsel %vm422, %v3085, 0
      %v3138 = vsel %vm422, %v3086, 0
      %v3141 = vsel %vm422, %v3087, 0
      %v3144 = vsel %vm422, %v3088, 0
      %v3147 = vsel %vm422, %v3089, 0
      %v3150 = vsel %vm422, %v3090, 0
      %v3153 = vsel %vm422, %v3091, 0
      %v3156 = vsel %vm422, %v3092, 0
      %v3159 = vsel %vm422, %v3093, 0
      %v3162 = vsel %vm422, %v3094, 0
      %v3165 = vsel %vm422, %v3095, 0
      %v3168 = vsel %vm422, %v3096, 0
      %v3171 = vsel %vm422, %v3097, 0
      %v3174 = vsel %vm422, %v3098, 0
      %v3177 = vsel %vm422, %v3099, 0
      %v3180 = vsel %vm422, %v3100, 0
      %3182 = vmatpush.bf16.msra.mxu0 0
      %3183 = vmatpush.bf16.msra.mxu0 0
      %3184 = vmatpush.bf16.msra.mxu0 0
      %3185 = vmatpush.bf16.msra.mxu0 0
      %3186 = vmatpush.bf16.msra.mxu0 %v3129
      %3187 = vmatpush.bf16.msra.mxu0 %v3128
      %3188 = vmatpush.bf16.msra.mxu0 %v3127
      %3189 = vmatpush.bf16.msra.mxu0 %v3126
      %3190 = vmatmul.bf16.gmra.mxu0 %v3135
      %v3191 = vpop.f32.mrf.mxu0
      %v3192 = vadd.f32 0.0, %v3191
      %v3193 = vpop.f32.mrf.mxu0
      %v3194 = vadd.f32 0.0, %v3193
      %3195 = vmatmul.bf16.gmra.mxu0 %v3138
      %v3196 = vpop.f32.mrf.mxu0
      %v3197 = vadd.f32 0.0, %v3196
      %v3198 = vpop.f32.mrf.mxu0
      %v3199 = vadd.f32 0.0, %v3198
      %3200 = vmatmul.bf16.gmra.mxu0 %v3141
      %v3201 = vpop.f32.mrf.mxu0
      %v3202 = vadd.f32 0.0, %v3201
      %v3203 = vpop.f32.mrf.mxu0
      %v3204 = vadd.f32 0.0, %v3203
      %3205 = vmatmul.bf16.gmra.mxu0 %v3144
      %v3206 = vpop.f32.mrf.mxu0
      %v3207 = vadd.f32 0.0, %v3206
      %v3208 = vpop.f32.mrf.mxu0
      %v3209 = vadd.f32 0.0, %v3208
      %3210 = vmatmul.bf16.gmra.mxu0 %v3147
      %v3211 = vpop.f32.mrf.mxu0
      %v3212 = vadd.f32 0.0, %v3211
      %v3213 = vpop.f32.mrf.mxu0
      %v3214 = vadd.f32 0.0, %v3213
      %3215 = vmatmul.bf16.gmra.mxu0 %v3150
      %v3216 = vpop.f32.mrf.mxu0
      %v3217 = vadd.f32 0.0, %v3216
      %v3218 = vpop.f32.mrf.mxu0
      %v3219 = vadd.f32 0.0, %v3218
      %3220 = vmatmul.bf16.gmra.mxu0 %v3153
      %v3221 = vpop.f32.mrf.mxu0
      %v3222 = vadd.f32 0.0, %v3221
      %v3223 = vpop.f32.mrf.mxu0
      %v3224 = vadd.f32 0.0, %v3223
      %3225 = vmatmul.bf16.gmra.mxu0 %v3156
      %v3226 = vpop.f32.mrf.mxu0
      %v3227 = vadd.f32 0.0, %v3226
      %v3228 = vpop.f32.mrf.mxu0
      %v3229 = vadd.f32 0.0, %v3228
      %3230 = vmatmul.bf16.gmra.mxu0 %v3159
      %v3231 = vpop.f32.mrf.mxu0
      %v3232 = vadd.f32 0.0, %v3231
      %v3233 = vpop.f32.mrf.mxu0
      %v3234 = vadd.f32 0.0, %v3233
      %3235 = vmatmul.bf16.gmra.mxu0 %v3162
      %v3236 = vpop.f32.mrf.mxu0
      %v3237 = vadd.f32 0.0, %v3236
      %v3238 = vpop.f32.mrf.mxu0
      %v3239 = vadd.f32 0.0, %v3238
      %3240 = vmatmul.bf16.gmra.mxu0 %v3165
      %v3241 = vpop.f32.mrf.mxu0
      %v3242 = vadd.f32 0.0, %v3241
      %v3243 = vpop.f32.mrf.mxu0
      %v3244 = vadd.f32 0.0, %v3243
      %3245 = vmatmul.bf16.gmra.mxu0 %v3168
      %v3246 = vpop.f32.mrf.mxu0
      %v3247 = vadd.f32 0.0, %v3246
      %v3248 = vpop.f32.mrf.mxu0
      %v3249 = vadd.f32 0.0, %v3248
      %3250 = vmatmul.bf16.gmra.mxu0 %v3171
      %v3251 = vpop.f32.mrf.mxu0
      %v3252 = vadd.f32 0.0, %v3251
      %v3253 = vpop.f32.mrf.mxu0
      %v3254 = vadd.f32 0.0, %v3253
      %3255 = vmatmul.bf16.gmra.mxu0 %v3174
      %v3256 = vpop.f32.mrf.mxu0
      %v3257 = vadd.f32 0.0, %v3256
      %v3258 = vpop.f32.mrf.mxu0
      %v3259 = vadd.f32 0.0, %v3258
      %3260 = vmatmul.bf16.gmra.mxu0 %v3177
      %v3261 = vpop.f32.mrf.mxu0
      %v3262 = vadd.f32 0.0, %v3261
      %v3263 = vpop.f32.mrf.mxu0
      %v3264 = vadd.f32 0.0, %v3263
      %3265 = vmatmul.bf16.gmra.mxu0 %v3180
      %v3266 = vpop.f32.mrf.mxu0
      %v3267 = vadd.f32 0.0, %v3266
      %v3268 = vpop.f32.mrf.mxu0
      %v3269 = vadd.f32 0.0, %v3268
      %3270 = vdwg.mxu0
      %v3271 = vadd.f32 %v2989, %v3192
      %v3272 = vadd.f32 %v2990, %v3194
      %v3273 = vadd.f32 %v2991, %v3197
      %v3274 = vadd.f32 %v2992, %v3199
      %v3275 = vadd.f32 %v2993, %v3202
      %v3276 = vadd.f32 %v2994, %v3204
      %v3277 = vadd.f32 %v2995, %v3207
      %v3278 = vadd.f32 %v2996, %v3209
      %v3279 = vadd.f32 %v2997, %v3212
      %v3280 = vadd.f32 %v2998, %v3214
      %v3281 = vadd.f32 %v2999, %v3217
      %v3282 = vadd.f32 %v3000, %v3219
      %v3283 = vadd.f32 %v3001, %v3222
      %v3284 = vadd.f32 %v3002, %v3224
      %v3285 = vadd.f32 %v3003, %v3227
      %v3286 = vadd.f32 %v3004, %v3229
      %v3287 = vadd.f32 %v3005, %v3232
      %v3288 = vadd.f32 %v3006, %v3234
      %v3289 = vadd.f32 %v3007, %v3237
      %v3290 = vadd.f32 %v3008, %v3239
      %v3291 = vadd.f32 %v3009, %v3242
      %v3292 = vadd.f32 %v3010, %v3244
      %v3293 = vadd.f32 %v3011, %v3247
      %v3294 = vadd.f32 %v3012, %v3249
      %v3295 = vadd.f32 %v3013, %v3252
      %v3296 = vadd.f32 %v3014, %v3254
      %v3297 = vadd.f32 %v3015, %v3257
      %v3298 = vadd.f32 %v3016, %v3259
      %v3299 = vadd.f32 %v3017, %v3262
      %v3300 = vadd.f32 %v3018, %v3264
      %v3301 = vadd.f32 %v3019, %v3267
      %v3302 = vadd.f32 %v3020, %v3269
      %v3303 = vld [vmem:[#allocation2 + $0x18] sm:$0xff]
      %v3304 = vld [vmem:[#allocation2 + $0x20] sm:$0xff]
      %v3305 = vld [vmem:[#allocation2 + $0x28] sm:$0xff]
      %v3306 = vld [vmem:[#allocation2 + $0x30] sm:$0xff]
      %v3307 = vld [vmem:[#allocation2 + $0x38] sm:$0xff]
      %v3308 = vld [vmem:[#allocation2 + $0x40] sm:$0xff]
      %v3309 = vld [vmem:[#allocation2 + $0x48] sm:$0xff]
      %v3310 = vld [vmem:[#allocation2 + $0x50] sm:$0xff]
      %v3311 = vld [vmem:[#allocation2 + $0x58] sm:$0xff]
      %v3312 = vld [vmem:[#allocation2 + $0x60] sm:$0xff]
      %v3313 = vld [vmem:[#allocation2 + $0x68] sm:$0xff]
      %v3314 = vld [vmem:[#allocation2 + $0x70] sm:$0xff]
      %v3315 = vld [vmem:[#allocation2 + $0x78] sm:$0xff]
      %v3316 = vld [vmem:[#allocation2 + $0x80] sm:$0xff]
      %v3317 = vld [vmem:[#allocation2 + $0x88] sm:$0xff]
      %v3318 = vld [vmem:[#allocation2 + $0x90] sm:$0xff]
      %v3319 = vld [vmem:[#allocation2 + $0x98] sm:$0xff]
      %v3320 = vld [vmem:[#allocation2 + $0xa0] sm:$0xff]
      %v3321 = vld [vmem:[#allocation2 + $0xa8] sm:$0xff]
      %v3322 = vld [vmem:[#allocation2 + $0xb0] sm:$0xff]
      %v3323 = vld [vmem:[#allocation2 + $0xb8] sm:$0xff]
      %v3324 = vld [vmem:[#allocation2 + $0xc0] sm:$0xff]
      %v3325 = vld [vmem:[#allocation2 + $0xc8] sm:$0xff]
      %v3326 = vld [vmem:[#allocation2 + $0xd0] sm:$0xff]
      %v3327 = vld [vmem:[#allocation2 + $0xd8] sm:$0xff]
      %v3328 = vld [vmem:[#allocation2 + $0xe0] sm:$0xff]
      %v3329 = vld [vmem:[#allocation2 + $0xe8] sm:$0xff]
      %v3330 = vld [vmem:[#allocation2 + $0xf0] sm:$0xff]
      %v3331 = vld [vmem:[#allocation2 + $0xf8] sm:$0xff]
      %v3332 = vld [vmem:[#allocation2 + $0x100] sm:$0xff]
      %v3333 = vld [vmem:[#allocation2 + $0x108] sm:$0xff]
      %v3334 = vld [vmem:[#allocation2 + $0x110] sm:$0xff]
      %v3335 = vmul.f32 %v3303, %v2010
      %v3336 = vmul.f32 %v3304, %v2015
      %v3337 = vmul.f32 %v3305, %v2020
      %v3338 = vmul.f32 %v3306, %v2025
      %v3339 = vmul.f32 %v3307, %v2030
      %v3340 = vmul.f32 %v3308, %v2035
      %v3341 = vmul.f32 %v3309, %v2040
      %v3342 = vmul.f32 %v3310, %v2045
      %v3343 = vmul.f32 %v3311, %v2050
      %v3344 = vmul.f32 %v3312, %v2055
      %v3345 = vmul.f32 %v3313, %v2060
      %v3346 = vmul.f32 %v3314, %v2065
      %v3347 = vmul.f32 %v3315, %v2070
      %v3348 = vmul.f32 %v3316, %v2075
      %v3349 = vmul.f32 %v3317, %v2080
      %v3350 = vmul.f32 %v3318, %v2085
      %v3351 = vmul.f32 %v3319, %v2090
      %v3352 = vmul.f32 %v3320, %v2095
      %v3353 = vmul.f32 %v3321, %v2100
      %v3354 = vmul.f32 %v3322, %v2105
      %v3355 = vmul.f32 %v3323, %v2110
      %v3356 = vmul.f32 %v3324, %v2115
      %v3357 = vmul.f32 %v3325, %v2120
      %v3358 = vmul.f32 %v3326, %v2125
      %v3359 = vmul.f32 %v3327, %v2130
      %v3360 = vmul.f32 %v3328, %v2135
      %v3361 = vmul.f32 %v3329, %v2140
      %v3362 = vmul.f32 %v3330, %v2145
      %v3363 = vmul.f32 %v3331, %v2150
      %v3364 = vmul.f32 %v3332, %v2155
      %v3365 = vmul.f32 %v3333, %v2160
      %v3366 = vmul.f32 %v3334, %v2165
      %v3367 = vpack.c.bf16 %v3336, %v3335
      %v3368 = vpack.c.bf16 %v3338, %v3337
      %v3369 = vpack.c.bf16 %v3340, %v3339
      %v3370 = vpack.c.bf16 %v3342, %v3341
      %v3371 = vpack.c.bf16 %v3344, %v3343
      %v3372 = vpack.c.bf16 %v3346, %v3345
      %v3373 = vpack.c.bf16 %v3348, %v3347
      %v3374 = vpack.c.bf16 %v3350, %v3349
      %v3375 = vpack.c.bf16 %v3352, %v3351
      %v3376 = vpack.c.bf16 %v3354, %v3353
      %v3377 = vpack.c.bf16 %v3356, %v3355
      %v3378 = vpack.c.bf16 %v3358, %v3357
      %v3379 = vpack.c.bf16 %v3360, %v3359
      %v3380 = vpack.c.bf16 %v3362, %v3361
      %v3381 = vpack.c.bf16 %v3364, %v3363
      %v3382 = vpack.c.bf16 %v3366, %v3365
      %s3383 = scalar_lea.vmem %s7, 128
      %v3384 = vld [vmem:[%s3383] sm:$0xf]
      %v3385 = vld [vmem:[%s3383 + $0x4] sm:$0xf]
      %v3386 = vld [vmem:[%s3383 + $0x8] sm:$0xf]
      %v3387 = vld [vmem:[%s3383 + $0xc] sm:$0xf]
      %v3388 = vld [vmem:[%s3383 + $0x10] sm:$0xf]
      %v3389 = vld [vmem:[%s3383 + $0x14] sm:$0xf]
      %v3390 = vld [vmem:[%s3383 + $0x18] sm:$0xf]
      %v3391 = vld [vmem:[%s3383 + $0x1c] sm:$0xf]
      %v3400 = vunpack.c.l.b16 %v3384
      %v3401 = vunpack.c.l.b16 %v3385
      %v3402 = vunpack.c.l.b16 %v3386
      %v3403 = vunpack.c.l.b16 %v3387
      %v3404 = vunpack.c.l.b16 %v3388
      %v3405 = vunpack.c.l.b16 %v3389
      %v3406 = vunpack.c.l.b16 %v3390
      %v3407 = vunpack.c.l.b16 %v3391
      %v3408 = vpack.c.b16 %v3401, %v3400
      %v3409 = vpack.c.b16 %v3403, %v3402
      %v3410 = vpack.c.b16 %v3405, %v3404
      %v3411 = vpack.c.b16 %v3407, %v3406
      %v3417 = vsel %vm422, %v3367, 0
      %v3420 = vsel %vm422, %v3368, 0
      %v3423 = vsel %vm422, %v3369, 0
      %v3426 = vsel %vm422, %v3370, 0
      %v3429 = vsel %vm422, %v3371, 0
      %v3432 = vsel %vm422, %v3372, 0
      %v3435 = vsel %vm422, %v3373, 0
      %v3438 = vsel %vm422, %v3374, 0
      %v3441 = vsel %vm422, %v3375, 0
      %v3444 = vsel %vm422, %v3376, 0
      %v3447 = vsel %vm422, %v3377, 0
      %v3450 = vsel %vm422, %v3378, 0
      %v3453 = vsel %vm422, %v3379, 0
      %v3456 = vsel %vm422, %v3380, 0
      %v3459 = vsel %vm422, %v3381, 0
      %v3462 = vsel %vm422, %v3382, 0
      %3464 = vmatpush.bf16.msra.mxu0 0
      %3465 = vmatpush.bf16.msra.mxu0 0
      %3466 = vmatpush.bf16.msra.mxu0 0
      %3467 = vmatpush.bf16.msra.mxu0 0
      %3468 = vmatpush.bf16.msra.mxu0 %v3411
      %3469 = vmatpush.bf16.msra.mxu0 %v3410
      %3470 = vmatpush.bf16.msra.mxu0 %v3409
      %3471 = vmatpush.bf16.msra.mxu0 %v3408
      %3472 = vmatmul.bf16.gmra.mxu0 %v3417
      %v3473 = vpop.f32.mrf.mxu0
      %v3474 = vadd.f32 0.0, %v3473
      %v3475 = vpop.f32.mrf.mxu0
      %v3476 = vadd.f32 0.0, %v3475
      %3477 = vmatmul.bf16.gmra.mxu0 %v3420
      %v3478 = vpop.f32.mrf.mxu0
      %v3479 = vadd.f32 0.0, %v3478
      %v3480 = vpop.f32.mrf.mxu0
      %v3481 = vadd.f32 0.0, %v3480
      %3482 = vmatmul.bf16.gmra.mxu0 %v3423
      %v3483 = vpop.f32.mrf.mxu0
      %v3484 = vadd.f32 0.0, %v3483
      %v3485 = vpop.f32.mrf.mxu0
      %v3486 = vadd.f32 0.0, %v3485
      %3487 = vmatmul.bf16.gmra.mxu0 %v3426
      %v3488 = vpop.f32.mrf.mxu0
      %v3489 = vadd.f32 0.0, %v3488
      %v3490 = vpop.f32.mrf.mxu0
      %v3491 = vadd.f32 0.0, %v3490
      %3492 = vmatmul.bf16.gmra.mxu0 %v3429
      %v3493 = vpop.f32.mrf.mxu0
      %v3494 = vadd.f32 0.0, %v3493
      %v3495 = vpop.f32.mrf.mxu0
      %v3496 = vadd.f32 0.0, %v3495
      %3497 = vmatmul.bf16.gmra.mxu0 %v3432
      %v3498 = vpop.f32.mrf.mxu0
      %v3499 = vadd.f32 0.0, %v3498
      %v3500 = vpop.f32.mrf.mxu0
      %v3501 = vadd.f32 0.0, %v3500
      %3502 = vmatmul.bf16.gmra.mxu0 %v3435
      %v3503 = vpop.f32.mrf.mxu0
      %v3504 = vadd.f32 0.0, %v3503
      %v3505 = vpop.f32.mrf.mxu0
      %v3506 = vadd.f32 0.0, %v3505
      %3507 = vmatmul.bf16.gmra.mxu0 %v3438
      %v3508 = vpop.f32.mrf.mxu0
      %v3509 = vadd.f32 0.0, %v3508
      %v3510 = vpop.f32.mrf.mxu0
      %v3511 = vadd.f32 0.0, %v3510
      %3512 = vmatmul.bf16.gmra.mxu0 %v3441
      %v3513 = vpop.f32.mrf.mxu0
      %v3514 = vadd.f32 0.0, %v3513
      %v3515 = vpop.f32.mrf.mxu0
      %v3516 = vadd.f32 0.0, %v3515
      %3517 = vmatmul.bf16.gmra.mxu0 %v3444
      %v3518 = vpop.f32.mrf.mxu0
      %v3519 = vadd.f32 0.0, %v3518
      %v3520 = vpop.f32.mrf.mxu0
      %v3521 = vadd.f32 0.0, %v3520
      %3522 = vmatmul.bf16.gmra.mxu0 %v3447
      %v3523 = vpop.f32.mrf.mxu0
      %v3524 = vadd.f32 0.0, %v3523
      %v3525 = vpop.f32.mrf.mxu0
      %v3526 = vadd.f32 0.0, %v3525
      %3527 = vmatmul.bf16.gmra.mxu0 %v3450
      %v3528 = vpop.f32.mrf.mxu0
      %v3529 = vadd.f32 0.0, %v3528
      %v3530 = vpop.f32.mrf.mxu0
      %v3531 = vadd.f32 0.0, %v3530
      %3532 = vmatmul.bf16.gmra.mxu0 %v3453
      %v3533 = vpop.f32.mrf.mxu0
      %v3534 = vadd.f32 0.0, %v3533
      %v3535 = vpop.f32.mrf.mxu0
      %v3536 = vadd.f32 0.0, %v3535
      %3537 = vmatmul.bf16.gmra.mxu0 %v3456
      %v3538 = vpop.f32.mrf.mxu0
      %v3539 = vadd.f32 0.0, %v3538
      %v3540 = vpop.f32.mrf.mxu0
      %v3541 = vadd.f32 0.0, %v3540
      %3542 = vmatmul.bf16.gmra.mxu0 %v3459
      %v3543 = vpop.f32.mrf.mxu0
      %v3544 = vadd.f32 0.0, %v3543
      %v3545 = vpop.f32.mrf.mxu0
      %v3546 = vadd.f32 0.0, %v3545
      %3547 = vmatmul.bf16.gmra.mxu0 %v3462
      %v3548 = vpop.f32.mrf.mxu0
      %v3549 = vadd.f32 0.0, %v3548
      %v3550 = vpop.f32.mrf.mxu0
      %v3551 = vadd.f32 0.0, %v3550
      %3552 = vdwg.mxu0
      %v3553 = vadd.f32 %v3271, %v3474
      %v3554 = vadd.f32 %v3272, %v3476
      %v3555 = vadd.f32 %v3273, %v3479
      %v3556 = vadd.f32 %v3274, %v3481
      %v3557 = vadd.f32 %v3275, %v3484
      %v3558 = vadd.f32 %v3276, %v3486
      %v3559 = vadd.f32 %v3277, %v3489
      %v3560 = vadd.f32 %v3278, %v3491
      %v3561 = vadd.f32 %v3279, %v3494
      %v3562 = vadd.f32 %v3280, %v3496
      %v3563 = vadd.f32 %v3281, %v3499
      %v3564 = vadd.f32 %v3282, %v3501
      %v3565 = vadd.f32 %v3283, %v3504
      %v3566 = vadd.f32 %v3284, %v3506
      %v3567 = vadd.f32 %v3285, %v3509
      %v3568 = vadd.f32 %v3286, %v3511
      %v3569 = vadd.f32 %v3287, %v3514
      %v3570 = vadd.f32 %v3288, %v3516
      %v3571 = vadd.f32 %v3289, %v3519
      %v3572 = vadd.f32 %v3290, %v3521
      %v3573 = vadd.f32 %v3291, %v3524
      %v3574 = vadd.f32 %v3292, %v3526
      %v3575 = vadd.f32 %v3293, %v3529
      %v3576 = vadd.f32 %v3294, %v3531
      %v3577 = vadd.f32 %v3295, %v3534
      %v3578 = vadd.f32 %v3296, %v3536
      %v3579 = vadd.f32 %v3297, %v3539
      %v3580 = vadd.f32 %v3298, %v3541
      %v3581 = vadd.f32 %v3299, %v3544
      %v3582 = vadd.f32 %v3300, %v3546
      %v3583 = vadd.f32 %v3301, %v3549
      %v3584 = vadd.f32 %v3302, %v3551
      %v3585 = vld [vmem:[#allocation2 + $0x19] sm:$0xff]
      %v3586 = vld [vmem:[#allocation2 + $0x21] sm:$0xff]
      %v3587 = vld [vmem:[#allocation2 + $0x29] sm:$0xff]
      %v3588 = vld [vmem:[#allocation2 + $0x31] sm:$0xff]
      %v3589 = vld [vmem:[#allocation2 + $0x39] sm:$0xff]
      %v3590 = vld [vmem:[#allocation2 + $0x41] sm:$0xff]
      %v3591 = vld [vmem:[#allocation2 + $0x49] sm:$0xff]
      %v3592 = vld [vmem:[#allocation2 + $0x51] sm:$0xff]
      %v3593 = vld [vmem:[#allocation2 + $0x59] sm:$0xff]
      %v3594 = vld [vmem:[#allocation2 + $0x61] sm:$0xff]
      %v3595 = vld [vmem:[#allocation2 + $0x69] sm:$0xff]
      %v3596 = vld [vmem:[#allocation2 + $0x71] sm:$0xff]
      %v3597 = vld [vmem:[#allocation2 + $0x79] sm:$0xff]
      %v3598 = vld [vmem:[#allocation2 + $0x81] sm:$0xff]
      %v3599 = vld [vmem:[#allocation2 + $0x89] sm:$0xff]
      %v3600 = vld [vmem:[#allocation2 + $0x91] sm:$0xff]
      %v3601 = vld [vmem:[#allocation2 + $0x99] sm:$0xff]
      %v3602 = vld [vmem:[#allocation2 + $0xa1] sm:$0xff]
      %v3603 = vld [vmem:[#allocation2 + $0xa9] sm:$0xff]
      %v3604 = vld [vmem:[#allocation2 + $0xb1] sm:$0xff]
      %v3605 = vld [vmem:[#allocation2 + $0xb9] sm:$0xff]
      %v3606 = vld [vmem:[#allocation2 + $0xc1] sm:$0xff]
      %v3607 = vld [vmem:[#allocation2 + $0xc9] sm:$0xff]
      %v3608 = vld [vmem:[#allocation2 + $0xd1] sm:$0xff]
      %v3609 = vld [vmem:[#allocation2 + $0xd9] sm:$0xff]
      %v3610 = vld [vmem:[#allocation2 + $0xe1] sm:$0xff]
      %v3611 = vld [vmem:[#allocation2 + $0xe9] sm:$0xff]
      %v3612 = vld [vmem:[#allocation2 + $0xf1] sm:$0xff]
      %v3613 = vld [vmem:[#allocation2 + $0xf9] sm:$0xff]
      %v3614 = vld [vmem:[#allocation2 + $0x101] sm:$0xff]
      %v3615 = vld [vmem:[#allocation2 + $0x109] sm:$0xff]
      %v3616 = vld [vmem:[#allocation2 + $0x111] sm:$0xff]
      %v3617 = vmul.f32 %v3585, %v2614
      %v3618 = vmul.f32 %v3586, %v2619
      %v3619 = vmul.f32 %v3587, %v2624
      %v3620 = vmul.f32 %v3588, %v2629
      %v3621 = vmul.f32 %v3589, %v2634
      %v3622 = vmul.f32 %v3590, %v2639
      %v3623 = vmul.f32 %v3591, %v2644
      %v3624 = vmul.f32 %v3592, %v2649
      %v3625 = vmul.f32 %v3593, %v2654
      %v3626 = vmul.f32 %v3594, %v2659
      %v3627 = vmul.f32 %v3595, %v2664
      %v3628 = vmul.f32 %v3596, %v2669
      %v3629 = vmul.f32 %v3597, %v2674
      %v3630 = vmul.f32 %v3598, %v2679
      %v3631 = vmul.f32 %v3599, %v2684
      %v3632 = vmul.f32 %v3600, %v2689
      %v3633 = vmul.f32 %v3601, %v2694
      %v3634 = vmul.f32 %v3602, %v2699
      %v3635 = vmul.f32 %v3603, %v2704
      %v3636 = vmul.f32 %v3604, %v2709
      %v3637 = vmul.f32 %v3605, %v2714
      %v3638 = vmul.f32 %v3606, %v2719
      %v3639 = vmul.f32 %v3607, %v2724
      %v3640 = vmul.f32 %v3608, %v2729
      %v3641 = vmul.f32 %v3609, %v2734
      %v3642 = vmul.f32 %v3610, %v2739
      %v3643 = vmul.f32 %v3611, %v2744
      %v3644 = vmul.f32 %v3612, %v2749
      %v3645 = vmul.f32 %v3613, %v2754
      %v3646 = vmul.f32 %v3614, %v2759
      %v3647 = vmul.f32 %v3615, %v2764
      %v3648 = vmul.f32 %v3616, %v2769
      %v3649 = vpack.c.bf16 %v3618, %v3617
      %v3650 = vpack.c.bf16 %v3620, %v3619
      %v3651 = vpack.c.bf16 %v3622, %v3621
      %v3652 = vpack.c.bf16 %v3624, %v3623
      %v3653 = vpack.c.bf16 %v3626, %v3625
      %v3654 = vpack.c.bf16 %v3628, %v3627
      %v3655 = vpack.c.bf16 %v3630, %v3629
      %v3656 = vpack.c.bf16 %v3632, %v3631
      %v3657 = vpack.c.bf16 %v3634, %v3633
      %v3658 = vpack.c.bf16 %v3636, %v3635
      %v3659 = vpack.c.bf16 %v3638, %v3637
      %v3660 = vpack.c.bf16 %v3640, %v3639
      %v3661 = vpack.c.bf16 %v3642, %v3641
      %v3662 = vpack.c.bf16 %v3644, %v3643
      %v3663 = vpack.c.bf16 %v3646, %v3645
      %v3664 = vpack.c.bf16 %v3648, %v3647
      %s3665 = scalar_lea.vmem %s7, 160
      %v3666 = vld [vmem:[%s3665] sm:$0xf]
      %v3667 = vld [vmem:[%s3665 + $0x4] sm:$0xf]
      %v3668 = vld [vmem:[%s3665 + $0x8] sm:$0xf]
      %v3669 = vld [vmem:[%s3665 + $0xc] sm:$0xf]
      %v3670 = vld [vmem:[%s3665 + $0x10] sm:$0xf]
      %v3671 = vld [vmem:[%s3665 + $0x14] sm:$0xf]
      %v3672 = vld [vmem:[%s3665 + $0x18] sm:$0xf]
      %v3673 = vld [vmem:[%s3665 + $0x1c] sm:$0xf]
      %v3682 = vunpack.c.l.b16 %v3666
      %v3683 = vunpack.c.l.b16 %v3667
      %v3684 = vunpack.c.l.b16 %v3668
      %v3685 = vunpack.c.l.b16 %v3669
      %v3686 = vunpack.c.l.b16 %v3670
      %v3687 = vunpack.c.l.b16 %v3671
      %v3688 = vunpack.c.l.b16 %v3672
      %v3689 = vunpack.c.l.b16 %v3673
      %v3690 = vpack.c.b16 %v3683, %v3682
      %v3691 = vpack.c.b16 %v3685, %v3684
      %v3692 = vpack.c.b16 %v3687, %v3686
      %v3693 = vpack.c.b16 %v3689, %v3688
      %v3699 = vsel %vm422, %v3649, 0
      %v3702 = vsel %vm422, %v3650, 0
      %v3705 = vsel %vm422, %v3651, 0
      %v3708 = vsel %vm422, %v3652, 0
      %v3711 = vsel %vm422, %v3653, 0
      %v3714 = vsel %vm422, %v3654, 0
      %v3717 = vsel %vm422, %v3655, 0
      %v3720 = vsel %vm422, %v3656, 0
      %v3723 = vsel %vm422, %v3657, 0
      %v3726 = vsel %vm422, %v3658, 0
      %v3729 = vsel %vm422, %v3659, 0
      %v3732 = vsel %vm422, %v3660, 0
      %v3735 = vsel %vm422, %v3661, 0
      %v3738 = vsel %vm422, %v3662, 0
      %v3741 = vsel %vm422, %v3663, 0
      %v3744 = vsel %vm422, %v3664, 0
      %3746 = vmatpush.bf16.msra.mxu0 0
      %3747 = vmatpush.bf16.msra.mxu0 0
      %3748 = vmatpush.bf16.msra.mxu0 0
      %3749 = vmatpush.bf16.msra.mxu0 0
      %3750 = vmatpush.bf16.msra.mxu0 %v3693
      %3751 = vmatpush.bf16.msra.mxu0 %v3692
      %3752 = vmatpush.bf16.msra.mxu0 %v3691
      %3753 = vmatpush.bf16.msra.mxu0 %v3690
      %3754 = vmatmul.bf16.gmra.mxu0 %v3699
      %v3755 = vpop.f32.mrf.mxu0
      %v3756 = vadd.f32 0.0, %v3755
      %v3757 = vpop.f32.mrf.mxu0
      %v3758 = vadd.f32 0.0, %v3757
      %3759 = vmatmul.bf16.gmra.mxu0 %v3702
      %v3760 = vpop.f32.mrf.mxu0
      %v3761 = vadd.f32 0.0, %v3760
      %v3762 = vpop.f32.mrf.mxu0
      %v3763 = vadd.f32 0.0, %v3762
      %3764 = vmatmul.bf16.gmra.mxu0 %v3705
      %v3765 = vpop.f32.mrf.mxu0
      %v3766 = vadd.f32 0.0, %v3765
      %v3767 = vpop.f32.mrf.mxu0
      %v3768 = vadd.f32 0.0, %v3767
      %3769 = vmatmul.bf16.gmra.mxu0 %v3708
      %v3770 = vpop.f32.mrf.mxu0
      %v3771 = vadd.f32 0.0, %v3770
      %v3772 = vpop.f32.mrf.mxu0
      %v3773 = vadd.f32 0.0, %v3772
      %3774 = vmatmul.bf16.gmra.mxu0 %v3711
      %v3775 = vpop.f32.mrf.mxu0
      %v3776 = vadd.f32 0.0, %v3775
      %v3777 = vpop.f32.mrf.mxu0
      %v3778 = vadd.f32 0.0, %v3777
      %3779 = vmatmul.bf16.gmra.mxu0 %v3714
      %v3780 = vpop.f32.mrf.mxu0
      %v3781 = vadd.f32 0.0, %v3780
      %v3782 = vpop.f32.mrf.mxu0
      %v3783 = vadd.f32 0.0, %v3782
      %3784 = vmatmul.bf16.gmra.mxu0 %v3717
      %v3785 = vpop.f32.mrf.mxu0
      %v3786 = vadd.f32 0.0, %v3785
      %v3787 = vpop.f32.mrf.mxu0
      %v3788 = vadd.f32 0.0, %v3787
      %3789 = vmatmul.bf16.gmra.mxu0 %v3720
      %v3790 = vpop.f32.mrf.mxu0
      %v3791 = vadd.f32 0.0, %v3790
      %v3792 = vpop.f32.mrf.mxu0
      %v3793 = vadd.f32 0.0, %v3792
      %3794 = vmatmul.bf16.gmra.mxu0 %v3723
      %v3795 = vpop.f32.mrf.mxu0
      %v3796 = vadd.f32 0.0, %v3795
      %v3797 = vpop.f32.mrf.mxu0
      %v3798 = vadd.f32 0.0, %v3797
      %3799 = vmatmul.bf16.gmra.mxu0 %v3726
      %v3800 = vpop.f32.mrf.mxu0
      %v3801 = vadd.f32 0.0, %v3800
      %v3802 = vpop.f32.mrf.mxu0
      %v3803 = vadd.f32 0.0, %v3802
      %3804 = vmatmul.bf16.gmra.mxu0 %v3729
      %v3805 = vpop.f32.mrf.mxu0
      %v3806 = vadd.f32 0.0, %v3805
      %v3807 = vpop.f32.mrf.mxu0
      %v3808 = vadd.f32 0.0, %v3807
      %3809 = vmatmul.bf16.gmra.mxu0 %v3732
      %v3810 = vpop.f32.mrf.mxu0
      %v3811 = vadd.f32 0.0, %v3810
      %v3812 = vpop.f32.mrf.mxu0
      %v3813 = vadd.f32 0.0, %v3812
      %3814 = vmatmul.bf16.gmra.mxu0 %v3735
      %v3815 = vpop.f32.mrf.mxu0
      %v3816 = vadd.f32 0.0, %v3815
      %v3817 = vpop.f32.mrf.mxu0
      %v3818 = vadd.f32 0.0, %v3817
      %3819 = vmatmul.bf16.gmra.mxu0 %v3738
      %v3820 = vpop.f32.mrf.mxu0
      %v3821 = vadd.f32 0.0, %v3820
      %v3822 = vpop.f32.mrf.mxu0
      %v3823 = vadd.f32 0.0, %v3822
      %3824 = vmatmul.bf16.gmra.mxu0 %v3741
      %v3825 = vpop.f32.mrf.mxu0
      %v3826 = vadd.f32 0.0, %v3825
      %v3827 = vpop.f32.mrf.mxu0
      %v3828 = vadd.f32 0.0, %v3827
      %3829 = vmatmul.bf16.gmra.mxu0 %v3744
      %v3830 = vpop.f32.mrf.mxu0
      %v3831 = vadd.f32 0.0, %v3830
      %v3832 = vpop.f32.mrf.mxu0
      %v3833 = vadd.f32 0.0, %v3832
      %3834 = vdwg.mxu0
      %v3835 = vadd.f32 %v3553, %v3756
      %v3836 = vadd.f32 %v3554, %v3758
      %v3837 = vadd.f32 %v3555, %v3761
      %v3838 = vadd.f32 %v3556, %v3763
      %v3839 = vadd.f32 %v3557, %v3766
      %v3840 = vadd.f32 %v3558, %v3768
      %v3841 = vadd.f32 %v3559, %v3771
      %v3842 = vadd.f32 %v3560, %v3773
      %v3843 = vadd.f32 %v3561, %v3776
      %v3844 = vadd.f32 %v3562, %v3778
      %v3845 = vadd.f32 %v3563, %v3781
      %v3846 = vadd.f32 %v3564, %v3783
      %v3847 = vadd.f32 %v3565, %v3786
      %v3848 = vadd.f32 %v3566, %v3788
      %v3849 = vadd.f32 %v3567, %v3791
      %v3850 = vadd.f32 %v3568, %v3793
      %v3851 = vadd.f32 %v3569, %v3796
      %v3852 = vadd.f32 %v3570, %v3798
      %v3853 = vadd.f32 %v3571, %v3801
      %v3854 = vadd.f32 %v3572, %v3803
      %v3855 = vadd.f32 %v3573, %v3806
      %v3856 = vadd.f32 %v3574, %v3808
      %v3857 = vadd.f32 %v3575, %v3811
      %v3858 = vadd.f32 %v3576, %v3813
      %v3859 = vadd.f32 %v3577, %v3816
      %v3860 = vadd.f32 %v3578, %v3818
      %v3861 = vadd.f32 %v3579, %v3821
      %v3862 = vadd.f32 %v3580, %v3823
      %v3863 = vadd.f32 %v3581, %v3826
      %v3864 = vadd.f32 %v3582, %v3828
      %v3865 = vadd.f32 %v3583, %v3831
      %v3866 = vadd.f32 %v3584, %v3833
      %v3867 = vld [vmem:[#allocation2 + $0x27] sm:$0xff]
      %v3868 = vld [vmem:[#allocation2 + $0x2f] sm:$0xff]
      %v3869 = vld [vmem:[#allocation2 + $0x37] sm:$0xff]
      %v3870 = vld [vmem:[#allocation2 + $0x3f] sm:$0xff]
      %v3871 = vld [vmem:[#allocation2 + $0x47] sm:$0xff]
      %v3872 = vld [vmem:[#allocation2 + $0x4f] sm:$0xff]
      %v3873 = vld [vmem:[#allocation2 + $0x57] sm:$0xff]
      %v3874 = vld [vmem:[#allocation2 + $0x5f] sm:$0xff]
      %v3875 = vld [vmem:[#allocation2 + $0x67] sm:$0xff]
      %v3876 = vld [vmem:[#allocation2 + $0x6f] sm:$0xff]
      %v3877 = vld [vmem:[#allocation2 + $0x77] sm:$0xff]
      %v3878 = vld [vmem:[#allocation2 + $0x7f] sm:$0xff]
      %v3879 = vld [vmem:[#allocation2 + $0x87] sm:$0xff]
      %v3880 = vld [vmem:[#allocation2 + $0x8f] sm:$0xff]
      %v3881 = vld [vmem:[#allocation2 + $0x97] sm:$0xff]
      %v3882 = vld [vmem:[#allocation2 + $0x9f] sm:$0xff]
      %v3883 = vld [vmem:[#allocation2 + $0xa7] sm:$0xff]
      %v3884 = vld [vmem:[#allocation2 + $0xaf] sm:$0xff]
      %v3885 = vld [vmem:[#allocation2 + $0xb7] sm:$0xff]
      %v3886 = vld [vmem:[#allocation2 + $0xbf] sm:$0xff]
      %v3887 = vld [vmem:[#allocation2 + $0xc7] sm:$0xff]
      %v3888 = vld [vmem:[#allocation2 + $0xcf] sm:$0xff]
      %v3889 = vld [vmem:[#allocation2 + $0xd7] sm:$0xff]
      %v3890 = vld [vmem:[#allocation2 + $0xdf] sm:$0xff]
      %v3891 = vld [vmem:[#allocation2 + $0xe7] sm:$0xff]
      %v3892 = vld [vmem:[#allocation2 + $0xef] sm:$0xff]
      %v3893 = vld [vmem:[#allocation2 + $0xf7] sm:$0xff]
      %v3894 = vld [vmem:[#allocation2 + $0xff] sm:$0xff]
      %v3895 = vld [vmem:[#allocation2 + $0x107] sm:$0xff]
      %v3896 = vld [vmem:[#allocation2 + $0x10f] sm:$0xff]
      %v3897 = vld [vmem:[#allocation2 + $0x117] sm:$0xff]
      %v3898 = vld [vmem:[#allocation2 + $0x11f] sm:$0xff]
      %v3899 = vmul.f32 %v3867, %v1729
      %v3900 = vmul.f32 %v3868, %v1734
      %v3901 = vmul.f32 %v3869, %v1739
      %v3902 = vmul.f32 %v3870, %v1744
      %v3903 = vmul.f32 %v3871, %v1749
      %v3904 = vmul.f32 %v3872, %v1754
      %v3905 = vmul.f32 %v3873, %v1759
      %v3906 = vmul.f32 %v3874, %v1764
      %v3907 = vmul.f32 %v3875, %v1769
      %v3908 = vmul.f32 %v3876, %v1774
      %v3909 = vmul.f32 %v3877, %v1779
      %v3910 = vmul.f32 %v3878, %v1784
      %v3911 = vmul.f32 %v3879, %v1789
      %v3912 = vmul.f32 %v3880, %v1794
      %v3913 = vmul.f32 %v3881, %v1799
      %v3914 = vmul.f32 %v3882, %v1804
      %v3915 = vmul.f32 %v3883, %v1809
      %v3916 = vmul.f32 %v3884, %v1814
      %v3917 = vmul.f32 %v3885, %v1819
      %v3918 = vmul.f32 %v3886, %v1824
      %v3919 = vmul.f32 %v3887, %v1829
      %v3920 = vmul.f32 %v3888, %v1834
      %v3921 = vmul.f32 %v3889, %v1839
      %v3922 = vmul.f32 %v3890, %v1844
      %v3923 = vmul.f32 %v3891, %v1849
      %v3924 = vmul.f32 %v3892, %v1854
      %v3925 = vmul.f32 %v3893, %v1859
      %v3926 = vmul.f32 %v3894, %v1864
      %v3927 = vmul.f32 %v3895, %v1869
      %v3928 = vmul.f32 %v3896, %v1874
      %v3929 = vmul.f32 %v3897, %v1879
      %v3930 = vmul.f32 %v3898, %v1884
      %v3931 = vpack.c.bf16 %v3900, %v3899
      %v3932 = vpack.c.bf16 %v3902, %v3901
      %v3933 = vpack.c.bf16 %v3904, %v3903
      %v3934 = vpack.c.bf16 %v3906, %v3905
      %v3935 = vpack.c.bf16 %v3908, %v3907
      %v3936 = vpack.c.bf16 %v3910, %v3909
      %v3937 = vpack.c.bf16 %v3912, %v3911
      %v3938 = vpack.c.bf16 %v3914, %v3913
      %v3939 = vpack.c.bf16 %v3916, %v3915
      %v3940 = vpack.c.bf16 %v3918, %v3917
      %v3941 = vpack.c.bf16 %v3920, %v3919
      %v3942 = vpack.c.bf16 %v3922, %v3921
      %v3943 = vpack.c.bf16 %v3924, %v3923
      %v3944 = vpack.c.bf16 %v3926, %v3925
      %v3945 = vpack.c.bf16 %v3928, %v3927
      %v3946 = vpack.c.bf16 %v3930, %v3929
      %s3947 = scalar_lea.vmem %s7, 192
      %v3948 = vld [vmem:[%s3947] sm:$0xf]
      %v3949 = vld [vmem:[%s3947 + $0x4] sm:$0xf]
      %v3950 = vld [vmem:[%s3947 + $0x8] sm:$0xf]
      %v3951 = vld [vmem:[%s3947 + $0xc] sm:$0xf]
      %v3952 = vld [vmem:[%s3947 + $0x10] sm:$0xf]
      %v3953 = vld [vmem:[%s3947 + $0x14] sm:$0xf]
      %v3954 = vld [vmem:[%s3947 + $0x18] sm:$0xf]
      %v3955 = vld [vmem:[%s3947 + $0x1c] sm:$0xf]
      %v3964 = vunpack.c.l.b16 %v3948
      %v3965 = vunpack.c.l.b16 %v3949
      %v3966 = vunpack.c.l.b16 %v3950
      %v3967 = vunpack.c.l.b16 %v3951
      %v3968 = vunpack.c.l.b16 %v3952
      %v3969 = vunpack.c.l.b16 %v3953
      %v3970 = vunpack.c.l.b16 %v3954
      %v3971 = vunpack.c.l.b16 %v3955
      %v3972 = vpack.c.b16 %v3965, %v3964
      %v3973 = vpack.c.b16 %v3967, %v3966
      %v3974 = vpack.c.b16 %v3969, %v3968
      %v3975 = vpack.c.b16 %v3971, %v3970
      %v3981 = vsel %vm422, %v3931, 0
      %v3984 = vsel %vm422, %v3932, 0
      %v3987 = vsel %vm422, %v3933, 0
      %v3990 = vsel %vm422, %v3934, 0
      %v3993 = vsel %vm422, %v3935, 0
      %v3996 = vsel %vm422, %v3936, 0
      %v3999 = vsel %vm422, %v3937, 0
      %v4002 = vsel %vm422, %v3938, 0
      %v4005 = vsel %vm422, %v3939, 0
      %v4008 = vsel %vm422, %v3940, 0
      %v4011 = vsel %vm422, %v3941, 0
      %v4014 = vsel %vm422, %v3942, 0
      %v4017 = vsel %vm422, %v3943, 0
      %v4020 = vsel %vm422, %v3944, 0
      %v4023 = vsel %vm422, %v3945, 0
      %v4026 = vsel %vm422, %v3946, 0
      %4028 = vmatpush.bf16.msra.mxu0 0
      %4029 = vmatpush.bf16.msra.mxu0 0
      %4030 = vmatpush.bf16.msra.mxu0 0
      %4031 = vmatpush.bf16.msra.mxu0 0
      %4032 = vmatpush.bf16.msra.mxu0 %v3975
      %4033 = vmatpush.bf16.msra.mxu0 %v3974
      %4034 = vmatpush.bf16.msra.mxu0 %v3973
      %4035 = vmatpush.bf16.msra.mxu0 %v3972
      %4036 = vmatmul.bf16.gmra.mxu0 %v3981
      %v4037 = vpop.f32.mrf.mxu0
      %v4038 = vadd.f32 0.0, %v4037
      %v4039 = vpop.f32.mrf.mxu0
      %v4040 = vadd.f32 0.0, %v4039
      %4041 = vmatmul.bf16.gmra.mxu0 %v3984
      %v4042 = vpop.f32.mrf.mxu0
      %v4043 = vadd.f32 0.0, %v4042
      %v4044 = vpop.f32.mrf.mxu0
      %v4045 = vadd.f32 0.0, %v4044
      %4046 = vmatmul.bf16.gmra.mxu0 %v3987
      %v4047 = vpop.f32.mrf.mxu0
      %v4048 = vadd.f32 0.0, %v4047
      %v4049 = vpop.f32.mrf.mxu0
      %v4050 = vadd.f32 0.0, %v4049
      %4051 = vmatmul.bf16.gmra.mxu0 %v3990
      %v4052 = vpop.f32.mrf.mxu0
      %v4053 = vadd.f32 0.0, %v4052
      %v4054 = vpop.f32.mrf.mxu0
      %v4055 = vadd.f32 0.0, %v4054
      %4056 = vmatmul.bf16.gmra.mxu0 %v3993
      %v4057 = vpop.f32.mrf.mxu0
      %v4058 = vadd.f32 0.0, %v4057
      %v4059 = vpop.f32.mrf.mxu0
      %v4060 = vadd.f32 0.0, %v4059
      %4061 = vmatmul.bf16.gmra.mxu0 %v3996
      %v4062 = vpop.f32.mrf.mxu0
      %v4063 = vadd.f32 0.0, %v4062
      %v4064 = vpop.f32.mrf.mxu0
      %v4065 = vadd.f32 0.0, %v4064
      %4066 = vmatmul.bf16.gmra.mxu0 %v3999
      %v4067 = vpop.f32.mrf.mxu0
      %v4068 = vadd.f32 0.0, %v4067
      %v4069 = vpop.f32.mrf.mxu0
      %v4070 = vadd.f32 0.0, %v4069
      %4071 = vmatmul.bf16.gmra.mxu0 %v4002
      %v4072 = vpop.f32.mrf.mxu0
      %v4073 = vadd.f32 0.0, %v4072
      %v4074 = vpop.f32.mrf.mxu0
      %v4075 = vadd.f32 0.0, %v4074
      %4076 = vmatmul.bf16.gmra.mxu0 %v4005
      %v4077 = vpop.f32.mrf.mxu0
      %v4078 = vadd.f32 0.0, %v4077
      %v4079 = vpop.f32.mrf.mxu0
      %v4080 = vadd.f32 0.0, %v4079
      %4081 = vmatmul.bf16.gmra.mxu0 %v4008
      %v4082 = vpop.f32.mrf.mxu0
      %v4083 = vadd.f32 0.0, %v4082
      %v4084 = vpop.f32.mrf.mxu0
      %v4085 = vadd.f32 0.0, %v4084
      %4086 = vmatmul.bf16.gmra.mxu0 %v4011
      %v4087 = vpop.f32.mrf.mxu0
      %v4088 = vadd.f32 0.0, %v4087
      %v4089 = vpop.f32.mrf.mxu0
      %v4090 = vadd.f32 0.0, %v4089
      %4091 = vmatmul.bf16.gmra.mxu0 %v4014
      %v4092 = vpop.f32.mrf.mxu0
      %v4093 = vadd.f32 0.0, %v4092
      %v4094 = vpop.f32.mrf.mxu0
      %v4095 = vadd.f32 0.0, %v4094
      %4096 = vmatmul.bf16.gmra.mxu0 %v4017
      %v4097 = vpop.f32.mrf.mxu0
      %v4098 = vadd.f32 0.0, %v4097
      %v4099 = vpop.f32.mrf.mxu0
      %v4100 = vadd.f32 0.0, %v4099
      %4101 = vmatmul.bf16.gmra.mxu0 %v4020
      %v4102 = vpop.f32.mrf.mxu0
      %v4103 = vadd.f32 0.0, %v4102
      %v4104 = vpop.f32.mrf.mxu0
      %v4105 = vadd.f32 0.0, %v4104
      %4106 = vmatmul.bf16.gmra.mxu0 %v4023
      %v4107 = vpop.f32.mrf.mxu0
      %v4108 = vadd.f32 0.0, %v4107
      %v4109 = vpop.f32.mrf.mxu0
      %v4110 = vadd.f32 0.0, %v4109
      %4111 = vmatmul.bf16.gmra.mxu0 %v4026
      %v4112 = vpop.f32.mrf.mxu0
      %v4113 = vadd.f32 0.0, %v4112
      %v4114 = vpop.f32.mrf.mxu0
      %v4115 = vadd.f32 0.0, %v4114
      %4116 = vdwg.mxu0
      %v4117 = vadd.f32 %v3835, %v4038
      %v4118 = vadd.f32 %v3836, %v4040
      %v4119 = vadd.f32 %v3837, %v4043
      %v4120 = vadd.f32 %v3838, %v4045
      %v4121 = vadd.f32 %v3839, %v4048
      %v4122 = vadd.f32 %v3840, %v4050
      %v4123 = vadd.f32 %v3841, %v4053
      %v4124 = vadd.f32 %v3842, %v4055
      %v4125 = vadd.f32 %v3843, %v4058
      %v4126 = vadd.f32 %v3844, %v4060
      %v4127 = vadd.f32 %v3845, %v4063
      %v4128 = vadd.f32 %v3846, %v4065
      %v4129 = vadd.f32 %v3847, %v4068
      %v4130 = vadd.f32 %v3848, %v4070
      %v4131 = vadd.f32 %v3849, %v4073
      %v4132 = vadd.f32 %v3850, %v4075
      %v4133 = vadd.f32 %v3851, %v4078
      %v4134 = vadd.f32 %v3852, %v4080
      %v4135 = vadd.f32 %v3853, %v4083
      %v4136 = vadd.f32 %v3854, %v4085
      %v4137 = vadd.f32 %v3855, %v4088
      %v4138 = vadd.f32 %v3856, %v4090
      %v4139 = vadd.f32 %v3857, %v4093
      %v4140 = vadd.f32 %v3858, %v4095
      %v4141 = vadd.f32 %v3859, %v4098
      %v4142 = vadd.f32 %v3860, %v4100
      %v4143 = vadd.f32 %v3861, %v4103
      %v4144 = vadd.f32 %v3862, %v4105
      %v4145 = vadd.f32 %v3863, %v4108
      %v4146 = vadd.f32 %v3864, %v4110
      %v4147 = vadd.f32 %v3865, %v4113
      %v4148 = vadd.f32 %v3866, %v4115
      %v4149 = vld [vmem:[#allocation2 + $0x28] sm:$0xff]
      %v4150 = vld [vmem:[#allocation2 + $0x30] sm:$0xff]
      %v4151 = vld [vmem:[#allocation2 + $0x38] sm:$0xff]
      %v4152 = vld [vmem:[#allocation2 + $0x40] sm:$0xff]
      %v4153 = vld [vmem:[#allocation2 + $0x48] sm:$0xff]
      %v4154 = vld [vmem:[#allocation2 + $0x50] sm:$0xff]
      %v4155 = vld [vmem:[#allocation2 + $0x58] sm:$0xff]
      %v4156 = vld [vmem:[#allocation2 + $0x60] sm:$0xff]
      %v4157 = vld [vmem:[#allocation2 + $0x68] sm:$0xff]
      %v4158 = vld [vmem:[#allocation2 + $0x70] sm:$0xff]
      %v4159 = vld [vmem:[#allocation2 + $0x78] sm:$0xff]
      %v4160 = vld [vmem:[#allocation2 + $0x80] sm:$0xff]
      %v4161 = vld [vmem:[#allocation2 + $0x88] sm:$0xff]
      %v4162 = vld [vmem:[#allocation2 + $0x90] sm:$0xff]
      %v4163 = vld [vmem:[#allocation2 + $0x98] sm:$0xff]
      %v4164 = vld [vmem:[#allocation2 + $0xa0] sm:$0xff]
      %v4165 = vld [vmem:[#allocation2 + $0xa8] sm:$0xff]
      %v4166 = vld [vmem:[#allocation2 + $0xb0] sm:$0xff]
      %v4167 = vld [vmem:[#allocation2 + $0xb8] sm:$0xff]
      %v4168 = vld [vmem:[#allocation2 + $0xc0] sm:$0xff]
      %v4169 = vld [vmem:[#allocation2 + $0xc8] sm:$0xff]
      %v4170 = vld [vmem:[#allocation2 + $0xd0] sm:$0xff]
      %v4171 = vld [vmem:[#allocation2 + $0xd8] sm:$0xff]
      %v4172 = vld [vmem:[#allocation2 + $0xe0] sm:$0xff]
      %v4173 = vld [vmem:[#allocation2 + $0xe8] sm:$0xff]
      %v4174 = vld [vmem:[#allocation2 + $0xf0] sm:$0xff]
      %v4175 = vld [vmem:[#allocation2 + $0xf8] sm:$0xff]
      %v4176 = vld [vmem:[#allocation2 + $0x100] sm:$0xff]
      %v4177 = vld [vmem:[#allocation2 + $0x108] sm:$0xff]
      %v4178 = vld [vmem:[#allocation2 + $0x110] sm:$0xff]
      %v4179 = vld [vmem:[#allocation2 + $0x118] sm:$0xff]
      %v4180 = vld [vmem:[#allocation2 + $0x120] sm:$0xff]
      %v4181 = vmul.f32 %v4149, %v2010
      %v4182 = vmul.f32 %v4150, %v2015
      %v4183 = vmul.f32 %v4151, %v2020
      %v4184 = vmul.f32 %v4152, %v2025
      %v4185 = vmul.f32 %v4153, %v2030
      %v4186 = vmul.f32 %v4154, %v2035
      %v4187 = vmul.f32 %v4155, %v2040
      %v4188 = vmul.f32 %v4156, %v2045
      %v4189 = vmul.f32 %v4157, %v2050
      %v4190 = vmul.f32 %v4158, %v2055
      %v4191 = vmul.f32 %v4159, %v2060
      %v4192 = vmul.f32 %v4160, %v2065
      %v4193 = vmul.f32 %v4161, %v2070
      %v4194 = vmul.f32 %v4162, %v2075
      %v4195 = vmul.f32 %v4163, %v2080
      %v4196 = vmul.f32 %v4164, %v2085
      %v4197 = vmul.f32 %v4165, %v2090
      %v4198 = vmul.f32 %v4166, %v2095
      %v4199 = vmul.f32 %v4167, %v2100
      %v4200 = vmul.f32 %v4168, %v2105
      %v4201 = vmul.f32 %v4169, %v2110
      %v4202 = vmul.f32 %v4170, %v2115
      %v4203 = vmul.f32 %v4171, %v2120
      %v4204 = vmul.f32 %v4172, %v2125
      %v4205 = vmul.f32 %v4173, %v2130
      %v4206 = vmul.f32 %v4174, %v2135
      %v4207 = vmul.f32 %v4175, %v2140
      %v4208 = vmul.f32 %v4176, %v2145
      %v4209 = vmul.f32 %v4177, %v2150
      %v4210 = vmul.f32 %v4178, %v2155
      %v4211 = vmul.f32 %v4179, %v2160
      %v4212 = vmul.f32 %v4180, %v2165
      %v4213 = vpack.c.bf16 %v4182, %v4181
      %v4214 = vpack.c.bf16 %v4184, %v4183
      %v4215 = vpack.c.bf16 %v4186, %v4185
      %v4216 = vpack.c.bf16 %v4188, %v4187
      %v4217 = vpack.c.bf16 %v4190, %v4189
      %v4218 = vpack.c.bf16 %v4192, %v4191
      %v4219 = vpack.c.bf16 %v4194, %v4193
      %v4220 = vpack.c.bf16 %v4196, %v4195
      %v4221 = vpack.c.bf16 %v4198, %v4197
      %v4222 = vpack.c.bf16 %v4200, %v4199
      %v4223 = vpack.c.bf16 %v4202, %v4201
      %v4224 = vpack.c.bf16 %v4204, %v4203
      %v4225 = vpack.c.bf16 %v4206, %v4205
      %v4226 = vpack.c.bf16 %v4208, %v4207
      %v4227 = vpack.c.bf16 %v4210, %v4209
      %v4228 = vpack.c.bf16 %v4212, %v4211
      %s4229 = scalar_lea.vmem %s7, 224
      %v4230 = vld [vmem:[%s4229] sm:$0xf]
      %v4231 = vld [vmem:[%s4229 + $0x4] sm:$0xf]
      %v4232 = vld [vmem:[%s4229 + $0x8] sm:$0xf]
      %v4233 = vld [vmem:[%s4229 + $0xc] sm:$0xf]
      %v4234 = vld [vmem:[%s4229 + $0x10] sm:$0xf]
      %v4235 = vld [vmem:[%s4229 + $0x14] sm:$0xf]
      %v4236 = vld [vmem:[%s4229 + $0x18] sm:$0xf]
      %v4237 = vld [vmem:[%s4229 + $0x1c] sm:$0xf]
      %v4246 = vunpack.c.l.b16 %v4230
      %v4247 = vunpack.c.l.b16 %v4231
      %v4248 = vunpack.c.l.b16 %v4232
      %v4249 = vunpack.c.l.b16 %v4233
      %v4250 = vunpack.c.l.b16 %v4234
      %v4251 = vunpack.c.l.b16 %v4235
      %v4252 = vunpack.c.l.b16 %v4236
      %v4253 = vunpack.c.l.b16 %v4237
      %v4254 = vpack.c.b16 %v4247, %v4246
      %v4255 = vpack.c.b16 %v4249, %v4248
      %v4256 = vpack.c.b16 %v4251, %v4250
      %v4257 = vpack.c.b16 %v4253, %v4252
      %v4263 = vsel %vm422, %v4213, 0
      %v4266 = vsel %vm422, %v4214, 0
      %v4269 = vsel %vm422, %v4215, 0
      %v4272 = vsel %vm422, %v4216, 0
      %v4275 = vsel %vm422, %v4217, 0
      %v4278 = vsel %vm422, %v4218, 0
      %v4281 = vsel %vm422, %v4219, 0
      %v4284 = vsel %vm422, %v4220, 0
      %v4287 = vsel %vm422, %v4221, 0
      %v4290 = vsel %vm422, %v4222, 0
      %v4293 = vsel %vm422, %v4223, 0
      %v4296 = vsel %vm422, %v4224, 0
      %v4299 = vsel %vm422, %v4225, 0
      %v4302 = vsel %vm422, %v4226, 0
      %v4305 = vsel %vm422, %v4227, 0
      %v4308 = vsel %vm422, %v4228, 0
      %4310 = vmatpush.bf16.msra.mxu0 0
      %4311 = vmatpush.bf16.msra.mxu0 0
      %4312 = vmatpush.bf16.msra.mxu0 0
      %4313 = vmatpush.bf16.msra.mxu0 0
      %4314 = vmatpush.bf16.msra.mxu0 %v4257
      %4315 = vmatpush.bf16.msra.mxu0 %v4256
      %4316 = vmatpush.bf16.msra.mxu0 %v4255
      %4317 = vmatpush.bf16.msra.mxu0 %v4254
      %4318 = vmatmul.bf16.gmra.mxu0 %v4263
      %v4319 = vpop.f32.mrf.mxu0
      %v4320 = vadd.f32 0.0, %v4319
      %v4321 = vpop.f32.mrf.mxu0
      %v4322 = vadd.f32 0.0, %v4321
      %4323 = vmatmul.bf16.gmra.mxu0 %v4266
      %v4324 = vpop.f32.mrf.mxu0
      %v4325 = vadd.f32 0.0, %v4324
      %v4326 = vpop.f32.mrf.mxu0
      %v4327 = vadd.f32 0.0, %v4326
      %4328 = vmatmul.bf16.gmra.mxu0 %v4269
      %v4329 = vpop.f32.mrf.mxu0
      %v4330 = vadd.f32 0.0, %v4329
      %v4331 = vpop.f32.mrf.mxu0
      %v4332 = vadd.f32 0.0, %v4331
      %4333 = vmatmul.bf16.gmra.mxu0 %v4272
      %v4334 = vpop.f32.mrf.mxu0
      %v4335 = vadd.f32 0.0, %v4334
      %v4336 = vpop.f32.mrf.mxu0
      %v4337 = vadd.f32 0.0, %v4336
      %4338 = vmatmul.bf16.gmra.mxu0 %v4275
      %v4339 = vpop.f32.mrf.mxu0
      %v4340 = vadd.f32 0.0, %v4339
      %v4341 = vpop.f32.mrf.mxu0
      %v4342 = vadd.f32 0.0, %v4341
      %4343 = vmatmul.bf16.gmra.mxu0 %v4278
      %v4344 = vpop.f32.mrf.mxu0
      %v4345 = vadd.f32 0.0, %v4344
      %v4346 = vpop.f32.mrf.mxu0
      %v4347 = vadd.f32 0.0, %v4346
      %4348 = vmatmul.bf16.gmra.mxu0 %v4281
      %v4349 = vpop.f32.mrf.mxu0
      %v4350 = vadd.f32 0.0, %v4349
      %v4351 = vpop.f32.mrf.mxu0
      %v4352 = vadd.f32 0.0, %v4351
      %4353 = vmatmul.bf16.gmra.mxu0 %v4284
      %v4354 = vpop.f32.mrf.mxu0
      %v4355 = vadd.f32 0.0, %v4354
      %v4356 = vpop.f32.mrf.mxu0
      %v4357 = vadd.f32 0.0, %v4356
      %4358 = vmatmul.bf16.gmra.mxu0 %v4287
      %v4359 = vpop.f32.mrf.mxu0
      %v4360 = vadd.f32 0.0, %v4359
      %v4361 = vpop.f32.mrf.mxu0
      %v4362 = vadd.f32 0.0, %v4361
      %4363 = vmatmul.bf16.gmra.mxu0 %v4290
      %v4364 = vpop.f32.mrf.mxu0
      %v4365 = vadd.f32 0.0, %v4364
      %v4366 = vpop.f32.mrf.mxu0
      %v4367 = vadd.f32 0.0, %v4366
      %4368 = vmatmul.bf16.gmra.mxu0 %v4293
      %v4369 = vpop.f32.mrf.mxu0
      %v4370 = vadd.f32 0.0, %v4369
      %v4371 = vpop.f32.mrf.mxu0
      %v4372 = vadd.f32 0.0, %v4371
      %4373 = vmatmul.bf16.gmra.mxu0 %v4296
      %v4374 = vpop.f32.mrf.mxu0
      %v4375 = vadd.f32 0.0, %v4374
      %v4376 = vpop.f32.mrf.mxu0
      %v4377 = vadd.f32 0.0, %v4376
      %4378 = vmatmul.bf16.gmra.mxu0 %v4299
      %v4379 = vpop.f32.mrf.mxu0
      %v4380 = vadd.f32 0.0, %v4379
      %v4381 = vpop.f32.mrf.mxu0
      %v4382 = vadd.f32 0.0, %v4381
      %4383 = vmatmul.bf16.gmra.mxu0 %v4302
      %v4384 = vpop.f32.mrf.mxu0
      %v4385 = vadd.f32 0.0, %v4384
      %v4386 = vpop.f32.mrf.mxu0
      %v4387 = vadd.f32 0.0, %v4386
      %4388 = vmatmul.bf16.gmra.mxu0 %v4305
      %v4389 = vpop.f32.mrf.mxu0
      %v4390 = vadd.f32 0.0, %v4389
      %v4391 = vpop.f32.mrf.mxu0
      %v4392 = vadd.f32 0.0, %v4391
      %4393 = vmatmul.bf16.gmra.mxu0 %v4308
      %v4394 = vpop.f32.mrf.mxu0
      %v4395 = vadd.f32 0.0, %v4394
      %v4396 = vpop.f32.mrf.mxu0
      %v4397 = vadd.f32 0.0, %v4396
      %4398 = vdwg.mxu0
      %v4399 = vadd.f32 %v4117, %v4320
      %v4400 = vadd.f32 %v4118, %v4322
      %v4401 = vadd.f32 %v4119, %v4325
      %v4402 = vadd.f32 %v4120, %v4327
      %v4403 = vadd.f32 %v4121, %v4330
      %v4404 = vadd.f32 %v4122, %v4332
      %v4405 = vadd.f32 %v4123, %v4335
      %v4406 = vadd.f32 %v4124, %v4337
      %v4407 = vadd.f32 %v4125, %v4340
      %v4408 = vadd.f32 %v4126, %v4342
      %v4409 = vadd.f32 %v4127, %v4345
      %v4410 = vadd.f32 %v4128, %v4347
      %v4411 = vadd.f32 %v4129, %v4350
      %v4412 = vadd.f32 %v4130, %v4352
      %v4413 = vadd.f32 %v4131, %v4355
      %v4414 = vadd.f32 %v4132, %v4357
      %v4415 = vadd.f32 %v4133, %v4360
      %v4416 = vadd.f32 %v4134, %v4362
      %v4417 = vadd.f32 %v4135, %v4365
      %v4418 = vadd.f32 %v4136, %v4367
      %v4419 = vadd.f32 %v4137, %v4370
      %v4420 = vadd.f32 %v4138, %v4372
      %v4421 = vadd.f32 %v4139, %v4375
      %v4422 = vadd.f32 %v4140, %v4377
      %v4423 = vadd.f32 %v4141, %v4380
      %v4424 = vadd.f32 %v4142, %v4382
      %v4425 = vadd.f32 %v4143, %v4385
      %v4426 = vadd.f32 %v4144, %v4387
      %v4427 = vadd.f32 %v4145, %v4390
      %v4428 = vadd.f32 %v4146, %v4392
      %v4429 = vadd.f32 %v4147, %v4395
      %v4430 = vadd.f32 %v4148, %v4397
      %v4431 = vld [vmem:[#allocation2 + $0x29] sm:$0xff]
      %v4432 = vld [vmem:[#allocation2 + $0x31] sm:$0xff]
      %v4433 = vld [vmem:[#allocation2 + $0x39] sm:$0xff]
      %v4434 = vld [vmem:[#allocation2 + $0x41] sm:$0xff]
      %v4435 = vld [vmem:[#allocation2 + $0x49] sm:$0xff]
      %v4436 = vld [vmem:[#allocation2 + $0x51] sm:$0xff]
      %v4437 = vld [vmem:[#allocation2 + $0x59] sm:$0xff]
      %v4438 = vld [vmem:[#allocation2 + $0x61] sm:$0xff]
      %v4439 = vld [vmem:[#allocation2 + $0x69] sm:$0xff]
      %v4440 = vld [vmem:[#allocation2 + $0x71] sm:$0xff]
      %v4441 = vld [vmem:[#allocation2 + $0x79] sm:$0xff]
      %v4442 = vld [vmem:[#allocation2 + $0x81] sm:$0xff]
      %v4443 = vld [vmem:[#allocation2 + $0x89] sm:$0xff]
      %v4444 = vld [vmem:[#allocation2 + $0x91] sm:$0xff]
      %v4445 = vld [vmem:[#allocation2 + $0x99] sm:$0xff]
      %v4446 = vld [vmem:[#allocation2 + $0xa1] sm:$0xff]
      %v4447 = vld [vmem:[#allocation2 + $0xa9] sm:$0xff]
      %v4448 = vld [vmem:[#allocation2 + $0xb1] sm:$0xff]
      %v4449 = vld [vmem:[#allocation2 + $0xb9] sm:$0xff]
      %v4450 = vld [vmem:[#allocation2 + $0xc1] sm:$0xff]
      %v4451 = vld [vmem:[#allocation2 + $0xc9] sm:$0xff]
      %v4452 = vld [vmem:[#allocation2 + $0xd1] sm:$0xff]
      %v4453 = vld [vmem:[#allocation2 + $0xd9] sm:$0xff]
      %v4454 = vld [vmem:[#allocation2 + $0xe1] sm:$0xff]
      %v4455 = vld [vmem:[#allocation2 + $0xe9] sm:$0xff]
      %v4456 = vld [vmem:[#allocation2 + $0xf1] sm:$0xff]
      %v4457 = vld [vmem:[#allocation2 + $0xf9] sm:$0xff]
      %v4458 = vld [vmem:[#allocation2 + $0x101] sm:$0xff]
      %v4459 = vld [vmem:[#allocation2 + $0x109] sm:$0xff]
      %v4460 = vld [vmem:[#allocation2 + $0x111] sm:$0xff]
      %v4461 = vld [vmem:[#allocation2 + $0x119] sm:$0xff]
      %v4462 = vld [vmem:[#allocation2 + $0x121] sm:$0xff]
      %v4463 = vmul.f32 %v4431, %v2614
      %v4464 = vmul.f32 %v4432, %v2619
      %v4465 = vmul.f32 %v4433, %v2624
      %v4466 = vmul.f32 %v4434, %v2629
      %v4467 = vmul.f32 %v4435, %v2634
      %v4468 = vmul.f32 %v4436, %v2639
      %v4469 = vmul.f32 %v4437, %v2644
      %v4470 = vmul.f32 %v4438, %v2649
      %v4471 = vmul.f32 %v4439, %v2654
      %v4472 = vmul.f32 %v4440, %v2659
      %v4473 = vmul.f32 %v4441, %v2664
      %v4474 = vmul.f32 %v4442, %v2669
      %v4475 = vmul.f32 %v4443, %v2674
      %v4476 = vmul.f32 %v4444, %v2679
      %v4477 = vmul.f32 %v4445, %v2684
      %v4478 = vmul.f32 %v4446, %v2689
      %v4479 = vmul.f32 %v4447, %v2694
      %v4480 = vmul.f32 %v4448, %v2699
      %v4481 = vmul.f32 %v4449, %v2704
      %v4482 = vmul.f32 %v4450, %v2709
      %v4483 = vmul.f32 %v4451, %v2714
      %v4484 = vmul.f32 %v4452, %v2719
      %v4485 = vmul.f32 %v4453, %v2724
      %v4486 = vmul.f32 %v4454, %v2729
      %v4487 = vmul.f32 %v4455, %v2734
      %v4488 = vmul.f32 %v4456, %v2739
      %v4489 = vmul.f32 %v4457, %v2744
      %v4490 = vmul.f32 %v4458, %v2749
      %v4491 = vmul.f32 %v4459, %v2754
      %v4492 = vmul.f32 %v4460, %v2759
      %v4493 = vmul.f32 %v4461, %v2764
      %v4494 = vmul.f32 %v4462, %v2769
      %v4495 = vpack.c.bf16 %v4464, %v4463
      %v4496 = vpack.c.bf16 %v4466, %v4465
      %v4497 = vpack.c.bf16 %v4468, %v4467
      %v4498 = vpack.c.bf16 %v4470, %v4469
      %v4499 = vpack.c.bf16 %v4472, %v4471
      %v4500 = vpack.c.bf16 %v4474, %v4473
      %v4501 = vpack.c.bf16 %v4476, %v4475
      %v4502 = vpack.c.bf16 %v4478, %v4477
      %v4503 = vpack.c.bf16 %v4480, %v4479
      %v4504 = vpack.c.bf16 %v4482, %v4481
      %v4505 = vpack.c.bf16 %v4484, %v4483
      %v4506 = vpack.c.bf16 %v4486, %v4485
      %v4507 = vpack.c.bf16 %v4488, %v4487
      %v4508 = vpack.c.bf16 %v4490, %v4489
      %v4509 = vpack.c.bf16 %v4492, %v4491
      %v4510 = vpack.c.bf16 %v4494, %v4493
      %s4511 = scalar_lea.vmem %s7, 256
      %v4512 = vld [vmem:[%s4511] sm:$0xf]
      %v4513 = vld [vmem:[%s4511 + $0x4] sm:$0xf]
      %v4514 = vld [vmem:[%s4511 + $0x8] sm:$0xf]
      %v4515 = vld [vmem:[%s4511 + $0xc] sm:$0xf]
      %v4516 = vld [vmem:[%s4511 + $0x10] sm:$0xf]
      %v4517 = vld [vmem:[%s4511 + $0x14] sm:$0xf]
      %v4518 = vld [vmem:[%s4511 + $0x18] sm:$0xf]
      %v4519 = vld [vmem:[%s4511 + $0x1c] sm:$0xf]
      %v4528 = vunpack.c.l.b16 %v4512
      %v4529 = vunpack.c.l.b16 %v4513
      %v4530 = vunpack.c.l.b16 %v4514
      %v4531 = vunpack.c.l.b16 %v4515
      %v4532 = vunpack.c.l.b16 %v4516
      %v4533 = vunpack.c.l.b16 %v4517
      %v4534 = vunpack.c.l.b16 %v4518
      %v4535 = vunpack.c.l.b16 %v4519
      %v4536 = vpack.c.b16 %v4529, %v4528
      %v4537 = vpack.c.b16 %v4531, %v4530
      %v4538 = vpack.c.b16 %v4533, %v4532
      %v4539 = vpack.c.b16 %v4535, %v4534
      %v4545 = vsel %vm422, %v4495, 0
      %v4548 = vsel %vm422, %v4496, 0
      %v4551 = vsel %vm422, %v4497, 0
      %v4554 = vsel %vm422, %v4498, 0
      %v4557 = vsel %vm422, %v4499, 0
      %v4560 = vsel %vm422, %v4500, 0
      %v4563 = vsel %vm422, %v4501, 0
      %v4566 = vsel %vm422, %v4502, 0
      %v4569 = vsel %vm422, %v4503, 0
      %v4572 = vsel %vm422, %v4504, 0
      %v4575 = vsel %vm422, %v4505, 0
      %v4578 = vsel %vm422, %v4506, 0
      %v4581 = vsel %vm422, %v4507, 0
      %v4584 = vsel %vm422, %v4508, 0
      %v4587 = vsel %vm422, %v4509, 0
      %v4590 = vsel %vm422, %v4510, 0
      %4592 = vmatpush.bf16.msra.mxu0 0
      %4593 = vmatpush.bf16.msra.mxu0 0
      %4594 = vmatpush.bf16.msra.mxu0 0
      %4595 = vmatpush.bf16.msra.mxu0 0
      %4596 = vmatpush.bf16.msra.mxu0 %v4539
      %4597 = vmatpush.bf16.msra.mxu0 %v4538
      %4598 = vmatpush.bf16.msra.mxu0 %v4537
      %4599 = vmatpush.bf16.msra.mxu0 %v4536
      %4600 = vmatmul.bf16.gmra.mxu0 %v4545
      %v4601 = vpop.f32.mrf.mxu0
      %v4602 = vadd.f32 0.0, %v4601
      %v4603 = vpop.f32.mrf.mxu0
      %v4604 = vadd.f32 0.0, %v4603
      %4605 = vmatmul.bf16.gmra.mxu0 %v4548
      %v4606 = vpop.f32.mrf.mxu0
      %v4607 = vadd.f32 0.0, %v4606
      %v4608 = vpop.f32.mrf.mxu0
      %v4609 = vadd.f32 0.0, %v4608
      %4610 = vmatmul.bf16.gmra.mxu0 %v4551
      %v4611 = vpop.f32.mrf.mxu0
      %v4612 = vadd.f32 0.0, %v4611
      %v4613 = vpop.f32.mrf.mxu0
      %v4614 = vadd.f32 0.0, %v4613
      %4615 = vmatmul.bf16.gmra.mxu0 %v4554
      %v4616 = vpop.f32.mrf.mxu0
      %v4617 = vadd.f32 0.0, %v4616
      %v4618 = vpop.f32.mrf.mxu0
      %v4619 = vadd.f32 0.0, %v4618
      %4620 = vmatmul.bf16.gmra.mxu0 %v4557
      %v4621 = vpop.f32.mrf.mxu0
      %v4622 = vadd.f32 0.0, %v4621
      %v4623 = vpop.f32.mrf.mxu0
      %v4624 = vadd.f32 0.0, %v4623
      %4625 = vmatmul.bf16.gmra.mxu0 %v4560
      %v4626 = vpop.f32.mrf.mxu0
      %v4627 = vadd.f32 0.0, %v4626
      %v4628 = vpop.f32.mrf.mxu0
      %v4629 = vadd.f32 0.0, %v4628
      %4630 = vmatmul.bf16.gmra.mxu0 %v4563
      %v4631 = vpop.f32.mrf.mxu0
      %v4632 = vadd.f32 0.0, %v4631
      %v4633 = vpop.f32.mrf.mxu0
      %v4634 = vadd.f32 0.0, %v4633
      %4635 = vmatmul.bf16.gmra.mxu0 %v4566
      %v4636 = vpop.f32.mrf.mxu0
      %v4637 = vadd.f32 0.0, %v4636
      %v4638 = vpop.f32.mrf.mxu0
      %v4639 = vadd.f32 0.0, %v4638
      %4640 = vmatmul.bf16.gmra.mxu0 %v4569
      %v4641 = vpop.f32.mrf.mxu0
      %v4642 = vadd.f32 0.0, %v4641
      %v4643 = vpop.f32.mrf.mxu0
      %v4644 = vadd.f32 0.0, %v4643
      %4645 = vmatmul.bf16.gmra.mxu0 %v4572
      %v4646 = vpop.f32.mrf.mxu0
      %v4647 = vadd.f32 0.0, %v4646
      %v4648 = vpop.f32.mrf.mxu0
      %v4649 = vadd.f32 0.0, %v4648
      %4650 = vmatmul.bf16.gmra.mxu0 %v4575
      %v4651 = vpop.f32.mrf.mxu0
      %v4652 = vadd.f32 0.0, %v4651
      %v4653 = vpop.f32.mrf.mxu0
      %v4654 = vadd.f32 0.0, %v4653
      %4655 = vmatmul.bf16.gmra.mxu0 %v4578
      %v4656 = vpop.f32.mrf.mxu0
      %v4657 = vadd.f32 0.0, %v4656
      %v4658 = vpop.f32.mrf.mxu0
      %v4659 = vadd.f32 0.0, %v4658
      %4660 = vmatmul.bf16.gmra.mxu0 %v4581
      %v4661 = vpop.f32.mrf.mxu0
      %v4662 = vadd.f32 0.0, %v4661
      %v4663 = vpop.f32.mrf.mxu0
      %v4664 = vadd.f32 0.0, %v4663
      %4665 = vmatmul.bf16.gmra.mxu0 %v4584
      %v4666 = vpop.f32.mrf.mxu0
      %v4667 = vadd.f32 0.0, %v4666
      %v4668 = vpop.f32.mrf.mxu0
      %v4669 = vadd.f32 0.0, %v4668
      %4670 = vmatmul.bf16.gmra.mxu0 %v4587
      %v4671 = vpop.f32.mrf.mxu0
      %v4672 = vadd.f32 0.0, %v4671
      %v4673 = vpop.f32.mrf.mxu0
      %v4674 = vadd.f32 0.0, %v4673
      %4675 = vmatmul.bf16.gmra.mxu0 %v4590
      %v4676 = vpop.f32.mrf.mxu0
      %v4677 = vadd.f32 0.0, %v4676
      %v4678 = vpop.f32.mrf.mxu0
      %v4679 = vadd.f32 0.0, %v4678
      %4680 = vdwg.mxu0
      %v4681 = vadd.f32 %v4399, %v4602
      %v4682 = vadd.f32 %v4400, %v4604
      %v4683 = vadd.f32 %v4401, %v4607
      %v4684 = vadd.f32 %v4402, %v4609
      %v4685 = vadd.f32 %v4403, %v4612
      %v4686 = vadd.f32 %v4404, %v4614
      %v4687 = vadd.f32 %v4405, %v4617
      %v4688 = vadd.f32 %v4406, %v4619
      %v4689 = vadd.f32 %v4407, %v4622
      %v4690 = vadd.f32 %v4408, %v4624
      %v4691 = vadd.f32 %v4409, %v4627
      %v4692 = vadd.f32 %v4410, %v4629
      %v4693 = vadd.f32 %v4411, %v4632
      %v4694 = vadd.f32 %v4412, %v4634
      %v4695 = vadd.f32 %v4413, %v4637
      %v4696 = vadd.f32 %v4414, %v4639
      %v4697 = vadd.f32 %v4415, %v4642
      %v4698 = vadd.f32 %v4416, %v4644
      %v4699 = vadd.f32 %v4417, %v4647
      %v4700 = vadd.f32 %v4418, %v4649
      %v4701 = vadd.f32 %v4419, %v4652
      %v4702 = vadd.f32 %v4420, %v4654
      %v4703 = vadd.f32 %v4421, %v4657
      %v4704 = vadd.f32 %v4422, %v4659
      %v4705 = vadd.f32 %v4423, %v4662
      %v4706 = vadd.f32 %v4424, %v4664
      %v4707 = vadd.f32 %v4425, %v4667
      %v4708 = vadd.f32 %v4426, %v4669
      %v4709 = vadd.f32 %v4427, %v4672
      %v4710 = vadd.f32 %v4428, %v4674
      %v4711 = vadd.f32 %v4429, %v4677
      %v4712 = vadd.f32 %v4430, %v4679
      %v4714 = vperm.slane %v1629, 0
      %v4716 = vadd.f32 %v4681, %v4714
      %v4717 = vadd.f32 %v4682, %v4714
      %v4718 = vadd.f32 %v4683, %v4714
      %v4719 = vadd.f32 %v4684, %v4714
      %v4720 = vadd.f32 %v4685, %v4714
      %v4721 = vadd.f32 %v4686, %v4714
      %v4722 = vadd.f32 %v4687, %v4714
      %v4723 = vadd.f32 %v4688, %v4714
      %v4724 = vadd.f32 %v4689, %v4714
      %v4725 = vadd.f32 %v4690, %v4714
      %v4726 = vadd.f32 %v4691, %v4714
      %v4727 = vadd.f32 %v4692, %v4714
      %v4728 = vadd.f32 %v4693, %v4714
      %v4729 = vadd.f32 %v4694, %v4714
      %v4730 = vadd.f32 %v4695, %v4714
      %v4731 = vadd.f32 %v4696, %v4714
      %v4732 = vadd.f32 %v4697, %v4714
      %v4733 = vadd.f32 %v4698, %v4714
      %v4734 = vadd.f32 %v4699, %v4714
      %v4735 = vadd.f32 %v4700, %v4714
      %v4736 = vadd.f32 %v4701, %v4714
      %v4737 = vadd.f32 %v4702, %v4714
      %v4738 = vadd.f32 %v4703, %v4714
      %v4739 = vadd.f32 %v4704, %v4714
      %v4740 = vadd.f32 %v4705, %v4714
      %v4741 = vadd.f32 %v4706, %v4714
      %v4742 = vadd.f32 %v4707, %v4714
      %v4743 = vadd.f32 %v4708, %v4714
      %v4744 = vadd.f32 %v4709, %v4714
      %v4745 = vadd.f32 %v4710, %v4714
      %v4746 = vadd.f32 %v4711, %v4714
      %v4747 = vadd.f32 %v4712, %v4714
      %v4748 = vmax.f32 %v4716, 0.0
      %v4749 = vmax.f32 %v4717, 0.0
      %v4750 = vmax.f32 %v4718, 0.0
      %v4751 = vmax.f32 %v4719, 0.0
      %v4752 = vmax.f32 %v4720, 0.0
      %v4753 = vmax.f32 %v4721, 0.0
      %v4754 = vmax.f32 %v4722, 0.0
      %v4755 = vmax.f32 %v4723, 0.0
      %v4756 = vmax.f32 %v4724, 0.0
      %v4757 = vmax.f32 %v4725, 0.0
      %v4758 = vmax.f32 %v4726, 0.0
      %v4759 = vmax.f32 %v4727, 0.0
      %v4760 = vmax.f32 %v4728, 0.0
      %v4761 = vmax.f32 %v4729, 0.0
      %v4762 = vmax.f32 %v4730, 0.0
      %v4763 = vmax.f32 %v4731, 0.0
      %v4764 = vmax.f32 %v4732, 0.0
      %v4765 = vmax.f32 %v4733, 0.0
      %v4766 = vmax.f32 %v4734, 0.0
      %v4767 = vmax.f32 %v4735, 0.0
      %v4768 = vmax.f32 %v4736, 0.0
      %v4769 = vmax.f32 %v4737, 0.0
      %v4770 = vmax.f32 %v4738, 0.0
      %v4771 = vmax.f32 %v4739, 0.0
      %v4772 = vmax.f32 %v4740, 0.0
      %v4773 = vmax.f32 %v4741, 0.0
      %v4774 = vmax.f32 %v4742, 0.0
      %v4775 = vmax.f32 %v4743, 0.0
      %v4776 = vmax.f32 %v4744, 0.0
      %v4777 = vmax.f32 %v4745, 0.0
      %v4778 = vmax.f32 %v4746, 0.0
      %v4779 = vmax.f32 %v4747, 0.0
      %v4780 = vld [vmem:[%s10] sm:$0x1]
      %4781 = vst.msk [vmem:[#allocation2 + $0x18] sm:$0xff] %vm522, %v4748
      %4782 = vst.msk [vmem:[#allocation2 + $0x20] sm:$0xff] %vm522, %v4749
      %4783 = vst.msk [vmem:[#allocation2 + $0x28] sm:$0xff] %vm522, %v4750
      %4784 = vst.msk [vmem:[#allocation2 + $0x30] sm:$0xff] %vm522, %v4751
      %4785 = vst.msk [vmem:[#allocation2 + $0x38] sm:$0xff] %vm522, %v4752
      %4786 = vst.msk [vmem:[#allocation2 + $0x40] sm:$0xff] %vm522, %v4753
      %4787 = vst.msk [vmem:[#allocation2 + $0x48] sm:$0xff] %vm522, %v4754
      %4788 = vst.msk [vmem:[#allocation2 + $0x50] sm:$0xff] %vm522, %v4755
      %4789 = vst.msk [vmem:[#allocation2 + $0x58] sm:$0xff] %vm522, %v4756
      %4790 = vst.msk [vmem:[#allocation2 + $0x60] sm:$0xff] %vm522, %v4757
      %4791 = vst.msk [vmem:[#allocation2 + $0x68] sm:$0xff] %vm522, %v4758
      %4792 = vst.msk [vmem:[#allocation2 + $0x70] sm:$0xff] %vm522, %v4759
      %4793 = vst.msk [vmem:[#allocation2 + $0x78] sm:$0xff] %vm522, %v4760
      %4794 = vst.msk [vmem:[#allocation2 + $0x80] sm:$0xff] %vm522, %v4761
      %4795 = vst.msk [vmem:[#allocation2 + $0x88] sm:$0xff] %vm522, %v4762
      %4796 = vst.msk [vmem:[#allocation2 + $0x90] sm:$0xff] %vm522, %v4763
      %4797 = vst.msk [vmem:[#allocation2 + $0x98] sm:$0xff] %vm522, %v4764
      %4798 = vst.msk [vmem:[#allocation2 + $0xa0] sm:$0xff] %vm522, %v4765
      %4799 = vst.msk [vmem:[#allocation2 + $0xa8] sm:$0xff] %vm522, %v4766
      %4800 = vst.msk [vmem:[#allocation2 + $0xb0] sm:$0xff] %vm522, %v4767
      %4801 = vst.msk [vmem:[#allocation2 + $0xb8] sm:$0xff] %vm522, %v4768
      %4802 = vst.msk [vmem:[#allocation2 + $0xc0] sm:$0xff] %vm522, %v4769
      %4803 = vst.msk [vmem:[#allocation2 + $0xc8] sm:$0xff] %vm522, %v4770
      %4804 = vst.msk [vmem:[#allocation2 + $0xd0] sm:$0xff] %vm522, %v4771
      %4805 = vst.msk [vmem:[#allocation2 + $0xd8] sm:$0xff] %vm522, %v4772
      %4806 = vst.msk [vmem:[#allocation2 + $0xe0] sm:$0xff] %vm522, %v4773
      %4807 = vst.msk [vmem:[#allocation2 + $0xe8] sm:$0xff] %vm522, %v4774
      %4808 = vst.msk [vmem:[#allocation2 + $0xf0] sm:$0xff] %vm522, %v4775
      %4809 = vst.msk [vmem:[#allocation2 + $0xf8] sm:$0xff] %vm522, %v4776
      %4810 = vst.msk [vmem:[#allocation2 + $0x100] sm:$0xff] %vm522, %v4777
      %4811 = vst.msk [vmem:[#allocation2 + $0x108] sm:$0xff] %vm522, %v4778
      %4812 = vst.msk [vmem:[#allocation2 + $0x110] sm:$0xff] %vm522, %v4779
      %v4813 = vld [vmem:[#allocation2 + $0x7] sm:$0xff]
      %v4814 = vld [vmem:[#allocation2 + $0xf] sm:$0xff]
      %v4815 = vld [vmem:[#allocation2 + $0x17] sm:$0xff]
      %v4816 = vld [vmem:[#allocation2 + $0x1f] sm:$0xff]
      %v4817 = vld [vmem:[#allocation2 + $0x27] sm:$0xff]
      %v4818 = vld [vmem:[#allocation2 + $0x2f] sm:$0xff]
      %v4819 = vld [vmem:[#allocation2 + $0x37] sm:$0xff]
      %v4820 = vld [vmem:[#allocation2 + $0x3f] sm:$0xff]
      %v4821 = vld [vmem:[#allocation2 + $0x47] sm:$0xff]
      %v4822 = vld [vmem:[#allocation2 + $0x4f] sm:$0xff]
      %v4823 = vld [vmem:[#allocation2 + $0x57] sm:$0xff]
      %v4824 = vld [vmem:[#allocation2 + $0x5f] sm:$0xff]
      %v4825 = vld [vmem:[#allocation2 + $0x67] sm:$0xff]
      %v4826 = vld [vmem:[#allocation2 + $0x6f] sm:$0xff]
      %v4827 = vld [vmem:[#allocation2 + $0x77] sm:$0xff]
      %v4828 = vld [vmem:[#allocation2 + $0x7f] sm:$0xff]
      %v4829 = vld [vmem:[#allocation2 + $0x87] sm:$0xff]
      %v4830 = vld [vmem:[#allocation2 + $0x8f] sm:$0xff]
      %v4831 = vld [vmem:[#allocation2 + $0x97] sm:$0xff]
      %v4832 = vld [vmem:[#allocation2 + $0x9f] sm:$0xff]
      %v4833 = vld [vmem:[#allocation2 + $0xa7] sm:$0xff]
      %v4834 = vld [vmem:[#allocation2 + $0xaf] sm:$0xff]
      %v4835 = vld [vmem:[#allocation2 + $0xb7] sm:$0xff]
      %v4836 = vld [vmem:[#allocation2 + $0xbf] sm:$0xff]
      %v4837 = vld [vmem:[#allocation2 + $0xc7] sm:$0xff]
      %v4838 = vld [vmem:[#allocation2 + $0xcf] sm:$0xff]
      %v4839 = vld [vmem:[#allocation2 + $0xd7] sm:$0xff]
      %v4840 = vld [vmem:[#allocation2 + $0xdf] sm:$0xff]
      %v4841 = vld [vmem:[#allocation2 + $0xe7] sm:$0xff]
      %v4842 = vld [vmem:[#allocation2 + $0xef] sm:$0xff]
      %v4843 = vld [vmem:[#allocation2 + $0xf7] sm:$0xff]
      %v4844 = vld [vmem:[#allocation2 + $0xff] sm:$0xff]
      %v4845 = vld [vmem:[%s6] sm:$0xff]
      %v4846 = vld [vmem:[%s6 + $0x8] sm:$0xff]
      %v4847 = vld [vmem:[%s6 + $0x10] sm:$0xff]
      %v4848 = vld [vmem:[%s6 + $0x18] sm:$0xff]
      %v4849 = vld [vmem:[%s6 + $0x20] sm:$0xff]
      %v4850 = vld [vmem:[%s6 + $0x28] sm:$0xff]
      %v4851 = vld [vmem:[%s6 + $0x30] sm:$0xff]
      %v4852 = vld [vmem:[%s6 + $0x38] sm:$0xff]
      %v4853 = vld [vmem:[%s6 + $0x40] sm:$0xff]
      %v4854 = vld [vmem:[%s6 + $0x48] sm:$0xff]
      %v4855 = vld [vmem:[%s6 + $0x50] sm:$0xff]
      %v4856 = vld [vmem:[%s6 + $0x58] sm:$0xff]
      %v4857 = vld [vmem:[%s6 + $0x60] sm:$0xff]
      %v4858 = vld [vmem:[%s6 + $0x68] sm:$0xff]
      %v4859 = vld [vmem:[%s6 + $0x70] sm:$0xff]
      %v4860 = vld [vmem:[%s6 + $0x78] sm:$0xff]
      %v4861 = vld [vmem:[%s6 + $0x80] sm:$0xff]
      %v4862 = vld [vmem:[%s6 + $0x88] sm:$0xff]
      %v4863 = vld [vmem:[%s6 + $0x90] sm:$0xff]
      %v4864 = vld [vmem:[%s6 + $0x98] sm:$0xff]
      %v4865 = vld [vmem:[%s6 + $0xa0] sm:$0xff]
      %v4866 = vld [vmem:[%s6 + $0xa8] sm:$0xff]
      %v4867 = vld [vmem:[%s6 + $0xb0] sm:$0xff]
      %v4868 = vld [vmem:[%s6 + $0xb8] sm:$0xff]
      %v4869 = vld [vmem:[%s6 + $0xc0] sm:$0xff]
      %v4870 = vld [vmem:[%s6 + $0xc8] sm:$0xff]
      %v4871 = vld [vmem:[%s6 + $0xd0] sm:$0xff]
      %v4872 = vld [vmem:[%s6 + $0xd8] sm:$0xff]
      %v4873 = vld [vmem:[%s6 + $0xe0] sm:$0xff]
      %v4874 = vld [vmem:[%s6 + $0xe8] sm:$0xff]
      %v4875 = vld [vmem:[%s6 + $0xf0] sm:$0xff]
      %v4876 = vld [vmem:[%s6 + $0xf8] sm:$0xff]
      %4878 = vset.pattern.permute.xlu0 0
      %4879 = vperm.xlu0 %4878, %v4845
      %v4880 = vpop.permute.xlu0 %4879
      %4883 = vset.pattern.permute.xlu0 0
      %4884 = vperm.xlu0 %4883, %v4846
      %v4885 = vpop.permute.xlu0 %4884
      %4888 = vset.pattern.permute.xlu0 0
      %4889 = vperm.xlu0 %4888, %v4847
      %v4890 = vpop.permute.xlu0 %4889
      %4893 = vset.pattern.permute.xlu0 0
      %4894 = vperm.xlu0 %4893, %v4848
      %v4895 = vpop.permute.xlu0 %4894
      %4898 = vset.pattern.permute.xlu0 0
      %4899 = vperm.xlu0 %4898, %v4849
      %v4900 = vpop.permute.xlu0 %4899
      %4903 = vset.pattern.permute.xlu0 0
      %4904 = vperm.xlu0 %4903, %v4850
      %v4905 = vpop.permute.xlu0 %4904
      %4908 = vset.pattern.permute.xlu0 0
      %4909 = vperm.xlu0 %4908, %v4851
      %v4910 = vpop.permute.xlu0 %4909
      %4913 = vset.pattern.permute.xlu0 0
      %4914 = vperm.xlu0 %4913, %v4852
      %v4915 = vpop.permute.xlu0 %4914
      %4918 = vset.pattern.permute.xlu0 0
      %4919 = vperm.xlu0 %4918, %v4853
      %v4920 = vpop.permute.xlu0 %4919
      %4923 = vset.pattern.permute.xlu0 0
      %4924 = vperm.xlu0 %4923, %v4854
      %v4925 = vpop.permute.xlu0 %4924
      %4928 = vset.pattern.permute.xlu0 0
      %4929 = vperm.xlu0 %4928, %v4855
      %v4930 = vpop.permute.xlu0 %4929
      %4933 = vset.pattern.permute.xlu0 0
      %4934 = vperm.xlu0 %4933, %v4856
      %v4935 = vpop.permute.xlu0 %4934
      %4938 = vset.pattern.permute.xlu0 0
      %4939 = vperm.xlu0 %4938, %v4857
      %v4940 = vpop.permute.xlu0 %4939
      %4943 = vset.pattern.permute.xlu0 0
      %4944 = vperm.xlu0 %4943, %v4858
      %v4945 = vpop.permute.xlu0 %4944
      %4948 = vset.pattern.permute.xlu0 0
      %4949 = vperm.xlu0 %4948, %v4859
      %v4950 = vpop.permute.xlu0 %4949
      %4953 = vset.pattern.permute.xlu0 0
      %4954 = vperm.xlu0 %4953, %v4860
      %v4955 = vpop.permute.xlu0 %4954
      %4958 = vset.pattern.permute.xlu0 0
      %4959 = vperm.xlu0 %4958, %v4861
      %v4960 = vpop.permute.xlu0 %4959
      %4963 = vset.pattern.permute.xlu0 0
      %4964 = vperm.xlu0 %4963, %v4862
      %v4965 = vpop.permute.xlu0 %4964
      %4968 = vset.pattern.permute.xlu0 0
      %4969 = vperm.xlu0 %4968, %v4863
      %v4970 = vpop.permute.xlu0 %4969
      %4973 = vset.pattern.permute.xlu0 0
      %4974 = vperm.xlu0 %4973, %v4864
      %v4975 = vpop.permute.xlu0 %4974
      %4978 = vset.pattern.permute.xlu0 0
      %4979 = vperm.xlu0 %4978, %v4865
      %v4980 = vpop.permute.xlu0 %4979
      %4983 = vset.pattern.permute.xlu0 0
      %4984 = vperm.xlu0 %4983, %v4866
      %v4985 = vpop.permute.xlu0 %4984
      %4988 = vset.pattern.permute.xlu0 0
      %4989 = vperm.xlu0 %4988, %v4867
      %v4990 = vpop.permute.xlu0 %4989
      %4993 = vset.pattern.permute.xlu0 0
      %4994 = vperm.xlu0 %4993, %v4868
      %v4995 = vpop.permute.xlu0 %4994
      %4998 = vset.pattern.permute.xlu0 0
      %4999 = vperm.xlu0 %4998, %v4869
      %v5000 = vpop.permute.xlu0 %4999
      %5003 = vset.pattern.permute.xlu0 0
      %5004 = vperm.xlu0 %5003, %v4870
      %v5005 = vpop.permute.xlu0 %5004
      %5008 = vset.pattern.permute.xlu0 0
      %5009 = vperm.xlu0 %5008, %v4871
      %v5010 = vpop.permute.xlu0 %5009
      %5013 = vset.pattern.permute.xlu0 0
      %5014 = vperm.xlu0 %5013, %v4872
      %v5015 = vpop.permute.xlu0 %5014
      %5018 = vset.pattern.permute.xlu0 0
      %5019 = vperm.xlu0 %5018, %v4873
      %v5020 = vpop.permute.xlu0 %5019
      %5023 = vset.pattern.permute.xlu0 0
      %5024 = vperm.xlu0 %5023, %v4874
      %v5025 = vpop.permute.xlu0 %5024
      %5028 = vset.pattern.permute.xlu0 0
      %5029 = vperm.xlu0 %5028, %v4875
      %v5030 = vpop.permute.xlu0 %5029
      %5033 = vset.pattern.permute.xlu0 0
      %5034 = vperm.xlu0 %5033, %v4876
      %v5035 = vpop.permute.xlu0 %5034
      %v5037 = vmul.f32 %v4813, %v4880
      %v5038 = vmul.f32 %v4814, %v4885
      %v5039 = vmul.f32 %v4815, %v4890
      %v5040 = vmul.f32 %v4816, %v4895
      %v5041 = vmul.f32 %v4817, %v4900
      %v5042 = vmul.f32 %v4818, %v4905
      %v5043 = vmul.f32 %v4819, %v4910
      %v5044 = vmul.f32 %v4820, %v4915
      %v5045 = vmul.f32 %v4821, %v4920
      %v5046 = vmul.f32 %v4822, %v4925
      %v5047 = vmul.f32 %v4823, %v4930
      %v5048 = vmul.f32 %v4824, %v4935
      %v5049 = vmul.f32 %v4825, %v4940
      %v5050 = vmul.f32 %v4826, %v4945
      %v5051 = vmul.f32 %v4827, %v4950
      %v5052 = vmul.f32 %v4828, %v4955
      %v5053 = vmul.f32 %v4829, %v4960
      %v5054 = vmul.f32 %v4830, %v4965
      %v5055 = vmul.f32 %v4831, %v4970
      %v5056 = vmul.f32 %v4832, %v4975
      %v5057 = vmul.f32 %v4833, %v4980
      %v5058 = vmul.f32 %v4834, %v4985
      %v5059 = vmul.f32 %v4835, %v4990
      %v5060 = vmul.f32 %v4836, %v4995
      %v5061 = vmul.f32 %v4837, %v5000
      %v5062 = vmul.f32 %v4838, %v5005
      %v5063 = vmul.f32 %v4839, %v5010
      %v5064 = vmul.f32 %v4840, %v5015
      %v5065 = vmul.f32 %v4841, %v5020
      %v5066 = vmul.f32 %v4842, %v5025
      %v5067 = vmul.f32 %v4843, %v5030
      %v5068 = vmul.f32 %v4844, %v5035
      %v5069 = vpack.c.bf16 %v5038, %v5037
      %v5070 = vpack.c.bf16 %v5040, %v5039
      %v5071 = vpack.c.bf16 %v5042, %v5041
      %v5072 = vpack.c.bf16 %v5044, %v5043
      %v5073 = vpack.c.bf16 %v5046, %v5045
      %v5074 = vpack.c.bf16 %v5048, %v5047
      %v5075 = vpack.c.bf16 %v5050, %v5049
      %v5076 = vpack.c.bf16 %v5052, %v5051
      %v5077 = vpack.c.bf16 %v5054, %v5053
      %v5078 = vpack.c.bf16 %v5056, %v5055
      %v5079 = vpack.c.bf16 %v5058, %v5057
      %v5080 = vpack.c.bf16 %v5060, %v5059
      %v5081 = vpack.c.bf16 %v5062, %v5061
      %v5082 = vpack.c.bf16 %v5064, %v5063
      %v5083 = vpack.c.bf16 %v5066, %v5065
      %v5084 = vpack.c.bf16 %v5068, %v5067
      %v5085 = vld [vmem:[%s9] sm:$0xf]
      %v5086 = vld [vmem:[%s9 + $0x4] sm:$0xf]
      %v5087 = vld [vmem:[%s9 + $0x8] sm:$0xf]
      %v5088 = vld [vmem:[%s9 + $0xc] sm:$0xf]
      %v5089 = vld [vmem:[#allocation2 + $0x8] sm:$0xff]
      %v5090 = vld [vmem:[#allocation2 + $0x10] sm:$0xff]
      %v5091 = vld [vmem:[#allocation2 + $0x18] sm:$0xff]
      %v5092 = vld [vmem:[#allocation2 + $0x20] sm:$0xff]
      %v5093 = vld [vmem:[#allocation2 + $0x28] sm:$0xff]
      %v5094 = vld [vmem:[#allocation2 + $0x30] sm:$0xff]
      %v5095 = vld [vmem:[#allocation2 + $0x38] sm:$0xff]
      %v5096 = vld [vmem:[#allocation2 + $0x40] sm:$0xff]
      %v5097 = vld [vmem:[#allocation2 + $0x48] sm:$0xff]
      %v5098 = vld [vmem:[#allocation2 + $0x50] sm:$0xff]
      %v5099 = vld [vmem:[#allocation2 + $0x58] sm:$0xff]
      %v5100 = vld [vmem:[#allocation2 + $0x60] sm:$0xff]
      %v5101 = vld [vmem:[#allocation2 + $0x68] sm:$0xff]
      %v5102 = vld [vmem:[#allocation2 + $0x70] sm:$0xff]
      %v5103 = vld [vmem:[#allocation2 + $0x78] sm:$0xff]
      %v5104 = vld [vmem:[#allocation2 + $0x80] sm:$0xff]
      %v5105 = vld [vmem:[#allocation2 + $0x88] sm:$0xff]
      %v5106 = vld [vmem:[#allocation2 + $0x90] sm:$0xff]
      %v5107 = vld [vmem:[#allocation2 + $0x98] sm:$0xff]
      %v5108 = vld [vmem:[#allocation2 + $0xa0] sm:$0xff]
      %v5109 = vld [vmem:[#allocation2 + $0xa8] sm:$0xff]
      %v5110 = vld [vmem:[#allocation2 + $0xb0] sm:$0xff]
      %v5111 = vld [vmem:[#allocation2 + $0xb8] sm:$0xff]
      %v5112 = vld [vmem:[#allocation2 + $0xc0] sm:$0xff]
      %v5113 = vld [vmem:[#allocation2 + $0xc8] sm:$0xff]
      %v5114 = vld [vmem:[#allocation2 + $0xd0] sm:$0xff]
      %v5115 = vld [vmem:[#allocation2 + $0xd8] sm:$0xff]
      %v5116 = vld [vmem:[#allocation2 + $0xe0] sm:$0xff]
      %v5117 = vld [vmem:[#allocation2 + $0xe8] sm:$0xff]
      %v5118 = vld [vmem:[#allocation2 + $0xf0] sm:$0xff]
      %v5119 = vld [vmem:[#allocation2 + $0xf8] sm:$0xff]
      %v5120 = vld [vmem:[#allocation2 + $0x100] sm:$0xff]
      %v5121 = vld [vmem:[%s1974] sm:$0xff]
      %v5122 = vld [vmem:[%s1974 + $0x8] sm:$0xff]
      %v5123 = vld [vmem:[%s1974 + $0x10] sm:$0xff]
      %v5124 = vld [vmem:[%s1974 + $0x18] sm:$0xff]
      %v5125 = vld [vmem:[%s1974 + $0x20] sm:$0xff]
      %v5126 = vld [vmem:[%s1974 + $0x28] sm:$0xff]
      %v5127 = vld [vmem:[%s1974 + $0x30] sm:$0xff]
      %v5128 = vld [vmem:[%s1974 + $0x38] sm:$0xff]
      %v5129 = vld [vmem:[%s1974 + $0x40] sm:$0xff]
      %v5130 = vld [vmem:[%s1974 + $0x48] sm:$0xff]
      %v5131 = vld [vmem:[%s1974 + $0x50] sm:$0xff]
      %v5132 = vld [vmem:[%s1974 + $0x58] sm:$0xff]
      %v5133 = vld [vmem:[%s1974 + $0x60] sm:$0xff]
      %v5134 = vld [vmem:[%s1974 + $0x68] sm:$0xff]
      %v5135 = vld [vmem:[%s1974 + $0x70] sm:$0xff]
      %v5136 = vld [vmem:[%s1974 + $0x78] sm:$0xff]
      %v5137 = vld [vmem:[%s1974 + $0x80] sm:$0xff]
      %v5138 = vld [vmem:[%s1974 + $0x88] sm:$0xff]
      %v5139 = vld [vmem:[%s1974 + $0x90] sm:$0xff]
      %v5140 = vld [vmem:[%s1974 + $0x98] sm:$0xff]
      %v5141 = vld [vmem:[%s1974 + $0xa0] sm:$0xff]
      %v5142 = vld [vmem:[%s1974 + $0xa8] sm:$0xff]
      %v5143 = vld [vmem:[%s1974 + $0xb0] sm:$0xff]
      %v5144 = vld [vmem:[%s1974 + $0xb8] sm:$0xff]
      %v5145 = vld [vmem:[%s1974 + $0xc0] sm:$0xff]
      %v5146 = vld [vmem:[%s1974 + $0xc8] sm:$0xff]
      %v5147 = vld [vmem:[%s1974 + $0xd0] sm:$0xff]
      %v5148 = vld [vmem:[%s1974 + $0xd8] sm:$0xff]
      %v5149 = vld [vmem:[%s1974 + $0xe0] sm:$0xff]
      %v5150 = vld [vmem:[%s1974 + $0xe8] sm:$0xff]
      %v5151 = vld [vmem:[%s1974 + $0xf0] sm:$0xff]
      %v5152 = vld [vmem:[%s1974 + $0xf8] sm:$0xff]
      %5154 = vset.pattern.permute.xlu0 0
      %5155 = vperm.xlu0 %5154, %v5121
      %v5156 = vpop.permute.xlu0 %5155
      %5159 = vset.pattern.permute.xlu0 0
      %5160 = vperm.xlu0 %5159, %v5122
      %v5161 = vpop.permute.xlu0 %5160
      %5164 = vset.pattern.permute.xlu0 0
      %5165 = vperm.xlu0 %5164, %v5123
      %v5166 = vpop.permute.xlu0 %5165
      %5169 = vset.pattern.permute.xlu0 0
      %5170 = vperm.xlu0 %5169, %v5124
      %v5171 = vpop.permute.xlu0 %5170
      %5174 = vset.pattern.permute.xlu0 0
      %5175 = vperm.xlu0 %5174, %v5125
      %v5176 = vpop.permute.xlu0 %5175
      %5179 = vset.pattern.permute.xlu0 0
      %5180 = vperm.xlu0 %5179, %v5126
      %v5181 = vpop.permute.xlu0 %5180
      %5184 = vset.pattern.permute.xlu0 0
      %5185 = vperm.xlu0 %5184, %v5127
      %v5186 = vpop.permute.xlu0 %5185
      %5189 = vset.pattern.permute.xlu0 0
      %5190 = vperm.xlu0 %5189, %v5128
      %v5191 = vpop.permute.xlu0 %5190
      %5194 = vset.pattern.permute.xlu0 0
      %5195 = vperm.xlu0 %5194, %v5129
      %v5196 = vpop.permute.xlu0 %5195
      %5199 = vset.pattern.permute.xlu0 0
      %5200 = vperm.xlu0 %5199, %v5130
      %v5201 = vpop.permute.xlu0 %5200
      %5204 = vset.pattern.permute.xlu0 0
      %5205 = vperm.xlu0 %5204, %v5131
      %v5206 = vpop.permute.xlu0 %5205
      %5209 = vset.pattern.permute.xlu0 0
      %5210 = vperm.xlu0 %5209, %v5132
      %v5211 = vpop.permute.xlu0 %5210
      %5214 = vset.pattern.permute.xlu0 0
      %5215 = vperm.xlu0 %5214, %v5133
      %v5216 = vpop.permute.xlu0 %5215
      %5219 = vset.pattern.permute.xlu0 0
      %5220 = vperm.xlu0 %5219, %v5134
      %v5221 = vpop.permute.xlu0 %5220
      %5224 = vset.pattern.permute.xlu0 0
      %5225 = vperm.xlu0 %5224, %v5135
      %v5226 = vpop.permute.xlu0 %5225
      %5229 = vset.pattern.permute.xlu0 0
      %5230 = vperm.xlu0 %5229, %v5136
      %v5231 = vpop.permute.xlu0 %5230
      %5234 = vset.pattern.permute.xlu0 0
      %5235 = vperm.xlu0 %5234, %v5137
      %v5236 = vpop.permute.xlu0 %5235
      %5239 = vset.pattern.permute.xlu0 0
      %5240 = vperm.xlu0 %5239, %v5138
      %v5241 = vpop.permute.xlu0 %5240
      %5244 = vset.pattern.permute.xlu0 0
      %5245 = vperm.xlu0 %5244, %v5139
      %v5246 = vpop.permute.xlu0 %5245
      %5249 = vset.pattern.permute.xlu0 0
      %5250 = vperm.xlu0 %5249, %v5140
      %v5251 = vpop.permute.xlu0 %5250
      %5254 = vset.pattern.permute.xlu0 0
      %5255 = vperm.xlu0 %5254, %v5141
      %v5256 = vpop.permute.xlu0 %5255
      %5259 = vset.pattern.permute.xlu0 0
      %5260 = vperm.xlu0 %5259, %v5142
      %v5261 = vpop.permute.xlu0 %5260
      %5264 = vset.pattern.permute.xlu0 0
      %5265 = vperm.xlu0 %5264, %v5143
      %v5266 = vpop.permute.xlu0 %5265
      %5269 = vset.pattern.permute.xlu0 0
      %5270 = vperm.xlu0 %5269, %v5144
      %v5271 = vpop.permute.xlu0 %5270
      %5274 = vset.pattern.permute.xlu0 0
      %5275 = vperm.xlu0 %5274, %v5145
      %v5276 = vpop.permute.xlu0 %5275
      %5279 = vset.pattern.permute.xlu0 0
      %5280 = vperm.xlu0 %5279, %v5146
      %v5281 = vpop.permute.xlu0 %5280
      %5284 = vset.pattern.permute.xlu0 0
      %5285 = vperm.xlu0 %5284, %v5147
      %v5286 = vpop.permute.xlu0 %5285
      %5289 = vset.pattern.permute.xlu0 0
      %5290 = vperm.xlu0 %5289, %v5148
      %v5291 = vpop.permute.xlu0 %5290
      %5294 = vset.pattern.permute.xlu0 0
      %5295 = vperm.xlu0 %5294, %v5149
      %v5296 = vpop.permute.xlu0 %5295
      %5299 = vset.pattern.permute.xlu0 0
      %5300 = vperm.xlu0 %5299, %v5150
      %v5301 = vpop.permute.xlu0 %5300
      %5304 = vset.pattern.permute.xlu0 0
      %5305 = vperm.xlu0 %5304, %v5151
      %v5306 = vpop.permute.xlu0 %5305
      %5309 = vset.pattern.permute.xlu0 0
      %5310 = vperm.xlu0 %5309, %v5152
      %v5311 = vpop.permute.xlu0 %5310
      %v5313 = vmul.f32 %v5089, %v5156
      %v5314 = vmul.f32 %v5090, %v5161
      %v5315 = vmul.f32 %v5091, %v5166
      %v5316 = vmul.f32 %v5092, %v5171
      %v5317 = vmul.f32 %v5093, %v5176
      %v5318 = vmul.f32 %v5094, %v5181
      %v5319 = vmul.f32 %v5095, %v5186
      %v5320 = vmul.f32 %v5096, %v5191
      %v5321 = vmul.f32 %v5097, %v5196
      %v5322 = vmul.f32 %v5098, %v5201
      %v5323 = vmul.f32 %v5099, %v5206
      %v5324 = vmul.f32 %v5100, %v5211
      %v5325 = vmul.f32 %v5101, %v5216
      %v5326 = vmul.f32 %v5102, %v5221
      %v5327 = vmul.f32 %v5103, %v5226
      %v5328 = vmul.f32 %v5104, %v5231
      %v5329 = vmul.f32 %v5105, %v5236
      %v5330 = vmul.f32 %v5106, %v5241
      %v5331 = vmul.f32 %v5107, %v5246
      %v5332 = vmul.f32 %v5108, %v5251
      %v5333 = vmul.f32 %v5109, %v5256
      %v5334 = vmul.f32 %v5110, %v5261
      %v5335 = vmul.f32 %v5111, %v5266
      %v5336 = vmul.f32 %v5112, %v5271
      %v5337 = vmul.f32 %v5113, %v5276
      %v5338 = vmul.f32 %v5114, %v5281
      %v5339 = vmul.f32 %v5115, %v5286
      %v5340 = vmul.f32 %v5116, %v5291
      %v5341 = vmul.f32 %v5117, %v5296
      %v5342 = vmul.f32 %v5118, %v5301
      %v5343 = vmul.f32 %v5119, %v5306
      %v5344 = vmul.f32 %v5120, %v5311
      %v5345 = vpack.c.bf16 %v5314, %v5313
      %v5346 = vpack.c.bf16 %v5316, %v5315
      %v5347 = vpack.c.bf16 %v5318, %v5317
      %v5348 = vpack.c.bf16 %v5320, %v5319
      %v5349 = vpack.c.bf16 %v5322, %v5321
      %v5350 = vpack.c.bf16 %v5324, %v5323
      %v5351 = vpack.c.bf16 %v5326, %v5325
      %v5352 = vpack.c.bf16 %v5328, %v5327
      %v5353 = vpack.c.bf16 %v5330, %v5329
      %v5354 = vpack.c.bf16 %v5332, %v5331
      %v5355 = vpack.c.bf16 %v5334, %v5333
      %v5356 = vpack.c.bf16 %v5336, %v5335
      %v5357 = vpack.c.bf16 %v5338, %v5337
      %v5358 = vpack.c.bf16 %v5340, %v5339
      %v5359 = vpack.c.bf16 %v5342, %v5341
      %v5360 = vpack.c.bf16 %v5344, %v5343
      %s5361 = scalar_lea.vmem %s9, 16
      %v5362 = vld [vmem:[%s5361] sm:$0xf]
      %v5363 = vld [vmem:[%s5361 + $0x4] sm:$0xf]
      %v5364 = vld [vmem:[%s5361 + $0x8] sm:$0xf]
      %v5365 = vld [vmem:[%s5361 + $0xc] sm:$0xf]
      %v5370 = vunpack.c.l.b16 %v5362
      %v5371 = vunpack.c.l.b16 %v5363
      %v5372 = vunpack.c.l.b16 %v5364
      %v5373 = vunpack.c.l.b16 %v5365
      %v5374 = vpack.c.b16 %v5371, %v5370
      %v5375 = vpack.c.b16 %v5373, %v5372
      %v5379 = vsel %vm522, %v5345, 0
      %v5382 = vsel %vm522, %v5346, 0
      %v5385 = vsel %vm522, %v5347, 0
      %v5388 = vsel %vm522, %v5348, 0
      %v5391 = vsel %vm522, %v5349, 0
      %v5394 = vsel %vm522, %v5350, 0
      %v5397 = vsel %vm522, %v5351, 0
      %v5400 = vsel %vm522, %v5352, 0
      %v5403 = vsel %vm522, %v5353, 0
      %v5406 = vsel %vm522, %v5354, 0
      %v5409 = vsel %vm522, %v5355, 0
      %v5412 = vsel %vm522, %v5356, 0
      %v5415 = vsel %vm522, %v5357, 0
      %v5418 = vsel %vm522, %v5358, 0
      %v5421 = vsel %vm522, %v5359, 0
      %v5424 = vsel %vm522, %v5360, 0
      %5426 = vmatpush.bf16.msra.mxu0 0
      %5427 = vmatpush.bf16.msra.mxu0 0
      %5428 = vmatpush.bf16.msra.mxu0 0
      %5429 = vmatpush.bf16.msra.mxu0 0
      %5430 = vmatpush.bf16.msra.mxu0 0
      %5431 = vmatpush.bf16.msra.mxu0 0
      %5432 = vmatpush.bf16.msra.mxu0 %v5375
      %5433 = vmatpush.bf16.msra.mxu0 %v5374
      %5434 = vmatmul.bf16.gmra.mxu0 %v5379
      %v5435 = vpop.f32.mrf.mxu0
      %v5436 = vadd.f32 0.0, %v5435
      %v5437 = vpop.f32.mrf.mxu0
      %v5438 = vadd.f32 0.0, %v5437
      %5439 = vmatmul.bf16.gmra.mxu0 %v5382
      %v5440 = vpop.f32.mrf.mxu0
      %v5441 = vadd.f32 0.0, %v5440
      %v5442 = vpop.f32.mrf.mxu0
      %v5443 = vadd.f32 0.0, %v5442
      %5444 = vmatmul.bf16.gmra.mxu0 %v5385
      %v5445 = vpop.f32.mrf.mxu0
      %v5446 = vadd.f32 0.0, %v5445
      %v5447 = vpop.f32.mrf.mxu0
      %v5448 = vadd.f32 0.0, %v5447
      %5449 = vmatmul.bf16.gmra.mxu0 %v5388
      %v5450 = vpop.f32.mrf.mxu0
      %v5451 = vadd.f32 0.0, %v5450
      %v5452 = vpop.f32.mrf.mxu0
      %v5453 = vadd.f32 0.0, %v5452
      %5454 = vmatmul.bf16.gmra.mxu0 %v5391
      %v5455 = vpop.f32.mrf.mxu0
      %v5456 = vadd.f32 0.0, %v5455
      %v5457 = vpop.f32.mrf.mxu0
      %v5458 = vadd.f32 0.0, %v5457
      %5459 = vmatmul.bf16.gmra.mxu0 %v5394
      %v5460 = vpop.f32.mrf.mxu0
      %v5461 = vadd.f32 0.0, %v5460
      %v5462 = vpop.f32.mrf.mxu0
      %v5463 = vadd.f32 0.0, %v5462
      %5464 = vmatmul.bf16.gmra.mxu0 %v5397
      %v5465 = vpop.f32.mrf.mxu0
      %v5466 = vadd.f32 0.0, %v5465
      %v5467 = vpop.f32.mrf.mxu0
      %v5468 = vadd.f32 0.0, %v5467
      %5469 = vmatmul.bf16.gmra.mxu0 %v5400
      %v5470 = vpop.f32.mrf.mxu0
      %v5471 = vadd.f32 0.0, %v5470
      %v5472 = vpop.f32.mrf.mxu0
      %v5473 = vadd.f32 0.0, %v5472
      %5474 = vmatmul.bf16.gmra.mxu0 %v5403
      %v5475 = vpop.f32.mrf.mxu0
      %v5476 = vadd.f32 0.0, %v5475
      %v5477 = vpop.f32.mrf.mxu0
      %v5478 = vadd.f32 0.0, %v5477
      %5479 = vmatmul.bf16.gmra.mxu0 %v5406
      %v5480 = vpop.f32.mrf.mxu0
      %v5481 = vadd.f32 0.0, %v5480
      %v5482 = vpop.f32.mrf.mxu0
      %v5483 = vadd.f32 0.0, %v5482
      %5484 = vmatmul.bf16.gmra.mxu0 %v5409
      %v5485 = vpop.f32.mrf.mxu0
      %v5486 = vadd.f32 0.0, %v5485
      %v5487 = vpop.f32.mrf.mxu0
      %v5488 = vadd.f32 0.0, %v5487
      %5489 = vmatmul.bf16.gmra.mxu0 %v5412
      %v5490 = vpop.f32.mrf.mxu0
      %v5491 = vadd.f32 0.0, %v5490
      %v5492 = vpop.f32.mrf.mxu0
      %v5493 = vadd.f32 0.0, %v5492
      %5494 = vmatmul.bf16.gmra.mxu0 %v5415
      %v5495 = vpop.f32.mrf.mxu0
      %v5496 = vadd.f32 0.0, %v5495
      %v5497 = vpop.f32.mrf.mxu0
      %v5498 = vadd.f32 0.0, %v5497
      %5499 = vmatmul.bf16.gmra.mxu0 %v5418
      %v5500 = vpop.f32.mrf.mxu0
      %v5501 = vadd.f32 0.0, %v5500
      %v5502 = vpop.f32.mrf.mxu0
      %v5503 = vadd.f32 0.0, %v5502
      %5504 = vmatmul.bf16.gmra.mxu0 %v5421
      %v5505 = vpop.f32.mrf.mxu0
      %v5506 = vadd.f32 0.0, %v5505
      %v5507 = vpop.f32.mrf.mxu0
      %v5508 = vadd.f32 0.0, %v5507
      %5509 = vmatmul.bf16.gmra.mxu0 %v5424
      %v5510 = vpop.f32.mrf.mxu0
      %v5511 = vadd.f32 0.0, %v5510
      %v5512 = vpop.f32.mrf.mxu0
      %v5513 = vadd.f32 0.0, %v5512
      %5514 = vdwg.mxu0
      %v5519 = vunpack.c.l.b16 %v5085
      %v5520 = vunpack.c.l.b16 %v5086
      %v5521 = vunpack.c.l.b16 %v5087
      %v5522 = vunpack.c.l.b16 %v5088
      %v5523 = vpack.c.b16 %v5520, %v5519
      %v5524 = vpack.c.b16 %v5522, %v5521
      %v5528 = vsel %vm522, %v5069, 0
      %v5531 = vsel %vm522, %v5070, 0
      %v5534 = vsel %vm522, %v5071, 0
      %v5537 = vsel %vm522, %v5072, 0
      %v5540 = vsel %vm522, %v5073, 0
      %v5543 = vsel %vm522, %v5074, 0
      %v5546 = vsel %vm522, %v5075, 0
      %v5549 = vsel %vm522, %v5076, 0
      %v5552 = vsel %vm522, %v5077, 0
      %v5555 = vsel %vm522, %v5078, 0
      %v5558 = vsel %vm522, %v5079, 0
      %v5561 = vsel %vm522, %v5080, 0
      %v5564 = vsel %vm522, %v5081, 0
      %v5567 = vsel %vm522, %v5082, 0
      %v5570 = vsel %vm522, %v5083, 0
      %v5573 = vsel %vm522, %v5084, 0
      %5575 = vmatpush.bf16.msra.mxu0 0
      %5576 = vmatpush.bf16.msra.mxu0 0
      %5577 = vmatpush.bf16.msra.mxu0 0
      %5578 = vmatpush.bf16.msra.mxu0 0
      %5579 = vmatpush.bf16.msra.mxu0 0
      %5580 = vmatpush.bf16.msra.mxu0 0
      %5581 = vmatpush.bf16.msra.mxu0 %v5524
      %5582 = vmatpush.bf16.msra.mxu0 %v5523
      %5583 = vmatmul.bf16.gmra.mxu0 %v5528
      %v5584 = vpop.f32.mrf.mxu0
      %v5585 = vadd.f32 %v5436, %v5584
      %v5586 = vpop.f32.mrf.mxu0
      %v5587 = vadd.f32 %v5438, %v5586
      %5588 = vmatmul.bf16.gmra.mxu0 %v5531
      %v5589 = vpop.f32.mrf.mxu0
      %v5590 = vadd.f32 %v5441, %v5589
      %v5591 = vpop.f32.mrf.mxu0
      %v5592 = vadd.f32 %v5443, %v5591
      %5593 = vmatmul.bf16.gmra.mxu0 %v5534
      %v5594 = vpop.f32.mrf.mxu0
      %v5595 = vadd.f32 %v5446, %v5594
      %v5596 = vpop.f32.mrf.mxu0
      %v5597 = vadd.f32 %v5448, %v5596
      %5598 = vmatmul.bf16.gmra.mxu0 %v5537
      %v5599 = vpop.f32.mrf.mxu0
      %v5600 = vadd.f32 %v5451, %v5599
      %v5601 = vpop.f32.mrf.mxu0
      %v5602 = vadd.f32 %v5453, %v5601
      %5603 = vmatmul.bf16.gmra.mxu0 %v5540
      %v5604 = vpop.f32.mrf.mxu0
      %v5605 = vadd.f32 %v5456, %v5604
      %v5606 = vpop.f32.mrf.mxu0
      %v5607 = vadd.f32 %v5458, %v5606
      %5608 = vmatmul.bf16.gmra.mxu0 %v5543
      %v5609 = vpop.f32.mrf.mxu0
      %v5610 = vadd.f32 %v5461, %v5609
      %v5611 = vpop.f32.mrf.mxu0
      %v5612 = vadd.f32 %v5463, %v5611
      %5613 = vmatmul.bf16.gmra.mxu0 %v5546
      %v5614 = vpop.f32.mrf.mxu0
      %v5615 = vadd.f32 %v5466, %v5614
      %v5616 = vpop.f32.mrf.mxu0
      %v5617 = vadd.f32 %v5468, %v5616
      %5618 = vmatmul.bf16.gmra.mxu0 %v5549
      %v5619 = vpop.f32.mrf.mxu0
      %v5620 = vadd.f32 %v5471, %v5619
      %v5621 = vpop.f32.mrf.mxu0
      %v5622 = vadd.f32 %v5473, %v5621
      %5623 = vmatmul.bf16.gmra.mxu0 %v5552
      %v5624 = vpop.f32.mrf.mxu0
      %v5625 = vadd.f32 %v5476, %v5624
      %v5626 = vpop.f32.mrf.mxu0
      %v5627 = vadd.f32 %v5478, %v5626
      %5628 = vmatmul.bf16.gmra.mxu0 %v5555
      %v5629 = vpop.f32.mrf.mxu0
      %v5630 = vadd.f32 %v5481, %v5629
      %v5631 = vpop.f32.mrf.mxu0
      %v5632 = vadd.f32 %v5483, %v5631
      %5633 = vmatmul.bf16.gmra.mxu0 %v5558
      %v5634 = vpop.f32.mrf.mxu0
      %v5635 = vadd.f32 %v5486, %v5634
      %v5636 = vpop.f32.mrf.mxu0
      %v5637 = vadd.f32 %v5488, %v5636
      %5638 = vmatmul.bf16.gmra.mxu0 %v5561
      %v5639 = vpop.f32.mrf.mxu0
      %v5640 = vadd.f32 %v5491, %v5639
      %v5641 = vpop.f32.mrf.mxu0
      %v5642 = vadd.f32 %v5493, %v5641
      %5643 = vmatmul.bf16.gmra.mxu0 %v5564
      %v5644 = vpop.f32.mrf.mxu0
      %v5645 = vadd.f32 %v5496, %v5644
      %v5646 = vpop.f32.mrf.mxu0
      %v5647 = vadd.f32 %v5498, %v5646
      %5648 = vmatmul.bf16.gmra.mxu0 %v5567
      %v5649 = vpop.f32.mrf.mxu0
      %v5650 = vadd.f32 %v5501, %v5649
      %v5651 = vpop.f32.mrf.mxu0
      %v5652 = vadd.f32 %v5503, %v5651
      %5653 = vmatmul.bf16.gmra.mxu0 %v5570
      %v5654 = vpop.f32.mrf.mxu0
      %v5655 = vadd.f32 %v5506, %v5654
      %v5656 = vpop.f32.mrf.mxu0
      %v5657 = vadd.f32 %v5508, %v5656
      %5658 = vmatmul.bf16.gmra.mxu0 %v5573
      %v5659 = vpop.f32.mrf.mxu0
      %v5660 = vadd.f32 %v5511, %v5659
      %v5661 = vpop.f32.mrf.mxu0
      %v5662 = vadd.f32 %v5513, %v5661
      %5663 = vdwg.mxu0
      %v5664 = vld [vmem:[#allocation2 + $0x9] sm:$0xff]
      %v5665 = vld [vmem:[#allocation2 + $0x11] sm:$0xff]
      %v5666 = vld [vmem:[#allocation2 + $0x19] sm:$0xff]
      %v5667 = vld [vmem:[#allocation2 + $0x21] sm:$0xff]
      %v5668 = vld [vmem:[#allocation2 + $0x29] sm:$0xff]
      %v5669 = vld [vmem:[#allocation2 + $0x31] sm:$0xff]
      %v5670 = vld [vmem:[#allocation2 + $0x39] sm:$0xff]
      %v5671 = vld [vmem:[#allocation2 + $0x41] sm:$0xff]
      %v5672 = vld [vmem:[#allocation2 + $0x49] sm:$0xff]
      %v5673 = vld [vmem:[#allocation2 + $0x51] sm:$0xff]
      %v5674 = vld [vmem:[#allocation2 + $0x59] sm:$0xff]
      %v5675 = vld [vmem:[#allocation2 + $0x61] sm:$0xff]
      %v5676 = vld [vmem:[#allocation2 + $0x69] sm:$0xff]
      %v5677 = vld [vmem:[#allocation2 + $0x71] sm:$0xff]
      %v5678 = vld [vmem:[#allocation2 + $0x79] sm:$0xff]
      %v5679 = vld [vmem:[#allocation2 + $0x81] sm:$0xff]
      %v5680 = vld [vmem:[#allocation2 + $0x89] sm:$0xff]
      %v5681 = vld [vmem:[#allocation2 + $0x91] sm:$0xff]
      %v5682 = vld [vmem:[#allocation2 + $0x99] sm:$0xff]
      %v5683 = vld [vmem:[#allocation2 + $0xa1] sm:$0xff]
      %v5684 = vld [vmem:[#allocation2 + $0xa9] sm:$0xff]
      %v5685 = vld [vmem:[#allocation2 + $0xb1] sm:$0xff]
      %v5686 = vld [vmem:[#allocation2 + $0xb9] sm:$0xff]
      %v5687 = vld [vmem:[#allocation2 + $0xc1] sm:$0xff]
      %v5688 = vld [vmem:[#allocation2 + $0xc9] sm:$0xff]
      %v5689 = vld [vmem:[#allocation2 + $0xd1] sm:$0xff]
      %v5690 = vld [vmem:[#allocation2 + $0xd9] sm:$0xff]
      %v5691 = vld [vmem:[#allocation2 + $0xe1] sm:$0xff]
      %v5692 = vld [vmem:[#allocation2 + $0xe9] sm:$0xff]
      %v5693 = vld [vmem:[#allocation2 + $0xf1] sm:$0xff]
      %v5694 = vld [vmem:[#allocation2 + $0xf9] sm:$0xff]
      %v5695 = vld [vmem:[#allocation2 + $0x101] sm:$0xff]
      %v5696 = vld [vmem:[%s2578] sm:$0xff]
      %v5697 = vld [vmem:[%s2578 + $0x8] sm:$0xff]
      %v5698 = vld [vmem:[%s2578 + $0x10] sm:$0xff]
      %v5699 = vld [vmem:[%s2578 + $0x18] sm:$0xff]
      %v5700 = vld [vmem:[%s2578 + $0x20] sm:$0xff]
      %v5701 = vld [vmem:[%s2578 + $0x28] sm:$0xff]
      %v5702 = vld [vmem:[%s2578 + $0x30] sm:$0xff]
      %v5703 = vld [vmem:[%s2578 + $0x38] sm:$0xff]
      %v5704 = vld [vmem:[%s2578 + $0x40] sm:$0xff]
      %v5705 = vld [vmem:[%s2578 + $0x48] sm:$0xff]
      %v5706 = vld [vmem:[%s2578 + $0x50] sm:$0xff]
      %v5707 = vld [vmem:[%s2578 + $0x58] sm:$0xff]
      %v5708 = vld [vmem:[%s2578 + $0x60] sm:$0xff]
      %v5709 = vld [vmem:[%s2578 + $0x68] sm:$0xff]
      %v5710 = vld [vmem:[%s2578 + $0x70] sm:$0xff]
      %v5711 = vld [vmem:[%s2578 + $0x78] sm:$0xff]
      %v5712 = vld [vmem:[%s2578 + $0x80] sm:$0xff]
      %v5713 = vld [vmem:[%s2578 + $0x88] sm:$0xff]
      %v5714 = vld [vmem:[%s2578 + $0x90] sm:$0xff]
      %v5715 = vld [vmem:[%s2578 + $0x98] sm:$0xff]
      %v5716 = vld [vmem:[%s2578 + $0xa0] sm:$0xff]
      %v5717 = vld [vmem:[%s2578 + $0xa8] sm:$0xff]
      %v5718 = vld [vmem:[%s2578 + $0xb0] sm:$0xff]
      %v5719 = vld [vmem:[%s2578 + $0xb8] sm:$0xff]
      %v5720 = vld [vmem:[%s2578 + $0xc0] sm:$0xff]
      %v5721 = vld [vmem:[%s2578 + $0xc8] sm:$0xff]
      %v5722 = vld [vmem:[%s2578 + $0xd0] sm:$0xff]
      %v5723 = vld [vmem:[%s2578 + $0xd8] sm:$0xff]
      %v5724 = vld [vmem:[%s2578 + $0xe0] sm:$0xff]
      %v5725 = vld [vmem:[%s2578 + $0xe8] sm:$0xff]
      %v5726 = vld [vmem:[%s2578 + $0xf0] sm:$0xff]
      %v5727 = vld [vmem:[%s2578 + $0xf8] sm:$0xff]
      %5729 = vset.pattern.permute.xlu0 0
      %5730 = vperm.xlu0 %5729, %v5696
      %v5731 = vpop.permute.xlu0 %5730
      %5734 = vset.pattern.permute.xlu0 0
      %5735 = vperm.xlu0 %5734, %v5697
      %v5736 = vpop.permute.xlu0 %5735
      %5739 = vset.pattern.permute.xlu0 0
      %5740 = vperm.xlu0 %5739, %v5698
      %v5741 = vpop.permute.xlu0 %5740
      %5744 = vset.pattern.permute.xlu0 0
      %5745 = vperm.xlu0 %5744, %v5699
      %v5746 = vpop.permute.xlu0 %5745
      %5749 = vset.pattern.permute.xlu0 0
      %5750 = vperm.xlu0 %5749, %v5700
      %v5751 = vpop.permute.xlu0 %5750
      %5754 = vset.pattern.permute.xlu0 0
      %5755 = vperm.xlu0 %5754, %v5701
      %v5756 = vpop.permute.xlu0 %5755
      %5759 = vset.pattern.permute.xlu0 0
      %5760 = vperm.xlu0 %5759, %v5702
      %v5761 = vpop.permute.xlu0 %5760
      %5764 = vset.pattern.permute.xlu0 0
      %5765 = vperm.xlu0 %5764, %v5703
      %v5766 = vpop.permute.xlu0 %5765
      %5769 = vset.pattern.permute.xlu0 0
      %5770 = vperm.xlu0 %5769, %v5704
      %v5771 = vpop.permute.xlu0 %5770
      %5774 = vset.pattern.permute.xlu0 0
      %5775 = vperm.xlu0 %5774, %v5705
      %v5776 = vpop.permute.xlu0 %5775
      %5779 = vset.pattern.permute.xlu0 0
      %5780 = vperm.xlu0 %5779, %v5706
      %v5781 = vpop.permute.xlu0 %5780
      %5784 = vset.pattern.permute.xlu0 0
      %5785 = vperm.xlu0 %5784, %v5707
      %v5786 = vpop.permute.xlu0 %5785
      %5789 = vset.pattern.permute.xlu0 0
      %5790 = vperm.xlu0 %5789, %v5708
      %v5791 = vpop.permute.xlu0 %5790
      %5794 = vset.pattern.permute.xlu0 0
      %5795 = vperm.xlu0 %5794, %v5709
      %v5796 = vpop.permute.xlu0 %5795
      %5799 = vset.pattern.permute.xlu0 0
      %5800 = vperm.xlu0 %5799, %v5710
      %v5801 = vpop.permute.xlu0 %5800
      %5804 = vset.pattern.permute.xlu0 0
      %5805 = vperm.xlu0 %5804, %v5711
      %v5806 = vpop.permute.xlu0 %5805
      %5809 = vset.pattern.permute.xlu0 0
      %5810 = vperm.xlu0 %5809, %v5712
      %v5811 = vpop.permute.xlu0 %5810
      %5814 = vset.pattern.permute.xlu0 0
      %5815 = vperm.xlu0 %5814, %v5713
      %v5816 = vpop.permute.xlu0 %5815
      %5819 = vset.pattern.permute.xlu0 0
      %5820 = vperm.xlu0 %5819, %v5714
      %v5821 = vpop.permute.xlu0 %5820
      %5824 = vset.pattern.permute.xlu0 0
      %5825 = vperm.xlu0 %5824, %v5715
      %v5826 = vpop.permute.xlu0 %5825
      %5829 = vset.pattern.permute.xlu0 0
      %5830 = vperm.xlu0 %5829, %v5716
      %v5831 = vpop.permute.xlu0 %5830
      %5834 = vset.pattern.permute.xlu0 0
      %5835 = vperm.xlu0 %5834, %v5717
      %v5836 = vpop.permute.xlu0 %5835
      %5839 = vset.pattern.permute.xlu0 0
      %5840 = vperm.xlu0 %5839, %v5718
      %v5841 = vpop.permute.xlu0 %5840
      %5844 = vset.pattern.permute.xlu0 0
      %5845 = vperm.xlu0 %5844, %v5719
      %v5846 = vpop.permute.xlu0 %5845
      %5849 = vset.pattern.permute.xlu0 0
      %5850 = vperm.xlu0 %5849, %v5720
      %v5851 = vpop.permute.xlu0 %5850
      %5854 = vset.pattern.permute.xlu0 0
      %5855 = vperm.xlu0 %5854, %v5721
      %v5856 = vpop.permute.xlu0 %5855
      %5859 = vset.pattern.permute.xlu0 0
      %5860 = vperm.xlu0 %5859, %v5722
      %v5861 = vpop.permute.xlu0 %5860
      %5864 = vset.pattern.permute.xlu0 0
      %5865 = vperm.xlu0 %5864, %v5723
      %v5866 = vpop.permute.xlu0 %5865
      %5869 = vset.pattern.permute.xlu0 0
      %5870 = vperm.xlu0 %5869, %v5724
      %v5871 = vpop.permute.xlu0 %5870
      %5874 = vset.pattern.permute.xlu0 0
      %5875 = vperm.xlu0 %5874, %v5725
      %v5876 = vpop.permute.xlu0 %5875
      %5879 = vset.pattern.permute.xlu0 0
      %5880 = vperm.xlu0 %5879, %v5726
      %v5881 = vpop.permute.xlu0 %5880
      %5884 = vset.pattern.permute.xlu0 0
      %5885 = vperm.xlu0 %5884, %v5727
      %v5886 = vpop.permute.xlu0 %5885
      %v5888 = vmul.f32 %v5664, %v5731
      %v5889 = vmul.f32 %v5665, %v5736
      %v5890 = vmul.f32 %v5666, %v5741
      %v5891 = vmul.f32 %v5667, %v5746
      %v5892 = vmul.f32 %v5668, %v5751
      %v5893 = vmul.f32 %v5669, %v5756
      %v5894 = vmul.f32 %v5670, %v5761
      %v5895 = vmul.f32 %v5671, %v5766
      %v5896 = vmul.f32 %v5672, %v5771
      %v5897 = vmul.f32 %v5673, %v5776
      %v5898 = vmul.f32 %v5674, %v5781
      %v5899 = vmul.f32 %v5675, %v5786
      %v5900 = vmul.f32 %v5676, %v5791
      %v5901 = vmul.f32 %v5677, %v5796
      %v5902 = vmul.f32 %v5678, %v5801
      %v5903 = vmul.f32 %v5679, %v5806
      %v5904 = vmul.f32 %v5680, %v5811
      %v5905 = vmul.f32 %v5681, %v5816
      %v5906 = vmul.f32 %v5682, %v5821
      %v5907 = vmul.f32 %v5683, %v5826
      %v5908 = vmul.f32 %v5684, %v5831
      %v5909 = vmul.f32 %v5685, %v5836
      %v5910 = vmul.f32 %v5686, %v5841
      %v5911 = vmul.f32 %v5687, %v5846
      %v5912 = vmul.f32 %v5688, %v5851
      %v5913 = vmul.f32 %v5689, %v5856
      %v5914 = vmul.f32 %v5690, %v5861
      %v5915 = vmul.f32 %v5691, %v5866
      %v5916 = vmul.f32 %v5692, %v5871
      %v5917 = vmul.f32 %v5693, %v5876
      %v5918 = vmul.f32 %v5694, %v5881
      %v5919 = vmul.f32 %v5695, %v5886
      %v5920 = vpack.c.bf16 %v5889, %v5888
      %v5921 = vpack.c.bf16 %v5891, %v5890
      %v5922 = vpack.c.bf16 %v5893, %v5892
      %v5923 = vpack.c.bf16 %v5895, %v5894
      %v5924 = vpack.c.bf16 %v5897, %v5896
      %v5925 = vpack.c.bf16 %v5899, %v5898
      %v5926 = vpack.c.bf16 %v5901, %v5900
      %v5927 = vpack.c.bf16 %v5903, %v5902
      %v5928 = vpack.c.bf16 %v5905, %v5904
      %v5929 = vpack.c.bf16 %v5907, %v5906
      %v5930 = vpack.c.bf16 %v5909, %v5908
      %v5931 = vpack.c.bf16 %v5911, %v5910
      %v5932 = vpack.c.bf16 %v5913, %v5912
      %v5933 = vpack.c.bf16 %v5915, %v5914
      %v5934 = vpack.c.bf16 %v5917, %v5916
      %v5935 = vpack.c.bf16 %v5919, %v5918
      %s5936 = scalar_lea.vmem %s9, 32
      %v5937 = vld [vmem:[%s5936] sm:$0xf]
      %v5938 = vld [vmem:[%s5936 + $0x4] sm:$0xf]
      %v5939 = vld [vmem:[%s5936 + $0x8] sm:$0xf]
      %v5940 = vld [vmem:[%s5936 + $0xc] sm:$0xf]
      %v5945 = vunpack.c.l.b16 %v5937
      %v5946 = vunpack.c.l.b16 %v5938
      %v5947 = vunpack.c.l.b16 %v5939
      %v5948 = vunpack.c.l.b16 %v5940
      %v5949 = vpack.c.b16 %v5946, %v5945
      %v5950 = vpack.c.b16 %v5948, %v5947
      %v5954 = vsel %vm522, %v5920, 0
      %v5957 = vsel %vm522, %v5921, 0
      %v5960 = vsel %vm522, %v5922, 0
      %v5963 = vsel %vm522, %v5923, 0
      %v5966 = vsel %vm522, %v5924, 0
      %v5969 = vsel %vm522, %v5925, 0
      %v5972 = vsel %vm522, %v5926, 0
      %v5975 = vsel %vm522, %v5927, 0
      %v5978 = vsel %vm522, %v5928, 0
      %v5981 = vsel %vm522, %v5929, 0
      %v5984 = vsel %vm522, %v5930, 0
      %v5987 = vsel %vm522, %v5931, 0
      %v5990 = vsel %vm522, %v5932, 0
      %v5993 = vsel %vm522, %v5933, 0
      %v5996 = vsel %vm522, %v5934, 0
      %v5999 = vsel %vm522, %v5935, 0
      %6001 = vmatpush.bf16.msra.mxu0 0
      %6002 = vmatpush.bf16.msra.mxu0 0
      %6003 = vmatpush.bf16.msra.mxu0 0
      %6004 = vmatpush.bf16.msra.mxu0 0
      %6005 = vmatpush.bf16.msra.mxu0 0
      %6006 = vmatpush.bf16.msra.mxu0 0
      %6007 = vmatpush.bf16.msra.mxu0 %v5950
      %6008 = vmatpush.bf16.msra.mxu0 %v5949
      %6009 = vmatmul.bf16.gmra.mxu0 %v5954
      %v6010 = vpop.f32.mrf.mxu0
      %v6011 = vadd.f32 0.0, %v6010
      %v6012 = vpop.f32.mrf.mxu0
      %v6013 = vadd.f32 0.0, %v6012
      %6014 = vmatmul.bf16.gmra.mxu0 %v5957
      %v6015 = vpop.f32.mrf.mxu0
      %v6016 = vadd.f32 0.0, %v6015
      %v6017 = vpop.f32.mrf.mxu0
      %v6018 = vadd.f32 0.0, %v6017
      %6019 = vmatmul.bf16.gmra.mxu0 %v5960
      %v6020 = vpop.f32.mrf.mxu0
      %v6021 = vadd.f32 0.0, %v6020
      %v6022 = vpop.f32.mrf.mxu0
      %v6023 = vadd.f32 0.0, %v6022
      %6024 = vmatmul.bf16.gmra.mxu0 %v5963
      %v6025 = vpop.f32.mrf.mxu0
      %v6026 = vadd.f32 0.0, %v6025
      %v6027 = vpop.f32.mrf.mxu0
      %v6028 = vadd.f32 0.0, %v6027
      %6029 = vmatmul.bf16.gmra.mxu0 %v5966
      %v6030 = vpop.f32.mrf.mxu0
      %v6031 = vadd.f32 0.0, %v6030
      %v6032 = vpop.f32.mrf.mxu0
      %v6033 = vadd.f32 0.0, %v6032
      %6034 = vmatmul.bf16.gmra.mxu0 %v5969
      %v6035 = vpop.f32.mrf.mxu0
      %v6036 = vadd.f32 0.0, %v6035
      %v6037 = vpop.f32.mrf.mxu0
      %v6038 = vadd.f32 0.0, %v6037
      %6039 = vmatmul.bf16.gmra.mxu0 %v5972
      %v6040 = vpop.f32.mrf.mxu0
      %v6041 = vadd.f32 0.0, %v6040
      %v6042 = vpop.f32.mrf.mxu0
      %v6043 = vadd.f32 0.0, %v6042
      %6044 = vmatmul.bf16.gmra.mxu0 %v5975
      %v6045 = vpop.f32.mrf.mxu0
      %v6046 = vadd.f32 0.0, %v6045
      %v6047 = vpop.f32.mrf.mxu0
      %v6048 = vadd.f32 0.0, %v6047
      %6049 = vmatmul.bf16.gmra.mxu0 %v5978
      %v6050 = vpop.f32.mrf.mxu0
      %v6051 = vadd.f32 0.0, %v6050
      %v6052 = vpop.f32.mrf.mxu0
      %v6053 = vadd.f32 0.0, %v6052
      %6054 = vmatmul.bf16.gmra.mxu0 %v5981
      %v6055 = vpop.f32.mrf.mxu0
      %v6056 = vadd.f32 0.0, %v6055
      %v6057 = vpop.f32.mrf.mxu0
      %v6058 = vadd.f32 0.0, %v6057
      %6059 = vmatmul.bf16.gmra.mxu0 %v5984
      %v6060 = vpop.f32.mrf.mxu0
      %v6061 = vadd.f32 0.0, %v6060
      %v6062 = vpop.f32.mrf.mxu0
      %v6063 = vadd.f32 0.0, %v6062
      %6064 = vmatmul.bf16.gmra.mxu0 %v5987
      %v6065 = vpop.f32.mrf.mxu0
      %v6066 = vadd.f32 0.0, %v6065
      %v6067 = vpop.f32.mrf.mxu0
      %v6068 = vadd.f32 0.0, %v6067
      %6069 = vmatmul.bf16.gmra.mxu0 %v5990
      %v6070 = vpop.f32.mrf.mxu0
      %v6071 = vadd.f32 0.0, %v6070
      %v6072 = vpop.f32.mrf.mxu0
      %v6073 = vadd.f32 0.0, %v6072
      %6074 = vmatmul.bf16.gmra.mxu0 %v5993
      %v6075 = vpop.f32.mrf.mxu0
      %v6076 = vadd.f32 0.0, %v6075
      %v6077 = vpop.f32.mrf.mxu0
      %v6078 = vadd.f32 0.0, %v6077
      %6079 = vmatmul.bf16.gmra.mxu0 %v5996
      %v6080 = vpop.f32.mrf.mxu0
      %v6081 = vadd.f32 0.0, %v6080
      %v6082 = vpop.f32.mrf.mxu0
      %v6083 = vadd.f32 0.0, %v6082
      %6084 = vmatmul.bf16.gmra.mxu0 %v5999
      %v6085 = vpop.f32.mrf.mxu0
      %v6086 = vadd.f32 0.0, %v6085
      %v6087 = vpop.f32.mrf.mxu0
      %v6088 = vadd.f32 0.0, %v6087
      %6089 = vdwg.mxu0
      %v6090 = vadd.f32 %v5585, %v6011
      %v6091 = vadd.f32 %v5587, %v6013
      %v6092 = vadd.f32 %v5590, %v6016
      %v6093 = vadd.f32 %v5592, %v6018
      %v6094 = vadd.f32 %v5595, %v6021
      %v6095 = vadd.f32 %v5597, %v6023
      %v6096 = vadd.f32 %v5600, %v6026
      %v6097 = vadd.f32 %v5602, %v6028
      %v6098 = vadd.f32 %v5605, %v6031
      %v6099 = vadd.f32 %v5607, %v6033
      %v6100 = vadd.f32 %v5610, %v6036
      %v6101 = vadd.f32 %v5612, %v6038
      %v6102 = vadd.f32 %v5615, %v6041
      %v6103 = vadd.f32 %v5617, %v6043
      %v6104 = vadd.f32 %v5620, %v6046
      %v6105 = vadd.f32 %v5622, %v6048
      %v6106 = vadd.f32 %v5625, %v6051
      %v6107 = vadd.f32 %v5627, %v6053
      %v6108 = vadd.f32 %v5630, %v6056
      %v6109 = vadd.f32 %v5632, %v6058
      %v6110 = vadd.f32 %v5635, %v6061
      %v6111 = vadd.f32 %v5637, %v6063
      %v6112 = vadd.f32 %v5640, %v6066
      %v6113 = vadd.f32 %v5642, %v6068
      %v6114 = vadd.f32 %v5645, %v6071
      %v6115 = vadd.f32 %v5647, %v6073
      %v6116 = vadd.f32 %v5650, %v6076
      %v6117 = vadd.f32 %v5652, %v6078
      %v6118 = vadd.f32 %v5655, %v6081
      %v6119 = vadd.f32 %v5657, %v6083
      %v6120 = vadd.f32 %v5660, %v6086
      %v6121 = vadd.f32 %v5662, %v6088
      %v6122 = vld [vmem:[#allocation2 + $0x17] sm:$0xff]
      %v6123 = vld [vmem:[#allocation2 + $0x1f] sm:$0xff]
      %v6124 = vld [vmem:[#allocation2 + $0x27] sm:$0xff]
      %v6125 = vld [vmem:[#allocation2 + $0x2f] sm:$0xff]
      %v6126 = vld [vmem:[#allocation2 + $0x37] sm:$0xff]
      %v6127 = vld [vmem:[#allocation2 + $0x3f] sm:$0xff]
      %v6128 = vld [vmem:[#allocation2 + $0x47] sm:$0xff]
      %v6129 = vld [vmem:[#allocation2 + $0x4f] sm:$0xff]
      %v6130 = vld [vmem:[#allocation2 + $0x57] sm:$0xff]
      %v6131 = vld [vmem:[#allocation2 + $0x5f] sm:$0xff]
      %v6132 = vld [vmem:[#allocation2 + $0x67] sm:$0xff]
      %v6133 = vld [vmem:[#allocation2 + $0x6f] sm:$0xff]
      %v6134 = vld [vmem:[#allocation2 + $0x77] sm:$0xff]
      %v6135 = vld [vmem:[#allocation2 + $0x7f] sm:$0xff]
      %v6136 = vld [vmem:[#allocation2 + $0x87] sm:$0xff]
      %v6137 = vld [vmem:[#allocation2 + $0x8f] sm:$0xff]
      %v6138 = vld [vmem:[#allocation2 + $0x97] sm:$0xff]
      %v6139 = vld [vmem:[#allocation2 + $0x9f] sm:$0xff]
      %v6140 = vld [vmem:[#allocation2 + $0xa7] sm:$0xff]
      %v6141 = vld [vmem:[#allocation2 + $0xaf] sm:$0xff]
      %v6142 = vld [vmem:[#allocation2 + $0xb7] sm:$0xff]
      %v6143 = vld [vmem:[#allocation2 + $0xbf] sm:$0xff]
      %v6144 = vld [vmem:[#allocation2 + $0xc7] sm:$0xff]
      %v6145 = vld [vmem:[#allocation2 + $0xcf] sm:$0xff]
      %v6146 = vld [vmem:[#allocation2 + $0xd7] sm:$0xff]
      %v6147 = vld [vmem:[#allocation2 + $0xdf] sm:$0xff]
      %v6148 = vld [vmem:[#allocation2 + $0xe7] sm:$0xff]
      %v6149 = vld [vmem:[#allocation2 + $0xef] sm:$0xff]
      %v6150 = vld [vmem:[#allocation2 + $0xf7] sm:$0xff]
      %v6151 = vld [vmem:[#allocation2 + $0xff] sm:$0xff]
      %v6152 = vld [vmem:[#allocation2 + $0x107] sm:$0xff]
      %v6153 = vld [vmem:[#allocation2 + $0x10f] sm:$0xff]
      %v6154 = vmul.f32 %v6122, %v4880
      %v6155 = vmul.f32 %v6123, %v4885
      %v6156 = vmul.f32 %v6124, %v4890
      %v6157 = vmul.f32 %v6125, %v4895
      %v6158 = vmul.f32 %v6126, %v4900
      %v6159 = vmul.f32 %v6127, %v4905
      %v6160 = vmul.f32 %v6128, %v4910
      %v6161 = vmul.f32 %v6129, %v4915
      %v6162 = vmul.f32 %v6130, %v4920
      %v6163 = vmul.f32 %v6131, %v4925
      %v6164 = vmul.f32 %v6132, %v4930
      %v6165 = vmul.f32 %v6133, %v4935
      %v6166 = vmul.f32 %v6134, %v4940
      %v6167 = vmul.f32 %v6135, %v4945
      %v6168 = vmul.f32 %v6136, %v4950
      %v6169 = vmul.f32 %v6137, %v4955
      %v6170 = vmul.f32 %v6138, %v4960
      %v6171 = vmul.f32 %v6139, %v4965
      %v6172 = vmul.f32 %v6140, %v4970
      %v6173 = vmul.f32 %v6141, %v4975
      %v6174 = vmul.f32 %v6142, %v4980
      %v6175 = vmul.f32 %v6143, %v4985
      %v6176 = vmul.f32 %v6144, %v4990
      %v6177 = vmul.f32 %v6145, %v4995
      %v6178 = vmul.f32 %v6146, %v5000
      %v6179 = vmul.f32 %v6147, %v5005
      %v6180 = vmul.f32 %v6148, %v5010
      %v6181 = vmul.f32 %v6149, %v5015
      %v6182 = vmul.f32 %v6150, %v5020
      %v6183 = vmul.f32 %v6151, %v5025
      %v6184 = vmul.f32 %v6152, %v5030
      %v6185 = vmul.f32 %v6153, %v5035
      %v6186 = vpack.c.bf16 %v6155, %v6154
      %v6187 = vpack.c.bf16 %v6157, %v6156
      %v6188 = vpack.c.bf16 %v6159, %v6158
      %v6189 = vpack.c.bf16 %v6161, %v6160
      %v6190 = vpack.c.bf16 %v6163, %v6162
      %v6191 = vpack.c.bf16 %v6165, %v6164
      %v6192 = vpack.c.bf16 %v6167, %v6166
      %v6193 = vpack.c.bf16 %v6169, %v6168
      %v6194 = vpack.c.bf16 %v6171, %v6170
      %v6195 = vpack.c.bf16 %v6173, %v6172
      %v6196 = vpack.c.bf16 %v6175, %v6174
      %v6197 = vpack.c.bf16 %v6177, %v6176
      %v6198 = vpack.c.bf16 %v6179, %v6178
      %v6199 = vpack.c.bf16 %v6181, %v6180
      %v6200 = vpack.c.bf16 %v6183, %v6182
      %v6201 = vpack.c.bf16 %v6185, %v6184
      %s6202 = scalar_lea.vmem %s9, 48
      %v6203 = vld [vmem:[%s6202] sm:$0xf]
      %v6204 = vld [vmem:[%s6202 + $0x4] sm:$0xf]
      %v6205 = vld [vmem:[%s6202 + $0x8] sm:$0xf]
      %v6206 = vld [vmem:[%s6202 + $0xc] sm:$0xf]
      %v6211 = vunpack.c.l.b16 %v6203
      %v6212 = vunpack.c.l.b16 %v6204
      %v6213 = vunpack.c.l.b16 %v6205
      %v6214 = vunpack.c.l.b16 %v6206
      %v6215 = vpack.c.b16 %v6212, %v6211
      %v6216 = vpack.c.b16 %v6214, %v6213
      %v6220 = vsel %vm522, %v6186, 0
      %v6223 = vsel %vm522, %v6187, 0
      %v6226 = vsel %vm522, %v6188, 0
      %v6229 = vsel %vm522, %v6189, 0
      %v6232 = vsel %vm522, %v6190, 0
      %v6235 = vsel %vm522, %v6191, 0
      %v6238 = vsel %vm522, %v6192, 0
      %v6241 = vsel %vm522, %v6193, 0
      %v6244 = vsel %vm522, %v6194, 0
      %v6247 = vsel %vm522, %v6195, 0
      %v6250 = vsel %vm522, %v6196, 0
      %v6253 = vsel %vm522, %v6197, 0
      %v6256 = vsel %vm522, %v6198, 0
      %v6259 = vsel %vm522, %v6199, 0
      %v6262 = vsel %vm522, %v6200, 0
      %v6265 = vsel %vm522, %v6201, 0
      %6267 = vmatpush.bf16.msra.mxu0 0
      %6268 = vmatpush.bf16.msra.mxu0 0
      %6269 = vmatpush.bf16.msra.mxu0 0
      %6270 = vmatpush.bf16.msra.mxu0 0
      %6271 = vmatpush.bf16.msra.mxu0 0
      %6272 = vmatpush.bf16.msra.mxu0 0
      %6273 = vmatpush.bf16.msra.mxu0 %v6216
      %6274 = vmatpush.bf16.msra.mxu0 %v6215
      %6275 = vmatmul.bf16.gmra.mxu0 %v6220
      %v6276 = vpop.f32.mrf.mxu0
      %v6277 = vadd.f32 0.0, %v6276
      %v6278 = vpop.f32.mrf.mxu0
      %v6279 = vadd.f32 0.0, %v6278
      %6280 = vmatmul.bf16.gmra.mxu0 %v6223
      %v6281 = vpop.f32.mrf.mxu0
      %v6282 = vadd.f32 0.0, %v6281
      %v6283 = vpop.f32.mrf.mxu0
      %v6284 = vadd.f32 0.0, %v6283
      %6285 = vmatmul.bf16.gmra.mxu0 %v6226
      %v6286 = vpop.f32.mrf.mxu0
      %v6287 = vadd.f32 0.0, %v6286
      %v6288 = vpop.f32.mrf.mxu0
      %v6289 = vadd.f32 0.0, %v6288
      %6290 = vmatmul.bf16.gmra.mxu0 %v6229
      %v6291 = vpop.f32.mrf.mxu0
      %v6292 = vadd.f32 0.0, %v6291
      %v6293 = vpop.f32.mrf.mxu0
      %v6294 = vadd.f32 0.0, %v6293
      %6295 = vmatmul.bf16.gmra.mxu0 %v6232
      %v6296 = vpop.f32.mrf.mxu0
      %v6297 = vadd.f32 0.0, %v6296
      %v6298 = vpop.f32.mrf.mxu0
      %v6299 = vadd.f32 0.0, %v6298
      %6300 = vmatmul.bf16.gmra.mxu0 %v6235
      %v6301 = vpop.f32.mrf.mxu0
      %v6302 = vadd.f32 0.0, %v6301
      %v6303 = vpop.f32.mrf.mxu0
      %v6304 = vadd.f32 0.0, %v6303
      %6305 = vmatmul.bf16.gmra.mxu0 %v6238
      %v6306 = vpop.f32.mrf.mxu0
      %v6307 = vadd.f32 0.0, %v6306
      %v6308 = vpop.f32.mrf.mxu0
      %v6309 = vadd.f32 0.0, %v6308
      %6310 = vmatmul.bf16.gmra.mxu0 %v6241
      %v6311 = vpop.f32.mrf.mxu0
      %v6312 = vadd.f32 0.0, %v6311
      %v6313 = vpop.f32.mrf.mxu0
      %v6314 = vadd.f32 0.0, %v6313
      %6315 = vmatmul.bf16.gmra.mxu0 %v6244
      %v6316 = vpop.f32.mrf.mxu0
      %v6317 = vadd.f32 0.0, %v6316
      %v6318 = vpop.f32.mrf.mxu0
      %v6319 = vadd.f32 0.0, %v6318
      %6320 = vmatmul.bf16.gmra.mxu0 %v6247
      %v6321 = vpop.f32.mrf.mxu0
      %v6322 = vadd.f32 0.0, %v6321
      %v6323 = vpop.f32.mrf.mxu0
      %v6324 = vadd.f32 0.0, %v6323
      %6325 = vmatmul.bf16.gmra.mxu0 %v6250
      %v6326 = vpop.f32.mrf.mxu0
      %v6327 = vadd.f32 0.0, %v6326
      %v6328 = vpop.f32.mrf.mxu0
      %v6329 = vadd.f32 0.0, %v6328
      %6330 = vmatmul.bf16.gmra.mxu0 %v6253
      %v6331 = vpop.f32.mrf.mxu0
      %v6332 = vadd.f32 0.0, %v6331
      %v6333 = vpop.f32.mrf.mxu0
      %v6334 = vadd.f32 0.0, %v6333
      %6335 = vmatmul.bf16.gmra.mxu0 %v6256
      %v6336 = vpop.f32.mrf.mxu0
      %v6337 = vadd.f32 0.0, %v6336
      %v6338 = vpop.f32.mrf.mxu0
      %v6339 = vadd.f32 0.0, %v6338
      %6340 = vmatmul.bf16.gmra.mxu0 %v6259
      %v6341 = vpop.f32.mrf.mxu0
      %v6342 = vadd.f32 0.0, %v6341
      %v6343 = vpop.f32.mrf.mxu0
      %v6344 = vadd.f32 0.0, %v6343
      %6345 = vmatmul.bf16.gmra.mxu0 %v6262
      %v6346 = vpop.f32.mrf.mxu0
      %v6347 = vadd.f32 0.0, %v6346
      %v6348 = vpop.f32.mrf.mxu0
      %v6349 = vadd.f32 0.0, %v6348
      %6350 = vmatmul.bf16.gmra.mxu0 %v6265
      %v6351 = vpop.f32.mrf.mxu0
      %v6352 = vadd.f32 0.0, %v6351
      %v6353 = vpop.f32.mrf.mxu0
      %v6354 = vadd.f32 0.0, %v6353
      %6355 = vdwg.mxu0
      %v6356 = vadd.f32 %v6090, %v6277
      %v6357 = vadd.f32 %v6091, %v6279
      %v6358 = vadd.f32 %v6092, %v6282
      %v6359 = vadd.f32 %v6093, %v6284
      %v6360 = vadd.f32 %v6094, %v6287
      %v6361 = vadd.f32 %v6095, %v6289
      %v6362 = vadd.f32 %v6096, %v6292
      %v6363 = vadd.f32 %v6097, %v6294
      %v6364 = vadd.f32 %v6098, %v6297
      %v6365 = vadd.f32 %v6099, %v6299
      %v6366 = vadd.f32 %v6100, %v6302
      %v6367 = vadd.f32 %v6101, %v6304
      %v6368 = vadd.f32 %v6102, %v6307
      %v6369 = vadd.f32 %v6103, %v6309
      %v6370 = vadd.f32 %v6104, %v6312
      %v6371 = vadd.f32 %v6105, %v6314
      %v6372 = vadd.f32 %v6106, %v6317
      %v6373 = vadd.f32 %v6107, %v6319
      %v6374 = vadd.f32 %v6108, %v6322
      %v6375 = vadd.f32 %v6109, %v6324
      %v6376 = vadd.f32 %v6110, %v6327
      %v6377 = vadd.f32 %v6111, %v6329
      %v6378 = vadd.f32 %v6112, %v6332
      %v6379 = vadd.f32 %v6113, %v6334
      %v6380 = vadd.f32 %v6114, %v6337
      %v6381 = vadd.f32 %v6115, %v6339
      %v6382 = vadd.f32 %v6116, %v6342
      %v6383 = vadd.f32 %v6117, %v6344
      %v6384 = vadd.f32 %v6118, %v6347
      %v6385 = vadd.f32 %v6119, %v6349
      %v6386 = vadd.f32 %v6120, %v6352
      %v6387 = vadd.f32 %v6121, %v6354
      %v6388 = vld [vmem:[#allocation2 + $0x18] sm:$0xff]
      %v6389 = vld [vmem:[#allocation2 + $0x20] sm:$0xff]
      %v6390 = vld [vmem:[#allocation2 + $0x28] sm:$0xff]
      %v6391 = vld [vmem:[#allocation2 + $0x30] sm:$0xff]
      %v6392 = vld [vmem:[#allocation2 + $0x38] sm:$0xff]
      %v6393 = vld [vmem:[#allocation2 + $0x40] sm:$0xff]
      %v6394 = vld [vmem:[#allocation2 + $0x48] sm:$0xff]
      %v6395 = vld [vmem:[#allocation2 + $0x50] sm:$0xff]
      %v6396 = vld [vmem:[#allocation2 + $0x58] sm:$0xff]
      %v6397 = vld [vmem:[#allocation2 + $0x60] sm:$0xff]
      %v6398 = vld [vmem:[#allocation2 + $0x68] sm:$0xff]
      %v6399 = vld [vmem:[#allocation2 + $0x70] sm:$0xff]
      %v6400 = vld [vmem:[#allocation2 + $0x78] sm:$0xff]
      %v6401 = vld [vmem:[#allocation2 + $0x80] sm:$0xff]
      %v6402 = vld [vmem:[#allocation2 + $0x88] sm:$0xff]
      %v6403 = vld [vmem:[#allocation2 + $0x90] sm:$0xff]
      %v6404 = vld [vmem:[#allocation2 + $0x98] sm:$0xff]
      %v6405 = vld [vmem:[#allocation2 + $0xa0] sm:$0xff]
      %v6406 = vld [vmem:[#allocation2 + $0xa8] sm:$0xff]
      %v6407 = vld [vmem:[#allocation2 + $0xb0] sm:$0xff]
      %v6408 = vld [vmem:[#allocation2 + $0xb8] sm:$0xff]
      %v6409 = vld [vmem:[#allocation2 + $0xc0] sm:$0xff]
      %v6410 = vld [vmem:[#allocation2 + $0xc8] sm:$0xff]
      %v6411 = vld [vmem:[#allocation2 + $0xd0] sm:$0xff]
      %v6412 = vld [vmem:[#allocation2 + $0xd8] sm:$0xff]
      %v6413 = vld [vmem:[#allocation2 + $0xe0] sm:$0xff]
      %v6414 = vld [vmem:[#allocation2 + $0xe8] sm:$0xff]
      %v6415 = vld [vmem:[#allocation2 + $0xf0] sm:$0xff]
      %v6416 = vld [vmem:[#allocation2 + $0xf8] sm:$0xff]
      %v6417 = vld [vmem:[#allocation2 + $0x100] sm:$0xff]
      %v6418 = vld [vmem:[#allocation2 + $0x108] sm:$0xff]
      %v6419 = vld [vmem:[#allocation2 + $0x110] sm:$0xff]
      %v6420 = vmul.f32 %v6388, %v5156
      %v6421 = vmul.f32 %v6389, %v5161
      %v6422 = vmul.f32 %v6390, %v5166
      %v6423 = vmul.f32 %v6391, %v5171
      %v6424 = vmul.f32 %v6392, %v5176
      %v6425 = vmul.f32 %v6393, %v5181
      %v6426 = vmul.f32 %v6394, %v5186
      %v6427 = vmul.f32 %v6395, %v5191
      %v6428 = vmul.f32 %v6396, %v5196
      %v6429 = vmul.f32 %v6397, %v5201
      %v6430 = vmul.f32 %v6398, %v5206
      %v6431 = vmul.f32 %v6399, %v5211
      %v6432 = vmul.f32 %v6400, %v5216
      %v6433 = vmul.f32 %v6401, %v5221
      %v6434 = vmul.f32 %v6402, %v5226
      %v6435 = vmul.f32 %v6403, %v5231
      %v6436 = vmul.f32 %v6404, %v5236
      %v6437 = vmul.f32 %v6405, %v5241
      %v6438 = vmul.f32 %v6406, %v5246
      %v6439 = vmul.f32 %v6407, %v5251
      %v6440 = vmul.f32 %v6408, %v5256
      %v6441 = vmul.f32 %v6409, %v5261
      %v6442 = vmul.f32 %v6410, %v5266
      %v6443 = vmul.f32 %v6411, %v5271
      %v6444 = vmul.f32 %v6412, %v5276
      %v6445 = vmul.f32 %v6413, %v5281
      %v6446 = vmul.f32 %v6414, %v5286
      %v6447 = vmul.f32 %v6415, %v5291
      %v6448 = vmul.f32 %v6416, %v5296
      %v6449 = vmul.f32 %v6417, %v5301
      %v6450 = vmul.f32 %v6418, %v5306
      %v6451 = vmul.f32 %v6419, %v5311
      %v6452 = vpack.c.bf16 %v6421, %v6420
      %v6453 = vpack.c.bf16 %v6423, %v6422
      %v6454 = vpack.c.bf16 %v6425, %v6424
      %v6455 = vpack.c.bf16 %v6427, %v6426
      %v6456 = vpack.c.bf16 %v6429, %v6428
      %v6457 = vpack.c.bf16 %v6431, %v6430
      %v6458 = vpack.c.bf16 %v6433, %v6432
      %v6459 = vpack.c.bf16 %v6435, %v6434
      %v6460 = vpack.c.bf16 %v6437, %v6436
      %v6461 = vpack.c.bf16 %v6439, %v6438
      %v6462 = vpack.c.bf16 %v6441, %v6440
      %v6463 = vpack.c.bf16 %v6443, %v6442
      %v6464 = vpack.c.bf16 %v6445, %v6444
      %v6465 = vpack.c.bf16 %v6447, %v6446
      %v6466 = vpack.c.bf16 %v6449, %v6448
      %v6467 = vpack.c.bf16 %v6451, %v6450
      %s6468 = scalar_lea.vmem %s9, 64
      %v6469 = vld [vmem:[%s6468] sm:$0xf]
      %v6470 = vld [vmem:[%s6468 + $0x4] sm:$0xf]
      %v6471 = vld [vmem:[%s6468 + $0x8] sm:$0xf]
      %v6472 = vld [vmem:[%s6468 + $0xc] sm:$0xf]
      %v6477 = vunpack.c.l.b16 %v6469
      %v6478 = vunpack.c.l.b16 %v6470
      %v6479 = vunpack.c.l.b16 %v6471
      %v6480 = vunpack.c.l.b16 %v6472
      %v6481 = vpack.c.b16 %v6478, %v6477
      %v6482 = vpack.c.b16 %v6480, %v6479
      %v6486 = vsel %vm522, %v6452, 0
      %v6489 = vsel %vm522, %v6453, 0
      %v6492 = vsel %vm522, %v6454, 0
      %v6495 = vsel %vm522, %v6455, 0
      %v6498 = vsel %vm522, %v6456, 0
      %v6501 = vsel %vm522, %v6457, 0
      %v6504 = vsel %vm522, %v6458, 0
      %v6507 = vsel %vm522, %v6459, 0
      %v6510 = vsel %vm522, %v6460, 0
      %v6513 = vsel %vm522, %v6461, 0
      %v6516 = vsel %vm522, %v6462, 0
      %v6519 = vsel %vm522, %v6463, 0
      %v6522 = vsel %vm522, %v6464, 0
      %v6525 = vsel %vm522, %v6465, 0
      %v6528 = vsel %vm522, %v6466, 0
      %v6531 = vsel %vm522, %v6467, 0
      %6533 = vmatpush.bf16.msra.mxu0 0
      %6534 = vmatpush.bf16.msra.mxu0 0
      %6535 = vmatpush.bf16.msra.mxu0 0
      %6536 = vmatpush.bf16.msra.mxu0 0
      %6537 = vmatpush.bf16.msra.mxu0 0
      %6538 = vmatpush.bf16.msra.mxu0 0
      %6539 = vmatpush.bf16.msra.mxu0 %v6482
      %6540 = vmatpush.bf16.msra.mxu0 %v6481
      %6541 = vmatmul.bf16.gmra.mxu0 %v6486
      %v6542 = vpop.f32.mrf.mxu0
      %v6543 = vadd.f32 0.0, %v6542
      %v6544 = vpop.f32.mrf.mxu0
      %v6545 = vadd.f32 0.0, %v6544
      %6546 = vmatmul.bf16.gmra.mxu0 %v6489
      %v6547 = vpop.f32.mrf.mxu0
      %v6548 = vadd.f32 0.0, %v6547
      %v6549 = vpop.f32.mrf.mxu0
      %v6550 = vadd.f32 0.0, %v6549
      %6551 = vmatmul.bf16.gmra.mxu0 %v6492
      %v6552 = vpop.f32.mrf.mxu0
      %v6553 = vadd.f32 0.0, %v6552
      %v6554 = vpop.f32.mrf.mxu0
      %v6555 = vadd.f32 0.0, %v6554
      %6556 = vmatmul.bf16.gmra.mxu0 %v6495
      %v6557 = vpop.f32.mrf.mxu0
      %v6558 = vadd.f32 0.0, %v6557
      %v6559 = vpop.f32.mrf.mxu0
      %v6560 = vadd.f32 0.0, %v6559
      %6561 = vmatmul.bf16.gmra.mxu0 %v6498
      %v6562 = vpop.f32.mrf.mxu0
      %v6563 = vadd.f32 0.0, %v6562
      %v6564 = vpop.f32.mrf.mxu0
      %v6565 = vadd.f32 0.0, %v6564
      %6566 = vmatmul.bf16.gmra.mxu0 %v6501
      %v6567 = vpop.f32.mrf.mxu0
      %v6568 = vadd.f32 0.0, %v6567
      %v6569 = vpop.f32.mrf.mxu0
      %v6570 = vadd.f32 0.0, %v6569
      %6571 = vmatmul.bf16.gmra.mxu0 %v6504
      %v6572 = vpop.f32.mrf.mxu0
      %v6573 = vadd.f32 0.0, %v6572
      %v6574 = vpop.f32.mrf.mxu0
      %v6575 = vadd.f32 0.0, %v6574
      %6576 = vmatmul.bf16.gmra.mxu0 %v6507
      %v6577 = vpop.f32.mrf.mxu0
      %v6578 = vadd.f32 0.0, %v6577
      %v6579 = vpop.f32.mrf.mxu0
      %v6580 = vadd.f32 0.0, %v6579
      %6581 = vmatmul.bf16.gmra.mxu0 %v6510
      %v6582 = vpop.f32.mrf.mxu0
      %v6583 = vadd.f32 0.0, %v6582
      %v6584 = vpop.f32.mrf.mxu0
      %v6585 = vadd.f32 0.0, %v6584
      %6586 = vmatmul.bf16.gmra.mxu0 %v6513
      %v6587 = vpop.f32.mrf.mxu0
      %v6588 = vadd.f32 0.0, %v6587
      %v6589 = vpop.f32.mrf.mxu0
      %v6590 = vadd.f32 0.0, %v6589
      %6591 = vmatmul.bf16.gmra.mxu0 %v6516
      %v6592 = vpop.f32.mrf.mxu0
      %v6593 = vadd.f32 0.0, %v6592
      %v6594 = vpop.f32.mrf.mxu0
      %v6595 = vadd.f32 0.0, %v6594
      %6596 = vmatmul.bf16.gmra.mxu0 %v6519
      %v6597 = vpop.f32.mrf.mxu0
      %v6598 = vadd.f32 0.0, %v6597
      %v6599 = vpop.f32.mrf.mxu0
      %v6600 = vadd.f32 0.0, %v6599
      %6601 = vmatmul.bf16.gmra.mxu0 %v6522
      %v6602 = vpop.f32.mrf.mxu0
      %v6603 = vadd.f32 0.0, %v6602
      %v6604 = vpop.f32.mrf.mxu0
      %v6605 = vadd.f32 0.0, %v6604
      %6606 = vmatmul.bf16.gmra.mxu0 %v6525
      %v6607 = vpop.f32.mrf.mxu0
      %v6608 = vadd.f32 0.0, %v6607
      %v6609 = vpop.f32.mrf.mxu0
      %v6610 = vadd.f32 0.0, %v6609
      %6611 = vmatmul.bf16.gmra.mxu0 %v6528
      %v6612 = vpop.f32.mrf.mxu0
      %v6613 = vadd.f32 0.0, %v6612
      %v6614 = vpop.f32.mrf.mxu0
      %v6615 = vadd.f32 0.0, %v6614
      %6616 = vmatmul.bf16.gmra.mxu0 %v6531
      %v6617 = vpop.f32.mrf.mxu0
      %v6618 = vadd.f32 0.0, %v6617
      %v6619 = vpop.f32.mrf.mxu0
      %v6620 = vadd.f32 0.0, %v6619
      %6621 = vdwg.mxu0
      %v6622 = vadd.f32 %v6356, %v6543
      %v6623 = vadd.f32 %v6357, %v6545
      %v6624 = vadd.f32 %v6358, %v6548
      %v6625 = vadd.f32 %v6359, %v6550
      %v6626 = vadd.f32 %v6360, %v6553
      %v6627 = vadd.f32 %v6361, %v6555
      %v6628 = vadd.f32 %v6362, %v6558
      %v6629 = vadd.f32 %v6363, %v6560
      %v6630 = vadd.f32 %v6364, %v6563
      %v6631 = vadd.f32 %v6365, %v6565
      %v6632 = vadd.f32 %v6366, %v6568
      %v6633 = vadd.f32 %v6367, %v6570
      %v6634 = vadd.f32 %v6368, %v6573
      %v6635 = vadd.f32 %v6369, %v6575
      %v6636 = vadd.f32 %v6370, %v6578
      %v6637 = vadd.f32 %v6371, %v6580
      %v6638 = vadd.f32 %v6372, %v6583
      %v6639 = vadd.f32 %v6373, %v6585
      %v6640 = vadd.f32 %v6374, %v6588
      %v6641 = vadd.f32 %v6375, %v6590
      %v6642 = vadd.f32 %v6376, %v6593
      %v6643 = vadd.f32 %v6377, %v6595
      %v6644 = vadd.f32 %v6378, %v6598
      %v6645 = vadd.f32 %v6379, %v6600
      %v6646 = vadd.f32 %v6380, %v6603
      %v6647 = vadd.f32 %v6381, %v6605
      %v6648 = vadd.f32 %v6382, %v6608
      %v6649 = vadd.f32 %v6383, %v6610
      %v6650 = vadd.f32 %v6384, %v6613
      %v6651 = vadd.f32 %v6385, %v6615
      %v6652 = vadd.f32 %v6386, %v6618
      %v6653 = vadd.f32 %v6387, %v6620
      %v6654 = vld [vmem:[#allocation2 + $0x19] sm:$0xff]
      %v6655 = vld [vmem:[#allocation2 + $0x21] sm:$0xff]
      %v6656 = vld [vmem:[#allocation2 + $0x29] sm:$0xff]
      %v6657 = vld [vmem:[#allocation2 + $0x31] sm:$0xff]
      %v6658 = vld [vmem:[#allocation2 + $0x39] sm:$0xff]
      %v6659 = vld [vmem:[#allocation2 + $0x41] sm:$0xff]
      %v6660 = vld [vmem:[#allocation2 + $0x49] sm:$0xff]
      %v6661 = vld [vmem:[#allocation2 + $0x51] sm:$0xff]
      %v6662 = vld [vmem:[#allocation2 + $0x59] sm:$0xff]
      %v6663 = vld [vmem:[#allocation2 + $0x61] sm:$0xff]
      %v6664 = vld [vmem:[#allocation2 + $0x69] sm:$0xff]
      %v6665 = vld [vmem:[#allocation2 + $0x71] sm:$0xff]
      %v6666 = vld [vmem:[#allocation2 + $0x79] sm:$0xff]
      %v6667 = vld [vmem:[#allocation2 + $0x81] sm:$0xff]
      %v6668 = vld [vmem:[#allocation2 + $0x89] sm:$0xff]
      %v6669 = vld [vmem:[#allocation2 + $0x91] sm:$0xff]
      %v6670 = vld [vmem:[#allocation2 + $0x99] sm:$0xff]
      %v6671 = vld [vmem:[#allocation2 + $0xa1] sm:$0xff]
      %v6672 = vld [vmem:[#allocation2 + $0xa9] sm:$0xff]
      %v6673 = vld [vmem:[#allocation2 + $0xb1] sm:$0xff]
      %v6674 = vld [vmem:[#allocation2 + $0xb9] sm:$0xff]
      %v6675 = vld [vmem:[#allocation2 + $0xc1] sm:$0xff]
      %v6676 = vld [vmem:[#allocation2 + $0xc9] sm:$0xff]
      %v6677 = vld [vmem:[#allocation2 + $0xd1] sm:$0xff]
      %v6678 = vld [vmem:[#allocation2 + $0xd9] sm:$0xff]
      %v6679 = vld [vmem:[#allocation2 + $0xe1] sm:$0xff]
      %v6680 = vld [vmem:[#allocation2 + $0xe9] sm:$0xff]
      %v6681 = vld [vmem:[#allocation2 + $0xf1] sm:$0xff]
      %v6682 = vld [vmem:[#allocation2 + $0xf9] sm:$0xff]
      %v6683 = vld [vmem:[#allocation2 + $0x101] sm:$0xff]
      %v6684 = vld [vmem:[#allocation2 + $0x109] sm:$0xff]
      %v6685 = vld [vmem:[#allocation2 + $0x111] sm:$0xff]
      %v6686 = vmul.f32 %v6654, %v5731
      %v6687 = vmul.f32 %v6655, %v5736
      %v6688 = vmul.f32 %v6656, %v5741
      %v6689 = vmul.f32 %v6657, %v5746
      %v6690 = vmul.f32 %v6658, %v5751
      %v6691 = vmul.f32 %v6659, %v5756
      %v6692 = vmul.f32 %v6660, %v5761
      %v6693 = vmul.f32 %v6661, %v5766
      %v6694 = vmul.f32 %v6662, %v5771
      %v6695 = vmul.f32 %v6663, %v5776
      %v6696 = vmul.f32 %v6664, %v5781
      %v6697 = vmul.f32 %v6665, %v5786
      %v6698 = vmul.f32 %v6666, %v5791
      %v6699 = vmul.f32 %v6667, %v5796
      %v6700 = vmul.f32 %v6668, %v5801
      %v6701 = vmul.f32 %v6669, %v5806
      %v6702 = vmul.f32 %v6670, %v5811
      %v6703 = vmul.f32 %v6671, %v5816
      %v6704 = vmul.f32 %v6672, %v5821
      %v6705 = vmul.f32 %v6673, %v5826
      %v6706 = vmul.f32 %v6674, %v5831
      %v6707 = vmul.f32 %v6675, %v5836
      %v6708 = vmul.f32 %v6676, %v5841
      %v6709 = vmul.f32 %v6677, %v5846
      %v6710 = vmul.f32 %v6678, %v5851
      %v6711 = vmul.f32 %v6679, %v5856
      %v6712 = vmul.f32 %v6680, %v5861
      %v6713 = vmul.f32 %v6681, %v5866
      %v6714 = vmul.f32 %v6682, %v5871
      %v6715 = vmul.f32 %v6683, %v5876
      %v6716 = vmul.f32 %v6684, %v5881
      %v6717 = vmul.f32 %v6685, %v5886
      %v6718 = vpack.c.bf16 %v6687, %v6686
      %v6719 = vpack.c.bf16 %v6689, %v6688
      %v6720 = vpack.c.bf16 %v6691, %v6690
      %v6721 = vpack.c.bf16 %v6693, %v6692
      %v6722 = vpack.c.bf16 %v6695, %v6694
      %v6723 = vpack.c.bf16 %v6697, %v6696
      %v6724 = vpack.c.bf16 %v6699, %v6698
      %v6725 = vpack.c.bf16 %v6701, %v6700
      %v6726 = vpack.c.bf16 %v6703, %v6702
      %v6727 = vpack.c.bf16 %v6705, %v6704
      %v6728 = vpack.c.bf16 %v6707, %v6706
      %v6729 = vpack.c.bf16 %v6709, %v6708
      %v6730 = vpack.c.bf16 %v6711, %v6710
      %v6731 = vpack.c.bf16 %v6713, %v6712
      %v6732 = vpack.c.bf16 %v6715, %v6714
      %v6733 = vpack.c.bf16 %v6717, %v6716
      %s6734 = scalar_lea.vmem %s9, 80
      %v6735 = vld [vmem:[%s6734] sm:$0xf]
      %v6736 = vld [vmem:[%s6734 + $0x4] sm:$0xf]
      %v6737 = vld [vmem:[%s6734 + $0x8] sm:$0xf]
      %v6738 = vld [vmem:[%s6734 + $0xc] sm:$0xf]
      %v6743 = vunpack.c.l.b16 %v6735
      %v6744 = vunpack.c.l.b16 %v6736
      %v6745 = vunpack.c.l.b16 %v6737
      %v6746 = vunpack.c.l.b16 %v6738
      %v6747 = vpack.c.b16 %v6744, %v6743
      %v6748 = vpack.c.b16 %v6746, %v6745
      %v6752 = vsel %vm522, %v6718, 0
      %v6755 = vsel %vm522, %v6719, 0
      %v6758 = vsel %vm522, %v6720, 0
      %v6761 = vsel %vm522, %v6721, 0
      %v6764 = vsel %vm522, %v6722, 0
      %v6767 = vsel %vm522, %v6723, 0
      %v6770 = vsel %vm522, %v6724, 0
      %v6773 = vsel %vm522, %v6725, 0
      %v6776 = vsel %vm522, %v6726, 0
      %v6779 = vsel %vm522, %v6727, 0
      %v6782 = vsel %vm522, %v6728, 0
      %v6785 = vsel %vm522, %v6729, 0
      %v6788 = vsel %vm522, %v6730, 0
      %v6791 = vsel %vm522, %v6731, 0
      %v6794 = vsel %vm522, %v6732, 0
      %v6797 = vsel %vm522, %v6733, 0
      %6799 = vmatpush.bf16.msra.mxu0 0
      %6800 = vmatpush.bf16.msra.mxu0 0
      %6801 = vmatpush.bf16.msra.mxu0 0
      %6802 = vmatpush.bf16.msra.mxu0 0
      %6803 = vmatpush.bf16.msra.mxu0 0
      %6804 = vmatpush.bf16.msra.mxu0 0
      %6805 = vmatpush.bf16.msra.mxu0 %v6748
      %6806 = vmatpush.bf16.msra.mxu0 %v6747
      %6807 = vmatmul.bf16.gmra.mxu0 %v6752
      %v6808 = vpop.f32.mrf.mxu0
      %v6809 = vadd.f32 0.0, %v6808
      %v6810 = vpop.f32.mrf.mxu0
      %v6811 = vadd.f32 0.0, %v6810
      %6812 = vmatmul.bf16.gmra.mxu0 %v6755
      %v6813 = vpop.f32.mrf.mxu0
      %v6814 = vadd.f32 0.0, %v6813
      %v6815 = vpop.f32.mrf.mxu0
      %v6816 = vadd.f32 0.0, %v6815
      %6817 = vmatmul.bf16.gmra.mxu0 %v6758
      %v6818 = vpop.f32.mrf.mxu0
      %v6819 = vadd.f32 0.0, %v6818
      %v6820 = vpop.f32.mrf.mxu0
      %v6821 = vadd.f32 0.0, %v6820
      %6822 = vmatmul.bf16.gmra.mxu0 %v6761
      %v6823 = vpop.f32.mrf.mxu0
      %v6824 = vadd.f32 0.0, %v6823
      %v6825 = vpop.f32.mrf.mxu0
      %v6826 = vadd.f32 0.0, %v6825
      %6827 = vmatmul.bf16.gmra.mxu0 %v6764
      %v6828 = vpop.f32.mrf.mxu0
      %v6829 = vadd.f32 0.0, %v6828
      %v6830 = vpop.f32.mrf.mxu0
      %v6831 = vadd.f32 0.0, %v6830
      %6832 = vmatmul.bf16.gmra.mxu0 %v6767
      %v6833 = vpop.f32.mrf.mxu0
      %v6834 = vadd.f32 0.0, %v6833
      %v6835 = vpop.f32.mrf.mxu0
      %v6836 = vadd.f32 0.0, %v6835
      %6837 = vmatmul.bf16.gmra.mxu0 %v6770
      %v6838 = vpop.f32.mrf.mxu0
      %v6839 = vadd.f32 0.0, %v6838
      %v6840 = vpop.f32.mrf.mxu0
      %v6841 = vadd.f32 0.0, %v6840
      %6842 = vmatmul.bf16.gmra.mxu0 %v6773
      %v6843 = vpop.f32.mrf.mxu0
      %v6844 = vadd.f32 0.0, %v6843
      %v6845 = vpop.f32.mrf.mxu0
      %v6846 = vadd.f32 0.0, %v6845
      %6847 = vmatmul.bf16.gmra.mxu0 %v6776
      %v6848 = vpop.f32.mrf.mxu0
      %v6849 = vadd.f32 0.0, %v6848
      %v6850 = vpop.f32.mrf.mxu0
      %v6851 = vadd.f32 0.0, %v6850
      %6852 = vmatmul.bf16.gmra.mxu0 %v6779
      %v6853 = vpop.f32.mrf.mxu0
      %v6854 = vadd.f32 0.0, %v6853
      %v6855 = vpop.f32.mrf.mxu0
      %v6856 = vadd.f32 0.0, %v6855
      %6857 = vmatmul.bf16.gmra.mxu0 %v6782
      %v6858 = vpop.f32.mrf.mxu0
      %v6859 = vadd.f32 0.0, %v6858
      %v6860 = vpop.f32.mrf.mxu0
      %v6861 = vadd.f32 0.0, %v6860
      %6862 = vmatmul.bf16.gmra.mxu0 %v6785
      %v6863 = vpop.f32.mrf.mxu0
      %v6864 = vadd.f32 0.0, %v6863
      %v6865 = vpop.f32.mrf.mxu0
      %v6866 = vadd.f32 0.0, %v6865
      %6867 = vmatmul.bf16.gmra.mxu0 %v6788
      %v6868 = vpop.f32.mrf.mxu0
      %v6869 = vadd.f32 0.0, %v6868
      %v6870 = vpop.f32.mrf.mxu0
      %v6871 = vadd.f32 0.0, %v6870
      %6872 = vmatmul.bf16.gmra.mxu0 %v6791
      %v6873 = vpop.f32.mrf.mxu0
      %v6874 = vadd.f32 0.0, %v6873
      %v6875 = vpop.f32.mrf.mxu0
      %v6876 = vadd.f32 0.0, %v6875
      %6877 = vmatmul.bf16.gmra.mxu0 %v6794
      %v6878 = vpop.f32.mrf.mxu0
      %v6879 = vadd.f32 0.0, %v6878
      %v6880 = vpop.f32.mrf.mxu0
      %v6881 = vadd.f32 0.0, %v6880
      %6882 = vmatmul.bf16.gmra.mxu0 %v6797
      %v6883 = vpop.f32.mrf.mxu0
      %v6884 = vadd.f32 0.0, %v6883
      %v6885 = vpop.f32.mrf.mxu0
      %v6886 = vadd.f32 0.0, %v6885
      %6887 = vdwg.mxu0
      %v6888 = vadd.f32 %v6622, %v6809
      %v6889 = vadd.f32 %v6623, %v6811
      %v6890 = vadd.f32 %v6624, %v6814
      %v6891 = vadd.f32 %v6625, %v6816
      %v6892 = vadd.f32 %v6626, %v6819
      %v6893 = vadd.f32 %v6627, %v6821
      %v6894 = vadd.f32 %v6628, %v6824
      %v6895 = vadd.f32 %v6629, %v6826
      %v6896 = vadd.f32 %v6630, %v6829
      %v6897 = vadd.f32 %v6631, %v6831
      %v6898 = vadd.f32 %v6632, %v6834
      %v6899 = vadd.f32 %v6633, %v6836
      %v6900 = vadd.f32 %v6634, %v6839
      %v6901 = vadd.f32 %v6635, %v6841
      %v6902 = vadd.f32 %v6636, %v6844
      %v6903 = vadd.f32 %v6637, %v6846
      %v6904 = vadd.f32 %v6638, %v6849
      %v6905 = vadd.f32 %v6639, %v6851
      %v6906 = vadd.f32 %v6640, %v6854
      %v6907 = vadd.f32 %v6641, %v6856
      %v6908 = vadd.f32 %v6642, %v6859
      %v6909 = vadd.f32 %v6643, %v6861
      %v6910 = vadd.f32 %v6644, %v6864
      %v6911 = vadd.f32 %v6645, %v6866
      %v6912 = vadd.f32 %v6646, %v6869
      %v6913 = vadd.f32 %v6647, %v6871
      %v6914 = vadd.f32 %v6648, %v6874
      %v6915 = vadd.f32 %v6649, %v6876
      %v6916 = vadd.f32 %v6650, %v6879
      %v6917 = vadd.f32 %v6651, %v6881
      %v6918 = vadd.f32 %v6652, %v6884
      %v6919 = vadd.f32 %v6653, %v6886
      %v6920 = vld [vmem:[#allocation2 + $0x27] sm:$0xff]
      %v6921 = vld [vmem:[#allocation2 + $0x2f] sm:$0xff]
      %v6922 = vld [vmem:[#allocation2 + $0x37] sm:$0xff]
      %v6923 = vld [vmem:[#allocation2 + $0x3f] sm:$0xff]
      %v6924 = vld [vmem:[#allocation2 + $0x47] sm:$0xff]
      %v6925 = vld [vmem:[#allocation2 + $0x4f] sm:$0xff]
      %v6926 = vld [vmem:[#allocation2 + $0x57] sm:$0xff]
      %v6927 = vld [vmem:[#allocation2 + $0x5f] sm:$0xff]
      %v6928 = vld [vmem:[#allocation2 + $0x67] sm:$0xff]
      %v6929 = vld [vmem:[#allocation2 + $0x6f] sm:$0xff]
      %v6930 = vld [vmem:[#allocation2 + $0x77] sm:$0xff]
      %v6931 = vld [vmem:[#allocation2 + $0x7f] sm:$0xff]
      %v6932 = vld [vmem:[#allocation2 + $0x87] sm:$0xff]
      %v6933 = vld [vmem:[#allocation2 + $0x8f] sm:$0xff]
      %v6934 = vld [vmem:[#allocation2 + $0x97] sm:$0xff]
      %v6935 = vld [vmem:[#allocation2 + $0x9f] sm:$0xff]
      %v6936 = vld [vmem:[#allocation2 + $0xa7] sm:$0xff]
      %v6937 = vld [vmem:[#allocation2 + $0xaf] sm:$0xff]
      %v6938 = vld [vmem:[#allocation2 + $0xb7] sm:$0xff]
      %v6939 = vld [vmem:[#allocation2 + $0xbf] sm:$0xff]
      %v6940 = vld [vmem:[#allocation2 + $0xc7] sm:$0xff]
      %v6941 = vld [vmem:[#allocation2 + $0xcf] sm:$0xff]
      %v6942 = vld [vmem:[#allocation2 + $0xd7] sm:$0xff]
      %v6943 = vld [vmem:[#allocation2 + $0xdf] sm:$0xff]
      %v6944 = vld [vmem:[#allocation2 + $0xe7] sm:$0xff]
      %v6945 = vld [vmem:[#allocation2 + $0xef] sm:$0xff]
      %v6946 = vld [vmem:[#allocation2 + $0xf7] sm:$0xff]
      %v6947 = vld [vmem:[#allocation2 + $0xff] sm:$0xff]
      %v6948 = vld [vmem:[#allocation2 + $0x107] sm:$0xff]
      %v6949 = vld [vmem:[#allocation2 + $0x10f] sm:$0xff]
      %v6950 = vld [vmem:[#allocation2 + $0x117] sm:$0xff]
      %v6951 = vld [vmem:[#allocation2 + $0x11f] sm:$0xff]
      %v6952 = vmul.f32 %v6920, %v4880
      %v6953 = vmul.f32 %v6921, %v4885
      %v6954 = vmul.f32 %v6922, %v4890
      %v6955 = vmul.f32 %v6923, %v4895
      %v6956 = vmul.f32 %v6924, %v4900
      %v6957 = vmul.f32 %v6925, %v4905
      %v6958 = vmul.f32 %v6926, %v4910
      %v6959 = vmul.f32 %v6927, %v4915
      %v6960 = vmul.f32 %v6928, %v4920
      %v6961 = vmul.f32 %v6929, %v4925
      %v6962 = vmul.f32 %v6930, %v4930
      %v6963 = vmul.f32 %v6931, %v4935
      %v6964 = vmul.f32 %v6932, %v4940
      %v6965 = vmul.f32 %v6933, %v4945
      %v6966 = vmul.f32 %v6934, %v4950
      %v6967 = vmul.f32 %v6935, %v4955
      %v6968 = vmul.f32 %v6936, %v4960
      %v6969 = vmul.f32 %v6937, %v4965
      %v6970 = vmul.f32 %v6938, %v4970
      %v6971 = vmul.f32 %v6939, %v4975
      %v6972 = vmul.f32 %v6940, %v4980
      %v6973 = vmul.f32 %v6941, %v4985
      %v6974 = vmul.f32 %v6942, %v4990
      %v6975 = vmul.f32 %v6943, %v4995
      %v6976 = vmul.f32 %v6944, %v5000
      %v6977 = vmul.f32 %v6945, %v5005
      %v6978 = vmul.f32 %v6946, %v5010
      %v6979 = vmul.f32 %v6947, %v5015
      %v6980 = vmul.f32 %v6948, %v5020
      %v6981 = vmul.f32 %v6949, %v5025
      %v6982 = vmul.f32 %v6950, %v5030
      %v6983 = vmul.f32 %v6951, %v5035
      %v6984 = vpack.c.bf16 %v6953, %v6952
      %v6985 = vpack.c.bf16 %v6955, %v6954
      %v6986 = vpack.c.bf16 %v6957, %v6956
      %v6987 = vpack.c.bf16 %v6959, %v6958
      %v6988 = vpack.c.bf16 %v6961, %v6960
      %v6989 = vpack.c.bf16 %v6963, %v6962
      %v6990 = vpack.c.bf16 %v6965, %v6964
      %v6991 = vpack.c.bf16 %v6967, %v6966
      %v6992 = vpack.c.bf16 %v6969, %v6968
      %v6993 = vpack.c.bf16 %v6971, %v6970
      %v6994 = vpack.c.bf16 %v6973, %v6972
      %v6995 = vpack.c.bf16 %v6975, %v6974
      %v6996 = vpack.c.bf16 %v6977, %v6976
      %v6997 = vpack.c.bf16 %v6979, %v6978
      %v6998 = vpack.c.bf16 %v6981, %v6980
      %v6999 = vpack.c.bf16 %v6983, %v6982
      %s7000 = scalar_lea.vmem %s9, 96
      %v7001 = vld [vmem:[%s7000] sm:$0xf]
      %v7002 = vld [vmem:[%s7000 + $0x4] sm:$0xf]
      %v7003 = vld [vmem:[%s7000 + $0x8] sm:$0xf]
      %v7004 = vld [vmem:[%s7000 + $0xc] sm:$0xf]
      %v7009 = vunpack.c.l.b16 %v7001
      %v7010 = vunpack.c.l.b16 %v7002
      %v7011 = vunpack.c.l.b16 %v7003
      %v7012 = vunpack.c.l.b16 %v7004
      %v7013 = vpack.c.b16 %v7010, %v7009
      %v7014 = vpack.c.b16 %v7012, %v7011
      %v7018 = vsel %vm522, %v6984, 0
      %v7021 = vsel %vm522, %v6985, 0
      %v7024 = vsel %vm522, %v6986, 0
      %v7027 = vsel %vm522, %v6987, 0
      %v7030 = vsel %vm522, %v6988, 0
      %v7033 = vsel %vm522, %v6989, 0
      %v7036 = vsel %vm522, %v6990, 0
      %v7039 = vsel %vm522, %v6991, 0
      %v7042 = vsel %vm522, %v6992, 0
      %v7045 = vsel %vm522, %v6993, 0
      %v7048 = vsel %vm522, %v6994, 0
      %v7051 = vsel %vm522, %v6995, 0
      %v7054 = vsel %vm522, %v6996, 0
      %v7057 = vsel %vm522, %v6997, 0
      %v7060 = vsel %vm522, %v6998, 0
      %v7063 = vsel %vm522, %v6999, 0
      %7065 = vmatpush.bf16.msra.mxu0 0
      %7066 = vmatpush.bf16.msra.mxu0 0
      %7067 = vmatpush.bf16.msra.mxu0 0
      %7068 = vmatpush.bf16.msra.mxu0 0
      %7069 = vmatpush.bf16.msra.mxu0 0
      %7070 = vmatpush.bf16.msra.mxu0 0
      %7071 = vmatpush.bf16.msra.mxu0 %v7014
      %7072 = vmatpush.bf16.msra.mxu0 %v7013
      %7073 = vmatmul.bf16.gmra.mxu0 %v7018
      %v7074 = vpop.f32.mrf.mxu0
      %v7075 = vadd.f32 0.0, %v7074
      %v7076 = vpop.f32.mrf.mxu0
      %v7077 = vadd.f32 0.0, %v7076
      %7078 = vmatmul.bf16.gmra.mxu0 %v7021
      %v7079 = vpop.f32.mrf.mxu0
      %v7080 = vadd.f32 0.0, %v7079
      %v7081 = vpop.f32.mrf.mxu0
      %v7082 = vadd.f32 0.0, %v7081
      %7083 = vmatmul.bf16.gmra.mxu0 %v7024
      %v7084 = vpop.f32.mrf.mxu0
      %v7085 = vadd.f32 0.0, %v7084
      %v7086 = vpop.f32.mrf.mxu0
      %v7087 = vadd.f32 0.0, %v7086
      %7088 = vmatmul.bf16.gmra.mxu0 %v7027
      %v7089 = vpop.f32.mrf.mxu0
      %v7090 = vadd.f32 0.0, %v7089
      %v7091 = vpop.f32.mrf.mxu0
      %v7092 = vadd.f32 0.0, %v7091
      %7093 = vmatmul.bf16.gmra.mxu0 %v7030
      %v7094 = vpop.f32.mrf.mxu0
      %v7095 = vadd.f32 0.0, %v7094
      %v7096 = vpop.f32.mrf.mxu0
      %v7097 = vadd.f32 0.0, %v7096
      %7098 = vmatmul.bf16.gmra.mxu0 %v7033
      %v7099 = vpop.f32.mrf.mxu0
      %v7100 = vadd.f32 0.0, %v7099
      %v7101 = vpop.f32.mrf.mxu0
      %v7102 = vadd.f32 0.0, %v7101
      %7103 = vmatmul.bf16.gmra.mxu0 %v7036
      %v7104 = vpop.f32.mrf.mxu0
      %v7105 = vadd.f32 0.0, %v7104
      %v7106 = vpop.f32.mrf.mxu0
      %v7107 = vadd.f32 0.0, %v7106
      %7108 = vmatmul.bf16.gmra.mxu0 %v7039
      %v7109 = vpop.f32.mrf.mxu0
      %v7110 = vadd.f32 0.0, %v7109
      %v7111 = vpop.f32.mrf.mxu0
      %v7112 = vadd.f32 0.0, %v7111
      %7113 = vmatmul.bf16.gmra.mxu0 %v7042
      %v7114 = vpop.f32.mrf.mxu0
      %v7115 = vadd.f32 0.0, %v7114
      %v7116 = vpop.f32.mrf.mxu0
      %v7117 = vadd.f32 0.0, %v7116
      %7118 = vmatmul.bf16.gmra.mxu0 %v7045
      %v7119 = vpop.f32.mrf.mxu0
      %v7120 = vadd.f32 0.0, %v7119
      %v7121 = vpop.f32.mrf.mxu0
      %v7122 = vadd.f32 0.0, %v7121
      %7123 = vmatmul.bf16.gmra.mxu0 %v7048
      %v7124 = vpop.f32.mrf.mxu0
      %v7125 = vadd.f32 0.0, %v7124
      %v7126 = vpop.f32.mrf.mxu0
      %v7127 = vadd.f32 0.0, %v7126
      %7128 = vmatmul.bf16.gmra.mxu0 %v7051
      %v7129 = vpop.f32.mrf.mxu0
      %v7130 = vadd.f32 0.0, %v7129
      %v7131 = vpop.f32.mrf.mxu0
      %v7132 = vadd.f32 0.0, %v7131
      %7133 = vmatmul.bf16.gmra.mxu0 %v7054
      %v7134 = vpop.f32.mrf.mxu0
      %v7135 = vadd.f32 0.0, %v7134
      %v7136 = vpop.f32.mrf.mxu0
      %v7137 = vadd.f32 0.0, %v7136
      %7138 = vmatmul.bf16.gmra.mxu0 %v7057
      %v7139 = vpop.f32.mrf.mxu0
      %v7140 = vadd.f32 0.0, %v7139
      %v7141 = vpop.f32.mrf.mxu0
      %v7142 = vadd.f32 0.0, %v7141
      %7143 = vmatmul.bf16.gmra.mxu0 %v7060
      %v7144 = vpop.f32.mrf.mxu0
      %v7145 = vadd.f32 0.0, %v7144
      %v7146 = vpop.f32.mrf.mxu0
      %v7147 = vadd.f32 0.0, %v7146
      %7148 = vmatmul.bf16.gmra.mxu0 %v7063
      %v7149 = vpop.f32.mrf.mxu0
      %v7150 = vadd.f32 0.0, %v7149
      %v7151 = vpop.f32.mrf.mxu0
      %v7152 = vadd.f32 0.0, %v7151
      %7153 = vdwg.mxu0
      %v7154 = vadd.f32 %v6888, %v7075
      %v7155 = vadd.f32 %v6889, %v7077
      %v7156 = vadd.f32 %v6890, %v7080
      %v7157 = vadd.f32 %v6891, %v7082
      %v7158 = vadd.f32 %v6892, %v7085
      %v7159 = vadd.f32 %v6893, %v7087
      %v7160 = vadd.f32 %v6894, %v7090
      %v7161 = vadd.f32 %v6895, %v7092
      %v7162 = vadd.f32 %v6896, %v7095
      %v7163 = vadd.f32 %v6897, %v7097
      %v7164 = vadd.f32 %v6898, %v7100
      %v7165 = vadd.f32 %v6899, %v7102
      %v7166 = vadd.f32 %v6900, %v7105
      %v7167 = vadd.f32 %v6901, %v7107
      %v7168 = vadd.f32 %v6902, %v7110
      %v7169 = vadd.f32 %v6903, %v7112
      %v7170 = vadd.f32 %v6904, %v7115
      %v7171 = vadd.f32 %v6905, %v7117
      %v7172 = vadd.f32 %v6906, %v7120
      %v7173 = vadd.f32 %v6907, %v7122
      %v7174 = vadd.f32 %v6908, %v7125
      %v7175 = vadd.f32 %v6909, %v7127
      %v7176 = vadd.f32 %v6910, %v7130
      %v7177 = vadd.f32 %v6911, %v7132
      %v7178 = vadd.f32 %v6912, %v7135
      %v7179 = vadd.f32 %v6913, %v7137
      %v7180 = vadd.f32 %v6914, %v7140
      %v7181 = vadd.f32 %v6915, %v7142
      %v7182 = vadd.f32 %v6916, %v7145
      %v7183 = vadd.f32 %v6917, %v7147
      %v7184 = vadd.f32 %v6918, %v7150
      %v7185 = vadd.f32 %v6919, %v7152
      %v7186 = vld [vmem:[#allocation2 + $0x28] sm:$0xff]
      %v7187 = vld [vmem:[#allocation2 + $0x30] sm:$0xff]
      %v7188 = vld [vmem:[#allocation2 + $0x38] sm:$0xff]
      %v7189 = vld [vmem:[#allocation2 + $0x40] sm:$0xff]
      %v7190 = vld [vmem:[#allocation2 + $0x48] sm:$0xff]
      %v7191 = vld [vmem:[#allocation2 + $0x50] sm:$0xff]
      %v7192 = vld [vmem:[#allocation2 + $0x58] sm:$0xff]
      %v7193 = vld [vmem:[#allocation2 + $0x60] sm:$0xff]
      %v7194 = vld [vmem:[#allocation2 + $0x68] sm:$0xff]
      %v7195 = vld [vmem:[#allocation2 + $0x70] sm:$0xff]
      %v7196 = vld [vmem:[#allocation2 + $0x78] sm:$0xff]
      %v7197 = vld [vmem:[#allocation2 + $0x80] sm:$0xff]
      %v7198 = vld [vmem:[#allocation2 + $0x88] sm:$0xff]
      %v7199 = vld [vmem:[#allocation2 + $0x90] sm:$0xff]
      %v7200 = vld [vmem:[#allocation2 + $0x98] sm:$0xff]
      %v7201 = vld [vmem:[#allocation2 + $0xa0] sm:$0xff]
      %v7202 = vld [vmem:[#allocation2 + $0xa8] sm:$0xff]
      %v7203 = vld [vmem:[#allocation2 + $0xb0] sm:$0xff]
      %v7204 = vld [vmem:[#allocation2 + $0xb8] sm:$0xff]
      %v7205 = vld [vmem:[#allocation2 + $0xc0] sm:$0xff]
      %v7206 = vld [vmem:[#allocation2 + $0xc8] sm:$0xff]
      %v7207 = vld [vmem:[#allocation2 + $0xd0] sm:$0xff]
      %v7208 = vld [vmem:[#allocation2 + $0xd8] sm:$0xff]
      %v7209 = vld [vmem:[#allocation2 + $0xe0] sm:$0xff]
      %v7210 = vld [vmem:[#allocation2 + $0xe8] sm:$0xff]
      %v7211 = vld [vmem:[#allocation2 + $0xf0] sm:$0xff]
      %v7212 = vld [vmem:[#allocation2 + $0xf8] sm:$0xff]
      %v7213 = vld [vmem:[#allocation2 + $0x100] sm:$0xff]
      %v7214 = vld [vmem:[#allocation2 + $0x108] sm:$0xff]
      %v7215 = vld [vmem:[#allocation2 + $0x110] sm:$0xff]
      %v7216 = vld [vmem:[#allocation2 + $0x118] sm:$0xff]
      %v7217 = vld [vmem:[#allocation2 + $0x120] sm:$0xff]
      %v7218 = vmul.f32 %v7186, %v5156
      %v7219 = vmul.f32 %v7187, %v5161
      %v7220 = vmul.f32 %v7188, %v5166
      %v7221 = vmul.f32 %v7189, %v5171
      %v7222 = vmul.f32 %v7190, %v5176
      %v7223 = vmul.f32 %v7191, %v5181
      %v7224 = vmul.f32 %v7192, %v5186
      %v7225 = vmul.f32 %v7193, %v5191
      %v7226 = vmul.f32 %v7194, %v5196
      %v7227 = vmul.f32 %v7195, %v5201
      %v7228 = vmul.f32 %v7196, %v5206
      %v7229 = vmul.f32 %v7197, %v5211
      %v7230 = vmul.f32 %v7198, %v5216
      %v7231 = vmul.f32 %v7199, %v5221
      %v7232 = vmul.f32 %v7200, %v5226
      %v7233 = vmul.f32 %v7201, %v5231
      %v7234 = vmul.f32 %v7202, %v5236
      %v7235 = vmul.f32 %v7203, %v5241
      %v7236 = vmul.f32 %v7204, %v5246
      %v7237 = vmul.f32 %v7205, %v5251
      %v7238 = vmul.f32 %v7206, %v5256
      %v7239 = vmul.f32 %v7207, %v5261
      %v7240 = vmul.f32 %v7208, %v5266
      %v7241 = vmul.f32 %v7209, %v5271
      %v7242 = vmul.f32 %v7210, %v5276
      %v7243 = vmul.f32 %v7211, %v5281
      %v7244 = vmul.f32 %v7212, %v5286
      %v7245 = vmul.f32 %v7213, %v5291
      %v7246 = vmul.f32 %v7214, %v5296
      %v7247 = vmul.f32 %v7215, %v5301
      %v7248 = vmul.f32 %v7216, %v5306
      %v7249 = vmul.f32 %v7217, %v5311
      %v7250 = vpack.c.bf16 %v7219, %v7218
      %v7251 = vpack.c.bf16 %v7221, %v7220
      %v7252 = vpack.c.bf16 %v7223, %v7222
      %v7253 = vpack.c.bf16 %v7225, %v7224
      %v7254 = vpack.c.bf16 %v7227, %v7226
      %v7255 = vpack.c.bf16 %v7229, %v7228
      %v7256 = vpack.c.bf16 %v7231, %v7230
      %v7257 = vpack.c.bf16 %v7233, %v7232
      %v7258 = vpack.c.bf16 %v7235, %v7234
      %v7259 = vpack.c.bf16 %v7237, %v7236
      %v7260 = vpack.c.bf16 %v7239, %v7238
      %v7261 = vpack.c.bf16 %v7241, %v7240
      %v7262 = vpack.c.bf16 %v7243, %v7242
      %v7263 = vpack.c.bf16 %v7245, %v7244
      %v7264 = vpack.c.bf16 %v7247, %v7246
      %v7265 = vpack.c.bf16 %v7249, %v7248
      %s7266 = scalar_lea.vmem %s9, 112
      %v7267 = vld [vmem:[%s7266] sm:$0xf]
      %v7268 = vld [vmem:[%s7266 + $0x4] sm:$0xf]
      %v7269 = vld [vmem:[%s7266 + $0x8] sm:$0xf]
      %v7270 = vld [vmem:[%s7266 + $0xc] sm:$0xf]
      %v7275 = vunpack.c.l.b16 %v7267
      %v7276 = vunpack.c.l.b16 %v7268
      %v7277 = vunpack.c.l.b16 %v7269
      %v7278 = vunpack.c.l.b16 %v7270
      %v7279 = vpack.c.b16 %v7276, %v7275
      %v7280 = vpack.c.b16 %v7278, %v7277
      %v7284 = vsel %vm522, %v7250, 0
      %v7287 = vsel %vm522, %v7251, 0
      %v7290 = vsel %vm522, %v7252, 0
      %v7293 = vsel %vm522, %v7253, 0
      %v7296 = vsel %vm522, %v7254, 0
      %v7299 = vsel %vm522, %v7255, 0
      %v7302 = vsel %vm522, %v7256, 0
      %v7305 = vsel %vm522, %v7257, 0
      %v7308 = vsel %vm522, %v7258, 0
      %v7311 = vsel %vm522, %v7259, 0
      %v7314 = vsel %vm522, %v7260, 0
      %v7317 = vsel %vm522, %v7261, 0
      %v7320 = vsel %vm522, %v7262, 0
      %v7323 = vsel %vm522, %v7263, 0
      %v7326 = vsel %vm522, %v7264, 0
      %v7329 = vsel %vm522, %v7265, 0
      %7331 = vmatpush.bf16.msra.mxu0 0
      %7332 = vmatpush.bf16.msra.mxu0 0
      %7333 = vmatpush.bf16.msra.mxu0 0
      %7334 = vmatpush.bf16.msra.mxu0 0
      %7335 = vmatpush.bf16.msra.mxu0 0
      %7336 = vmatpush.bf16.msra.mxu0 0
      %7337 = vmatpush.bf16.msra.mxu0 %v7280
      %7338 = vmatpush.bf16.msra.mxu0 %v7279
      %7339 = vmatmul.bf16.gmra.mxu0 %v7284
      %v7340 = vpop.f32.mrf.mxu0
      %v7341 = vadd.f32 0.0, %v7340
      %v7342 = vpop.f32.mrf.mxu0
      %v7343 = vadd.f32 0.0, %v7342
      %7344 = vmatmul.bf16.gmra.mxu0 %v7287
      %v7345 = vpop.f32.mrf.mxu0
      %v7346 = vadd.f32 0.0, %v7345
      %v7347 = vpop.f32.mrf.mxu0
      %v7348 = vadd.f32 0.0, %v7347
      %7349 = vmatmul.bf16.gmra.mxu0 %v7290
      %v7350 = vpop.f32.mrf.mxu0
      %v7351 = vadd.f32 0.0, %v7350
      %v7352 = vpop.f32.mrf.mxu0
      %v7353 = vadd.f32 0.0, %v7352
      %7354 = vmatmul.bf16.gmra.mxu0 %v7293
      %v7355 = vpop.f32.mrf.mxu0
      %v7356 = vadd.f32 0.0, %v7355
      %v7357 = vpop.f32.mrf.mxu0
      %v7358 = vadd.f32 0.0, %v7357
      %7359 = vmatmul.bf16.gmra.mxu0 %v7296
      %v7360 = vpop.f32.mrf.mxu0
      %v7361 = vadd.f32 0.0, %v7360
      %v7362 = vpop.f32.mrf.mxu0
      %v7363 = vadd.f32 0.0, %v7362
      %7364 = vmatmul.bf16.gmra.mxu0 %v7299
      %v7365 = vpop.f32.mrf.mxu0
      %v7366 = vadd.f32 0.0, %v7365
      %v7367 = vpop.f32.mrf.mxu0
      %v7368 = vadd.f32 0.0, %v7367
      %7369 = vmatmul.bf16.gmra.mxu0 %v7302
      %v7370 = vpop.f32.mrf.mxu0
      %v7371 = vadd.f32 0.0, %v7370
      %v7372 = vpop.f32.mrf.mxu0
      %v7373 = vadd.f32 0.0, %v7372
      %7374 = vmatmul.bf16.gmra.mxu0 %v7305
      %v7375 = vpop.f32.mrf.mxu0
      %v7376 = vadd.f32 0.0, %v7375
      %v7377 = vpop.f32.mrf.mxu0
      %v7378 = vadd.f32 0.0, %v7377
      %7379 = vmatmul.bf16.gmra.mxu0 %v7308
      %v7380 = vpop.f32.mrf.mxu0
      %v7381 = vadd.f32 0.0, %v7380
      %v7382 = vpop.f32.mrf.mxu0
      %v7383 = vadd.f32 0.0, %v7382
      %7384 = vmatmul.bf16.gmra.mxu0 %v7311
      %v7385 = vpop.f32.mrf.mxu0
      %v7386 = vadd.f32 0.0, %v7385
      %v7387 = vpop.f32.mrf.mxu0
      %v7388 = vadd.f32 0.0, %v7387
      %7389 = vmatmul.bf16.gmra.mxu0 %v7314
      %v7390 = vpop.f32.mrf.mxu0
      %v7391 = vadd.f32 0.0, %v7390
      %v7392 = vpop.f32.mrf.mxu0
      %v7393 = vadd.f32 0.0, %v7392
      %7394 = vmatmul.bf16.gmra.mxu0 %v7317
      %v7395 = vpop.f32.mrf.mxu0
      %v7396 = vadd.f32 0.0, %v7395
      %v7397 = vpop.f32.mrf.mxu0
      %v7398 = vadd.f32 0.0, %v7397
      %7399 = vmatmul.bf16.gmra.mxu0 %v7320
      %v7400 = vpop.f32.mrf.mxu0
      %v7401 = vadd.f32 0.0, %v7400
      %v7402 = vpop.f32.mrf.mxu0
      %v7403 = vadd.f32 0.0, %v7402
      %7404 = vmatmul.bf16.gmra.mxu0 %v7323
      %v7405 = vpop.f32.mrf.mxu0
      %v7406 = vadd.f32 0.0, %v7405
      %v7407 = vpop.f32.mrf.mxu0
      %v7408 = vadd.f32 0.0, %v7407
      %7409 = vmatmul.bf16.gmra.mxu0 %v7326
      %v7410 = vpop.f32.mrf.mxu0
      %v7411 = vadd.f32 0.0, %v7410
      %v7412 = vpop.f32.mrf.mxu0
      %v7413 = vadd.f32 0.0, %v7412
      %7414 = vmatmul.bf16.gmra.mxu0 %v7329
      %v7415 = vpop.f32.mrf.mxu0
      %v7416 = vadd.f32 0.0, %v7415
      %v7417 = vpop.f32.mrf.mxu0
      %v7418 = vadd.f32 0.0, %v7417
      %7419 = vdwg.mxu0
      %v7420 = vadd.f32 %v7154, %v7341
      %v7421 = vadd.f32 %v7155, %v7343
      %v7422 = vadd.f32 %v7156, %v7346
      %v7423 = vadd.f32 %v7157, %v7348
      %v7424 = vadd.f32 %v7158, %v7351
      %v7425 = vadd.f32 %v7159, %v7353
      %v7426 = vadd.f32 %v7160, %v7356
      %v7427 = vadd.f32 %v7161, %v7358
      %v7428 = vadd.f32 %v7162, %v7361
      %v7429 = vadd.f32 %v7163, %v7363
      %v7430 = vadd.f32 %v7164, %v7366
      %v7431 = vadd.f32 %v7165, %v7368
      %v7432 = vadd.f32 %v7166, %v7371
      %v7433 = vadd.f32 %v7167, %v7373
      %v7434 = vadd.f32 %v7168, %v7376
      %v7435 = vadd.f32 %v7169, %v7378
      %v7436 = vadd.f32 %v7170, %v7381
      %v7437 = vadd.f32 %v7171, %v7383
      %v7438 = vadd.f32 %v7172, %v7386
      %v7439 = vadd.f32 %v7173, %v7388
      %v7440 = vadd.f32 %v7174, %v7391
      %v7441 = vadd.f32 %v7175, %v7393
      %v7442 = vadd.f32 %v7176, %v7396
      %v7443 = vadd.f32 %v7177, %v7398
      %v7444 = vadd.f32 %v7178, %v7401
      %v7445 = vadd.f32 %v7179, %v7403
      %v7446 = vadd.f32 %v7180, %v7406
      %v7447 = vadd.f32 %v7181, %v7408
      %v7448 = vadd.f32 %v7182, %v7411
      %v7449 = vadd.f32 %v7183, %v7413
      %v7450 = vadd.f32 %v7184, %v7416
      %v7451 = vadd.f32 %v7185, %v7418
      %v7452 = vld [vmem:[#allocation2 + $0x29] sm:$0xff]
      %v7453 = vld [vmem:[#allocation2 + $0x31] sm:$0xff]
      %v7454 = vld [vmem:[#allocation2 + $0x39] sm:$0xff]
      %v7455 = vld [vmem:[#allocation2 + $0x41] sm:$0xff]
      %v7456 = vld [vmem:[#allocation2 + $0x49] sm:$0xff]
      %v7457 = vld [vmem:[#allocation2 + $0x51] sm:$0xff]
      %v7458 = vld [vmem:[#allocation2 + $0x59] sm:$0xff]
      %v7459 = vld [vmem:[#allocation2 + $0x61] sm:$0xff]
      %v7460 = vld [vmem:[#allocation2 + $0x69] sm:$0xff]
      %v7461 = vld [vmem:[#allocation2 + $0x71] sm:$0xff]
      %v7462 = vld [vmem:[#allocation2 + $0x79] sm:$0xff]
      %v7463 = vld [vmem:[#allocation2 + $0x81] sm:$0xff]
      %v7464 = vld [vmem:[#allocation2 + $0x89] sm:$0xff]
      %v7465 = vld [vmem:[#allocation2 + $0x91] sm:$0xff]
      %v7466 = vld [vmem:[#allocation2 + $0x99] sm:$0xff]
      %v7467 = vld [vmem:[#allocation2 + $0xa1] sm:$0xff]
      %v7468 = vld [vmem:[#allocation2 + $0xa9] sm:$0xff]
      %v7469 = vld [vmem:[#allocation2 + $0xb1] sm:$0xff]
      %v7470 = vld [vmem:[#allocation2 + $0xb9] sm:$0xff]
      %v7471 = vld [vmem:[#allocation2 + $0xc1] sm:$0xff]
      %v7472 = vld [vmem:[#allocation2 + $0xc9] sm:$0xff]
      %v7473 = vld [vmem:[#allocation2 + $0xd1] sm:$0xff]
      %v7474 = vld [vmem:[#allocation2 + $0xd9] sm:$0xff]
      %v7475 = vld [vmem:[#allocation2 + $0xe1] sm:$0xff]
      %v7476 = vld [vmem:[#allocation2 + $0xe9] sm:$0xff]
      %v7477 = vld [vmem:[#allocation2 + $0xf1] sm:$0xff]
      %v7478 = vld [vmem:[#allocation2 + $0xf9] sm:$0xff]
      %v7479 = vld [vmem:[#allocation2 + $0x101] sm:$0xff]
      %v7480 = vld [vmem:[#allocation2 + $0x109] sm:$0xff]
      %v7481 = vld [vmem:[#allocation2 + $0x111] sm:$0xff]
      %v7482 = vld [vmem:[#allocation2 + $0x119] sm:$0xff]
      %v7483 = vld [vmem:[#allocation2 + $0x121] sm:$0xff]
      %v7484 = vmul.f32 %v7452, %v5731
      %v7485 = vmul.f32 %v7453, %v5736
      %v7486 = vmul.f32 %v7454, %v5741
      %v7487 = vmul.f32 %v7455, %v5746
      %v7488 = vmul.f32 %v7456, %v5751
      %v7489 = vmul.f32 %v7457, %v5756
      %v7490 = vmul.f32 %v7458, %v5761
      %v7491 = vmul.f32 %v7459, %v5766
      %v7492 = vmul.f32 %v7460, %v5771
      %v7493 = vmul.f32 %v7461, %v5776
      %v7494 = vmul.f32 %v7462, %v5781
      %v7495 = vmul.f32 %v7463, %v5786
      %v7496 = vmul.f32 %v7464, %v5791
      %v7497 = vmul.f32 %v7465, %v5796
      %v7498 = vmul.f32 %v7466, %v5801
      %v7499 = vmul.f32 %v7467, %v5806
      %v7500 = vmul.f32 %v7468, %v5811
      %v7501 = vmul.f32 %v7469, %v5816
      %v7502 = vmul.f32 %v7470, %v5821
      %v7503 = vmul.f32 %v7471, %v5826
      %v7504 = vmul.f32 %v7472, %v5831
      %v7505 = vmul.f32 %v7473, %v5836
      %v7506 = vmul.f32 %v7474, %v5841
      %v7507 = vmul.f32 %v7475, %v5846
      %v7508 = vmul.f32 %v7476, %v5851
      %v7509 = vmul.f32 %v7477, %v5856
      %v7510 = vmul.f32 %v7478, %v5861
      %v7511 = vmul.f32 %v7479, %v5866
      %v7512 = vmul.f32 %v7480, %v5871
      %v7513 = vmul.f32 %v7481, %v5876
      %v7514 = vmul.f32 %v7482, %v5881
      %v7515 = vmul.f32 %v7483, %v5886
      %v7516 = vpack.c.bf16 %v7485, %v7484
      %v7517 = vpack.c.bf16 %v7487, %v7486
      %v7518 = vpack.c.bf16 %v7489, %v7488
      %v7519 = vpack.c.bf16 %v7491, %v7490
      %v7520 = vpack.c.bf16 %v7493, %v7492
      %v7521 = vpack.c.bf16 %v7495, %v7494
      %v7522 = vpack.c.bf16 %v7497, %v7496
      %v7523 = vpack.c.bf16 %v7499, %v7498
      %v7524 = vpack.c.bf16 %v7501, %v7500
      %v7525 = vpack.c.bf16 %v7503, %v7502
      %v7526 = vpack.c.bf16 %v7505, %v7504
      %v7527 = vpack.c.bf16 %v7507, %v7506
      %v7528 = vpack.c.bf16 %v7509, %v7508
      %v7529 = vpack.c.bf16 %v7511, %v7510
      %v7530 = vpack.c.bf16 %v7513, %v7512
      %v7531 = vpack.c.bf16 %v7515, %v7514
      %s7532 = scalar_lea.vmem %s9, 128
      %v7533 = vld [vmem:[%s7532] sm:$0xf]
      %v7534 = vld [vmem:[%s7532 + $0x4] sm:$0xf]
      %v7535 = vld [vmem:[%s7532 + $0x8] sm:$0xf]
      %v7536 = vld [vmem:[%s7532 + $0xc] sm:$0xf]
      %v7541 = vunpack.c.l.b16 %v7533
      %v7542 = vunpack.c.l.b16 %v7534
      %v7543 = vunpack.c.l.b16 %v7535
      %v7544 = vunpack.c.l.b16 %v7536
      %v7545 = vpack.c.b16 %v7542, %v7541
      %v7546 = vpack.c.b16 %v7544, %v7543
      %v7550 = vsel %vm522, %v7516, 0
      %v7553 = vsel %vm522, %v7517, 0
      %v7556 = vsel %vm522, %v7518, 0
      %v7559 = vsel %vm522, %v7519, 0
      %v7562 = vsel %vm522, %v7520, 0
      %v7565 = vsel %vm522, %v7521, 0
      %v7568 = vsel %vm522, %v7522, 0
      %v7571 = vsel %vm522, %v7523, 0
      %v7574 = vsel %vm522, %v7524, 0
      %v7577 = vsel %vm522, %v7525, 0
      %v7580 = vsel %vm522, %v7526, 0
      %v7583 = vsel %vm522, %v7527, 0
      %v7586 = vsel %vm522, %v7528, 0
      %v7589 = vsel %vm522, %v7529, 0
      %v7592 = vsel %vm522, %v7530, 0
      %v7595 = vsel %vm522, %v7531, 0
      %7597 = vmatpush.bf16.msra.mxu0 0
      %7598 = vmatpush.bf16.msra.mxu0 0
      %7599 = vmatpush.bf16.msra.mxu0 0
      %7600 = vmatpush.bf16.msra.mxu0 0
      %7601 = vmatpush.bf16.msra.mxu0 0
      %7602 = vmatpush.bf16.msra.mxu0 0
      %7603 = vmatpush.bf16.msra.mxu0 %v7546
      %7604 = vmatpush.bf16.msra.mxu0 %v7545
      %7605 = vmatmul.bf16.gmra.mxu0 %v7550
      %v7606 = vpop.f32.mrf.mxu0
      %v7607 = vadd.f32 0.0, %v7606
      %v7608 = vpop.f32.mrf.mxu0
      %v7609 = vadd.f32 0.0, %v7608
      %7610 = vmatmul.bf16.gmra.mxu0 %v7553
      %v7611 = vpop.f32.mrf.mxu0
      %v7612 = vadd.f32 0.0, %v7611
      %v7613 = vpop.f32.mrf.mxu0
      %v7614 = vadd.f32 0.0, %v7613
      %7615 = vmatmul.bf16.gmra.mxu0 %v7556
      %v7616 = vpop.f32.mrf.mxu0
      %v7617 = vadd.f32 0.0, %v7616
      %v7618 = vpop.f32.mrf.mxu0
      %v7619 = vadd.f32 0.0, %v7618
      %7620 = vmatmul.bf16.gmra.mxu0 %v7559
      %v7621 = vpop.f32.mrf.mxu0
      %v7622 = vadd.f32 0.0, %v7621
      %v7623 = vpop.f32.mrf.mxu0
      %v7624 = vadd.f32 0.0, %v7623
      %7625 = vmatmul.bf16.gmra.mxu0 %v7562
      %v7626 = vpop.f32.mrf.mxu0
      %v7627 = vadd.f32 0.0, %v7626
      %v7628 = vpop.f32.mrf.mxu0
      %v7629 = vadd.f32 0.0, %v7628
      %7630 = vmatmul.bf16.gmra.mxu0 %v7565
      %v7631 = vpop.f32.mrf.mxu0
      %v7632 = vadd.f32 0.0, %v7631
      %v7633 = vpop.f32.mrf.mxu0
      %v7634 = vadd.f32 0.0, %v7633
      %7635 = vmatmul.bf16.gmra.mxu0 %v7568
      %v7636 = vpop.f32.mrf.mxu0
      %v7637 = vadd.f32 0.0, %v7636
      %v7638 = vpop.f32.mrf.mxu0
      %v7639 = vadd.f32 0.0, %v7638
      %7640 = vmatmul.bf16.gmra.mxu0 %v7571
      %v7641 = vpop.f32.mrf.mxu0
      %v7642 = vadd.f32 0.0, %v7641
      %v7643 = vpop.f32.mrf.mxu0
      %v7644 = vadd.f32 0.0, %v7643
      %7645 = vmatmul.bf16.gmra.mxu0 %v7574
      %v7646 = vpop.f32.mrf.mxu0
      %v7647 = vadd.f32 0.0, %v7646
      %v7648 = vpop.f32.mrf.mxu0
      %v7649 = vadd.f32 0.0, %v7648
      %7650 = vmatmul.bf16.gmra.mxu0 %v7577
      %v7651 = vpop.f32.mrf.mxu0
      %v7652 = vadd.f32 0.0, %v7651
      %v7653 = vpop.f32.mrf.mxu0
      %v7654 = vadd.f32 0.0, %v7653
      %7655 = vmatmul.bf16.gmra.mxu0 %v7580
      %v7656 = vpop.f32.mrf.mxu0
      %v7657 = vadd.f32 0.0, %v7656
      %v7658 = vpop.f32.mrf.mxu0
      %v7659 = vadd.f32 0.0, %v7658
      %7660 = vmatmul.bf16.gmra.mxu0 %v7583
      %v7661 = vpop.f32.mrf.mxu0
      %v7662 = vadd.f32 0.0, %v7661
      %v7663 = vpop.f32.mrf.mxu0
      %v7664 = vadd.f32 0.0, %v7663
      %7665 = vmatmul.bf16.gmra.mxu0 %v7586
      %v7666 = vpop.f32.mrf.mxu0
      %v7667 = vadd.f32 0.0, %v7666
      %v7668 = vpop.f32.mrf.mxu0
      %v7669 = vadd.f32 0.0, %v7668
      %7670 = vmatmul.bf16.gmra.mxu0 %v7589
      %v7671 = vpop.f32.mrf.mxu0
      %v7672 = vadd.f32 0.0, %v7671
      %v7673 = vpop.f32.mrf.mxu0
      %v7674 = vadd.f32 0.0, %v7673
      %7675 = vmatmul.bf16.gmra.mxu0 %v7592
      %v7676 = vpop.f32.mrf.mxu0
      %v7677 = vadd.f32 0.0, %v7676
      %v7678 = vpop.f32.mrf.mxu0
      %v7679 = vadd.f32 0.0, %v7678
      %7680 = vmatmul.bf16.gmra.mxu0 %v7595
      %v7681 = vpop.f32.mrf.mxu0
      %v7682 = vadd.f32 0.0, %v7681
      %v7683 = vpop.f32.mrf.mxu0
      %v7684 = vadd.f32 0.0, %v7683
      %7685 = vdwg.mxu0
      %v7686 = vadd.f32 %v7420, %v7607
      %v7687 = vadd.f32 %v7421, %v7609
      %v7688 = vadd.f32 %v7422, %v7612
      %v7689 = vadd.f32 %v7423, %v7614
      %v7690 = vadd.f32 %v7424, %v7617
      %v7691 = vadd.f32 %v7425, %v7619
      %v7692 = vadd.f32 %v7426, %v7622
      %v7693 = vadd.f32 %v7427, %v7624
      %v7694 = vadd.f32 %v7428, %v7627
      %v7695 = vadd.f32 %v7429, %v7629
      %v7696 = vadd.f32 %v7430, %v7632
      %v7697 = vadd.f32 %v7431, %v7634
      %v7698 = vadd.f32 %v7432, %v7637
      %v7699 = vadd.f32 %v7433, %v7639
      %v7700 = vadd.f32 %v7434, %v7642
      %v7701 = vadd.f32 %v7435, %v7644
      %v7702 = vadd.f32 %v7436, %v7647
      %v7703 = vadd.f32 %v7437, %v7649
      %v7704 = vadd.f32 %v7438, %v7652
      %v7705 = vadd.f32 %v7439, %v7654
      %v7706 = vadd.f32 %v7440, %v7657
      %v7707 = vadd.f32 %v7441, %v7659
      %v7708 = vadd.f32 %v7442, %v7662
      %v7709 = vadd.f32 %v7443, %v7664
      %v7710 = vadd.f32 %v7444, %v7667
      %v7711 = vadd.f32 %v7445, %v7669
      %v7712 = vadd.f32 %v7446, %v7672
      %v7713 = vadd.f32 %v7447, %v7674
      %v7714 = vadd.f32 %v7448, %v7677
      %v7715 = vadd.f32 %v7449, %v7679
      %v7716 = vadd.f32 %v7450, %v7682
      %v7717 = vadd.f32 %v7451, %v7684
      %v7719 = vperm.slane %v4780, 0
      %v7721 = vadd.f32 %v7686, %v7719
      %v7722 = vadd.f32 %v7687, %v7719
      %v7723 = vadd.f32 %v7688, %v7719
      %v7724 = vadd.f32 %v7689, %v7719
      %v7725 = vadd.f32 %v7690, %v7719
      %v7726 = vadd.f32 %v7691, %v7719
      %v7727 = vadd.f32 %v7692, %v7719
      %v7728 = vadd.f32 %v7693, %v7719
      %v7729 = vadd.f32 %v7694, %v7719
      %v7730 = vadd.f32 %v7695, %v7719
      %v7731 = vadd.f32 %v7696, %v7719
      %v7732 = vadd.f32 %v7697, %v7719
      %v7733 = vadd.f32 %v7698, %v7719
      %v7734 = vadd.f32 %v7699, %v7719
      %v7735 = vadd.f32 %v7700, %v7719
      %v7736 = vadd.f32 %v7701, %v7719
      %v7737 = vadd.f32 %v7702, %v7719
      %v7738 = vadd.f32 %v7703, %v7719
      %v7739 = vadd.f32 %v7704, %v7719
      %v7740 = vadd.f32 %v7705, %v7719
      %v7741 = vadd.f32 %v7706, %v7719
      %v7742 = vadd.f32 %v7707, %v7719
      %v7743 = vadd.f32 %v7708, %v7719
      %v7744 = vadd.f32 %v7709, %v7719
      %v7745 = vadd.f32 %v7710, %v7719
      %v7746 = vadd.f32 %v7711, %v7719
      %v7747 = vadd.f32 %v7712, %v7719
      %v7748 = vadd.f32 %v7713, %v7719
      %v7749 = vadd.f32 %v7714, %v7719
      %v7750 = vadd.f32 %v7715, %v7719
      %v7751 = vadd.f32 %v7716, %v7719
      %v7752 = vadd.f32 %v7717, %v7719
      %v7753 = vmax.f32 %v7721, 0.0
      %v7754 = vmax.f32 %v7722, 0.0
      %v7755 = vmax.f32 %v7723, 0.0
      %v7756 = vmax.f32 %v7724, 0.0
      %v7757 = vmax.f32 %v7725, 0.0
      %v7758 = vmax.f32 %v7726, 0.0
      %v7759 = vmax.f32 %v7727, 0.0
      %v7760 = vmax.f32 %v7728, 0.0
      %v7761 = vmax.f32 %v7729, 0.0
      %v7762 = vmax.f32 %v7730, 0.0
      %v7763 = vmax.f32 %v7731, 0.0
      %v7764 = vmax.f32 %v7732, 0.0
      %v7765 = vmax.f32 %v7733, 0.0
      %v7766 = vmax.f32 %v7734, 0.0
      %v7767 = vmax.f32 %v7735, 0.0
      %v7768 = vmax.f32 %v7736, 0.0
      %v7769 = vmax.f32 %v7737, 0.0
      %v7770 = vmax.f32 %v7738, 0.0
      %v7771 = vmax.f32 %v7739, 0.0
      %v7772 = vmax.f32 %v7740, 0.0
      %v7773 = vmax.f32 %v7741, 0.0
      %v7774 = vmax.f32 %v7742, 0.0
      %v7775 = vmax.f32 %v7743, 0.0
      %v7776 = vmax.f32 %v7744, 0.0
      %v7777 = vmax.f32 %v7745, 0.0
      %v7778 = vmax.f32 %v7746, 0.0
      %v7779 = vmax.f32 %v7747, 0.0
      %v7780 = vmax.f32 %v7748, 0.0
      %v7781 = vmax.f32 %v7749, 0.0
      %v7782 = vmax.f32 %v7750, 0.0
      %v7783 = vmax.f32 %v7751, 0.0
      %v7784 = vmax.f32 %v7752, 0.0
      %v7785 = vld [vmem:[%s11] sm:$0x1]
      %v7786 = vld [vmem:[#allocation3] sm:$0x1]
      %7788 = vset.pattern.permute.xlu0 0
      %7789 = vperm.xlu0 %7788, %v7786
      %v7790 = vpop.permute.xlu0 %7789
      %v7792 = vperm.slane %v7790, 0
      %v7794 = vsel %vm522, %v7785, 0
      %v7797 = vsel %vm522, %v7753, 0
      %v7800 = vsel %vm522, %v7754, 0
      %v7803 = vsel %vm522, %v7755, 0
      %v7806 = vsel %vm522, %v7756, 0
      %v7809 = vsel %vm522, %v7757, 0
      %v7812 = vsel %vm522, %v7758, 0
      %v7815 = vsel %vm522, %v7759, 0
      %v7818 = vsel %vm522, %v7760, 0
      %v7821 = vsel %vm522, %v7761, 0
      %v7824 = vsel %vm522, %v7762, 0
      %v7827 = vsel %vm522, %v7763, 0
      %v7830 = vsel %vm522, %v7764, 0
      %v7833 = vsel %vm522, %v7765, 0
      %v7836 = vsel %vm522, %v7766, 0
      %v7839 = vsel %vm522, %v7767, 0
      %v7842 = vsel %vm522, %v7768, 0
      %v7845 = vsel %vm522, %v7769, 0
      %v7848 = vsel %vm522, %v7770, 0
      %v7851 = vsel %vm522, %v7771, 0
      %v7854 = vsel %vm522, %v7772, 0
      %v7857 = vsel %vm522, %v7773, 0
      %v7860 = vsel %vm522, %v7774, 0
      %v7863 = vsel %vm522, %v7775, 0
      %v7866 = vsel %vm522, %v7776, 0
      %v7869 = vsel %vm522, %v7777, 0
      %v7872 = vsel %vm522, %v7778, 0
      %v7875 = vsel %vm522, %v7779, 0
      %v7878 = vsel %vm522, %v7780, 0
      %v7881 = vsel %vm522, %v7781, 0
      %v7884 = vsel %vm522, %v7782, 0
      %v7887 = vsel %vm522, %v7783, 0
      %v7890 = vsel %vm522, %v7784, 0
      %7892 = vmatpush.xpose.msra.mxu0 %v7842
      %7893 = vmatpush.xpose.msra.mxu0 %v7839
      %7894 = vmatpush.xpose.msra.mxu0 %v7836
      %7895 = vmatpush.xpose.msra.mxu0 %v7833
      %7896 = vmatpush.xpose.msra.mxu0 %v7830
      %7897 = vmatpush.xpose.msra.mxu0 %v7827
      %7898 = vmatpush.xpose.msra.mxu0 %v7824
      %7899 = vmatpush.xpose.msra.mxu0 %v7821
      %7900 = vmatpush.xpose.msra.mxu0 %v7818
      %7901 = vmatpush.xpose.msra.mxu0 %v7815
      %7902 = vmatpush.xpose.msra.mxu0 %v7812
      %7903 = vmatpush.xpose.msra.mxu0 %v7809
      %7904 = vmatpush.xpose.msra.mxu0 %v7806
      %7905 = vmatpush.xpose.msra.mxu0 %v7803
      %7906 = vmatpush.xpose.msra.mxu0 %v7800
      %7907 = vmatpush.xpose.msra.mxu0 %v7797
      %7908 = vmatmul.f32.gmra.mxu0 %v7794
      %v7909 = vpop.f32.mrf.mxu0
      %v7910 = vadd.f32 %v7792, %v7909
      %7911 = vdwg.mxu0
      %7912 = vmatpush.xpose.msra.mxu0 %v7890
      %7913 = vmatpush.xpose.msra.mxu0 %v7887
      %7914 = vmatpush.xpose.msra.mxu0 %v7884
      %7915 = vmatpush.xpose.msra.mxu0 %v7881
      %7916 = vmatpush.xpose.msra.mxu0 %v7878
      %7917 = vmatpush.xpose.msra.mxu0 %v7875
      %7918 = vmatpush.xpose.msra.mxu0 %v7872
      %7919 = vmatpush.xpose.msra.mxu0 %v7869
      %7920 = vmatpush.xpose.msra.mxu0 %v7866
      %7921 = vmatpush.xpose.msra.mxu0 %v7863
      %7922 = vmatpush.xpose.msra.mxu0 %v7860
      %7923 = vmatpush.xpose.msra.mxu0 %v7857
      %7924 = vmatpush.xpose.msra.mxu0 %v7854
      %7925 = vmatpush.xpose.msra.mxu0 %v7851
      %7926 = vmatpush.xpose.msra.mxu0 %v7848
      %7927 = vmatpush.xpose.msra.mxu0 %v7845
      %7928 = vmatmul.f32.gmra.mxu0 %v7794
      %v7929 = vpop.f32.mrf.mxu0
      %v7930 = vadd.f32 %v7792, %v7929
      %7931 = vdwg.mxu0
      %v7934 = vrot.slane %v7930, 7
      %vm7935 = vcmask 1040384
      %v7936 = vsel %vm7935, %v7910, %v7934
      %v7938 = vlaneseq
      %vm7939 = vcmp.ge.s32.totalorder %v7938, 0
      %vm7940 = vcmp.lt.s32.totalorder %v7938, 256
      %vm7941 = vmand %vm7939, %vm7940
      %7942 = vst.msk [vmem:[%s420] sm:$0x3] %vm7941, %v7936
      %p7943 = scmp.lt.s32.totalorder %s26, 1
      %s7944 = scalar_select %p7943, %s26, 1
      %s7945 = smul.addr %s7944, 2
      %s7946 = scalar_lea.vmem %s13, %s7945
      // Predicated region
      $region73: #{depth_estimator_forward.3} parent=71 // pred_check
        %p7947 = pneg %p317
      $region74: #{depth_estimator_forward.3} parent=71 // pred_check_branch
        %7949 = sbr.rel (%p7947) target = $region76
      $region75: #{depth_estimator_forward.3} parent=71 // pred_region
        _
      $region76: #{depth_estimator_forward.3} parent=71 // pred_fallthru
        _
    $region72: #{depth_estimator_forward.3} parent=5 // pred_fallthru
      _
    %p7950 = scmp.le.s32.totalorder 2, %s21
    // Predicated region
    $region77: #{depth_estimator_forward.3} parent=5 // pred_check
      %p7951 = pneg %p7950
    $region78: #{depth_estimator_forward.3} parent=5 // pred_check_branch
      %7953 = sbr.rel (%p7951) target = $region80
    $region79: #{depth_estimator_forward.3} parent=5 // pred_region
      %s7954 = ssub.s32 %s21, 2
      // Predicated region
      $region81: #{depth_estimator_forward.3} parent=79 // pred_check
        %p7955 = pneg %p323
      $region82: #{depth_estimator_forward.3} parent=79 // pred_check_branch
        %7957 = sbr.rel (%p7955) target = $region84
      $region83: #{depth_estimator_forward.3} parent=79 // pred_region
        %p7958 = scmp.lt.s32.totalorder %s27, 1
        %s7959 = scalar_select %p7958, %s27, 1
        %s7960 = smul.addr %s7959, 2
        %s7961 = scalar_lea.vmem %s13, %s7960
      $region84: #{depth_estimator_forward.3} parent=79 // pred_fallthru
        _
    $region80: #{depth_estimator_forward.3} parent=5 // pred_fallthru
      _
  $region6: #{depth_estimator_forward.3} parent=0 // loop_footer
    %s25 = sadd.s32 1, %s21
  $region7: #{depth_estimator_forward.3} parent=0 // loop_footer_branch
    %20 = sbr.rel target = $region3
  $region8: #{depth_estimator_forward.3} parent=0 // loop_exit
    _

</llo_original>
